<compile_context>
chip_gen: v7x
topology: tpu7x:2x2x1
jax: 0.10.0
libtpu: 0.0.40
codegen_flags: <defaults>
</compile_context>

<pallas_src>
import functools

import jax
import jax.numpy as jnp
from jax import lax
from jax.experimental import pallas as pl
from jax.experimental.pallas import tpu as pltpu

# ---- TransLayer hyper-parameters (dim=512 default in PyTorch; small here) ---
DIM = 64                   # model dim
HEADS = 8                  # heads=8
DIM_HEAD = DIM // 8        # dim_head = dim // 8
INNER = HEADS * DIM_HEAD   # = dim
LANDMARKS = DIM // 2       # num_landmarks = dim // 2
PINV_ITERS = 6             # pinv_iterations
CONV_K = 33                # nystrom-attention residual_conv_kernel default
HALF_K = CONV_K // 2
LN_EPS = 1e-5
SCALE = DIM_HEAD ** -0.5


def _dot(a, b):
    return jnp.dot(a, b, precision=lax.Precision.HIGHEST,
                   preferred_element_type=jnp.float32)


def _dot_nt(a, b):
    # a @ b.T : contract the last dim of both operands (no explicit transpose).
    return lax.dot_general(a, b, (((1,), (1,)), ((), ())),
                           precision=lax.Precision.HIGHEST,
                           preferred_element_type=jnp.float32)


def _softmax_rows(s):
    s = s - jnp.max(s, axis=-1, keepdims=True)
    e = jnp.exp(s)
    return e / jnp.sum(e, axis=-1, keepdims=True)


def _softmax_cols(s):
    # softmax along axis 0; softmax_cols(S^T) == softmax_rows(S)^T  (transpose-free).
    s = s - jnp.max(s, axis=0, keepdims=True)
    e = jnp.exp(s)
    return e / jnp.sum(e, axis=0, keepdims=True)


# --------------------------- kernel 1: LN + QKV + landmarks + a2 -------------
def prep_kernel(x_ref, gamma_ref, beta_ref, wqkv_ref, pool_ref,
                qkv_ref, lmk_ref, a2_ref):
    d = DIM_HEAD
    xb = x_ref[0]                                          # (n, dim)
    mu = jnp.mean(xb, axis=-1, keepdims=True)
    var = jnp.mean((xb - mu) ** 2, axis=-1, keepdims=True)
    y = (xb - mu) * lax.rsqrt(var + LN_EPS) * gamma_ref[...] + beta_ref[...]

    # fused QKV projection (q scale already folded into the weights in the wrapper)
    qkv = _dot(y, wqkv_ref[...])                           # (n, 3*inner)
    qkv_ref[0] = qkv                                       # ONE lane-dense store

    # all-head landmark pooling: ONE matmul, ONE lane-dense store
    lmk = _dot(pool_ref[...], qkv)                         # (m, 3*inner)
    lmk_ref[0] = lmk

    # per-head landmark-landmark attention a2 (needed in HBM for the global denom)
    for hi in range(HEADS):
        c0, c1 = hi * d, (hi + 1) * d
        qlh = lmk[:, c0:c1]
        klh = lmk[:, INNER + c0:INNER + c1]
        a2_ref[0, hi] = _softmax_rows(_dot_nt(qlh, klh))


# ------------- kernel 2: pinv + attention out + conv residual + proj ---------
def attn_kernel(denom_ref, x_ref, qkv_ref, lmk_ref, a2_ref, band_ref,
                wout_ref, bout_ref, out_ref):
    n = x_ref.shape[1]
    d, m = DIM_HEAD, LANDMARKS
    inv_denom = 1.0 / denom_ref[0, 0]

    ii = lax.broadcasted_iota(jnp.int32, (m, m), 0)
    jj = lax.broadcasted_iota(jnp.int32, (m, m), 1)
    eye = (ii == jj).astype(jnp.float32)                   # (m, m)
    c13, c15, c7 = 13.0 * eye, 15.0 * eye, 7.0 * eye       # hoisted out of pinv loop

    qkv = qkv_ref[0]                                       # (n, 3*inner)
    lmk = lmk_ref[0]                                       # (m, 3*inner)
    wout = wout_ref[...]                                   # (inner, dim)

    acc = jnp.zeros((n, DIM), jnp.float32)                 # projected output accumulator
    for hi in range(HEADS):
        c0, c1 = hi * d, (hi + 1) * d
        qh = qkv[:, c0:c1]                                 # (n, d), pre-scaled
        kh = qkv[:, INNER + c0:INNER + c1]                 # (n, d)
        vh = qkv[:, 2 * INNER + c0:2 * INNER + c1]         # (n, d)
        qlh = lmk[:, c0:c1]                                # (m, d)
        klh = lmk[:, INNER + c0:INNER + c1]                # (m, d)

        # a2^T rebuilt transpose-free: col-softmax of the transposed logits.
        a2t = _softmax_cols(_dot_nt(klh, qlh))             # (m, m) == a2^T
        a2 = a2_ref[0, hi]                                 # (m, m)

        # Moore-Penrose iterative pseudo-inverse (13/15/7 Nystromformer form).
        z = a2t * inv_denom
        for _ in range(PINV_ITERS):
            xz = _dot(a2, z)
            z = 0.25 * _dot(z, c13 - _dot(xz, c15 - _dot(xz, c7 - xz)))

        a1 = _softmax_rows(_dot_nt(qh, klh))               # (n, m)
        a3 = _softmax_rows(_dot_nt(qlh, kh))               # (m, n)
        attn_h = _dot(_dot(a1, z), _dot(a3, vh))           # (n, d)

        # depthwise Conv2d(heads, heads, (33,1), groups=heads) residual on values,
        # as ONE banded (n,n)@(n,d) matmul on the MXU (band precomputed in wrapper).
        conv_h = _dot(band_ref[hi], vh)                    # (n, d)

        # project this head immediately with an aligned 8-row slice of W_out and
        # accumulate in registers: no masked stores, no VMEM scratch round trip.
        acc = acc + _dot(attn_h + conv_h, wout[c0:c1, :])  # (n, dim)

    out_ref[0] = x_ref[0] + acc + bout_ref[...]            # bias + TransLayer residual


# --------------------------------- wrapper -----------------------------------
def translayer_pallas(x, params):
    b, n, dim = x.shape
    assert dim == DIM
    m = LANDMARKS
    # TODO(synk): front zero-padding branch for n % num_landmarks != 0 not implemented;
    # sequence length is chosen divisible by the landmark count.
    assert n % m == 0
    l = n // m

    # fold the q scale into the first INNER columns of the fused QKV weight
    scale_vec = jnp.concatenate(
        [jnp.full((INNER,), SCALE, jnp.float32), jnp.ones((2 * INNER,), jnp.float32)])
    wqkv_t = jnp.transpose(params["wqkv"]) * scale_vec[None, :]     # (dim, 3*inner)
    wout_t = jnp.transpose(params["wout"])                          # (inner, dim)

    # landmark mean-pooling matrix: groups of l consecutive tokens, divided by l
    groups = jnp.arange(n) // l
    pool = (groups[None, :] == jnp.arange(m)[:, None]).astype(jnp.float32) / l  # (m, n)

    # per-head banded conv matrix: band[h, i, p] = convw[h, p - i + HALF_K] in-band.
    convw = params["convw"][:, 0, :, 0]                    # (h, CONV_K)
    ti = jnp.arange(n)[:, None]
    tp = jnp.arange(n)[None, :]
    tk = tp - ti + HALF_K
    valid = (tk >= 0) & (tk < CONV_K)
    band = jnp.where(valid[None, :, :],
                     convw[:, jnp.clip(tk, 0, CONV_K - 1)],
                     0.0).astype(jnp.float32)              # (h, n, n)

    full = lambda shape: pl.BlockSpec(shape, lambda i, _s=len(shape): (0,) * _s)

    qkv, lmk, a2 = pl.pallas_call(
        prep_kernel,
        grid=(b,),
        in_specs=[
            pl.BlockSpec((1, n, dim), lambda i: (i, 0, 0)),         # x
            full((1, dim)),                                         # gamma
            full((1, dim)),                                         # beta
            full((dim, 3 * INNER)),                                 # W_qkv (fused, scaled)
            full((m, n)),                                           # landmark pooling
        ],
        out_specs=[
            pl.BlockSpec((1, n, 3 * INNER), lambda i: (i, 0, 0)),
            pl.BlockSpec((1, m, 3 * INNER), lambda i: (i, 0, 0)),
            pl.BlockSpec((1, HEADS, m, m), lambda i: (i, 0, 0, 0)),
        ],
        out_shape=[
            jax.ShapeDtypeStruct((b, n, 3 * INNER), jnp.float32),
            jax.ShapeDtypeStruct((b, m, 3 * INNER), jnp.float32),
            jax.ShapeDtypeStruct((b, HEADS, m, m), jnp.float32),
        ],
        compiler_params=pltpu.CompilerParams(dimension_semantics=("parallel",)),
    )(x, params["gamma"], params["beta"], wqkv_t, pool)

    # torch-exact GLOBAL pinv normalization (couples all batches/heads) — tiny jnp glue.
    abs2 = jnp.abs(a2)
    denom = jnp.max(jnp.sum(abs2, axis=-1)) * jnp.max(jnp.sum(abs2, axis=-2))
    denom = denom.reshape(1, 1).astype(jnp.float32)

    out = pl.pallas_call(
        attn_kernel,
        grid=(b,),
        in_specs=[
            pl.BlockSpec(memory_space=pltpu.MemorySpace.SMEM),          # denom scalar
            pl.BlockSpec((1, n, dim), lambda i: (i, 0, 0)),             # x
            pl.BlockSpec((1, n, 3 * INNER), lambda i: (i, 0, 0)),       # qkv
            pl.BlockSpec((1, m, 3 * INNER), lambda i: (i, 0, 0)),       # landmarks
            pl.BlockSpec((1, HEADS, m, m), lambda i: (i, 0, 0, 0)),     # a2
            full((HEADS, n, n)),                                        # conv band
            full((INNER, dim)),                                         # W_out
            full((1, dim)),                                             # b_out
        ],
        out_specs=pl.BlockSpec((1, n, dim), lambda i: (i, 0, 0)),
        out_shape=jax.ShapeDtypeStruct((b, n, dim), jnp.float32),
        compiler_params=pltpu.CompilerParams(dimension_semantics=("parallel",)),
    )(denom, x, qkv, lmk, a2, band, wout_t, params["bout"])
    return out


# --------------------------------- params ------------------------------------
def make_params(key):
    ks = jax.random.split(key, 6)
    gamma = 1.0 + 0.1 * jax.random.normal(ks[0], (1, DIM), jnp.float32)
    beta = 0.1 * jax.random.normal(ks[1], (1, DIM), jnp.float32)
    wqkv = jax.random.normal(ks[2], (3 * INNER, DIM), jnp.float32) * DIM ** -0.5
    wout = jax.random.normal(ks[3], (DIM, INNER), jnp.float32) * INNER ** -0.5
    bout = 0.02 * jax.random.normal(ks[4], (1, DIM), jnp.float32)
    convw = jax.random.normal(ks[5], (HEADS, 1, CONV_K, 1), jnp.float32) * CONV_K ** -0.5
    return dict(gamma=gamma, beta=beta, wqkv=wqkv, wout=wout, bout=bout, convw=convw)


# ------------------------------- reference ------------------------------------
def translayer_reference(x, params):
    """Pure-JAX reference (eval mode, dropout off), matching the PyTorch module."""
    b, n, _ = x.shape
    h, d, m = HEADS, DIM_HEAD, LANDMARKS
    l = n // m
    hp = functools.partial(jnp.einsum, precision=lax.Precision.HIGHEST)

    mu = x.mean(-1, keepdims=True)
    var = ((x - mu) ** 2).mean(-1, keepdims=True)
    y = (x - mu) / jnp.sqrt(var + LN_EPS) * params["gamma"][0] + params["beta"][0]

    qkv = hp("bnd,ed->bne", y, params["wqkv"])             # (b, n, 3*inner)
    q, k, v = jnp.split(qkv, 3, axis=-1)
    to_heads = lambda t: t.reshape(b, n, h, d).transpose(0, 2, 1, 3)
    q, k, v = map(to_heads, (q, k, v))
    q = q * SCALE
    q_l = q.reshape(b, h, m, l, d).sum(3) / l
    k_l = k.reshape(b, h, m, l, d).sum(3) / l

    a1 = jax.nn.softmax(hp("bhid,bhjd->bhij", q, k_l), axis=-1)
    a2 = jax.nn.softmax(hp("bhid,bhjd->bhij", q_l, k_l), axis=-1)
    a3 = jax.nn.softmax(hp("bhid,bhjd->bhij", q_l, k), axis=-1)

    # Moore-Penrose iterative pinv (nystrom-attention / Nystromformer form)
    abs2 = jnp.abs(a2)
    denom = jnp.max(abs2.sum(-1)) * jnp.max(abs2.sum(-2))  # global over (b, h)
    z = jnp.swapaxes(a2, -1, -2) / denom
    eye = jnp.eye(m, dtype=jnp.float32)
    bmm = lambda u, w: hp("bhij,bhjk->bhik", u, w)
    for _ in range(PINV_ITERS):
        xz = bmm(a2, z)
        z = 0.25 * bmm(z, 13.0 * eye - bmm(xz, 15.0 * eye - bmm(xz, 7.0 * eye - xz)))

    out = hp("bhij,bhjd->bhid", bmm(a1, z), hp("bhij,bhjd->bhid", a3, v))
    res = lax.conv_general_dilated(
        v, params["convw"], window_strides=(1, 1),
        padding=((HALF_K, HALF_K), (0, 0)),
        dimension_numbers=("NCHW", "OIHW", "NCHW"),
        feature_group_count=h, precision=lax.Precision.HIGHEST)
    out = out + res
    out = out.transpose(0, 2, 1, 3).reshape(b, n, h * d)
    out = hp("bne,de->bnd", out, params["wout"]) + params["bout"][0]
    return x + out


if __name__ == "__main__":
    key = jax.random.PRNGKey(0)
    kx, kp = jax.random.split(key)
    B, N = 2, 64
    x = jax.random.normal(kx, (B, N, DIM), jnp.float32)
    params = make_params(kp)

    out = jax.block_until_ready(translayer_pallas(x, params))
    ref = jax.block_until_ready(translayer_reference(x, params))

    assert out.shape == (B, N, DIM) and out.dtype == jnp.float32
    err = float(jnp.max(jnp.abs(out - ref)))
    assert err < 5e-2, f"max abs error {err}"
    print("KERNEL_OK")
</pallas_src>

<mosaic_0001>
module attributes {stable_mosaic.version = 11 : i64} {
  func.func @prep_kernel(%arg0: i32, %arg1: memref<1x64x64xf32, #tpu.memory_space<vmem>>, %arg2: memref<1x64xf32, #tpu.memory_space<vmem>>, %arg3: memref<1x64xf32, #tpu.memory_space<vmem>>, %arg4: memref<64x192xf32, #tpu.memory_space<vmem>>, %arg5: memref<32x64xf32, #tpu.memory_space<vmem>>, %arg6: memref<1x64x192xf32, #tpu.memory_space<vmem>>, %arg7: memref<1x32x192xf32, #tpu.memory_space<vmem>>, %arg8: memref<1x8x32x32xf32, #tpu.memory_space<vmem>>) attributes {dimension_semantics = [#tpu.dimension_semantics<parallel>], iteration_bounds = array<i64: 2>, scalar_prefetch = 0 : i64, scratch_operands = 0 : i64, tpu.core_type = #tpu.core_type<tc>, window_params = [{transform_indices = @transform_0, window_bounds = array<i64: 1, 64, 64>}, {pipeline_mode = #tpu.pipeline_mode<synchronous>, transform_indices = @transform_1, window_bounds = array<i64: 1, 64>}, {pipeline_mode = #tpu.pipeline_mode<synchronous>, transform_indices = @transform_2, window_bounds = array<i64: 1, 64>}, {pipeline_mode = #tpu.pipeline_mode<synchronous>, transform_indices = @transform_3, window_bounds = array<i64: 64, 192>}, {pipeline_mode = #tpu.pipeline_mode<synchronous>, transform_indices = @transform_4, window_bounds = array<i64: 32, 64>}, {transform_indices = @transform_5, window_bounds = array<i64: 1, 64, 192>}, {transform_indices = @transform_6, window_bounds = array<i64: 1, 32, 192>}, {transform_indices = @transform_7, window_bounds = array<i64: 1, 8, 32, 32>}]} {
    %c0 = arith.constant 0 : index
    %c0_0 = arith.constant 0 : index
    %c0_1 = arith.constant 0 : index
    %0 = vector.load %arg1[%c0, %c0_0, %c0_1] : memref<1x64x64xf32, #tpu.memory_space<vmem>>, vector<1x64x64xf32>
    %1 = vector.shape_cast %0 : vector<1x64x64xf32> to vector<64x64xf32>
    %cst = arith.constant dense<0.000000e+00> : vector<64xf32>
    %2 = vector.multi_reduction <add>, %1, %cst [1] : vector<64x64xf32> to vector<64xf32>
    %3 = vector.shape_cast %2 : vector<64xf32> to vector<64x1xf32>
    %cst_2 = arith.constant 6.400000e+01 : f32
    %4 = vector.broadcast %cst_2 : f32 to vector<64x1xf32>
    %5 = arith.divf %3, %4 : vector<64x1xf32>
    %6 = vector.broadcast %5 : vector<64x1xf32> to vector<64x64xf32>
    %7 = arith.subf %1, %6 : vector<64x64xf32>
    %8 = arith.mulf %7, %7 : vector<64x64xf32>
    %cst_3 = arith.constant dense<0.000000e+00> : vector<64xf32>
    %9 = vector.multi_reduction <add>, %8, %cst_3 [1] : vector<64x64xf32> to vector<64xf32>
    %10 = vector.shape_cast %9 : vector<64xf32> to vector<64x1xf32>
    %cst_4 = arith.constant 6.400000e+01 : f32
    %11 = vector.broadcast %cst_4 : f32 to vector<64x1xf32>
    %12 = arith.divf %10, %11 : vector<64x1xf32>
    %13 = vector.broadcast %5 : vector<64x1xf32> to vector<64x64xf32>
    %14 = arith.subf %1, %13 : vector<64x64xf32>
    %cst_5 = arith.constant 9.99999974E-6 : f32
    %15 = vector.broadcast %cst_5 : f32 to vector<64x1xf32>
    %16 = arith.addf %12, %15 : vector<64x1xf32>
    %17 = math.rsqrt %16 : vector<64x1xf32>
    %18 = vector.broadcast %17 : vector<64x1xf32> to vector<64x64xf32>
    %19 = arith.mulf %14, %18 : vector<64x64xf32>
    %c0_6 = arith.constant 0 : index
    %c0_7 = arith.constant 0 : index
    %20 = vector.load %arg2[%c0_6, %c0_7] : memref<1x64xf32, #tpu.memory_space<vmem>>, vector<1x64xf32>
    %21 = vector.broadcast %20 : vector<1x64xf32> to vector<64x64xf32>
    %22 = arith.mulf %19, %21 : vector<64x64xf32>
    %c0_8 = arith.constant 0 : index
    %c0_9 = arith.constant 0 : index
    %23 = vector.load %arg3[%c0_8, %c0_9] : memref<1x64xf32, #tpu.memory_space<vmem>>, vector<1x64xf32>
    %24 = vector.broadcast %23 : vector<1x64xf32> to vector<64x64xf32>
    %25 = arith.addf %22, %24 : vector<64x64xf32>
    %c0_10 = arith.constant 0 : index
    %c0_11 = arith.constant 0 : index
    %26 = vector.load %arg4[%c0_10, %c0_11] : memref<64x192xf32, #tpu.memory_space<vmem>>, vector<64x192xf32>
    %cst_12 = arith.constant dense<0.000000e+00> : vector<64x192xf32>
    %27 = tpu.matmul %25, %26, %cst_12 {dimension_numbers = #tpu.dot_dimension_numbers<[1], [0], [0], [1], [0, 0, 1, 1], [], []>, precision = #tpu.contract_precision<fp32>} : vector<64x64xf32>, vector<64x192xf32>, vector<64x192xf32> -> vector<64x192xf32>
    %c0_13 = arith.constant 0 : index
    %c0_14 = arith.constant 0 : index
    %c0_15 = arith.constant 0 : index
    %28 = vector.load %arg6[%c0_13, %c0_14, %c0_15] : memref<1x64x192xf32, #tpu.memory_space<vmem>>, vector<1x64x192xf32>
    %29 = vector.shape_cast %28 : vector<1x64x192xf32> to vector<64x192xf32>
    %30 = vector.shape_cast %27 : vector<64x192xf32> to vector<1x64x192xf32>
    tpu.vector_store %arg6[%c0_13, %c0_14, %c0_15], %30 {strides = array<i32>} : memref<1x64x192xf32, #tpu.memory_space<vmem>>, vector<1x64x192xf32>,
    %c0_16 = arith.constant 0 : index
    %c0_17 = arith.constant 0 : index
    %31 = vector.load %arg5[%c0_16, %c0_17] : memref<32x64xf32, #tpu.memory_space<vmem>>, vector<32x64xf32>
    %cst_18 = arith.constant dense<0.000000e+00> : vector<32x192xf32>
    %32 = tpu.matmul %31, %27, %cst_18 {dimension_numbers = #tpu.dot_dimension_numbers<[1], [0], [0], [1], [0, 0, 1, 1], [], []>, precision = #tpu.contract_precision<fp32>} : vector<32x64xf32>, vector<64x192xf32>, vector<32x192xf32> -> vector<32x192xf32>
    %c0_19 = arith.constant 0 : index
    %c0_20 = arith.constant 0 : index
    %c0_21 = arith.constant 0 : index
    %33 = vector.load %arg7[%c0_19, %c0_20, %c0_21] : memref<1x32x192xf32, #tpu.memory_space<vmem>>, vector<1x32x192xf32>
    %34 = vector.shape_cast %33 : vector<1x32x192xf32> to vector<32x192xf32>
    %35 = vector.shape_cast %32 : vector<32x192xf32> to vector<1x32x192xf32>
    tpu.vector_store %arg7[%c0_19, %c0_20, %c0_21], %35 {strides = array<i32>} : memref<1x32x192xf32, #tpu.memory_space<vmem>>, vector<1x32x192xf32>,
    %36 = vector.extract_strided_slice %32 {offsets = [0, 0], sizes = [32, 8], strides = [1, 1]} : vector<32x192xf32> to vector<32x8xf32>
    %37 = vector.extract_strided_slice %32 {offsets = [0, 64], sizes = [32, 8], strides = [1, 1]} : vector<32x192xf32> to vector<32x8xf32>
    %cst_22 = arith.constant dense<0.000000e+00> : vector<32x32xf32>
    %38 = tpu.matmul %36, %37, %cst_22 {dimension_numbers = #tpu.dot_dimension_numbers<[1], [1], [0], [0], [0, 0, 1, 0], [], []>, precision = #tpu.contract_precision<fp32>} : vector<32x8xf32>, vector<32x8xf32>, vector<32x32xf32> -> vector<32x32xf32>
    %cst_23 = arith.constant dense<0xFF800000> : vector<32xf32>
    %39 = vector.multi_reduction <maximumf>, %38, %cst_23 [1] : vector<32x32xf32> to vector<32xf32>
    %40 = vector.shape_cast %39 : vector<32xf32> to vector<32x1xf32>
    %41 = vector.broadcast %40 : vector<32x1xf32> to vector<32x32xf32>
    %42 = arith.subf %38, %41 : vector<32x32xf32>
    %43 = math.exp %42 : vector<32x32xf32>
    %cst_24 = arith.constant dense<0.000000e+00> : vector<32xf32>
    %44 = vector.multi_reduction <add>, %43, %cst_24 [1] : vector<32x32xf32> to vector<32xf32>
    %45 = vector.shape_cast %44 : vector<32xf32> to vector<32x1xf32>
    %46 = vector.broadcast %45 : vector<32x1xf32> to vector<32x32xf32>
    %47 = arith.divf %43, %46 : vector<32x32xf32>
    %c0_25 = arith.constant 0 : index
    %c0_26 = arith.constant 0 : index
    %c0_27 = arith.constant 0 : index
    %c0_28 = arith.constant 0 : index
    %48 = vector.load %arg8[%c0_25, %c0_26, %c0_27, %c0_28] : memref<1x8x32x32xf32, #tpu.memory_space<vmem>>, vector<1x1x32x32xf32>
    %49 = vector.shape_cast %48 : vector<1x1x32x32xf32> to vector<32x32xf32>
    %50 = vector.shape_cast %47 : vector<32x32xf32> to vector<1x1x32x32xf32>
    tpu.vector_store %arg8[%c0_25, %c0_26, %c0_27, %c0_28], %50 {strides = array<i32>} : memref<1x8x32x32xf32, #tpu.memory_space<vmem>>, vector<1x1x32x32xf32>,
    %51 = vector.extract_strided_slice %32 {offsets = [0, 8], sizes = [32, 8], strides = [1, 1]} : vector<32x192xf32> to vector<32x8xf32>
    %52 = vector.extract_strided_slice %32 {offsets = [0, 72], sizes = [32, 8], strides = [1, 1]} : vector<32x192xf32> to vector<32x8xf32>
    %cst_29 = arith.constant dense<0.000000e+00> : vector<32x32xf32>
    %53 = tpu.matmul %51, %52, %cst_29 {dimension_numbers = #tpu.dot_dimension_numbers<[1], [1], [0], [0], [0, 0, 1, 0], [], []>, precision = #tpu.contract_precision<fp32>} : vector<32x8xf32>, vector<32x8xf32>, vector<32x32xf32> -> vector<32x32xf32>
    %cst_30 = arith.constant dense<0xFF800000> : vector<32xf32>
    %54 = vector.multi_reduction <maximumf>, %53, %cst_30 [1] : vector<32x32xf32> to vector<32xf32>
    %55 = vector.shape_cast %54 : vector<32xf32> to vector<32x1xf32>
    %56 = vector.broadcast %55 : vector<32x1xf32> to vector<32x32xf32>
    %57 = arith.subf %53, %56 : vector<32x32xf32>
    %58 = math.exp %57 : vector<32x32xf32>
    %cst_31 = arith.constant dense<0.000000e+00> : vector<32xf32>
    %59 = vector.multi_reduction <add>, %58, %cst_31 [1] : vector<32x32xf32> to vector<32xf32>
    %60 = vector.shape_cast %59 : vector<32xf32> to vector<32x1xf32>
    %61 = vector.broadcast %60 : vector<32x1xf32> to vector<32x32xf32>
    %62 = arith.divf %58, %61 : vector<32x32xf32>
    %c0_32 = arith.constant 0 : index
    %c1 = arith.constant 1 : index
    %c0_33 = arith.constant 0 : index
    %c0_34 = arith.constant 0 : index
    %63 = vector.load %arg8[%c0_32, %c1, %c0_33, %c0_34] : memref<1x8x32x32xf32, #tpu.memory_space<vmem>>, vector<1x1x32x32xf32>
    %64 = vector.shape_cast %63 : vector<1x1x32x32xf32> to vector<32x32xf32>
    %65 = vector.shape_cast %62 : vector<32x32xf32> to vector<1x1x32x32xf32>
    tpu.vector_store %arg8[%c0_32, %c1, %c0_33, %c0_34], %65 {strides = array<i32>} : memref<1x8x32x32xf32, #tpu.memory_space<vmem>>, vector<1x1x32x32xf32>,
    %66 = vector.extract_strided_slice %32 {offsets = [0, 16], sizes = [32, 8], strides = [1, 1]} : vector<32x192xf32> to vector<32x8xf32>
    %67 = vector.extract_strided_slice %32 {offsets = [0, 80], sizes = [32, 8], strides = [1, 1]} : vector<32x192xf32> to vector<32x8xf32>
    %cst_35 = arith.constant dense<0.000000e+00> : vector<32x32xf32>
    %68 = tpu.matmul %66, %67, %cst_35 {dimension_numbers = #tpu.dot_dimension_numbers<[1], [1], [0], [0], [0, 0, 1, 0], [], []>, precision = #tpu.contract_precision<fp32>} : vector<32x8xf32>, vector<32x8xf32>, vector<32x32xf32> -> vector<32x32xf32>
    %cst_36 = arith.constant dense<0xFF800000> : vector<32xf32>
    %69 = vector.multi_reduction <maximumf>, %68, %cst_36 [1] : vector<32x32xf32> to vector<32xf32>
    %70 = vector.shape_cast %69 : vector<32xf32> to vector<32x1xf32>
    %71 = vector.broadcast %70 : vector<32x1xf32> to vector<32x32xf32>
    %72 = arith.subf %68, %71 : vector<32x32xf32>
    %73 = math.exp %72 : vector<32x32xf32>
    %cst_37 = arith.constant dense<0.000000e+00> : vector<32xf32>
    %74 = vector.multi_reduction <add>, %73, %cst_37 [1] : vector<32x32xf32> to vector<32xf32>
    %75 = vector.shape_cast %74 : vector<32xf32> to vector<32x1xf32>
    %76 = vector.broadcast %75 : vector<32x1xf32> to vector<32x32xf32>
    %77 = arith.divf %73, %76 : vector<32x32xf32>
    %c0_38 = arith.constant 0 : index
    %c2 = arith.constant 2 : index
    %c0_39 = arith.constant 0 : index
    %c0_40 = arith.constant 0 : index
    %78 = vector.load %arg8[%c0_38, %c2, %c0_39, %c0_40] : memref<1x8x32x32xf32, #tpu.memory_space<vmem>>, vector<1x1x32x32xf32>
    %79 = vector.shape_cast %78 : vector<1x1x32x32xf32> to vector<32x32xf32>
    %80 = vector.shape_cast %77 : vector<32x32xf32> to vector<1x1x32x32xf32>
    tpu.vector_store %arg8[%c0_38, %c2, %c0_39, %c0_40], %80 {strides = array<i32>} : memref<1x8x32x32xf32, #tpu.memory_space<vmem>>, vector<1x1x32x32xf32>,
    %81 = vector.extract_strided_slice %32 {offsets = [0, 24], sizes = [32, 8], strides = [1, 1]} : vector<32x192xf32> to vector<32x8xf32>
    %82 = vector.extract_strided_slice %32 {offsets = [0, 88], sizes = [32, 8], strides = [1, 1]} : vector<32x192xf32> to vector<32x8xf32>
    %cst_41 = arith.constant dense<0.000000e+00> : vector<32x32xf32>
    %83 = tpu.matmul %81, %82, %cst_41 {dimension_numbers = #tpu.dot_dimension_numbers<[1], [1], [0], [0], [0, 0, 1, 0], [], []>, precision = #tpu.contract_precision<fp32>} : vector<32x8xf32>, vector<32x8xf32>, vector<32x32xf32> -> vector<32x32xf32>
    %cst_42 = arith.constant dense<0xFF800000> : vector<32xf32>
    %84 = vector.multi_reduction <maximumf>, %83, %cst_42 [1] : vector<32x32xf32> to vector<32xf32>
    %85 = vector.shape_cast %84 : vector<32xf32> to vector<32x1xf32>
    %86 = vector.broadcast %85 : vector<32x1xf32> to vector<32x32xf32>
    %87 = arith.subf %83, %86 : vector<32x32xf32>
    %88 = math.exp %87 : vector<32x32xf32>
    %cst_43 = arith.constant dense<0.000000e+00> : vector<32xf32>
    %89 = vector.multi_reduction <add>, %88, %cst_43 [1] : vector<32x32xf32> to vector<32xf32>
    %90 = vector.shape_cast %89 : vector<32xf32> to vector<32x1xf32>
    %91 = vector.broadcast %90 : vector<32x1xf32> to vector<32x32xf32>
    %92 = arith.divf %88, %91 : vector<32x32xf32>
    %c0_44 = arith.constant 0 : index
    %c3 = arith.constant 3 : index
    %c0_45 = arith.constant 0 : index
    %c0_46 = arith.constant 0 : index
    %93 = vector.load %arg8[%c0_44, %c3, %c0_45, %c0_46] : memref<1x8x32x32xf32, #tpu.memory_space<vmem>>, vector<1x1x32x32xf32>
    %94 = vector.shape_cast %93 : vector<1x1x32x32xf32> to vector<32x32xf32>
    %95 = vector.shape_cast %92 : vector<32x32xf32> to vector<1x1x32x32xf32>
    tpu.vector_store %arg8[%c0_44, %c3, %c0_45, %c0_46], %95 {strides = array<i32>} : memref<1x8x32x32xf32, #tpu.memory_space<vmem>>, vector<1x1x32x32xf32>,
    %96 = vector.extract_strided_slice %32 {offsets = [0, 32], sizes = [32, 8], strides = [1, 1]} : vector<32x192xf32> to vector<32x8xf32>
    %97 = vector.extract_strided_slice %32 {offsets = [0, 96], sizes = [32, 8], strides = [1, 1]} : vector<32x192xf32> to vector<32x8xf32>
    %cst_47 = arith.constant dense<0.000000e+00> : vector<32x32xf32>
    %98 = tpu.matmul %96, %97, %cst_47 {dimension_numbers = #tpu.dot_dimension_numbers<[1], [1], [0], [0], [0, 0, 1, 0], [], []>, precision = #tpu.contract_precision<fp32>} : vector<32x8xf32>, vector<32x8xf32>, vector<32x32xf32> -> vector<32x32xf32>
    %cst_48 = arith.constant dense<0xFF800000> : vector<32xf32>
    %99 = vector.multi_reduction <maximumf>, %98, %cst_48 [1] : vector<32x32xf32> to vector<32xf32>
    %100 = vector.shape_cast %99 : vector<32xf32> to vector<32x1xf32>
    %101 = vector.broadcast %100 : vector<32x1xf32> to vector<32x32xf32>
    %102 = arith.subf %98, %101 : vector<32x32xf32>
    %103 = math.exp %102 : vector<32x32xf32>
    %cst_49 = arith.constant dense<0.000000e+00> : vector<32xf32>
    %104 = vector.multi_reduction <add>, %103, %cst_49 [1] : vector<32x32xf32> to vector<32xf32>
    %105 = vector.shape_cast %104 : vector<32xf32> to vector<32x1xf32>
    %106 = vector.broadcast %105 : vector<32x1xf32> to vector<32x32xf32>
    %107 = arith.divf %103, %106 : vector<32x32xf32>
    %c0_50 = arith.constant 0 : index
    %c4 = arith.constant 4 : index
    %c0_51 = arith.constant 0 : index
    %c0_52 = arith.constant 0 : index
    %108 = vector.load %arg8[%c0_50, %c4, %c0_51, %c0_52] : memref<1x8x32x32xf32, #tpu.memory_space<vmem>>, vector<1x1x32x32xf32>
    %109 = vector.shape_cast %108 : vector<1x1x32x32xf32> to vector<32x32xf32>
    %110 = vector.shape_cast %107 : vector<32x32xf32> to vector<1x1x32x32xf32>
    tpu.vector_store %arg8[%c0_50, %c4, %c0_51, %c0_52], %110 {strides = array<i32>} : memref<1x8x32x32xf32, #tpu.memory_space<vmem>>, vector<1x1x32x32xf32>,
    %111 = vector.extract_strided_slice %32 {offsets = [0, 40], sizes = [32, 8], strides = [1, 1]} : vector<32x192xf32> to vector<32x8xf32>
    %112 = vector.extract_strided_slice %32 {offsets = [0, 104], sizes = [32, 8], strides = [1, 1]} : vector<32x192xf32> to vector<32x8xf32>
    %cst_53 = arith.constant dense<0.000000e+00> : vector<32x32xf32>
    %113 = tpu.matmul %111, %112, %cst_53 {dimension_numbers = #tpu.dot_dimension_numbers<[1], [1], [0], [0], [0, 0, 1, 0], [], []>, precision = #tpu.contract_precision<fp32>} : vector<32x8xf32>, vector<32x8xf32>, vector<32x32xf32> -> vector<32x32xf32>
    %cst_54 = arith.constant dense<0xFF800000> : vector<32xf32>
    %114 = vector.multi_reduction <maximumf>, %113, %cst_54 [1] : vector<32x32xf32> to vector<32xf32>
    %115 = vector.shape_cast %114 : vector<32xf32> to vector<32x1xf32>
    %116 = vector.broadcast %115 : vector<32x1xf32> to vector<32x32xf32>
    %117 = arith.subf %113, %116 : vector<32x32xf32>
    %118 = math.exp %117 : vector<32x32xf32>
    %cst_55 = arith.constant dense<0.000000e+00> : vector<32xf32>
    %119 = vector.multi_reduction <add>, %118, %cst_55 [1] : vector<32x32xf32> to vector<32xf32>
    %120 = vector.shape_cast %119 : vector<32xf32> to vector<32x1xf32>
    %121 = vector.broadcast %120 : vector<32x1xf32> to vector<32x32xf32>
    %122 = arith.divf %118, %121 : vector<32x32xf32>
    %c0_56 = arith.constant 0 : index
    %c5 = arith.constant 5 : index
    %c0_57 = arith.constant 0 : index
    %c0_58 = arith.constant 0 : index
    %123 = vector.load %arg8[%c0_56, %c5, %c0_57, %c0_58] : memref<1x8x32x32xf32, #tpu.memory_space<vmem>>, vector<1x1x32x32xf32>
    %124 = vector.shape_cast %123 : vector<1x1x32x32xf32> to vector<32x32xf32>
    %125 = vector.shape_cast %122 : vector<32x32xf32> to vector<1x1x32x32xf32>
    tpu.vector_store %arg8[%c0_56, %c5, %c0_57, %c0_58], %125 {strides = array<i32>} : memref<1x8x32x32xf32, #tpu.memory_space<vmem>>, vector<1x1x32x32xf32>,
    %126 = vector.extract_strided_slice %32 {offsets = [0, 48], sizes = [32, 8], strides = [1, 1]} : vector<32x192xf32> to vector<32x8xf32>
    %127 = vector.extract_strided_slice %32 {offsets = [0, 112], sizes = [32, 8], strides = [1, 1]} : vector<32x192xf32> to vector<32x8xf32>
    %cst_59 = arith.constant dense<0.000000e+00> : vector<32x32xf32>
    %128 = tpu.matmul %126, %127, %cst_59 {dimension_numbers = #tpu.dot_dimension_numbers<[1], [1], [0], [0], [0, 0, 1, 0], [], []>, precision = #tpu.contract_precision<fp32>} : vector<32x8xf32>, vector<32x8xf32>, vector<32x32xf32> -> vector<32x32xf32>
    %cst_60 = arith.constant dense<0xFF800000> : vector<32xf32>
    %129 = vector.multi_reduction <maximumf>, %128, %cst_60 [1] : vector<32x32xf32> to vector<32xf32>
    %130 = vector.shape_cast %129 : vector<32xf32> to vector<32x1xf32>
    %131 = vector.broadcast %130 : vector<32x1xf32> to vector<32x32xf32>
    %132 = arith.subf %128, %131 : vector<32x32xf32>
    %133 = math.exp %132 : vector<32x32xf32>
    %cst_61 = arith.constant dense<0.000000e+00> : vector<32xf32>
    %134 = vector.multi_reduction <add>, %133, %cst_61 [1] : vector<32x32xf32> to vector<32xf32>
    %135 = vector.shape_cast %134 : vector<32xf32> to vector<32x1xf32>
    %136 = vector.broadcast %135 : vector<32x1xf32> to vector<32x32xf32>
    %137 = arith.divf %133, %136 : vector<32x32xf32>
    %c0_62 = arith.constant 0 : index
    %c6 = arith.constant 6 : index
    %c0_63 = arith.constant 0 : index
    %c0_64 = arith.constant 0 : index
    %138 = vector.load %arg8[%c0_62, %c6, %c0_63, %c0_64] : memref<1x8x32x32xf32, #tpu.memory_space<vmem>>, vector<1x1x32x32xf32>
    %139 = vector.shape_cast %138 : vector<1x1x32x32xf32> to vector<32x32xf32>
    %140 = vector.shape_cast %137 : vector<32x32xf32> to vector<1x1x32x32xf32>
    tpu.vector_store %arg8[%c0_62, %c6, %c0_63, %c0_64], %140 {strides = array<i32>} : memref<1x8x32x32xf32, #tpu.memory_space<vmem>>, vector<1x1x32x32xf32>,
    %141 = vector.extract_strided_slice %32 {offsets = [0, 56], sizes = [32, 8], strides = [1, 1]} : vector<32x192xf32> to vector<32x8xf32>
    %142 = vector.extract_strided_slice %32 {offsets = [0, 120], sizes = [32, 8], strides = [1, 1]} : vector<32x192xf32> to vector<32x8xf32>
    %cst_65 = arith.constant dense<0.000000e+00> : vector<32x32xf32>
    %143 = tpu.matmul %141, %142, %cst_65 {dimension_numbers = #tpu.dot_dimension_numbers<[1], [1], [0], [0], [0, 0, 1, 0], [], []>, precision = #tpu.contract_precision<fp32>} : vector<32x8xf32>, vector<32x8xf32>, vector<32x32xf32> -> vector<32x32xf32>
    %cst_66 = arith.constant dense<0xFF800000> : vector<32xf32>
    %144 = vector.multi_reduction <maximumf>, %143, %cst_66 [1] : vector<32x32xf32> to vector<32xf32>
    %145 = vector.shape_cast %144 : vector<32xf32> to vector<32x1xf32>
    %146 = vector.broadcast %145 : vector<32x1xf32> to vector<32x32xf32>
    %147 = arith.subf %143, %146 : vector<32x32xf32>
    %148 = math.exp %147 : vector<32x32xf32>
    %cst_67 = arith.constant dense<0.000000e+00> : vector<32xf32>
    %149 = vector.multi_reduction <add>, %148, %cst_67 [1] : vector<32x32xf32> to vector<32xf32>
    %150 = vector.shape_cast %149 : vector<32xf32> to vector<32x1xf32>
    %151 = vector.broadcast %150 : vector<32x1xf32> to vector<32x32xf32>
    %152 = arith.divf %148, %151 : vector<32x32xf32>
    %c0_68 = arith.constant 0 : index
    %c7 = arith.constant 7 : index
    %c0_69 = arith.constant 0 : index
    %c0_70 = arith.constant 0 : index
    %153 = vector.load %arg8[%c0_68, %c7, %c0_69, %c0_70] : memref<1x8x32x32xf32, #tpu.memory_space<vmem>>, vector<1x1x32x32xf32>
    %154 = vector.shape_cast %153 : vector<1x1x32x32xf32> to vector<32x32xf32>
    %155 = vector.shape_cast %152 : vector<32x32xf32> to vector<1x1x32x32xf32>
    tpu.vector_store %arg8[%c0_68, %c7, %c0_69, %c0_70], %155 {strides = array<i32>} : memref<1x8x32x32xf32, #tpu.memory_space<vmem>>, vector<1x1x32x32xf32>,
    return
  }
  func.func @transform_0(%arg0: i32) -> (i32, i32, i32) {
    %c0_i32 = arith.constant 0 : i32
    %c0_i32_0 = arith.constant 0 : i32
    %c0_i32_1 = arith.constant 0 : i32
    return %arg0, %c0_i32, %c0_i32_0 : i32, i32, i32
  }
  func.func @transform_1(%arg0: i32) -> (i32, i32) {
    %c0_i32 = arith.constant 0 : i32
    %c0_i32_0 = arith.constant 0 : i32
    %c0_i32_1 = arith.constant 0 : i32
    return %c0_i32, %c0_i32_0 : i32, i32
  }
  func.func @transform_2(%arg0: i32) -> (i32, i32) {
    %c0_i32 = arith.constant 0 : i32
    %c0_i32_0 = arith.constant 0 : i32
    %c0_i32_1 = arith.constant 0 : i32
    return %c0_i32, %c0_i32_0 : i32, i32
  }
  func.func @transform_3(%arg0: i32) -> (i32, i32) {
    %c0_i32 = arith.constant 0 : i32
    %c0_i32_0 = arith.constant 0 : i32
    %c0_i32_1 = arith.constant 0 : i32
    return %c0_i32, %c0_i32_0 : i32, i32
  }
  func.func @transform_4(%arg0: i32) -> (i32, i32) {
    %c0_i32 = arith.constant 0 : i32
    %c0_i32_0 = arith.constant 0 : i32
    %c0_i32_1 = arith.constant 0 : i32
    return %c0_i32, %c0_i32_0 : i32, i32
  }
  func.func @transform_5(%arg0: i32) -> (i32, i32, i32) {
    %c0_i32 = arith.constant 0 : i32
    %c0_i32_0 = arith.constant 0 : i32
    %c0_i32_1 = arith.constant 0 : i32
    return %arg0, %c0_i32, %c0_i32_0 : i32, i32, i32
  }
  func.func @transform_6(%arg0: i32) -> (i32, i32, i32) {
    %c0_i32 = arith.constant 0 : i32
    %c0_i32_0 = arith.constant 0 : i32
    %c0_i32_1 = arith.constant 0 : i32
    return %arg0, %c0_i32, %c0_i32_0 : i32, i32, i32
  }
  func.func @transform_7(%arg0: i32) -> (i32, i32, i32, i32) {
    %c0_i32 = arith.constant 0 : i32
    %c0_i32_0 = arith.constant 0 : i32
    %c0_i32_1 = arith.constant 0 : i32
    %c0_i32_2 = arith.constant 0 : i32
    return %arg0, %c0_i32, %c0_i32_0, %c0_i32_1 : i32, i32, i32, i32
  }
}

</mosaic_0001>

<llo_original>
// kernel: tpu_custom_call.1
$region0: #{tpu_custom_call.1}
  #allocation0 [shape = 'u32[]', space=smem, size = 0x4, offset = 0x4, fixed_abs, tag = 'smem constant byte address 0x4 - core index']
  #allocation1 [shape = 'u32[144,128]{1,0:T(1,128)}', space=vmem, size = 0x12000, scoped, tag = 'internal scratch']
  %s0 = inlined_call_operand.hbm [shape: f32[2,64,64], index: 0, kind: input, shape index: {}]
  %s1 = inlined_call_operand.vmem [shape: f32[1,64], index: 1, kind: input, shape index: {}]
  %s2 = inlined_call_operand.vmem [shape: f32[1,64], index: 2, kind: input, shape index: {}]
  %s3 = inlined_call_operand.hbm [shape: f32[64,192], index: 3, kind: input, shape index: {}]
  %s4 = inlined_call_operand.hbm [shape: f32[32,64], index: 4, kind: input, shape index: {}]
  %s5 = inlined_call_operand.hbm [shape: f32[2,64,192], index: 5, kind: output, shape index: {0}]
  %s6 = inlined_call_operand.hbm [shape: f32[2,32,192], index: 6, kind: output, shape index: {1}]
  %s7 = inlined_call_operand.hbm [shape: f32[2,8,32,32], index: 7, kind: output, shape index: {2}]
  %8 = xla_tuple %s5, %s6, %s7
  %s9 = sld [smem:[#allocation0]]
  $region81: #{tpu_custom_call.1} parent=0
    _
  %s11 = ssub.s32 1, %s9
  %s12 = scalar_select 0, %s11, %s9
  $region1: #{tpu_custom_call.1} parent=0
    #allocation2 [shape = 'u8[65536]{0}', space=vmem, size = 0x10000, scoped, tag = 'input window, operand 0']
    #allocation3 [shape = 's32[2]{0}', space=sflag, size = 0x8, scoped, tag = 'scoped memory for tpu_custom_call.1']
    #allocation4 [shape = 's32[2]{0}', space=sflag, size = 0x8, scoped, tag = 'scoped memory for tpu_custom_call.1']
    #allocation5 [shape = 'u8[65536]{0}', space=vmem, size = 0x10000, scoped, tag = 'input window, operand 3, single buffered']
    #allocation6 [shape = 's32[1]{0}', space=sflag, size = 0x4, scoped, tag = 'scoped memory for tpu_custom_call.1']
    #allocation7 [shape = 'u8[16384]{0}', space=vmem, size = 0x4000, scoped, tag = 'input window, operand 4, single buffered']
    #allocation8 [shape = 'u8[131072]{0}', space=vmem, size = 0x20000, scoped, tag = 'output window, operand 0']
    #allocation9 [shape = 'u8[65536]{0}', space=vmem, size = 0x10000, scoped, tag = 'output window, operand 1']
    #allocation10 [shape = 's32[2]{0}', space=sflag, size = 0x8, scoped, tag = 'scoped memory for tpu_custom_call.1']
    #allocation11 [shape = 'u8[262144]{0}', space=vmem, size = 0x40000, scoped, tag = 'output window, operand 2']
    %13 = vsyncpa [#allocation3], 0
    %s14 = scalar_lea.sflag [#allocation3], 1
    %15 = vsyncpa %s14, 0
    %16 = vsyncpa [#allocation6], 0
    %17 = vsyncpa [#allocation4], 0
    %s18 = scalar_lea.sflag [#allocation4], 1
    %19 = vsyncpa %s18, 0
    %20 = vsyncpa [#allocation10], 0
    %s21 = scalar_lea.sflag [#allocation10], 1
    %22 = vsyncpa %s21, 0
    loop: start=0, step=1, limit=4
    $region2: #{tpu_custom_call.1} parent=1 // loop_pre_header
      _
    $region3: #{tpu_custom_call.1} parent=1 // loop_header
      %s24 = sphi 0, %s28
      %p25 = scmp.ge.s32.totalorder %s24, 4
      %s34 = sphi 0, %s36
      %s37 = sphi 0, %s34
      %s38 = sphi 0, %s37
      %s54 = sphi 0, %s38
      %s58 = sphi 0, %s58
      %s60 = sphi 0, %s58
      %s61 = sphi 0, %s60
      %s75 = sphi 0, %s61
      %s79 = sphi 0, %s79
      %s81 = sphi 0, %s79
      %s82 = sphi 0, %s81
      %s96 = sphi 0, %s82
      %s100 = sphi 0, %s100
      %s102 = sphi 0, %s100
      %s103 = sphi 0, %s102
      %s117 = sphi 0, %s103
      %s121 = sphi 0, %s121
      %s123 = sphi 0, %s121
      %s124 = sphi 0, %s123
      %s138 = sphi 0, %s124
      %s144 = sphi 0, %s146
      %s147 = sphi 0, %s144
      %s148 = sphi 0, %s147
      %s164 = sphi 0, %s148
      %s170 = sphi 0, %s172
      %s173 = sphi 0, %s170
      %s174 = sphi 0, %s173
      %s190 = sphi 0, %s174
      %s196 = sphi 0, %s198
      %s199 = sphi 0, %s196
      %s200 = sphi 0, %s199
      %s216 = sphi 0, %s200
    $region4: #{tpu_custom_call.1} parent=1 // loop_header_branch
      %27 = sbr.rel (%p25) target = $region8
    $region5: #{tpu_custom_call.1} parent=1 // loop_body
      %s29 = ssub.s32 %s24, 1
      %s30 = ssub.s32 %s24, 2
      %s31 = sadd.s32 %s24, 1
      %s32 = ssub.s32 %s24, %s31
      %p33 = scmp.eq.s32.totalorder %s32, 0
      %s35 = sadd.s32 %s34, 1
      %s36 = scalar_select %p33, %s34, %s35
      %p39 = pneg %p33
      %p40 = scmp.eq.s32.totalorder %s24, 1
      %p41 = por %p39, %p40
      %p42 = scmp.ne.s32.totalorder %s34, %s37
      %p43 = scmp.eq.s32.totalorder %s24, 0
      %p44 = por %p42, %p43
      %p45 = scmp.ne.s32.totalorder %s34, %s37
      %p46 = scmp.eq.s32.totalorder %s29, 1
      %p47 = por %p45, %p46
      %p48 = scmp.ne.s32.totalorder %s37, %s38
      %p49 = scmp.eq.s32.totalorder %s29, 0
      %p50 = por %p48, %p49
      %p51 = scmp.ne.s32.totalorder %s37, %s38
      %p52 = scmp.eq.s32.totalorder %s30, 1
      %p53 = por %p51, %p52
      %p55 = scmp.ne.s32.totalorder %s38, %s54
      %p56 = scmp.eq.s32.totalorder %s30, 0
      %p57 = por %p55, %p56
      %s59 = sadd.s32 %s58, 1
      %p62 = scmp.eq.s32.totalorder %s24, 1
      %p63 = scmp.ne.s32.totalorder %s58, %s60
      %p64 = scmp.eq.s32.totalorder %s24, 0
      %p65 = por %p63, %p64
      %p66 = scmp.ne.s32.totalorder %s58, %s60
      %p67 = scmp.eq.s32.totalorder %s29, 1
      %p68 = por %p66, %p67
      %p69 = scmp.ne.s32.totalorder %s60, %s61
      %p70 = scmp.eq.s32.totalorder %s29, 0
      %p71 = por %p69, %p70
      %p72 = scmp.ne.s32.totalorder %s60, %s61
      %p73 = scmp.eq.s32.totalorder %s30, 1
      %p74 = por %p72, %p73
      %p76 = scmp.ne.s32.totalorder %s61, %s75
      %p77 = scmp.eq.s32.totalorder %s30, 0
      %p78 = por %p76, %p77
      %s80 = sadd.s32 %s79, 1
      %p83 = scmp.eq.s32.totalorder %s24, 1
      %p84 = scmp.ne.s32.totalorder %s79, %s81
      %p85 = scmp.eq.s32.totalorder %s24, 0
      %p86 = por %p84, %p85
      %p87 = scmp.ne.s32.totalorder %s79, %s81
      %p88 = scmp.eq.s32.totalorder %s29, 1
      %p89 = por %p87, %p88
      %p90 = scmp.ne.s32.totalorder %s81, %s82
      %p91 = scmp.eq.s32.totalorder %s29, 0
      %p92 = por %p90, %p91
      %p93 = scmp.ne.s32.totalorder %s81, %s82
      %p94 = scmp.eq.s32.totalorder %s30, 1
      %p95 = por %p93, %p94
      %p97 = scmp.ne.s32.totalorder %s82, %s96
      %p98 = scmp.eq.s32.totalorder %s30, 0
      %p99 = por %p97, %p98
      %s101 = sadd.s32 %s100, 1
      %p104 = scmp.eq.s32.totalorder %s24, 1
      %p105 = scmp.ne.s32.totalorder %s100, %s102
      %p106 = scmp.eq.s32.totalorder %s24, 0
      %p107 = por %p105, %p106
      %p108 = scmp.ne.s32.totalorder %s100, %s102
      %p109 = scmp.eq.s32.totalorder %s29, 1
      %p110 = por %p108, %p109
      %p111 = scmp.ne.s32.totalorder %s102, %s103
      %p112 = scmp.eq.s32.totalorder %s29, 0
      %p113 = por %p111, %p112
      %p114 = scmp.ne.s32.totalorder %s102, %s103
      %p115 = scmp.eq.s32.totalorder %s30, 1
      %p116 = por %p114, %p115
      %p118 = scmp.ne.s32.totalorder %s103, %s117
      %p119 = scmp.eq.s32.totalorder %s30, 0
      %p120 = por %p118, %p119
      %s122 = sadd.s32 %s121, 1
      %p125 = scmp.eq.s32.totalorder %s24, 1
      %p126 = scmp.ne.s32.totalorder %s121, %s123
      %p127 = scmp.eq.s32.totalorder %s24, 0
      %p128 = por %p126, %p127
      %p129 = scmp.ne.s32.totalorder %s121, %s123
      %p130 = scmp.eq.s32.totalorder %s29, 1
      %p131 = por %p129, %p130
      %p132 = scmp.ne.s32.totalorder %s123, %s124
      %p133 = scmp.eq.s32.totalorder %s29, 0
      %p134 = por %p132, %p133
      %p135 = scmp.ne.s32.totalorder %s123, %s124
      %p136 = scmp.eq.s32.totalorder %s30, 1
      %p137 = por %p135, %p136
      %p139 = scmp.ne.s32.totalorder %s124, %s138
      %p140 = scmp.eq.s32.totalorder %s30, 0
      %p141 = por %p139, %p140
      %s142 = ssub.s32 %s24, %s31
      %p143 = scmp.eq.s32.totalorder %s142, 0
      %s145 = sadd.s32 %s144, 1
      %s146 = scalar_select %p143, %s144, %s145
      %p149 = pneg %p143
      %p150 = scmp.eq.s32.totalorder %s24, 1
      %p151 = por %p149, %p150
      %p152 = scmp.ne.s32.totalorder %s144, %s147
      %p153 = scmp.eq.s32.totalorder %s24, 0
      %p154 = por %p152, %p153
      %p155 = scmp.ne.s32.totalorder %s144, %s147
      %p156 = scmp.eq.s32.totalorder %s29, 1
      %p157 = por %p155, %p156
      %p158 = scmp.ne.s32.totalorder %s147, %s148
      %p159 = scmp.eq.s32.totalorder %s29, 0
      %p160 = por %p158, %p159
      %p161 = scmp.ne.s32.totalorder %s147, %s148
      %p162 = scmp.eq.s32.totalorder %s30, 1
      %p163 = por %p161, %p162
      %p165 = scmp.ne.s32.totalorder %s148, %s164
      %p166 = scmp.eq.s32.totalorder %s30, 0
      %p167 = por %p165, %p166
      %s168 = ssub.s32 %s24, %s31
      %p169 = scmp.eq.s32.totalorder %s168, 0
      %s171 = sadd.s32 %s170, 1
      %s172 = scalar_select %p169, %s170, %s171
      %p175 = pneg %p169
      %p176 = scmp.eq.s32.totalorder %s24, 1
      %p177 = por %p175, %p176
      %p178 = scmp.ne.s32.totalorder %s170, %s173
      %p179 = scmp.eq.s32.totalorder %s24, 0
      %p180 = por %p178, %p179
      %p181 = scmp.ne.s32.totalorder %s170, %s173
      %p182 = scmp.eq.s32.totalorder %s29, 1
      %p183 = por %p181, %p182
      %p184 = scmp.ne.s32.totalorder %s173, %s174
      %p185 = scmp.eq.s32.totalorder %s29, 0
      %p186 = por %p184, %p185
      %p187 = scmp.ne.s32.totalorder %s173, %s174
      %p188 = scmp.eq.s32.totalorder %s30, 1
      %p189 = por %p187, %p188
      %p191 = scmp.ne.s32.totalorder %s174, %s190
      %p192 = scmp.eq.s32.totalorder %s30, 0
      %p193 = por %p191, %p192
      %s194 = ssub.s32 %s24, %s31
      %p195 = scmp.eq.s32.totalorder %s194, 0
      %s197 = sadd.s32 %s196, 1
      %s198 = scalar_select %p195, %s196, %s197
      %p201 = pneg %p195
      %p202 = scmp.eq.s32.totalorder %s24, 1
      %p203 = por %p201, %p202
      %p204 = scmp.ne.s32.totalorder %s196, %s199
      %p205 = scmp.eq.s32.totalorder %s24, 0
      %p206 = por %p204, %p205
      %p207 = scmp.ne.s32.totalorder %s196, %s199
      %p208 = scmp.eq.s32.totalorder %s29, 1
      %p209 = por %p207, %p208
      %p210 = scmp.ne.s32.totalorder %s199, %s200
      %p211 = scmp.eq.s32.totalorder %s29, 0
      %p212 = por %p210, %p211
      %p213 = scmp.ne.s32.totalorder %s199, %s200
      %p214 = scmp.eq.s32.totalorder %s30, 1
      %p215 = por %p213, %p214
      %p217 = scmp.ne.s32.totalorder %s200, %s216
      %p218 = scmp.eq.s32.totalorder %s30, 0
      %p219 = por %p217, %p218
      %p220 = scmp.le.s32.totalorder 1, %s24
      %p221 = scmp.lt.s32.totalorder %s24, 3
      %p222 = pnand %p220, %p221
      %p223 = pneg %p222
      // Predicated region
      $region9: #{tpu_custom_call.1} parent=5 // pred_check
        _
      $region10: #{tpu_custom_call.1} parent=5 // pred_check_branch
        %225 = sbr.rel (%p222) target = $region12
      $region11: #{tpu_custom_call.1} parent=5 // pred_region
        %s226 = ssub.s32 %s24, 1
        // Predicated region
        $region13: #{tpu_custom_call.1} parent=11 // pred_check
          %p227 = pneg %p71
        $region14: #{tpu_custom_call.1} parent=11 // pred_check_branch
          %229 = sbr.rel (%p227) target = $region16
        $region15: #{tpu_custom_call.1} parent=11 // pred_region
          _
        $region16: #{tpu_custom_call.1} parent=11 // pred_fallthru
          _
        // Predicated region
        $region17: #{tpu_custom_call.1} parent=11 // pred_check
          %p230 = pneg %p92
        $region18: #{tpu_custom_call.1} parent=11 // pred_check_branch
          %232 = sbr.rel (%p230) target = $region20
        $region19: #{tpu_custom_call.1} parent=11 // pred_region
          _
        $region20: #{tpu_custom_call.1} parent=11 // pred_fallthru
          _
        // Predicated region
        $region21: #{tpu_custom_call.1} parent=11 // pred_check
          %p233 = pneg %p113
        $region22: #{tpu_custom_call.1} parent=11 // pred_check_branch
          %235 = sbr.rel (%p233) target = $region24
        $region23: #{tpu_custom_call.1} parent=11 // pred_region
          %s237 = ssub.s32 2048, 2048
          %238 = vsyncadd [#allocation6], %s237
          %s239 = sshll.u32 [#allocation5], 4
          %s240 = int_to_ptr.vmem [resolvable:$true] %s239
          %245 = dma.hbm_to_vmem [thread:$0]  %s3, 2048, %s240, [#allocation6], 256, 256, 16
        $region24: #{tpu_custom_call.1} parent=11 // pred_fallthru
          _
        // Predicated region
        $region25: #{tpu_custom_call.1} parent=11 // pred_check
          %p246 = pneg %p134
        $region26: #{tpu_custom_call.1} parent=11 // pred_check_branch
          %248 = sbr.rel (%p246) target = $region28
        $region27: #{tpu_custom_call.1} parent=11 // pred_region
          %s250 = ssub.s32 512, 512
          %251 = vsyncadd [#allocation6], %s250
          %s252 = sshll.u32 [#allocation7], 4
          %s253 = int_to_ptr.vmem [resolvable:$true] %s252
          %258 = dma.hbm_to_vmem [thread:$0]  %s4, 512, %s253, [#allocation6], 128, 128, 8
        $region28: #{tpu_custom_call.1} parent=11 // pred_fallthru
          _
      $region12: #{tpu_custom_call.1} parent=5 // pred_fallthru
        _
      %p259 = scmp.lt.s32.totalorder %s24, 2
      // Predicated region
      $region29: #{tpu_custom_call.1} parent=5 // pred_check
        %p260 = pneg %p259
      $region30: #{tpu_custom_call.1} parent=5 // pred_check_branch
        %262 = sbr.rel (%p260) target = $region32
      $region31: #{tpu_custom_call.1} parent=5 // pred_region
        // Predicated region
        $region33: #{tpu_custom_call.1} parent=31 // pred_check
          %p263 = pneg %p44
        $region34: #{tpu_custom_call.1} parent=31 // pred_check_branch
          %265 = sbr.rel (%p263) target = $region36
        $region35: #{tpu_custom_call.1} parent=31 // pred_region
          %s266 = sand.u32 %s34, 1
          %s267 = scalar_lea.sflag [#allocation3], %s266
          %s268 = sand.u32 %s34, 1
          %s269 = smul.addr %s268, 64
          %s270 = scalar_lea.vmem [#allocation2], %s269
          %s272 = ssub.s32 1024, 1024
          %273 = vsyncadd %s267, %s272
          %s274 = smul.addr %s24, 8
          %s275 = smul.addr %s274, 128
          %s276 = scalar_lea.hbm %s0, %s275
          %s277 = sshll.u32 %s270, 4
          %s278 = int_to_ptr.vmem [resolvable:$true] %s277
          %283 = dma.hbm_to_vmem [thread:$0]  %s276, 1024, %s278, %s267, 128, 128, 8
        $region36: #{tpu_custom_call.1} parent=31 // pred_fallthru
          _
      $region32: #{tpu_custom_call.1} parent=5 // pred_fallthru
        _
      %p284 = scmp.le.s32.totalorder 1, %s24
      %p285 = scmp.lt.s32.totalorder %s24, 3
      %p286 = pnand %p284, %p285
      %p287 = pneg %p286
      // Predicated region
      $region37: #{tpu_custom_call.1} parent=5 // pred_check
        _
      $region38: #{tpu_custom_call.1} parent=5 // pred_check_branch
        %289 = sbr.rel (%p286) target = $region40
      $region39: #{tpu_custom_call.1} parent=5 // pred_region
        %s290 = ssub.s32 %s24, 1
        %s291 = sand.u32 %s37, 1
        %s292 = scalar_lea.sflag [#allocation3], %s291
        %s293 = sand.u32 %s37, 1
        %s294 = smul.addr %s293, 64
        %s295 = scalar_lea.vmem [#allocation2], %s294
        // Predicated region
        $region41: #{tpu_custom_call.1} parent=39 // pred_check
          %p296 = pneg %p50
        $region42: #{tpu_custom_call.1} parent=39 // pred_check_branch
          %298 = sbr.rel (%p296) target = $region44
        $region43: #{tpu_custom_call.1} parent=39 // pred_region
          %299 = dma.done %s292, 1024
        $region44: #{tpu_custom_call.1} parent=39 // pred_fallthru
          _
        // Predicated region
        $region45: #{tpu_custom_call.1} parent=39 // pred_check
          %p300 = pneg %p113
        $region46: #{tpu_custom_call.1} parent=39 // pred_check_branch
          %302 = sbr.rel (%p300) target = $region48
        $region47: #{tpu_custom_call.1} parent=39 // pred_region
          %303 = dma.done [#allocation6], 2048
        $region48: #{tpu_custom_call.1} parent=39 // pred_fallthru
          _
        // Predicated region
        $region49: #{tpu_custom_call.1} parent=39 // pred_check
          %p304 = pneg %p134
        $region50: #{tpu_custom_call.1} parent=39 // pred_check_branch
          %306 = sbr.rel (%p304) target = $region52
        $region51: #{tpu_custom_call.1} parent=39 // pred_region
          %307 = dma.done [#allocation6], 512
        $region52: #{tpu_custom_call.1} parent=39 // pred_fallthru
          _
        %s308 = sand.u32 %s37, 1
        %s309 = scalar_lea.sflag [#allocation3], %s308
        %s310 = sand.u32 %s37, 1
        %s311 = smul.addr %s310, 64
        %s312 = scalar_lea.vmem [#allocation2], %s311
        %p313 = pneg %p50
        %p314 = pneg %p47
        %p315 = pneg %p71
        %p316 = pneg %p68
        %p317 = pneg %p92
        %p318 = pneg %p89
        %p319 = pneg %p113
        %p320 = pneg %p110
        %p321 = pneg %p134
        %p322 = pneg %p131
        %p323 = pneg %p160
        %p324 = pneg %p157
        %s325 = sand.u32 %s147, 1
        %s326 = scalar_lea.sflag [#allocation4], %s325
        %s327 = sand.u32 %s147, 1
        %s328 = smul.addr %s327, 128
        %s329 = scalar_lea.vmem [#allocation8], %s328
        %p330 = pneg %p186
        %p331 = pneg %p183
        %s332 = sand.u32 %s29, 1
        %s333 = scalar_lea.sflag [#allocation10], %s332
        %s334 = sand.u32 %s173, 1
        %s335 = smul.addr %s334, 64
        %s336 = scalar_lea.vmem [#allocation9], %s335
        %p337 = pneg %p212
        %p338 = pneg %p209
        %s339 = sand.u32 %s29, 1
        %s340 = scalar_lea.sflag [#allocation10], %s339
        %s341 = sand.u32 %s199, 1
        %s342 = smul.addr %s341, 256
        %s343 = scalar_lea.vmem [#allocation11], %s342
        %v344 = vld [vmem:[%s295] sm:$0xff]
        %v345 = vld [vmem:[%s295 + $0x8] sm:$0xff]
        %v346 = vld [vmem:[%s295 + $0x10] sm:$0xff]
        %v347 = vld [vmem:[%s295 + $0x18] sm:$0xff]
        %v348 = vld [vmem:[%s295 + $0x20] sm:$0xff]
        %v349 = vld [vmem:[%s295 + $0x28] sm:$0xff]
        %v350 = vld [vmem:[%s295 + $0x30] sm:$0xff]
        %v351 = vld [vmem:[%s295 + $0x38] sm:$0xff]
        %vm352 = vcmask 523264
        %v353 = vsel %vm352, %v344, 0.0
        %354 = vadd.xlane.f32.xlu0 %v353
        %v355 = vpop.xlane.xlu0 %354
        %v356 = vsel %vm352, %v345, 0.0
        %357 = vadd.xlane.f32.xlu0 %v356
        %v358 = vpop.xlane.xlu0 %357
        %v359 = vsel %vm352, %v346, 0.0
        %360 = vadd.xlane.f32.xlu0 %v359
        %v361 = vpop.xlane.xlu0 %360
        %v362 = vsel %vm352, %v347, 0.0
        %363 = vadd.xlane.f32.xlu0 %v362
        %v364 = vpop.xlane.xlu0 %363
        %v365 = vsel %vm352, %v348, 0.0
        %366 = vadd.xlane.f32.xlu0 %v365
        %v367 = vpop.xlane.xlu0 %366
        %v368 = vsel %vm352, %v349, 0.0
        %369 = vadd.xlane.f32.xlu0 %v368
        %v370 = vpop.xlane.xlu0 %369
        %v371 = vsel %vm352, %v350, 0.0
        %372 = vadd.xlane.f32.xlu0 %v371
        %v373 = vpop.xlane.xlu0 %372
        %v374 = vsel %vm352, %v351, 0.0
        %375 = vadd.xlane.f32.xlu0 %v374
        %v376 = vpop.xlane.xlu0 %375
        %v377 = vrcp.pop 64.0
        %v378 = vmul.f32 %v355, %v377
        %v379 = vmul.f32 %v358, %v377
        %v380 = vmul.f32 %v361, %v377
        %v381 = vmul.f32 %v364, %v377
        %v382 = vmul.f32 %v367, %v377
        %v383 = vmul.f32 %v370, %v377
        %v384 = vmul.f32 %v373, %v377
        %v385 = vmul.f32 %v376, %v377
        %v386 = vsub.f32 %v344, %v378
        %v387 = vsub.f32 %v345, %v379
        %v388 = vsub.f32 %v346, %v380
        %v389 = vsub.f32 %v347, %v381
        %v390 = vsub.f32 %v348, %v382
        %v391 = vsub.f32 %v349, %v383
        %v392 = vsub.f32 %v350, %v384
        %v393 = vsub.f32 %v351, %v385
        %v394 = vmul.f32 %v386, %v386
        %v395 = vmul.f32 %v387, %v387
        %v396 = vmul.f32 %v388, %v388
        %v397 = vmul.f32 %v389, %v389
        %v398 = vmul.f32 %v390, %v390
        %v399 = vmul.f32 %v391, %v391
        %v400 = vmul.f32 %v392, %v392
        %v401 = vmul.f32 %v393, %v393
        %v402 = vsel %vm352, %v394, 0.0
        %403 = vadd.xlane.f32.xlu0 %v402
        %v404 = vpop.xlane.xlu0 %403
        %v405 = vsel %vm352, %v395, 0.0
        %406 = vadd.xlane.f32.xlu0 %v405
        %v407 = vpop.xlane.xlu0 %406
        %v408 = vsel %vm352, %v396, 0.0
        %409 = vadd.xlane.f32.xlu0 %v408
        %v410 = vpop.xlane.xlu0 %409
        %v411 = vsel %vm352, %v397, 0.0
        %412 = vadd.xlane.f32.xlu0 %v411
        %v413 = vpop.xlane.xlu0 %412
        %v414 = vsel %vm352, %v398, 0.0
        %415 = vadd.xlane.f32.xlu0 %v414
        %v416 = vpop.xlane.xlu0 %415
        %v417 = vsel %vm352, %v399, 0.0
        %418 = vadd.xlane.f32.xlu0 %v417
        %v419 = vpop.xlane.xlu0 %418
        %v420 = vsel %vm352, %v400, 0.0
        %421 = vadd.xlane.f32.xlu0 %v420
        %v422 = vpop.xlane.xlu0 %421
        %v423 = vsel %vm352, %v401, 0.0
        %424 = vadd.xlane.f32.xlu0 %v423
        %v425 = vpop.xlane.xlu0 %424
        %v426 = vmul.f32 %v404, %v377
        %v427 = vmul.f32 %v407, %v377
        %v428 = vmul.f32 %v410, %v377
        %v429 = vmul.f32 %v413, %v377
        %v430 = vmul.f32 %v416, %v377
        %v431 = vmul.f32 %v419, %v377
        %v432 = vmul.f32 %v422, %v377
        %v433 = vmul.f32 %v425, %v377
        %v434 = vadd.f32 %v426, 1e-05
        %v435 = vadd.f32 %v427, 1e-05
        %v436 = vadd.f32 %v428, 1e-05
        %v437 = vadd.f32 %v429, 1e-05
        %v438 = vadd.f32 %v430, 1e-05
        %v439 = vadd.f32 %v431, 1e-05
        %v440 = vadd.f32 %v432, 1e-05
        %v441 = vadd.f32 %v433, 1e-05
        %v442 = vrsqrt.pop %v434
        %v443 = vrsqrt.pop %v435
        %v444 = vrsqrt.pop %v436
        %v445 = vrsqrt.pop %v437
        %v446 = vrsqrt.pop %v438
        %v447 = vrsqrt.pop %v439
        %v448 = vrsqrt.pop %v440
        %v449 = vrsqrt.pop %v441
        %v450 = vmul.f32 %v386, %v442
        %v451 = vmul.f32 %v387, %v443
        %v452 = vmul.f32 %v388, %v444
        %v453 = vmul.f32 %v389, %v445
        %v454 = vmul.f32 %v390, %v446
        %v455 = vmul.f32 %v391, %v447
        %v456 = vmul.f32 %v392, %v448
        %v457 = vmul.f32 %v393, %v449
        %v458 = vld [vmem:[%s1] sm:$0x1]
        %v460 = vlaneseq
        %v461 = vshrl.u32 %v460, 7
        %v462 = vsub.s32 0, %v461
        %v463 = vrot.slane %v458, %v462
        %v465 = vmul.f32 %v450, %v463
        %v466 = vmul.f32 %v451, %v463
        %v467 = vmul.f32 %v452, %v463
        %v468 = vmul.f32 %v453, %v463
        %v469 = vmul.f32 %v454, %v463
        %v470 = vmul.f32 %v455, %v463
        %v471 = vmul.f32 %v456, %v463
        %v472 = vmul.f32 %v457, %v463
        %v473 = vld [vmem:[%s2] sm:$0x1]
        %v475 = vlaneseq
        %v476 = vshrl.u32 %v475, 7
        %v477 = vsub.s32 0, %v476
        %v478 = vrot.slane %v473, %v477
        %v480 = vadd.f32 %v465, %v478
        %v481 = vadd.f32 %v466, %v478
        %v482 = vadd.f32 %v467, %v478
        %v483 = vadd.f32 %v468, %v478
        %v484 = vadd.f32 %v469, %v478
        %v485 = vadd.f32 %v470, %v478
        %v486 = vadd.f32 %v471, %v478
        %v487 = vadd.f32 %v472, %v478
        %v488 = vld [vmem:[#allocation5] sm:$0xff]
        %v489 = vld [vmem:[#allocation5 + $0x8] sm:$0xff]
        %v490 = vld [vmem:[#allocation5 + $0x10] sm:$0xff]
        %v491 = vld [vmem:[#allocation5 + $0x18] sm:$0xff]
        %v492 = vld [vmem:[#allocation5 + $0x20] sm:$0xff]
        %v493 = vld [vmem:[#allocation5 + $0x28] sm:$0xff]
        %v494 = vld [vmem:[#allocation5 + $0x30] sm:$0xff]
        %v495 = vld [vmem:[#allocation5 + $0x38] sm:$0xff]
        %v496 = vld [vmem:[#allocation5 + $0x40] sm:$0xff]
        %v497 = vld [vmem:[#allocation5 + $0x48] sm:$0xff]
        %v498 = vld [vmem:[#allocation5 + $0x50] sm:$0xff]
        %v499 = vld [vmem:[#allocation5 + $0x58] sm:$0xff]
        %v500 = vld [vmem:[#allocation5 + $0x60] sm:$0xff]
        %v501 = vld [vmem:[#allocation5 + $0x68] sm:$0xff]
        %v502 = vld [vmem:[#allocation5 + $0x70] sm:$0xff]
        %v503 = vld [vmem:[#allocation5 + $0x78] sm:$0xff]
        %v505 = vsel %vm352, %v480, 0
        %v508 = vsel %vm352, %v481, 0
        %v511 = vsel %vm352, %v482, 0
        %v514 = vsel %vm352, %v483, 0
        %v517 = vsel %vm352, %v484, 0
        %v520 = vsel %vm352, %v485, 0
        %v523 = vsel %vm352, %v486, 0
        %v526 = vsel %vm352, %v487, 0
        %v528 = vand.u32 %v489, 4294901760
        %529 = vmatprep.subr.mxu0 %v528
        %v530 = vand.u32 %v488, 4294901760
        %531 = vmatpush1.msra.mxu0 %v530
        %v532 = vand.u32 %v491, 4294901760
        %533 = vmatprep.subr.mxu0 %v532
        %v534 = vand.u32 %v490, 4294901760
        %535 = vmatpush1.msra.mxu0 %v534
        %v536 = vand.u32 %v493, 4294901760
        %537 = vmatprep.subr.mxu0 %v536
        %v538 = vand.u32 %v492, 4294901760
        %539 = vmatpush1.msra.mxu0 %v538
        %v540 = vand.u32 %v495, 4294901760
        %541 = vmatprep.subr.mxu0 %v540
        %v542 = vand.u32 %v494, 4294901760
        %543 = vmatpush1.msra.mxu0 %v542
        %v544 = vand.u32 %v497, 4294901760
        %545 = vmatprep.subr.mxu0 %v544
        %v546 = vand.u32 %v496, 4294901760
        %547 = vmatpush1.msra.mxu0 %v546
        %v548 = vand.u32 %v499, 4294901760
        %549 = vmatprep.subr.mxu0 %v548
        %v550 = vand.u32 %v498, 4294901760
        %551 = vmatpush1.msra.mxu0 %v550
        %v552 = vand.u32 %v501, 4294901760
        %553 = vmatprep.subr.mxu0 %v552
        %v554 = vand.u32 %v500, 4294901760
        %555 = vmatpush1.msra.mxu0 %v554
        %v556 = vand.u32 %v503, 4294901760
        %557 = vmatprep.subr.mxu0 %v556
        %v558 = vand.u32 %v502, 4294901760
        %559 = vmatpush1.msra.mxu0 %v558
        %560 = vmatprep.subr.mxu0 0.0
        %561 = vmatpush1.msra.mxu0 0.0
        %562 = vmatprep.subr.mxu0 0.0
        %563 = vmatpush1.msra.mxu0 0.0
        %564 = vmatprep.subr.mxu0 0.0
        %565 = vmatpush1.msra.mxu0 0.0
        %566 = vmatprep.subr.mxu0 0.0
        %567 = vmatpush1.msra.mxu0 0.0
        %568 = vmatprep.subr.mxu0 0.0
        %569 = vmatpush1.msra.mxu0 0.0
        %570 = vmatprep.subr.mxu0 0.0
        %571 = vmatpush1.msra.mxu0 0.0
        %572 = vmatprep.subr.mxu0 0.0
        %573 = vmatpush1.msra.mxu0 0.0
        %574 = vmatprep.subr.mxu0 0.0
        %575 = vmatpush1.msra.mxu0 0.0
        %576 = vmatprep.subr.mxu0 0.0
        %577 = vmatpush1.msra.mxu0 0.0
        %578 = vmatprep.subr.mxu0 0.0
        %579 = vmatpush1.msra.mxu0 0.0
        %580 = vmatprep.subr.mxu0 0.0
        %581 = vmatpush1.msra.mxu0 0.0
        %582 = vmatprep.subr.mxu0 0.0
        %583 = vmatpush1.msra.mxu0 0.0
        %584 = vmatprep.subr.mxu0 0.0
        %585 = vmatpush1.msra.mxu0 0.0
        %586 = vmatprep.subr.mxu0 0.0
        %587 = vmatpush1.msra.mxu0 0.0
        %588 = vmatprep.subr.mxu0 0.0
        %589 = vmatpush1.msra.mxu0 0.0
        %590 = vmatprep.subr.mxu0 0.0
        %591 = vmatpush1.msra.mxu0 0.0
        %592 = vmatprep.subr.mxu0 0.0
        %593 = vmatpush1.msra.mxu0 0.0
        %594 = vmatprep.subr.mxu0 0.0
        %595 = vmatpush1.msra.mxu0 0.0
        %596 = vmatprep.subr.mxu0 0.0
        %597 = vmatpush1.msra.mxu0 0.0
        %598 = vmatprep.subr.mxu0 0.0
        %599 = vmatpush1.msra.mxu0 0.0
        %600 = vmatprep.subr.mxu0 0.0
        %601 = vmatpush1.msra.mxu0 0.0
        %602 = vmatprep.subr.mxu0 0.0
        %603 = vmatpush1.msra.mxu0 0.0
        %604 = vmatprep.subr.mxu0 0.0
        %605 = vmatpush1.msra.mxu0 0.0
        %606 = vmatprep.subr.mxu0 0.0
        %607 = vmatpush1.msra.mxu0 0.0
        %608 = vmatprep.mubr.f32.mxu0 0.0
        %v609 = vand.u32 %v505, 4294901760
        %v610 = vsub.f32 %v505, %v609
        %v611 = vand.u32 %v610, 4294901760
        %v612 = vsub.f32 %v610, %v611
        %v613 = vand.u32 %v612, 4294901760
        %614 = vmatmul.mubr.f32.gmra.mrb[0].mxu0 %v613
        %v615 = vpop.f32.mrb[0].mxu0
        %v616 = vadd.f32 0.0, %v615
        %v617 = vpop.f32.mrb[0].mxu0
        %v618 = vadd.f32 0.0, %v617
        %619 = vmatprep.mubr.f32.mxu0 0.0
        %v620 = vand.u32 %v508, 4294901760
        %v621 = vsub.f32 %v508, %v620
        %v622 = vand.u32 %v621, 4294901760
        %v623 = vsub.f32 %v621, %v622
        %v624 = vand.u32 %v623, 4294901760
        %625 = vmatmul.mubr.f32.gmra.mrb[0].mxu0 %v624
        %v626 = vpop.f32.mrb[0].mxu0
        %v627 = vadd.f32 0.0, %v626
        %v628 = vpop.f32.mrb[0].mxu0
        %v629 = vadd.f32 0.0, %v628
        %630 = vmatprep.mubr.f32.mxu0 0.0
        %v631 = vand.u32 %v511, 4294901760
        %v632 = vsub.f32 %v511, %v631
        %v633 = vand.u32 %v632, 4294901760
        %v634 = vsub.f32 %v632, %v633
        %v635 = vand.u32 %v634, 4294901760
        %636 = vmatmul.mubr.f32.gmra.mrb[0].mxu0 %v635
        %v637 = vpop.f32.mrb[0].mxu0
        %v638 = vadd.f32 0.0, %v637
        %v639 = vpop.f32.mrb[0].mxu0
        %v640 = vadd.f32 0.0, %v639
        %641 = vmatprep.mubr.f32.mxu0 0.0
        %v642 = vand.u32 %v514, 4294901760
        %v643 = vsub.f32 %v514, %v642
        %v644 = vand.u32 %v643, 4294901760
        %v645 = vsub.f32 %v643, %v644
        %v646 = vand.u32 %v645, 4294901760
        %647 = vmatmul.mubr.f32.gmra.mrb[0].mxu0 %v646
        %v648 = vpop.f32.mrb[0].mxu0
        %v649 = vadd.f32 0.0, %v648
        %v650 = vpop.f32.mrb[0].mxu0
        %v651 = vadd.f32 0.0, %v650
        %652 = vmatprep.mubr.f32.mxu0 0.0
        %v653 = vand.u32 %v517, 4294901760
        %v654 = vsub.f32 %v517, %v653
        %v655 = vand.u32 %v654, 4294901760
        %v656 = vsub.f32 %v654, %v655
        %v657 = vand.u32 %v656, 4294901760
        %658 = vmatmul.mubr.f32.gmra.mrb[0].mxu0 %v657
        %v659 = vpop.f32.mrb[0].mxu0
        %v660 = vadd.f32 0.0, %v659
        %v661 = vpop.f32.mrb[0].mxu0
        %v662 = vadd.f32 0.0, %v661
        %663 = vmatprep.mubr.f32.mxu0 0.0
        %v664 = vand.u32 %v520, 4294901760
        %v665 = vsub.f32 %v520, %v664
        %v666 = vand.u32 %v665, 4294901760
        %v667 = vsub.f32 %v665, %v666
        %v668 = vand.u32 %v667, 4294901760
        %669 = vmatmul.mubr.f32.gmra.mrb[0].mxu0 %v668
        %v670 = vpop.f32.mrb[0].mxu0
        %v671 = vadd.f32 0.0, %v670
        %v672 = vpop.f32.mrb[0].mxu0
        %v673 = vadd.f32 0.0, %v672
        %674 = vmatprep.mubr.f32.mxu0 0.0
        %v675 = vand.u32 %v523, 4294901760
        %v676 = vsub.f32 %v523, %v675
        %v677 = vand.u32 %v676, 4294901760
        %v678 = vsub.f32 %v676, %v677
        %v679 = vand.u32 %v678, 4294901760
        %680 = vmatmul.mubr.f32.gmra.mrb[0].mxu0 %v679
        %v681 = vpop.f32.mrb[0].mxu0
        %v682 = vadd.f32 0.0, %v681
        %v683 = vpop.f32.mrb[0].mxu0
        %v684 = vadd.f32 0.0, %v683
        %685 = vmatprep.mubr.f32.mxu0 0.0
        %v686 = vand.u32 %v526, 4294901760
        %v687 = vsub.f32 %v526, %v686
        %v688 = vand.u32 %v687, 4294901760
        %v689 = vsub.f32 %v687, %v688
        %v690 = vand.u32 %v689, 4294901760
        %691 = vmatmul.mubr.f32.gmra.mrb[0].mxu0 %v690
        %v692 = vpop.f32.mrb[0].mxu0
        %v693 = vadd.f32 0.0, %v692
        %v694 = vpop.f32.mrb[0].mxu0
        %v695 = vadd.f32 0.0, %v694
        %696 = vdwg.mxu0
        %v697 = vand.u32 %v489, 4294901760
        %v698 = vsub.f32 %v489, %v697
        %v699 = vand.u32 %v698, 4294901760
        %v700 = vsub.f32 %v698, %v699
        %v701 = vand.u32 %v700, 4294901760
        %702 = vmatprep.subr.mxu0 %v701
        %v703 = vand.u32 %v488, 4294901760
        %v704 = vsub.f32 %v488, %v703
        %v705 = vand.u32 %v704, 4294901760
        %v706 = vsub.f32 %v704, %v705
        %v707 = vand.u32 %v706, 4294901760
        %708 = vmatpush1.msra.mxu0 %v707
        %v709 = vand.u32 %v491, 4294901760
        %v710 = vsub.f32 %v491, %v709
        %v711 = vand.u32 %v710, 4294901760
        %v712 = vsub.f32 %v710, %v711
        %v713 = vand.u32 %v712, 4294901760
        %714 = vmatprep.subr.mxu0 %v713
        %v715 = vand.u32 %v490, 4294901760
        %v716 = vsub.f32 %v490, %v715
        %v717 = vand.u32 %v716, 4294901760
        %v718 = vsub.f32 %v716, %v717
        %v719 = vand.u32 %v718, 4294901760
        %720 = vmatpush1.msra.mxu0 %v719
        %v721 = vand.u32 %v493, 4294901760
        %v722 = vsub.f32 %v493, %v721
        %v723 = vand.u32 %v722, 4294901760
        %v724 = vsub.f32 %v722, %v723
        %v725 = vand.u32 %v724, 4294901760
        %726 = vmatprep.subr.mxu0 %v725
        %v727 = vand.u32 %v492, 4294901760
        %v728 = vsub.f32 %v492, %v727
        %v729 = vand.u32 %v728, 4294901760
        %v730 = vsub.f32 %v728, %v729
        %v731 = vand.u32 %v730, 4294901760
        %732 = vmatpush1.msra.mxu0 %v731
        %v733 = vand.u32 %v495, 4294901760
        %v734 = vsub.f32 %v495, %v733
        %v735 = vand.u32 %v734, 4294901760
        %v736 = vsub.f32 %v734, %v735
        %v737 = vand.u32 %v736, 4294901760
        %738 = vmatprep.subr.mxu0 %v737
        %v739 = vand.u32 %v494, 4294901760
        %v740 = vsub.f32 %v494, %v739
        %v741 = vand.u32 %v740, 4294901760
        %v742 = vsub.f32 %v740, %v741
        %v743 = vand.u32 %v742, 4294901760
        %744 = vmatpush1.msra.mxu0 %v743
        %v745 = vand.u32 %v497, 4294901760
        %v746 = vsub.f32 %v497, %v745
        %v747 = vand.u32 %v746, 4294901760
        %v748 = vsub.f32 %v746, %v747
        %v749 = vand.u32 %v748, 4294901760
        %750 = vmatprep.subr.mxu0 %v749
        %v751 = vand.u32 %v496, 4294901760
        %v752 = vsub.f32 %v496, %v751
        %v753 = vand.u32 %v752, 4294901760
        %v754 = vsub.f32 %v752, %v753
        %v755 = vand.u32 %v754, 4294901760
        %756 = vmatpush1.msra.mxu0 %v755
        %v757 = vand.u32 %v499, 4294901760
        %v758 = vsub.f32 %v499, %v757
        %v759 = vand.u32 %v758, 4294901760
        %v760 = vsub.f32 %v758, %v759
        %v761 = vand.u32 %v760, 4294901760
        %762 = vmatprep.subr.mxu0 %v761
        %v763 = vand.u32 %v498, 4294901760
        %v764 = vsub.f32 %v498, %v763
        %v765 = vand.u32 %v764, 4294901760
        %v766 = vsub.f32 %v764, %v765
        %v767 = vand.u32 %v766, 4294901760
        %768 = vmatpush1.msra.mxu0 %v767
        %v769 = vand.u32 %v501, 4294901760
        %v770 = vsub.f32 %v501, %v769
        %v771 = vand.u32 %v770, 4294901760
        %v772 = vsub.f32 %v770, %v771
        %v773 = vand.u32 %v772, 4294901760
        %774 = vmatprep.subr.mxu0 %v773
        %v775 = vand.u32 %v500, 4294901760
        %v776 = vsub.f32 %v500, %v775
        %v777 = vand.u32 %v776, 4294901760
        %v778 = vsub.f32 %v776, %v777
        %v779 = vand.u32 %v778, 4294901760
        %780 = vmatpush1.msra.mxu0 %v779
        %v781 = vand.u32 %v503, 4294901760
        %v782 = vsub.f32 %v503, %v781
        %v783 = vand.u32 %v782, 4294901760
        %v784 = vsub.f32 %v782, %v783
        %v785 = vand.u32 %v784, 4294901760
        %786 = vmatprep.subr.mxu0 %v785
        %v787 = vand.u32 %v502, 4294901760
        %v788 = vsub.f32 %v502, %v787
        %v789 = vand.u32 %v788, 4294901760
        %v790 = vsub.f32 %v788, %v789
        %v791 = vand.u32 %v790, 4294901760
        %792 = vmatpush1.msra.mxu0 %v791
        %793 = vmatprep.subr.mxu0 0.0
        %794 = vmatpush1.msra.mxu0 0.0
        %795 = vmatprep.subr.mxu0 0.0
        %796 = vmatpush1.msra.mxu0 0.0
        %797 = vmatprep.subr.mxu0 0.0
        %798 = vmatpush1.msra.mxu0 0.0
        %799 = vmatprep.subr.mxu0 0.0
        %800 = vmatpush1.msra.mxu0 0.0
        %801 = vmatprep.subr.mxu0 0.0
        %802 = vmatpush1.msra.mxu0 0.0
        %803 = vmatprep.subr.mxu0 0.0
        %804 = vmatpush1.msra.mxu0 0.0
        %805 = vmatprep.subr.mxu0 0.0
        %806 = vmatpush1.msra.mxu0 0.0
        %807 = vmatprep.subr.mxu0 0.0
        %808 = vmatpush1.msra.mxu0 0.0
        %809 = vmatprep.subr.mxu0 0.0
        %810 = vmatpush1.msra.mxu0 0.0
        %811 = vmatprep.subr.mxu0 0.0
        %812 = vmatpush1.msra.mxu0 0.0
        %813 = vmatprep.subr.mxu0 0.0
        %814 = vmatpush1.msra.mxu0 0.0
        %815 = vmatprep.subr.mxu0 0.0
        %816 = vmatpush1.msra.mxu0 0.0
        %817 = vmatprep.subr.mxu0 0.0
        %818 = vmatpush1.msra.mxu0 0.0
        %819 = vmatprep.subr.mxu0 0.0
        %820 = vmatpush1.msra.mxu0 0.0
        %821 = vmatprep.subr.mxu0 0.0
        %822 = vmatpush1.msra.mxu0 0.0
        %823 = vmatprep.subr.mxu0 0.0
        %824 = vmatpush1.msra.mxu0 0.0
        %825 = vmatprep.subr.mxu0 0.0
        %826 = vmatpush1.msra.mxu0 0.0
        %827 = vmatprep.subr.mxu0 0.0
        %828 = vmatpush1.msra.mxu0 0.0
        %829 = vmatprep.subr.mxu0 0.0
        %830 = vmatpush1.msra.mxu0 0.0
        %831 = vmatprep.subr.mxu0 0.0
        %832 = vmatpush1.msra.mxu0 0.0
        %833 = vmatprep.subr.mxu0 0.0
        %834 = vmatpush1.msra.mxu0 0.0
        %835 = vmatprep.subr.mxu0 0.0
        %836 = vmatpush1.msra.mxu0 0.0
        %837 = vmatprep.subr.mxu0 0.0
        %838 = vmatpush1.msra.mxu0 0.0
        %839 = vmatprep.subr.mxu0 0.0
        %840 = vmatpush1.msra.mxu0 0.0
        %841 = vmatprep.mubr.f32.mxu0 0.0
        %v842 = vand.u32 %v505, 4294901760
        %843 = vmatmul.mubr.f32.gmra.mrb[0].mxu0 %v842
        %v844 = vpop.f32.mrb[0].mxu0
        %v845 = vadd.f32 %v616, %v844
        %v846 = vpop.f32.mrb[0].mxu0
        %v847 = vadd.f32 %v618, %v846
        %848 = vmatprep.mubr.f32.mxu0 0.0
        %v849 = vand.u32 %v508, 4294901760
        %850 = vmatmul.mubr.f32.gmra.mrb[0].mxu0 %v849
        %v851 = vpop.f32.mrb[0].mxu0
        %v852 = vadd.f32 %v627, %v851
        %v853 = vpop.f32.mrb[0].mxu0
        %v854 = vadd.f32 %v629, %v853
        %855 = vmatprep.mubr.f32.mxu0 0.0
        %v856 = vand.u32 %v511, 4294901760
        %857 = vmatmul.mubr.f32.gmra.mrb[0].mxu0 %v856
        %v858 = vpop.f32.mrb[0].mxu0
        %v859 = vadd.f32 %v638, %v858
        %v860 = vpop.f32.mrb[0].mxu0
        %v861 = vadd.f32 %v640, %v860
        %862 = vmatprep.mubr.f32.mxu0 0.0
        %v863 = vand.u32 %v514, 4294901760
        %864 = vmatmul.mubr.f32.gmra.mrb[0].mxu0 %v863
        %v865 = vpop.f32.mrb[0].mxu0
        %v866 = vadd.f32 %v649, %v865
        %v867 = vpop.f32.mrb[0].mxu0
        %v868 = vadd.f32 %v651, %v867
        %869 = vmatprep.mubr.f32.mxu0 0.0
        %v870 = vand.u32 %v517, 4294901760
        %871 = vmatmul.mubr.f32.gmra.mrb[0].mxu0 %v870
        %v872 = vpop.f32.mrb[0].mxu0
        %v873 = vadd.f32 %v660, %v872
        %v874 = vpop.f32.mrb[0].mxu0
        %v875 = vadd.f32 %v662, %v874
        %876 = vmatprep.mubr.f32.mxu0 0.0
        %v877 = vand.u32 %v520, 4294901760
        %878 = vmatmul.mubr.f32.gmra.mrb[0].mxu0 %v877
        %v879 = vpop.f32.mrb[0].mxu0
        %v880 = vadd.f32 %v671, %v879
        %v881 = vpop.f32.mrb[0].mxu0
        %v882 = vadd.f32 %v673, %v881
        %883 = vmatprep.mubr.f32.mxu0 0.0
        %v884 = vand.u32 %v523, 4294901760
        %885 = vmatmul.mubr.f32.gmra.mrb[0].mxu0 %v884
        %v886 = vpop.f32.mrb[0].mxu0
        %v887 = vadd.f32 %v682, %v886
        %v888 = vpop.f32.mrb[0].mxu0
        %v889 = vadd.f32 %v684, %v888
        %890 = vmatprep.mubr.f32.mxu0 0.0
        %v891 = vand.u32 %v526, 4294901760
        %892 = vmatmul.mubr.f32.gmra.mrb[0].mxu0 %v891
        %v893 = vpop.f32.mrb[0].mxu0
        %v894 = vadd.f32 %v693, %v893
        %v895 = vpop.f32.mrb[0].mxu0
        %v896 = vadd.f32 %v695, %v895
        %897 = vdwg.mxu0
        %v898 = vand.u32 %v489, 4294901760
        %v899 = vsub.f32 %v489, %v898
        %900 = vmatprep.subr.mxu0 %v899
        %v901 = vand.u32 %v488, 4294901760
        %v902 = vsub.f32 %v488, %v901
        %903 = vmatpush1.msra.mxu0 %v902
        %v904 = vand.u32 %v491, 4294901760
        %v905 = vsub.f32 %v491, %v904
        %906 = vmatprep.subr.mxu0 %v905
        %v907 = vand.u32 %v490, 4294901760
        %v908 = vsub.f32 %v490, %v907
        %909 = vmatpush1.msra.mxu0 %v908
        %v910 = vand.u32 %v493, 4294901760
        %v911 = vsub.f32 %v493, %v910
        %912 = vmatprep.subr.mxu0 %v911
        %v913 = vand.u32 %v492, 4294901760
        %v914 = vsub.f32 %v492, %v913
        %915 = vmatpush1.msra.mxu0 %v914
        %v916 = vand.u32 %v495, 4294901760
        %v917 = vsub.f32 %v495, %v916
        %918 = vmatprep.subr.mxu0 %v917
        %v919 = vand.u32 %v494, 4294901760
        %v920 = vsub.f32 %v494, %v919
        %921 = vmatpush1.msra.mxu0 %v920
        %v922 = vand.u32 %v497, 4294901760
        %v923 = vsub.f32 %v497, %v922
        %924 = vmatprep.subr.mxu0 %v923
        %v925 = vand.u32 %v496, 4294901760
        %v926 = vsub.f32 %v496, %v925
        %927 = vmatpush1.msra.mxu0 %v926
        %v928 = vand.u32 %v499, 4294901760
        %v929 = vsub.f32 %v499, %v928
        %930 = vmatprep.subr.mxu0 %v929
        %v931 = vand.u32 %v498, 4294901760
        %v932 = vsub.f32 %v498, %v931
        %933 = vmatpush1.msra.mxu0 %v932
        %v934 = vand.u32 %v501, 4294901760
        %v935 = vsub.f32 %v501, %v934
        %936 = vmatprep.subr.mxu0 %v935
        %v937 = vand.u32 %v500, 4294901760
        %v938 = vsub.f32 %v500, %v937
        %939 = vmatpush1.msra.mxu0 %v938
        %v940 = vand.u32 %v503, 4294901760
        %v941 = vsub.f32 %v503, %v940
        %942 = vmatprep.subr.mxu0 %v941
        %v943 = vand.u32 %v502, 4294901760
        %v944 = vsub.f32 %v502, %v943
        %945 = vmatpush1.msra.mxu0 %v944
        %946 = vmatprep.subr.mxu0 0.0
        %947 = vmatpush1.msra.mxu0 0.0
        %948 = vmatprep.subr.mxu0 0.0
        %949 = vmatpush1.msra.mxu0 0.0
        %950 = vmatprep.subr.mxu0 0.0
        %951 = vmatpush1.msra.mxu0 0.0
        %952 = vmatprep.subr.mxu0 0.0
        %953 = vmatpush1.msra.mxu0 0.0
        %954 = vmatprep.subr.mxu0 0.0
        %955 = vmatpush1.msra.mxu0 0.0
        %956 = vmatprep.subr.mxu0 0.0
        %957 = vmatpush1.msra.mxu0 0.0
        %958 = vmatprep.subr.mxu0 0.0
        %959 = vmatpush1.msra.mxu0 0.0
        %960 = vmatprep.subr.mxu0 0.0
        %961 = vmatpush1.msra.mxu0 0.0
        %962 = vmatprep.subr.mxu0 0.0
        %963 = vmatpush1.msra.mxu0 0.0
        %964 = vmatprep.subr.mxu0 0.0
        %965 = vmatpush1.msra.mxu0 0.0
        %966 = vmatprep.subr.mxu0 0.0
        %967 = vmatpush1.msra.mxu0 0.0
        %968 = vmatprep.subr.mxu0 0.0
        %969 = vmatpush1.msra.mxu0 0.0
        %970 = vmatprep.subr.mxu0 0.0
        %971 = vmatpush1.msra.mxu0 0.0
        %972 = vmatprep.subr.mxu0 0.0
        %973 = vmatpush1.msra.mxu0 0.0
        %974 = vmatprep.subr.mxu0 0.0
        %975 = vmatpush1.msra.mxu0 0.0
        %976 = vmatprep.subr.mxu0 0.0
        %977 = vmatpush1.msra.mxu0 0.0
        %978 = vmatprep.subr.mxu0 0.0
        %979 = vmatpush1.msra.mxu0 0.0
        %980 = vmatprep.subr.mxu0 0.0
        %981 = vmatpush1.msra.mxu0 0.0
        %982 = vmatprep.subr.mxu0 0.0
        %983 = vmatpush1.msra.mxu0 0.0
        %984 = vmatprep.subr.mxu0 0.0
        %985 = vmatpush1.msra.mxu0 0.0
        %986 = vmatprep.subr.mxu0 0.0
        %987 = vmatpush1.msra.mxu0 0.0
        %988 = vmatprep.subr.mxu0 0.0
        %989 = vmatpush1.msra.mxu0 0.0
        %990 = vmatprep.subr.mxu0 0.0
        %991 = vmatpush1.msra.mxu0 0.0
        %992 = vmatprep.subr.mxu0 0.0
        %993 = vmatpush1.msra.mxu0 0.0
        %994 = vmatprep.mubr.f32.mxu0 0.0
        %v995 = vand.u32 %v505, 4294901760
        %v996 = vsub.f32 %v505, %v995
        %997 = vmatmul.mubr.f32.gmra.mrb[0].mxu0 %v996
        %v998 = vpop.f32.mrb[0].mxu0
        %v999 = vadd.f32 %v845, %v998
        %v1000 = vpop.f32.mrb[0].mxu0
        %v1001 = vadd.f32 %v847, %v1000
        %1002 = vmatprep.mubr.f32.mxu0 0.0
        %v1003 = vand.u32 %v508, 4294901760
        %v1004 = vsub.f32 %v508, %v1003
        %1005 = vmatmul.mubr.f32.gmra.mrb[0].mxu0 %v1004
        %v1006 = vpop.f32.mrb[0].mxu0
        %v1007 = vadd.f32 %v852, %v1006
        %v1008 = vpop.f32.mrb[0].mxu0
        %v1009 = vadd.f32 %v854, %v1008
        %1010 = vmatprep.mubr.f32.mxu0 0.0
        %v1011 = vand.u32 %v511, 4294901760
        %v1012 = vsub.f32 %v511, %v1011
        %1013 = vmatmul.mubr.f32.gmra.mrb[0].mxu0 %v1012
        %v1014 = vpop.f32.mrb[0].mxu0
        %v1015 = vadd.f32 %v859, %v1014
        %v1016 = vpop.f32.mrb[0].mxu0
        %v1017 = vadd.f32 %v861, %v1016
        %1018 = vmatprep.mubr.f32.mxu0 0.0
        %v1019 = vand.u32 %v514, 4294901760
        %v1020 = vsub.f32 %v514, %v1019
        %1021 = vmatmul.mubr.f32.gmra.mrb[0].mxu0 %v1020
        %v1022 = vpop.f32.mrb[0].mxu0
        %v1023 = vadd.f32 %v866, %v1022
        %v1024 = vpop.f32.mrb[0].mxu0
        %v1025 = vadd.f32 %v868, %v1024
        %1026 = vmatprep.mubr.f32.mxu0 0.0
        %v1027 = vand.u32 %v517, 4294901760
        %v1028 = vsub.f32 %v517, %v1027
        %1029 = vmatmul.mubr.f32.gmra.mrb[0].mxu0 %v1028
        %v1030 = vpop.f32.mrb[0].mxu0
        %v1031 = vadd.f32 %v873, %v1030
        %v1032 = vpop.f32.mrb[0].mxu0
        %v1033 = vadd.f32 %v875, %v1032
        %1034 = vmatprep.mubr.f32.mxu0 0.0
        %v1035 = vand.u32 %v520, 4294901760
        %v1036 = vsub.f32 %v520, %v1035
        %1037 = vmatmul.mubr.f32.gmra.mrb[0].mxu0 %v1036
        %v1038 = vpop.f32.mrb[0].mxu0
        %v1039 = vadd.f32 %v880, %v1038
        %v1040 = vpop.f32.mrb[0].mxu0
        %v1041 = vadd.f32 %v882, %v1040
        %1042 = vmatprep.mubr.f32.mxu0 0.0
        %v1043 = vand.u32 %v523, 4294901760
        %v1044 = vsub.f32 %v523, %v1043
        %1045 = vmatmul.mubr.f32.gmra.mrb[0].mxu0 %v1044
        %v1046 = vpop.f32.mrb[0].mxu0
        %v1047 = vadd.f32 %v887, %v1046
        %v1048 = vpop.f32.mrb[0].mxu0
        %v1049 = vadd.f32 %v889, %v1048
        %1050 = vmatprep.mubr.f32.mxu0 0.0
        %v1051 = vand.u32 %v526, 4294901760
        %v1052 = vsub.f32 %v526, %v1051
        %1053 = vmatmul.mubr.f32.gmra.mrb[0].mxu0 %v1052
        %v1054 = vpop.f32.mrb[0].mxu0
        %v1055 = vadd.f32 %v894, %v1054
        %v1056 = vpop.f32.mrb[0].mxu0
        %v1057 = vadd.f32 %v896, %v1056
        %1058 = vdwg.mxu0
        %v1059 = vand.u32 %v489, 4294901760
        %1060 = vmatprep.subr.mxu0 %v1059
        %v1061 = vand.u32 %v488, 4294901760
        %1062 = vmatpush1.msra.mxu0 %v1061
        %v1063 = vand.u32 %v491, 4294901760
        %1064 = vmatprep.subr.mxu0 %v1063
        %v1065 = vand.u32 %v490, 4294901760
        %1066 = vmatpush1.msra.mxu0 %v1065
        %v1067 = vand.u32 %v493, 4294901760
        %1068 = vmatprep.subr.mxu0 %v1067
        %v1069 = vand.u32 %v492, 4294901760
        %1070 = vmatpush1.msra.mxu0 %v1069
        %v1071 = vand.u32 %v495, 4294901760
        %1072 = vmatprep.subr.mxu0 %v1071
        %v1073 = vand.u32 %v494, 4294901760
        %1074 = vmatpush1.msra.mxu0 %v1073
        %v1075 = vand.u32 %v497, 4294901760
        %1076 = vmatprep.subr.mxu0 %v1075
        %v1077 = vand.u32 %v496, 4294901760
        %1078 = vmatpush1.msra.mxu0 %v1077
        %v1079 = vand.u32 %v499, 4294901760
        %1080 = vmatprep.subr.mxu0 %v1079
        %v1081 = vand.u32 %v498, 4294901760
        %1082 = vmatpush1.msra.mxu0 %v1081
        %v1083 = vand.u32 %v501, 4294901760
        %1084 = vmatprep.subr.mxu0 %v1083
        %v1085 = vand.u32 %v500, 4294901760
        %1086 = vmatpush1.msra.mxu0 %v1085
        %v1087 = vand.u32 %v503, 4294901760
        %1088 = vmatprep.subr.mxu0 %v1087
        %v1089 = vand.u32 %v502, 4294901760
        %1090 = vmatpush1.msra.mxu0 %v1089
        %1091 = vmatprep.subr.mxu0 0.0
        %1092 = vmatpush1.msra.mxu0 0.0
        %1093 = vmatprep.subr.mxu0 0.0
        %1094 = vmatpush1.msra.mxu0 0.0
        %1095 = vmatprep.subr.mxu0 0.0
        %1096 = vmatpush1.msra.mxu0 0.0
        %1097 = vmatprep.subr.mxu0 0.0
        %1098 = vmatpush1.msra.mxu0 0.0
        %1099 = vmatprep.subr.mxu0 0.0
        %1100 = vmatpush1.msra.mxu0 0.0
        %1101 = vmatprep.subr.mxu0 0.0
        %1102 = vmatpush1.msra.mxu0 0.0
        %1103 = vmatprep.subr.mxu0 0.0
        %1104 = vmatpush1.msra.mxu0 0.0
        %1105 = vmatprep.subr.mxu0 0.0
        %1106 = vmatpush1.msra.mxu0 0.0
        %1107 = vmatprep.subr.mxu0 0.0
        %1108 = vmatpush1.msra.mxu0 0.0
        %1109 = vmatprep.subr.mxu0 0.0
        %1110 = vmatpush1.msra.mxu0 0.0
        %1111 = vmatprep.subr.mxu0 0.0
        %1112 = vmatpush1.msra.mxu0 0.0
        %1113 = vmatprep.subr.mxu0 0.0
        %1114 = vmatpush1.msra.mxu0 0.0
        %1115 = vmatprep.subr.mxu0 0.0
        %1116 = vmatpush1.msra.mxu0 0.0
        %1117 = vmatprep.subr.mxu0 0.0
        %1118 = vmatpush1.msra.mxu0 0.0
        %1119 = vmatprep.subr.mxu0 0.0
        %1120 = vmatpush1.msra.mxu0 0.0
        %1121 = vmatprep.subr.mxu0 0.0
        %1122 = vmatpush1.msra.mxu0 0.0
        %1123 = vmatprep.subr.mxu0 0.0
        %1124 = vmatpush1.msra.mxu0 0.0
        %1125 = vmatprep.subr.mxu0 0.0
        %1126 = vmatpush1.msra.mxu0 0.0
        %1127 = vmatprep.subr.mxu0 0.0
        %1128 = vmatpush1.msra.mxu0 0.0
        %1129 = vmatprep.subr.mxu0 0.0
        %1130 = vmatpush1.msra.mxu0 0.0
        %1131 = vmatprep.subr.mxu0 0.0
        %1132 = vmatpush1.msra.mxu0 0.0
        %1133 = vmatprep.subr.mxu0 0.0
        %1134 = vmatpush1.msra.mxu0 0.0
        %1135 = vmatprep.subr.mxu0 0.0
        %1136 = vmatpush1.msra.mxu0 0.0
        %1137 = vmatprep.subr.mxu0 0.0
        %1138 = vmatpush1.msra.mxu0 0.0
        %1139 = vmatprep.mubr.f32.mxu0 0.0
        %v1140 = vand.u32 %v505, 4294901760
        %v1141 = vsub.f32 %v505, %v1140
        %v1142 = vand.u32 %v1141, 4294901760
        %1143 = vmatmul.mubr.f32.gmra.mrb[0].mxu0 %v1142
        %v1144 = vpop.f32.mrb[0].mxu0
        %v1145 = vadd.f32 %v999, %v1144
        %v1146 = vpop.f32.mrb[0].mxu0
        %v1147 = vadd.f32 %v1001, %v1146
        %1148 = vmatprep.mubr.f32.mxu0 0.0
        %v1149 = vand.u32 %v508, 4294901760
        %v1150 = vsub.f32 %v508, %v1149
        %v1151 = vand.u32 %v1150, 4294901760
        %1152 = vmatmul.mubr.f32.gmra.mrb[0].mxu0 %v1151
        %v1153 = vpop.f32.mrb[0].mxu0
        %v1154 = vadd.f32 %v1007, %v1153
        %v1155 = vpop.f32.mrb[0].mxu0
        %v1156 = vadd.f32 %v1009, %v1155
        %1157 = vmatprep.mubr.f32.mxu0 0.0
        %v1158 = vand.u32 %v511, 4294901760
        %v1159 = vsub.f32 %v511, %v1158
        %v1160 = vand.u32 %v1159, 4294901760
        %1161 = vmatmul.mubr.f32.gmra.mrb[0].mxu0 %v1160
        %v1162 = vpop.f32.mrb[0].mxu0
        %v1163 = vadd.f32 %v1015, %v1162
        %v1164 = vpop.f32.mrb[0].mxu0
        %v1165 = vadd.f32 %v1017, %v1164
        %1166 = vmatprep.mubr.f32.mxu0 0.0
        %v1167 = vand.u32 %v514, 4294901760
        %v1168 = vsub.f32 %v514, %v1167
        %v1169 = vand.u32 %v1168, 4294901760
        %1170 = vmatmul.mubr.f32.gmra.mrb[0].mxu0 %v1169
        %v1171 = vpop.f32.mrb[0].mxu0
        %v1172 = vadd.f32 %v1023, %v1171
        %v1173 = vpop.f32.mrb[0].mxu0
        %v1174 = vadd.f32 %v1025, %v1173
        %1175 = vmatprep.mubr.f32.mxu0 0.0
        %v1176 = vand.u32 %v517, 4294901760
        %v1177 = vsub.f32 %v517, %v1176
        %v1178 = vand.u32 %v1177, 4294901760
        %1179 = vmatmul.mubr.f32.gmra.mrb[0].mxu0 %v1178
        %v1180 = vpop.f32.mrb[0].mxu0
        %v1181 = vadd.f32 %v1031, %v1180
        %v1182 = vpop.f32.mrb[0].mxu0
        %v1183 = vadd.f32 %v1033, %v1182
        %1184 = vmatprep.mubr.f32.mxu0 0.0
        %v1185 = vand.u32 %v520, 4294901760
        %v1186 = vsub.f32 %v520, %v1185
        %v1187 = vand.u32 %v1186, 4294901760
        %1188 = vmatmul.mubr.f32.gmra.mrb[0].mxu0 %v1187
        %v1189 = vpop.f32.mrb[0].mxu0
        %v1190 = vadd.f32 %v1039, %v1189
        %v1191 = vpop.f32.mrb[0].mxu0
        %v1192 = vadd.f32 %v1041, %v1191
        %1193 = vmatprep.mubr.f32.mxu0 0.0
        %v1194 = vand.u32 %v523, 4294901760
        %v1195 = vsub.f32 %v523, %v1194
        %v1196 = vand.u32 %v1195, 4294901760
        %1197 = vmatmul.mubr.f32.gmra.mrb[0].mxu0 %v1196
        %v1198 = vpop.f32.mrb[0].mxu0
        %v1199 = vadd.f32 %v1047, %v1198
        %v1200 = vpop.f32.mrb[0].mxu0
        %v1201 = vadd.f32 %v1049, %v1200
        %1202 = vmatprep.mubr.f32.mxu0 0.0
        %v1203 = vand.u32 %v526, 4294901760
        %v1204 = vsub.f32 %v526, %v1203
        %v1205 = vand.u32 %v1204, 4294901760
        %1206 = vmatmul.mubr.f32.gmra.mrb[0].mxu0 %v1205
        %v1207 = vpop.f32.mrb[0].mxu0
        %v1208 = vadd.f32 %v1055, %v1207
        %v1209 = vpop.f32.mrb[0].mxu0
        %v1210 = vadd.f32 %v1057, %v1209
        %1211 = vdwg.mxu0
        %v1212 = vand.u32 %v489, 4294901760
        %v1213 = vsub.f32 %v489, %v1212
        %v1214 = vand.u32 %v1213, 4294901760
        %1215 = vmatprep.subr.mxu0 %v1214
        %v1216 = vand.u32 %v488, 4294901760
        %v1217 = vsub.f32 %v488, %v1216
        %v1218 = vand.u32 %v1217, 4294901760
        %1219 = vmatpush1.msra.mxu0 %v1218
        %v1220 = vand.u32 %v491, 4294901760
        %v1221 = vsub.f32 %v491, %v1220
        %v1222 = vand.u32 %v1221, 4294901760
        %1223 = vmatprep.subr.mxu0 %v1222
        %v1224 = vand.u32 %v490, 4294901760
        %v1225 = vsub.f32 %v490, %v1224
        %v1226 = vand.u32 %v1225, 4294901760
        %1227 = vmatpush1.msra.mxu0 %v1226
        %v1228 = vand.u32 %v493, 4294901760
        %v1229 = vsub.f32 %v493, %v1228
        %v1230 = vand.u32 %v1229, 4294901760
        %1231 = vmatprep.subr.mxu0 %v1230
        %v1232 = vand.u32 %v492, 4294901760
        %v1233 = vsub.f32 %v492, %v1232
        %v1234 = vand.u32 %v1233, 4294901760
        %1235 = vmatpush1.msra.mxu0 %v1234
        %v1236 = vand.u32 %v495, 4294901760
        %v1237 = vsub.f32 %v495, %v1236
        %v1238 = vand.u32 %v1237, 4294901760
        %1239 = vmatprep.subr.mxu0 %v1238
        %v1240 = vand.u32 %v494, 4294901760
        %v1241 = vsub.f32 %v494, %v1240
        %v1242 = vand.u32 %v1241, 4294901760
        %1243 = vmatpush1.msra.mxu0 %v1242
        %v1244 = vand.u32 %v497, 4294901760
        %v1245 = vsub.f32 %v497, %v1244
        %v1246 = vand.u32 %v1245, 4294901760
        %1247 = vmatprep.subr.mxu0 %v1246
        %v1248 = vand.u32 %v496, 4294901760
        %v1249 = vsub.f32 %v496, %v1248
        %v1250 = vand.u32 %v1249, 4294901760
        %1251 = vmatpush1.msra.mxu0 %v1250
        %v1252 = vand.u32 %v499, 4294901760
        %v1253 = vsub.f32 %v499, %v1252
        %v1254 = vand.u32 %v1253, 4294901760
        %1255 = vmatprep.subr.mxu0 %v1254
        %v1256 = vand.u32 %v498, 4294901760
        %v1257 = vsub.f32 %v498, %v1256
        %v1258 = vand.u32 %v1257, 4294901760
        %1259 = vmatpush1.msra.mxu0 %v1258
        %v1260 = vand.u32 %v501, 4294901760
        %v1261 = vsub.f32 %v501, %v1260
        %v1262 = vand.u32 %v1261, 4294901760
        %1263 = vmatprep.subr.mxu0 %v1262
        %v1264 = vand.u32 %v500, 4294901760
        %v1265 = vsub.f32 %v500, %v1264
        %v1266 = vand.u32 %v1265, 4294901760
        %1267 = vmatpush1.msra.mxu0 %v1266
        %v1268 = vand.u32 %v503, 4294901760
        %v1269 = vsub.f32 %v503, %v1268
        %v1270 = vand.u32 %v1269, 4294901760
        %1271 = vmatprep.subr.mxu0 %v1270
        %v1272 = vand.u32 %v502, 4294901760
        %v1273 = vsub.f32 %v502, %v1272
        %v1274 = vand.u32 %v1273, 4294901760
        %1275 = vmatpush1.msra.mxu0 %v1274
        %1276 = vmatprep.subr.mxu0 0.0
        %1277 = vmatpush1.msra.mxu0 0.0
        %1278 = vmatprep.subr.mxu0 0.0
        %1279 = vmatpush1.msra.mxu0 0.0
        %1280 = vmatprep.subr.mxu0 0.0
        %1281 = vmatpush1.msra.mxu0 0.0
        %1282 = vmatprep.subr.mxu0 0.0
        %1283 = vmatpush1.msra.mxu0 0.0
        %1284 = vmatprep.subr.mxu0 0.0
        %1285 = vmatpush1.msra.mxu0 0.0
        %1286 = vmatprep.subr.mxu0 0.0
        %1287 = vmatpush1.msra.mxu0 0.0
        %1288 = vmatprep.subr.mxu0 0.0
        %1289 = vmatpush1.msra.mxu0 0.0
        %1290 = vmatprep.subr.mxu0 0.0
        %1291 = vmatpush1.msra.mxu0 0.0
        %1292 = vmatprep.subr.mxu0 0.0
        %1293 = vmatpush1.msra.mxu0 0.0
        %1294 = vmatprep.subr.mxu0 0.0
        %1295 = vmatpush1.msra.mxu0 0.0
        %1296 = vmatprep.subr.mxu0 0.0
        %1297 = vmatpush1.msra.mxu0 0.0
        %1298 = vmatprep.subr.mxu0 0.0
        %1299 = vmatpush1.msra.mxu0 0.0
        %1300 = vmatprep.subr.mxu0 0.0
        %1301 = vmatpush1.msra.mxu0 0.0
        %1302 = vmatprep.subr.mxu0 0.0
        %1303 = vmatpush1.msra.mxu0 0.0
        %1304 = vmatprep.subr.mxu0 0.0
        %1305 = vmatpush1.msra.mxu0 0.0
        %1306 = vmatprep.subr.mxu0 0.0
        %1307 = vmatpush1.msra.mxu0 0.0
        %1308 = vmatprep.subr.mxu0 0.0
        %1309 = vmatpush1.msra.mxu0 0.0
        %1310 = vmatprep.subr.mxu0 0.0
        %1311 = vmatpush1.msra.mxu0 0.0
        %1312 = vmatprep.subr.mxu0 0.0
        %1313 = vmatpush1.msra.mxu0 0.0
        %1314 = vmatprep.subr.mxu0 0.0
        %1315 = vmatpush1.msra.mxu0 0.0
        %1316 = vmatprep.subr.mxu0 0.0
        %1317 = vmatpush1.msra.mxu0 0.0
        %1318 = vmatprep.subr.mxu0 0.0
        %1319 = vmatpush1.msra.mxu0 0.0
        %1320 = vmatprep.subr.mxu0 0.0
        %1321 = vmatpush1.msra.mxu0 0.0
        %1322 = vmatprep.subr.mxu0 0.0
        %1323 = vmatpush1.msra.mxu0 0.0
        %1324 = vmatprep.mubr.f32.mxu0 0.0
        %v1325 = vand.u32 %v505, 4294901760
        %1326 = vmatmul.mubr.f32.gmra.mrb[0].mxu0 %v1325
        %v1327 = vpop.f32.mrb[0].mxu0
        %v1328 = vadd.f32 %v1145, %v1327
        %v1329 = vpop.f32.mrb[0].mxu0
        %v1330 = vadd.f32 %v1147, %v1329
        %1331 = vmatprep.mubr.f32.mxu0 0.0
        %v1332 = vand.u32 %v508, 4294901760
        %1333 = vmatmul.mubr.f32.gmra.mrb[0].mxu0 %v1332
        %v1334 = vpop.f32.mrb[0].mxu0
        %v1335 = vadd.f32 %v1154, %v1334
        %v1336 = vpop.f32.mrb[0].mxu0
        %v1337 = vadd.f32 %v1156, %v1336
        %1338 = vmatprep.mubr.f32.mxu0 0.0
        %v1339 = vand.u32 %v511, 4294901760
        %1340 = vmatmul.mubr.f32.gmra.mrb[0].mxu0 %v1339
        %v1341 = vpop.f32.mrb[0].mxu0
        %v1342 = vadd.f32 %v1163, %v1341
        %v1343 = vpop.f32.mrb[0].mxu0
        %v1344 = vadd.f32 %v1165, %v1343
        %1345 = vmatprep.mubr.f32.mxu0 0.0
        %v1346 = vand.u32 %v514, 4294901760
        %1347 = vmatmul.mubr.f32.gmra.mrb[0].mxu0 %v1346
        %v1348 = vpop.f32.mrb[0].mxu0
        %v1349 = vadd.f32 %v1172, %v1348
        %v1350 = vpop.f32.mrb[0].mxu0
        %v1351 = vadd.f32 %v1174, %v1350
        %1352 = vmatprep.mubr.f32.mxu0 0.0
        %v1353 = vand.u32 %v517, 4294901760
        %1354 = vmatmul.mubr.f32.gmra.mrb[0].mxu0 %v1353
        %v1355 = vpop.f32.mrb[0].mxu0
        %v1356 = vadd.f32 %v1181, %v1355
        %v1357 = vpop.f32.mrb[0].mxu0
        %v1358 = vadd.f32 %v1183, %v1357
        %1359 = vmatprep.mubr.f32.mxu0 0.0
        %v1360 = vand.u32 %v520, 4294901760
        %1361 = vmatmul.mubr.f32.gmra.mrb[0].mxu0 %v1360
        %v1362 = vpop.f32.mrb[0].mxu0
        %v1363 = vadd.f32 %v1190, %v1362
        %v1364 = vpop.f32.mrb[0].mxu0
        %v1365 = vadd.f32 %v1192, %v1364
        %1366 = vmatprep.mubr.f32.mxu0 0.0
        %v1367 = vand.u32 %v523, 4294901760
        %1368 = vmatmul.mubr.f32.gmra.mrb[0].mxu0 %v1367
        %v1369 = vpop.f32.mrb[0].mxu0
        %v1370 = vadd.f32 %v1199, %v1369
        %v1371 = vpop.f32.mrb[0].mxu0
        %v1372 = vadd.f32 %v1201, %v1371
        %1373 = vmatprep.mubr.f32.mxu0 0.0
        %v1374 = vand.u32 %v526, 4294901760
        %1375 = vmatmul.mubr.f32.gmra.mrb[0].mxu0 %v1374
        %v1376 = vpop.f32.mrb[0].mxu0
        %v1377 = vadd.f32 %v1208, %v1376
        %v1378 = vpop.f32.mrb[0].mxu0
        %v1379 = vadd.f32 %v1210, %v1378
        %1380 = vdwg.mxu0
        %v1381 = vand.u32 %v489, 4294901760
        %1382 = vmatprep.subr.mxu0 %v1381
        %v1383 = vand.u32 %v488, 4294901760
        %1384 = vmatpush1.msra.mxu0 %v1383
        %v1385 = vand.u32 %v491, 4294901760
        %1386 = vmatprep.subr.mxu0 %v1385
        %v1387 = vand.u32 %v490, 4294901760
        %1388 = vmatpush1.msra.mxu0 %v1387
        %v1389 = vand.u32 %v493, 4294901760
        %1390 = vmatprep.subr.mxu0 %v1389
        %v1391 = vand.u32 %v492, 4294901760
        %1392 = vmatpush1.msra.mxu0 %v1391
        %v1393 = vand.u32 %v495, 4294901760
        %1394 = vmatprep.subr.mxu0 %v1393
        %v1395 = vand.u32 %v494, 4294901760
        %1396 = vmatpush1.msra.mxu0 %v1395
        %v1397 = vand.u32 %v497, 4294901760
        %1398 = vmatprep.subr.mxu0 %v1397
        %v1399 = vand.u32 %v496, 4294901760
        %1400 = vmatpush1.msra.mxu0 %v1399
        %v1401 = vand.u32 %v499, 4294901760
        %1402 = vmatprep.subr.mxu0 %v1401
        %v1403 = vand.u32 %v498, 4294901760
        %1404 = vmatpush1.msra.mxu0 %v1403
        %v1405 = vand.u32 %v501, 4294901760
        %1406 = vmatprep.subr.mxu0 %v1405
        %v1407 = vand.u32 %v500, 4294901760
        %1408 = vmatpush1.msra.mxu0 %v1407
        %v1409 = vand.u32 %v503, 4294901760
        %1410 = vmatprep.subr.mxu0 %v1409
        %v1411 = vand.u32 %v502, 4294901760
        %1412 = vmatpush1.msra.mxu0 %v1411
        %1413 = vmatprep.subr.mxu0 0.0
        %1414 = vmatpush1.msra.mxu0 0.0
        %1415 = vmatprep.subr.mxu0 0.0
        %1416 = vmatpush1.msra.mxu0 0.0
        %1417 = vmatprep.subr.mxu0 0.0
        %1418 = vmatpush1.msra.mxu0 0.0
        %1419 = vmatprep.subr.mxu0 0.0
        %1420 = vmatpush1.msra.mxu0 0.0
        %1421 = vmatprep.subr.mxu0 0.0
        %1422 = vmatpush1.msra.mxu0 0.0
        %1423 = vmatprep.subr.mxu0 0.0
        %1424 = vmatpush1.msra.mxu0 0.0
        %1425 = vmatprep.subr.mxu0 0.0
        %1426 = vmatpush1.msra.mxu0 0.0
        %1427 = vmatprep.subr.mxu0 0.0
        %1428 = vmatpush1.msra.mxu0 0.0
        %1429 = vmatprep.subr.mxu0 0.0
        %1430 = vmatpush1.msra.mxu0 0.0
        %1431 = vmatprep.subr.mxu0 0.0
        %1432 = vmatpush1.msra.mxu0 0.0
        %1433 = vmatprep.subr.mxu0 0.0
        %1434 = vmatpush1.msra.mxu0 0.0
        %1435 = vmatprep.subr.mxu0 0.0
        %1436 = vmatpush1.msra.mxu0 0.0
        %1437 = vmatprep.subr.mxu0 0.0
        %1438 = vmatpush1.msra.mxu0 0.0
        %1439 = vmatprep.subr.mxu0 0.0
        %1440 = vmatpush1.msra.mxu0 0.0
        %1441 = vmatprep.subr.mxu0 0.0
        %1442 = vmatpush1.msra.mxu0 0.0
        %1443 = vmatprep.subr.mxu0 0.0
        %1444 = vmatpush1.msra.mxu0 0.0
        %1445 = vmatprep.subr.mxu0 0.0
        %1446 = vmatpush1.msra.mxu0 0.0
        %1447 = vmatprep.subr.mxu0 0.0
        %1448 = vmatpush1.msra.mxu0 0.0
        %1449 = vmatprep.subr.mxu0 0.0
        %1450 = vmatpush1.msra.mxu0 0.0
        %1451 = vmatprep.subr.mxu0 0.0
        %1452 = vmatpush1.msra.mxu0 0.0
        %1453 = vmatprep.subr.mxu0 0.0
        %1454 = vmatpush1.msra.mxu0 0.0
        %1455 = vmatprep.subr.mxu0 0.0
        %1456 = vmatpush1.msra.mxu0 0.0
        %1457 = vmatprep.subr.mxu0 0.0
        %1458 = vmatpush1.msra.mxu0 0.0
        %1459 = vmatprep.subr.mxu0 0.0
        %1460 = vmatpush1.msra.mxu0 0.0
        %1461 = vmatprep.mubr.f32.mxu0 0.0
        %v1462 = vand.u32 %v505, 4294901760
        %1463 = vmatmul.mubr.f32.gmra.mrb[0].mxu0 %v1462
        %v1464 = vpop.f32.mrb[0].mxu0
        %v1465 = vadd.f32 %v1328, %v1464
        %v1466 = vpop.f32.mrb[0].mxu0
        %v1467 = vadd.f32 %v1330, %v1466
        %1468 = vmatprep.mubr.f32.mxu0 0.0
        %v1469 = vand.u32 %v508, 4294901760
        %1470 = vmatmul.mubr.f32.gmra.mrb[0].mxu0 %v1469
        %v1471 = vpop.f32.mrb[0].mxu0
        %v1472 = vadd.f32 %v1335, %v1471
        %v1473 = vpop.f32.mrb[0].mxu0
        %v1474 = vadd.f32 %v1337, %v1473
        %1475 = vmatprep.mubr.f32.mxu0 0.0
        %v1476 = vand.u32 %v511, 4294901760
        %1477 = vmatmul.mubr.f32.gmra.mrb[0].mxu0 %v1476
        %v1478 = vpop.f32.mrb[0].mxu0
        %v1479 = vadd.f32 %v1342, %v1478
        %v1480 = vpop.f32.mrb[0].mxu0
        %v1481 = vadd.f32 %v1344, %v1480
        %1482 = vmatprep.mubr.f32.mxu0 0.0
        %v1483 = vand.u32 %v514, 4294901760
        %1484 = vmatmul.mubr.f32.gmra.mrb[0].mxu0 %v1483
        %v1485 = vpop.f32.mrb[0].mxu0
        %v1486 = vadd.f32 %v1349, %v1485
        %v1487 = vpop.f32.mrb[0].mxu0
        %v1488 = vadd.f32 %v1351, %v1487
        %1489 = vmatprep.mubr.f32.mxu0 0.0
        %v1490 = vand.u32 %v517, 4294901760
        %1491 = vmatmul.mubr.f32.gmra.mrb[0].mxu0 %v1490
        %v1492 = vpop.f32.mrb[0].mxu0
        %v1493 = vadd.f32 %v1356, %v1492
        %v1494 = vpop.f32.mrb[0].mxu0
        %v1495 = vadd.f32 %v1358, %v1494
        %1496 = vmatprep.mubr.f32.mxu0 0.0
        %v1497 = vand.u32 %v520, 4294901760
        %1498 = vmatmul.mubr.f32.gmra.mrb[0].mxu0 %v1497
        %v1499 = vpop.f32.mrb[0].mxu0
        %v1500 = vadd.f32 %v1363, %v1499
        %v1501 = vpop.f32.mrb[0].mxu0
        %v1502 = vadd.f32 %v1365, %v1501
        %1503 = vmatprep.mubr.f32.mxu0 0.0
        %v1504 = vand.u32 %v523, 4294901760
        %1505 = vmatmul.mubr.f32.gmra.mrb[0].mxu0 %v1504
        %v1506 = vpop.f32.mrb[0].mxu0
        %v1507 = vadd.f32 %v1370, %v1506
        %v1508 = vpop.f32.mrb[0].mxu0
        %v1509 = vadd.f32 %v1372, %v1508
        %1510 = vmatprep.mubr.f32.mxu0 0.0
        %v1511 = vand.u32 %v526, 4294901760
        %1512 = vmatmul.mubr.f32.gmra.mrb[0].mxu0 %v1511
        %v1513 = vpop.f32.mrb[0].mxu0
        %v1514 = vadd.f32 %v1377, %v1513
        %v1515 = vpop.f32.mrb[0].mxu0
        %v1516 = vadd.f32 %v1379, %v1515
        %1517 = vdwg.mxu0
        %1518 = vst [vmem:[%s329] sm:$0xff] %v1465
        %1519 = vst.msk [vmem:[%s329 + $0x8] sm:$0xff] %vm352, %v1467
        %1520 = vst [vmem:[%s329 + $0x10] sm:$0xff] %v1472
        %1521 = vst.msk [vmem:[%s329 + $0x18] sm:$0xff] %vm352, %v1474
        %1522 = vst [vmem:[%s329 + $0x20] sm:$0xff] %v1479
        %1523 = vst.msk [vmem:[%s329 + $0x28] sm:$0xff] %vm352, %v1481
        %1524 = vst [vmem:[%s329 + $0x30] sm:$0xff] %v1486
        %1525 = vst.msk [vmem:[%s329 + $0x38] sm:$0xff] %vm352, %v1488
        %1526 = vst [vmem:[%s329 + $0x40] sm:$0xff] %v1493
        %1527 = vst.msk [vmem:[%s329 + $0x48] sm:$0xff] %vm352, %v1495
        %1528 = vst [vmem:[%s329 + $0x50] sm:$0xff] %v1500
        %1529 = vst.msk [vmem:[%s329 + $0x58] sm:$0xff] %vm352, %v1502
        %1530 = vst [vmem:[%s329 + $0x60] sm:$0xff] %v1507
        %1531 = vst.msk [vmem:[%s329 + $0x68] sm:$0xff] %vm352, %v1509
        %1532 = vst [vmem:[%s329 + $0x70] sm:$0xff] %v1514
        %1533 = vst.msk [vmem:[%s329 + $0x78] sm:$0xff] %vm352, %v1516
        %v1534 = vld [vmem:[#allocation7] sm:$0xff]
        %v1535 = vld [vmem:[#allocation7 + $0x8] sm:$0xff]
        %v1536 = vld [vmem:[#allocation7 + $0x10] sm:$0xff]
        %v1537 = vld [vmem:[#allocation7 + $0x18] sm:$0xff]
        %v1539 = vsel %vm352, %v1534, 0
        %v1542 = vsel %vm352, %v1535, 0
        %v1545 = vsel %vm352, %v1536, 0
        %v1548 = vsel %vm352, %v1537, 0
        %v1550 = vand.u32 %v1467, 4294901760
        %1551 = vmatprep.subr.mxu0 %v1550
        %v1552 = vand.u32 %v1465, 4294901760
        %1553 = vmatpush1.msra.mxu0 %v1552
        %v1554 = vand.u32 %v1474, 4294901760
        %1555 = vmatprep.subr.mxu0 %v1554
        %v1556 = vand.u32 %v1472, 4294901760
        %1557 = vmatpush1.msra.mxu0 %v1556
        %v1558 = vand.u32 %v1481, 4294901760
        %1559 = vmatprep.subr.mxu0 %v1558
        %v1560 = vand.u32 %v1479, 4294901760
        %1561 = vmatpush1.msra.mxu0 %v1560
        %v1562 = vand.u32 %v1488, 4294901760
        %1563 = vmatprep.subr.mxu0 %v1562
        %v1564 = vand.u32 %v1486, 4294901760
        %1565 = vmatpush1.msra.mxu0 %v1564
        %v1566 = vand.u32 %v1495, 4294901760
        %1567 = vmatprep.subr.mxu0 %v1566
        %v1568 = vand.u32 %v1493, 4294901760
        %1569 = vmatpush1.msra.mxu0 %v1568
        %v1570 = vand.u32 %v1502, 4294901760
        %1571 = vmatprep.subr.mxu0 %v1570
        %v1572 = vand.u32 %v1500, 4294901760
        %1573 = vmatpush1.msra.mxu0 %v1572
        %v1574 = vand.u32 %v1509, 4294901760
        %1575 = vmatprep.subr.mxu0 %v1574
        %v1576 = vand.u32 %v1507, 4294901760
        %1577 = vmatpush1.msra.mxu0 %v1576
        %v1578 = vand.u32 %v1516, 4294901760
        %1579 = vmatprep.subr.mxu0 %v1578
        %v1580 = vand.u32 %v1514, 4294901760
        %1581 = vmatpush1.msra.mxu0 %v1580
        %1582 = vmatprep.subr.mxu0 0.0
        %1583 = vmatpush1.msra.mxu0 0.0
        %1584 = vmatprep.subr.mxu0 0.0
        %1585 = vmatpush1.msra.mxu0 0.0
        %1586 = vmatprep.subr.mxu0 0.0
        %1587 = vmatpush1.msra.mxu0 0.0
        %1588 = vmatprep.subr.mxu0 0.0
        %1589 = vmatpush1.msra.mxu0 0.0
        %1590 = vmatprep.subr.mxu0 0.0
        %1591 = vmatpush1.msra.mxu0 0.0
        %1592 = vmatprep.subr.mxu0 0.0
        %1593 = vmatpush1.msra.mxu0 0.0
        %1594 = vmatprep.subr.mxu0 0.0
        %1595 = vmatpush1.msra.mxu0 0.0
        %1596 = vmatprep.subr.mxu0 0.0
        %1597 = vmatpush1.msra.mxu0 0.0
        %1598 = vmatprep.subr.mxu0 0.0
        %1599 = vmatpush1.msra.mxu0 0.0
        %1600 = vmatprep.subr.mxu0 0.0
        %1601 = vmatpush1.msra.mxu0 0.0
        %1602 = vmatprep.subr.mxu0 0.0
        %1603 = vmatpush1.msra.mxu0 0.0
        %1604 = vmatprep.subr.mxu0 0.0
        %1605 = vmatpush1.msra.mxu0 0.0
        %1606 = vmatprep.subr.mxu0 0.0
        %1607 = vmatpush1.msra.mxu0 0.0
        %1608 = vmatprep.subr.mxu0 0.0
        %1609 = vmatpush1.msra.mxu0 0.0
        %1610 = vmatprep.subr.mxu0 0.0
        %1611 = vmatpush1.msra.mxu0 0.0
        %1612 = vmatprep.subr.mxu0 0.0
        %1613 = vmatpush1.msra.mxu0 0.0
        %1614 = vmatprep.subr.mxu0 0.0
        %1615 = vmatpush1.msra.mxu0 0.0
        %1616 = vmatprep.subr.mxu0 0.0
        %1617 = vmatpush1.msra.mxu0 0.0
        %1618 = vmatprep.subr.mxu0 0.0
        %1619 = vmatpush1.msra.mxu0 0.0
        %1620 = vmatprep.subr.mxu0 0.0
        %1621 = vmatpush1.msra.mxu0 0.0
        %1622 = vmatprep.subr.mxu0 0.0
        %1623 = vmatpush1.msra.mxu0 0.0
        %1624 = vmatprep.subr.mxu0 0.0
        %1625 = vmatpush1.msra.mxu0 0.0
        %1626 = vmatprep.subr.mxu0 0.0
        %1627 = vmatpush1.msra.mxu0 0.0
        %1628 = vmatprep.subr.mxu0 0.0
        %1629 = vmatpush1.msra.mxu0 0.0
        %1630 = vmatprep.mubr.f32.mxu0 0.0
        %v1631 = vand.u32 %v1539, 4294901760
        %v1632 = vsub.f32 %v1539, %v1631
        %v1633 = vand.u32 %v1632, 4294901760
        %v1634 = vsub.f32 %v1632, %v1633
        %v1635 = vand.u32 %v1634, 4294901760
        %1636 = vmatmul.mubr.f32.gmra.mrb[0].mxu0 %v1635
        %v1637 = vpop.f32.mrb[0].mxu0
        %v1638 = vadd.f32 0.0, %v1637
        %v1639 = vpop.f32.mrb[0].mxu0
        %v1640 = vadd.f32 0.0, %v1639
        %1641 = vmatprep.mubr.f32.mxu0 0.0
        %v1642 = vand.u32 %v1542, 4294901760
        %v1643 = vsub.f32 %v1542, %v1642
        %v1644 = vand.u32 %v1643, 4294901760
        %v1645 = vsub.f32 %v1643, %v1644
        %v1646 = vand.u32 %v1645, 4294901760
        %1647 = vmatmul.mubr.f32.gmra.mrb[0].mxu0 %v1646
        %v1648 = vpop.f32.mrb[0].mxu0
        %v1649 = vadd.f32 0.0, %v1648
        %v1650 = vpop.f32.mrb[0].mxu0
        %v1651 = vadd.f32 0.0, %v1650
        %1652 = vmatprep.mubr.f32.mxu0 0.0
        %v1653 = vand.u32 %v1545, 4294901760
        %v1654 = vsub.f32 %v1545, %v1653
        %v1655 = vand.u32 %v1654, 4294901760
        %v1656 = vsub.f32 %v1654, %v1655
        %v1657 = vand.u32 %v1656, 4294901760
        %1658 = vmatmul.mubr.f32.gmra.mrb[0].mxu0 %v1657
        %v1659 = vpop.f32.mrb[0].mxu0
        %v1660 = vadd.f32 0.0, %v1659
        %v1661 = vpop.f32.mrb[0].mxu0
        %v1662 = vadd.f32 0.0, %v1661
        %1663 = vmatprep.mubr.f32.mxu0 0.0
        %v1664 = vand.u32 %v1548, 4294901760
        %v1665 = vsub.f32 %v1548, %v1664
        %v1666 = vand.u32 %v1665, 4294901760
        %v1667 = vsub.f32 %v1665, %v1666
        %v1668 = vand.u32 %v1667, 4294901760
        %1669 = vmatmul.mubr.f32.gmra.mrb[0].mxu0 %v1668
        %v1670 = vpop.f32.mrb[0].mxu0
        %v1671 = vadd.f32 0.0, %v1670
        %v1672 = vpop.f32.mrb[0].mxu0
        %v1673 = vadd.f32 0.0, %v1672
        %1674 = vdwg.mxu0
        %v1675 = vand.u32 %v1467, 4294901760
        %v1676 = vsub.f32 %v1467, %v1675
        %v1677 = vand.u32 %v1676, 4294901760
        %v1678 = vsub.f32 %v1676, %v1677
        %v1679 = vand.u32 %v1678, 4294901760
        %1680 = vmatprep.subr.mxu0 %v1679
        %v1681 = vand.u32 %v1465, 4294901760
        %v1682 = vsub.f32 %v1465, %v1681
        %v1683 = vand.u32 %v1682, 4294901760
        %v1684 = vsub.f32 %v1682, %v1683
        %v1685 = vand.u32 %v1684, 4294901760
        %1686 = vmatpush1.msra.mxu0 %v1685
        %v1687 = vand.u32 %v1474, 4294901760
        %v1688 = vsub.f32 %v1474, %v1687
        %v1689 = vand.u32 %v1688, 4294901760
        %v1690 = vsub.f32 %v1688, %v1689
        %v1691 = vand.u32 %v1690, 4294901760
        %1692 = vmatprep.subr.mxu0 %v1691
        %v1693 = vand.u32 %v1472, 4294901760
        %v1694 = vsub.f32 %v1472, %v1693
        %v1695 = vand.u32 %v1694, 4294901760
        %v1696 = vsub.f32 %v1694, %v1695
        %v1697 = vand.u32 %v1696, 4294901760
        %1698 = vmatpush1.msra.mxu0 %v1697
        %v1699 = vand.u32 %v1481, 4294901760
        %v1700 = vsub.f32 %v1481, %v1699
        %v1701 = vand.u32 %v1700, 4294901760
        %v1702 = vsub.f32 %v1700, %v1701
        %v1703 = vand.u32 %v1702, 4294901760
        %1704 = vmatprep.subr.mxu0 %v1703
        %v1705 = vand.u32 %v1479, 4294901760
        %v1706 = vsub.f32 %v1479, %v1705
        %v1707 = vand.u32 %v1706, 4294901760
        %v1708 = vsub.f32 %v1706, %v1707
        %v1709 = vand.u32 %v1708, 4294901760
        %1710 = vmatpush1.msra.mxu0 %v1709
        %v1711 = vand.u32 %v1488, 4294901760
        %v1712 = vsub.f32 %v1488, %v1711
        %v1713 = vand.u32 %v1712, 4294901760
        %v1714 = vsub.f32 %v1712, %v1713
        %v1715 = vand.u32 %v1714, 4294901760
        %1716 = vmatprep.subr.mxu0 %v1715
        %v1717 = vand.u32 %v1486, 4294901760
        %v1718 = vsub.f32 %v1486, %v1717
        %v1719 = vand.u32 %v1718, 4294901760
        %v1720 = vsub.f32 %v1718, %v1719
        %v1721 = vand.u32 %v1720, 4294901760
        %1722 = vmatpush1.msra.mxu0 %v1721
        %v1723 = vand.u32 %v1495, 4294901760
        %v1724 = vsub.f32 %v1495, %v1723
        %v1725 = vand.u32 %v1724, 4294901760
        %v1726 = vsub.f32 %v1724, %v1725
        %v1727 = vand.u32 %v1726, 4294901760
        %1728 = vmatprep.subr.mxu0 %v1727
        %v1729 = vand.u32 %v1493, 4294901760
        %v1730 = vsub.f32 %v1493, %v1729
        %v1731 = vand.u32 %v1730, 4294901760
        %v1732 = vsub.f32 %v1730, %v1731
        %v1733 = vand.u32 %v1732, 4294901760
        %1734 = vmatpush1.msra.mxu0 %v1733
        %v1735 = vand.u32 %v1502, 4294901760
        %v1736 = vsub.f32 %v1502, %v1735
        %v1737 = vand.u32 %v1736, 4294901760
        %v1738 = vsub.f32 %v1736, %v1737
        %v1739 = vand.u32 %v1738, 4294901760
        %1740 = vmatprep.subr.mxu0 %v1739
        %v1741 = vand.u32 %v1500, 4294901760
        %v1742 = vsub.f32 %v1500, %v1741
        %v1743 = vand.u32 %v1742, 4294901760
        %v1744 = vsub.f32 %v1742, %v1743
        %v1745 = vand.u32 %v1744, 4294901760
        %1746 = vmatpush1.msra.mxu0 %v1745
        %v1747 = vand.u32 %v1509, 4294901760
        %v1748 = vsub.f32 %v1509, %v1747
        %v1749 = vand.u32 %v1748, 4294901760
        %v1750 = vsub.f32 %v1748, %v1749
        %v1751 = vand.u32 %v1750, 4294901760
        %1752 = vmatprep.subr.mxu0 %v1751
        %v1753 = vand.u32 %v1507, 4294901760
        %v1754 = vsub.f32 %v1507, %v1753
        %v1755 = vand.u32 %v1754, 4294901760
        %v1756 = vsub.f32 %v1754, %v1755
        %v1757 = vand.u32 %v1756, 4294901760
        %1758 = vmatpush1.msra.mxu0 %v1757
        %v1759 = vand.u32 %v1516, 4294901760
        %v1760 = vsub.f32 %v1516, %v1759
        %v1761 = vand.u32 %v1760, 4294901760
        %v1762 = vsub.f32 %v1760, %v1761
        %v1763 = vand.u32 %v1762, 4294901760
        %1764 = vmatprep.subr.mxu0 %v1763
        %v1765 = vand.u32 %v1514, 4294901760
        %v1766 = vsub.f32 %v1514, %v1765
        %v1767 = vand.u32 %v1766, 4294901760
        %v1768 = vsub.f32 %v1766, %v1767
        %v1769 = vand.u32 %v1768, 4294901760
        %1770 = vmatpush1.msra.mxu0 %v1769
        %1771 = vmatprep.subr.mxu0 0.0
        %1772 = vmatpush1.msra.mxu0 0.0
        %1773 = vmatprep.subr.mxu0 0.0
        %1774 = vmatpush1.msra.mxu0 0.0
        %1775 = vmatprep.subr.mxu0 0.0
        %1776 = vmatpush1.msra.mxu0 0.0
        %1777 = vmatprep.subr.mxu0 0.0
        %1778 = vmatpush1.msra.mxu0 0.0
        %1779 = vmatprep.subr.mxu0 0.0
        %1780 = vmatpush1.msra.mxu0 0.0
        %1781 = vmatprep.subr.mxu0 0.0
        %1782 = vmatpush1.msra.mxu0 0.0
        %1783 = vmatprep.subr.mxu0 0.0
        %1784 = vmatpush1.msra.mxu0 0.0
        %1785 = vmatprep.subr.mxu0 0.0
        %1786 = vmatpush1.msra.mxu0 0.0
        %1787 = vmatprep.subr.mxu0 0.0
        %1788 = vmatpush1.msra.mxu0 0.0
        %1789 = vmatprep.subr.mxu0 0.0
        %1790 = vmatpush1.msra.mxu0 0.0
        %1791 = vmatprep.subr.mxu0 0.0
        %1792 = vmatpush1.msra.mxu0 0.0
        %1793 = vmatprep.subr.mxu0 0.0
        %1794 = vmatpush1.msra.mxu0 0.0
        %1795 = vmatprep.subr.mxu0 0.0
        %1796 = vmatpush1.msra.mxu0 0.0
        %1797 = vmatprep.subr.mxu0 0.0
        %1798 = vmatpush1.msra.mxu0 0.0
        %1799 = vmatprep.subr.mxu0 0.0
        %1800 = vmatpush1.msra.mxu0 0.0
        %1801 = vmatprep.subr.mxu0 0.0
        %1802 = vmatpush1.msra.mxu0 0.0
        %1803 = vmatprep.subr.mxu0 0.0
        %1804 = vmatpush1.msra.mxu0 0.0
        %1805 = vmatprep.subr.mxu0 0.0
        %1806 = vmatpush1.msra.mxu0 0.0
        %1807 = vmatprep.subr.mxu0 0.0
        %1808 = vmatpush1.msra.mxu0 0.0
        %1809 = vmatprep.subr.mxu0 0.0
        %1810 = vmatpush1.msra.mxu0 0.0
        %1811 = vmatprep.subr.mxu0 0.0
        %1812 = vmatpush1.msra.mxu0 0.0
        %1813 = vmatprep.subr.mxu0 0.0
        %1814 = vmatpush1.msra.mxu0 0.0
        %1815 = vmatprep.subr.mxu0 0.0
        %1816 = vmatpush1.msra.mxu0 0.0
        %1817 = vmatprep.subr.mxu0 0.0
        %1818 = vmatpush1.msra.mxu0 0.0
        %1819 = vmatprep.mubr.f32.mxu0 0.0
        %v1820 = vand.u32 %v1539, 4294901760
        %1821 = vmatmul.mubr.f32.gmra.mrb[0].mxu0 %v1820
        %v1822 = vpop.f32.mrb[0].mxu0
        %v1823 = vadd.f32 %v1638, %v1822
        %v1824 = vpop.f32.mrb[0].mxu0
        %v1825 = vadd.f32 %v1640, %v1824
        %1826 = vmatprep.mubr.f32.mxu0 0.0
        %v1827 = vand.u32 %v1542, 4294901760
        %1828 = vmatmul.mubr.f32.gmra.mrb[0].mxu0 %v1827
        %v1829 = vpop.f32.mrb[0].mxu0
        %v1830 = vadd.f32 %v1649, %v1829
        %v1831 = vpop.f32.mrb[0].mxu0
        %v1832 = vadd.f32 %v1651, %v1831
        %1833 = vmatprep.mubr.f32.mxu0 0.0
        %v1834 = vand.u32 %v1545, 4294901760
        %1835 = vmatmul.mubr.f32.gmra.mrb[0].mxu0 %v1834
        %v1836 = vpop.f32.mrb[0].mxu0
        %v1837 = vadd.f32 %v1660, %v1836
        %v1838 = vpop.f32.mrb[0].mxu0
        %v1839 = vadd.f32 %v1662, %v1838
        %1840 = vmatprep.mubr.f32.mxu0 0.0
        %v1841 = vand.u32 %v1548, 4294901760
        %1842 = vmatmul.mubr.f32.gmra.mrb[0].mxu0 %v1841
        %v1843 = vpop.f32.mrb[0].mxu0
        %v1844 = vadd.f32 %v1671, %v1843
        %v1845 = vpop.f32.mrb[0].mxu0
        %v1846 = vadd.f32 %v1673, %v1845
        %1847 = vdwg.mxu0
        %v1848 = vand.u32 %v1467, 4294901760
        %v1849 = vsub.f32 %v1467, %v1848
        %1850 = vmatprep.subr.mxu0 %v1849
        %v1851 = vand.u32 %v1465, 4294901760
        %v1852 = vsub.f32 %v1465, %v1851
        %1853 = vmatpush1.msra.mxu0 %v1852
        %v1854 = vand.u32 %v1474, 4294901760
        %v1855 = vsub.f32 %v1474, %v1854
        %1856 = vmatprep.subr.mxu0 %v1855
        %v1857 = vand.u32 %v1472, 4294901760
        %v1858 = vsub.f32 %v1472, %v1857
        %1859 = vmatpush1.msra.mxu0 %v1858
        %v1860 = vand.u32 %v1481, 4294901760
        %v1861 = vsub.f32 %v1481, %v1860
        %1862 = vmatprep.subr.mxu0 %v1861
        %v1863 = vand.u32 %v1479, 4294901760
        %v1864 = vsub.f32 %v1479, %v1863
        %1865 = vmatpush1.msra.mxu0 %v1864
        %v1866 = vand.u32 %v1488, 4294901760
        %v1867 = vsub.f32 %v1488, %v1866
        %1868 = vmatprep.subr.mxu0 %v1867
        %v1869 = vand.u32 %v1486, 4294901760
        %v1870 = vsub.f32 %v1486, %v1869
        %1871 = vmatpush1.msra.mxu0 %v1870
        %v1872 = vand.u32 %v1495, 4294901760
        %v1873 = vsub.f32 %v1495, %v1872
        %1874 = vmatprep.subr.mxu0 %v1873
        %v1875 = vand.u32 %v1493, 4294901760
        %v1876 = vsub.f32 %v1493, %v1875
        %1877 = vmatpush1.msra.mxu0 %v1876
        %v1878 = vand.u32 %v1502, 4294901760
        %v1879 = vsub.f32 %v1502, %v1878
        %1880 = vmatprep.subr.mxu0 %v1879
        %v1881 = vand.u32 %v1500, 4294901760
        %v1882 = vsub.f32 %v1500, %v1881
        %1883 = vmatpush1.msra.mxu0 %v1882
        %v1884 = vand.u32 %v1509, 4294901760
        %v1885 = vsub.f32 %v1509, %v1884
        %1886 = vmatprep.subr.mxu0 %v1885
        %v1887 = vand.u32 %v1507, 4294901760
        %v1888 = vsub.f32 %v1507, %v1887
        %1889 = vmatpush1.msra.mxu0 %v1888
        %v1890 = vand.u32 %v1516, 4294901760
        %v1891 = vsub.f32 %v1516, %v1890
        %1892 = vmatprep.subr.mxu0 %v1891
        %v1893 = vand.u32 %v1514, 4294901760
        %v1894 = vsub.f32 %v1514, %v1893
        %1895 = vmatpush1.msra.mxu0 %v1894
        %1896 = vmatprep.subr.mxu0 0.0
        %1897 = vmatpush1.msra.mxu0 0.0
        %1898 = vmatprep.subr.mxu0 0.0
        %1899 = vmatpush1.msra.mxu0 0.0
        %1900 = vmatprep.subr.mxu0 0.0
        %1901 = vmatpush1.msra.mxu0 0.0
        %1902 = vmatprep.subr.mxu0 0.0
        %1903 = vmatpush1.msra.mxu0 0.0
        %1904 = vmatprep.subr.mxu0 0.0
        %1905 = vmatpush1.msra.mxu0 0.0
        %1906 = vmatprep.subr.mxu0 0.0
        %1907 = vmatpush1.msra.mxu0 0.0
        %1908 = vmatprep.subr.mxu0 0.0
        %1909 = vmatpush1.msra.mxu0 0.0
        %1910 = vmatprep.subr.mxu0 0.0
        %1911 = vmatpush1.msra.mxu0 0.0
        %1912 = vmatprep.subr.mxu0 0.0
        %1913 = vmatpush1.msra.mxu0 0.0
        %1914 = vmatprep.subr.mxu0 0.0
        %1915 = vmatpush1.msra.mxu0 0.0
        %1916 = vmatprep.subr.mxu0 0.0
        %1917 = vmatpush1.msra.mxu0 0.0
        %1918 = vmatprep.subr.mxu0 0.0
        %1919 = vmatpush1.msra.mxu0 0.0
        %1920 = vmatprep.subr.mxu0 0.0
        %1921 = vmatpush1.msra.mxu0 0.0
        %1922 = vmatprep.subr.mxu0 0.0
        %1923 = vmatpush1.msra.mxu0 0.0
        %1924 = vmatprep.subr.mxu0 0.0
        %1925 = vmatpush1.msra.mxu0 0.0
        %1926 = vmatprep.subr.mxu0 0.0
        %1927 = vmatpush1.msra.mxu0 0.0
        %1928 = vmatprep.subr.mxu0 0.0
        %1929 = vmatpush1.msra.mxu0 0.0
        %1930 = vmatprep.subr.mxu0 0.0
        %1931 = vmatpush1.msra.mxu0 0.0
        %1932 = vmatprep.subr.mxu0 0.0
        %1933 = vmatpush1.msra.mxu0 0.0
        %1934 = vmatprep.subr.mxu0 0.0
        %1935 = vmatpush1.msra.mxu0 0.0
        %1936 = vmatprep.subr.mxu0 0.0
        %1937 = vmatpush1.msra.mxu0 0.0
        %1938 = vmatprep.subr.mxu0 0.0
        %1939 = vmatpush1.msra.mxu0 0.0
        %1940 = vmatprep.subr.mxu0 0.0
        %1941 = vmatpush1.msra.mxu0 0.0
        %1942 = vmatprep.subr.mxu0 0.0
        %1943 = vmatpush1.msra.mxu0 0.0
        %1944 = vmatprep.mubr.f32.mxu0 0.0
        %v1945 = vand.u32 %v1539, 4294901760
        %v1946 = vsub.f32 %v1539, %v1945
        %1947 = vmatmul.mubr.f32.gmra.mrb[0].mxu0 %v1946
        %v1948 = vpop.f32.mrb[0].mxu0
        %v1949 = vadd.f32 %v1823, %v1948
        %v1950 = vpop.f32.mrb[0].mxu0
        %v1951 = vadd.f32 %v1825, %v1950
        %1952 = vmatprep.mubr.f32.mxu0 0.0
        %v1953 = vand.u32 %v1542, 4294901760
        %v1954 = vsub.f32 %v1542, %v1953
        %1955 = vmatmul.mubr.f32.gmra.mrb[0].mxu0 %v1954
        %v1956 = vpop.f32.mrb[0].mxu0
        %v1957 = vadd.f32 %v1830, %v1956
        %v1958 = vpop.f32.mrb[0].mxu0
        %v1959 = vadd.f32 %v1832, %v1958
        %1960 = vmatprep.mubr.f32.mxu0 0.0
        %v1961 = vand.u32 %v1545, 4294901760
        %v1962 = vsub.f32 %v1545, %v1961
        %1963 = vmatmul.mubr.f32.gmra.mrb[0].mxu0 %v1962
        %v1964 = vpop.f32.mrb[0].mxu0
        %v1965 = vadd.f32 %v1837, %v1964
        %v1966 = vpop.f32.mrb[0].mxu0
        %v1967 = vadd.f32 %v1839, %v1966
        %1968 = vmatprep.mubr.f32.mxu0 0.0
        %v1969 = vand.u32 %v1548, 4294901760
        %v1970 = vsub.f32 %v1548, %v1969
        %1971 = vmatmul.mubr.f32.gmra.mrb[0].mxu0 %v1970
        %v1972 = vpop.f32.mrb[0].mxu0
        %v1973 = vadd.f32 %v1844, %v1972
        %v1974 = vpop.f32.mrb[0].mxu0
        %v1975 = vadd.f32 %v1846, %v1974
        %1976 = vdwg.mxu0
        %v1977 = vand.u32 %v1467, 4294901760
        %1978 = vmatprep.subr.mxu0 %v1977
        %v1979 = vand.u32 %v1465, 4294901760
        %1980 = vmatpush1.msra.mxu0 %v1979
        %v1981 = vand.u32 %v1474, 4294901760
        %1982 = vmatprep.subr.mxu0 %v1981
        %v1983 = vand.u32 %v1472, 4294901760
        %1984 = vmatpush1.msra.mxu0 %v1983
        %v1985 = vand.u32 %v1481, 4294901760
        %1986 = vmatprep.subr.mxu0 %v1985
        %v1987 = vand.u32 %v1479, 4294901760
        %1988 = vmatpush1.msra.mxu0 %v1987
        %v1989 = vand.u32 %v1488, 4294901760
        %1990 = vmatprep.subr.mxu0 %v1989
        %v1991 = vand.u32 %v1486, 4294901760
        %1992 = vmatpush1.msra.mxu0 %v1991
        %v1993 = vand.u32 %v1495, 4294901760
        %1994 = vmatprep.subr.mxu0 %v1993
        %v1995 = vand.u32 %v1493, 4294901760
        %1996 = vmatpush1.msra.mxu0 %v1995
        %v1997 = vand.u32 %v1502, 4294901760
        %1998 = vmatprep.subr.mxu0 %v1997
        %v1999 = vand.u32 %v1500, 4294901760
        %2000 = vmatpush1.msra.mxu0 %v1999
        %v2001 = vand.u32 %v1509, 4294901760
        %2002 = vmatprep.subr.mxu0 %v2001
        %v2003 = vand.u32 %v1507, 4294901760
        %2004 = vmatpush1.msra.mxu0 %v2003
        %v2005 = vand.u32 %v1516, 4294901760
        %2006 = vmatprep.subr.mxu0 %v2005
        %v2007 = vand.u32 %v1514, 4294901760
        %2008 = vmatpush1.msra.mxu0 %v2007
        %2009 = vmatprep.subr.mxu0 0.0
        %2010 = vmatpush1.msra.mxu0 0.0
        %2011 = vmatprep.subr.mxu0 0.0
        %2012 = vmatpush1.msra.mxu0 0.0
        %2013 = vmatprep.subr.mxu0 0.0
        %2014 = vmatpush1.msra.mxu0 0.0
        %2015 = vmatprep.subr.mxu0 0.0
        %2016 = vmatpush1.msra.mxu0 0.0
        %2017 = vmatprep.subr.mxu0 0.0
        %2018 = vmatpush1.msra.mxu0 0.0
        %2019 = vmatprep.subr.mxu0 0.0
        %2020 = vmatpush1.msra.mxu0 0.0
        %2021 = vmatprep.subr.mxu0 0.0
        %2022 = vmatpush1.msra.mxu0 0.0
        %2023 = vmatprep.subr.mxu0 0.0
        %2024 = vmatpush1.msra.mxu0 0.0
        %2025 = vmatprep.subr.mxu0 0.0
        %2026 = vmatpush1.msra.mxu0 0.0
        %2027 = vmatprep.subr.mxu0 0.0
        %2028 = vmatpush1.msra.mxu0 0.0
        %2029 = vmatprep.subr.mxu0 0.0
        %2030 = vmatpush1.msra.mxu0 0.0
        %2031 = vmatprep.subr.mxu0 0.0
        %2032 = vmatpush1.msra.mxu0 0.0
        %2033 = vmatprep.subr.mxu0 0.0
        %2034 = vmatpush1.msra.mxu0 0.0
        %2035 = vmatprep.subr.mxu0 0.0
        %2036 = vmatpush1.msra.mxu0 0.0
        %2037 = vmatprep.subr.mxu0 0.0
        %2038 = vmatpush1.msra.mxu0 0.0
        %2039 = vmatprep.subr.mxu0 0.0
        %2040 = vmatpush1.msra.mxu0 0.0
        %2041 = vmatprep.subr.mxu0 0.0
        %2042 = vmatpush1.msra.mxu0 0.0
        %2043 = vmatprep.subr.mxu0 0.0
        %2044 = vmatpush1.msra.mxu0 0.0
        %2045 = vmatprep.subr.mxu0 0.0
        %2046 = vmatpush1.msra.mxu0 0.0
        %2047 = vmatprep.subr.mxu0 0.0
        %2048 = vmatpush1.msra.mxu0 0.0
        %2049 = vmatprep.subr.mxu0 0.0
        %2050 = vmatpush1.msra.mxu0 0.0
        %2051 = vmatprep.subr.mxu0 0.0
        %2052 = vmatpush1.msra.mxu0 0.0
        %2053 = vmatprep.subr.mxu0 0.0
        %2054 = vmatpush1.msra.mxu0 0.0
        %2055 = vmatprep.subr.mxu0 0.0
        %2056 = vmatpush1.msra.mxu0 0.0
        %2057 = vmatprep.mubr.f32.mxu0 0.0
        %v2058 = vand.u32 %v1539, 4294901760
        %v2059 = vsub.f32 %v1539, %v2058
        %v2060 = vand.u32 %v2059, 4294901760
        %2061 = vmatmul.mubr.f32.gmra.mrb[0].mxu0 %v2060
        %v2062 = vpop.f32.mrb[0].mxu0
        %v2063 = vadd.f32 %v1949, %v2062
        %v2064 = vpop.f32.mrb[0].mxu0
        %v2065 = vadd.f32 %v1951, %v2064
        %2066 = vmatprep.mubr.f32.mxu0 0.0
        %v2067 = vand.u32 %v1542, 4294901760
        %v2068 = vsub.f32 %v1542, %v2067
        %v2069 = vand.u32 %v2068, 4294901760
        %2070 = vmatmul.mubr.f32.gmra.mrb[0].mxu0 %v2069
        %v2071 = vpop.f32.mrb[0].mxu0
        %v2072 = vadd.f32 %v1957, %v2071
        %v2073 = vpop.f32.mrb[0].mxu0
        %v2074 = vadd.f32 %v1959, %v2073
        %2075 = vmatprep.mubr.f32.mxu0 0.0
        %v2076 = vand.u32 %v1545, 4294901760
        %v2077 = vsub.f32 %v1545, %v2076
        %v2078 = vand.u32 %v2077, 4294901760
        %2079 = vmatmul.mubr.f32.gmra.mrb[0].mxu0 %v2078
        %v2080 = vpop.f32.mrb[0].mxu0
        %v2081 = vadd.f32 %v1965, %v2080
        %v2082 = vpop.f32.mrb[0].mxu0
        %v2083 = vadd.f32 %v1967, %v2082
        %2084 = vmatprep.mubr.f32.mxu0 0.0
        %v2085 = vand.u32 %v1548, 4294901760
        %v2086 = vsub.f32 %v1548, %v2085
        %v2087 = vand.u32 %v2086, 4294901760
        %2088 = vmatmul.mubr.f32.gmra.mrb[0].mxu0 %v2087
        %v2089 = vpop.f32.mrb[0].mxu0
        %v2090 = vadd.f32 %v1973, %v2089
        %v2091 = vpop.f32.mrb[0].mxu0
        %v2092 = vadd.f32 %v1975, %v2091
        %2093 = vdwg.mxu0
        %v2094 = vand.u32 %v1467, 4294901760
        %v2095 = vsub.f32 %v1467, %v2094
        %v2096 = vand.u32 %v2095, 4294901760
        %2097 = vmatprep.subr.mxu0 %v2096
        %v2098 = vand.u32 %v1465, 4294901760
        %v2099 = vsub.f32 %v1465, %v2098
        %v2100 = vand.u32 %v2099, 4294901760
        %2101 = vmatpush1.msra.mxu0 %v2100
        %v2102 = vand.u32 %v1474, 4294901760
        %v2103 = vsub.f32 %v1474, %v2102
        %v2104 = vand.u32 %v2103, 4294901760
        %2105 = vmatprep.subr.mxu0 %v2104
        %v2106 = vand.u32 %v1472, 4294901760
        %v2107 = vsub.f32 %v1472, %v2106
        %v2108 = vand.u32 %v2107, 4294901760
        %2109 = vmatpush1.msra.mxu0 %v2108
        %v2110 = vand.u32 %v1481, 4294901760
        %v2111 = vsub.f32 %v1481, %v2110
        %v2112 = vand.u32 %v2111, 4294901760
        %2113 = vmatprep.subr.mxu0 %v2112
        %v2114 = vand.u32 %v1479, 4294901760
        %v2115 = vsub.f32 %v1479, %v2114
        %v2116 = vand.u32 %v2115, 4294901760
        %2117 = vmatpush1.msra.mxu0 %v2116
        %v2118 = vand.u32 %v1488, 4294901760
        %v2119 = vsub.f32 %v1488, %v2118
        %v2120 = vand.u32 %v2119, 4294901760
        %2121 = vmatprep.subr.mxu0 %v2120
        %v2122 = vand.u32 %v1486, 4294901760
        %v2123 = vsub.f32 %v1486, %v2122
        %v2124 = vand.u32 %v2123, 4294901760
        %2125 = vmatpush1.msra.mxu0 %v2124
        %v2126 = vand.u32 %v1495, 4294901760
        %v2127 = vsub.f32 %v1495, %v2126
        %v2128 = vand.u32 %v2127, 4294901760
        %2129 = vmatprep.subr.mxu0 %v2128
        %v2130 = vand.u32 %v1493, 4294901760
        %v2131 = vsub.f32 %v1493, %v2130
        %v2132 = vand.u32 %v2131, 4294901760
        %2133 = vmatpush1.msra.mxu0 %v2132
        %v2134 = vand.u32 %v1502, 4294901760
        %v2135 = vsub.f32 %v1502, %v2134
        %v2136 = vand.u32 %v2135, 4294901760
        %2137 = vmatprep.subr.mxu0 %v2136
        %v2138 = vand.u32 %v1500, 4294901760
        %v2139 = vsub.f32 %v1500, %v2138
        %v2140 = vand.u32 %v2139, 4294901760
        %2141 = vmatpush1.msra.mxu0 %v2140
        %v2142 = vand.u32 %v1509, 4294901760
        %v2143 = vsub.f32 %v1509, %v2142
        %v2144 = vand.u32 %v2143, 4294901760
        %2145 = vmatprep.subr.mxu0 %v2144
        %v2146 = vand.u32 %v1507, 4294901760
        %v2147 = vsub.f32 %v1507, %v2146
        %v2148 = vand.u32 %v2147, 4294901760
        %2149 = vmatpush1.msra.mxu0 %v2148
        %v2150 = vand.u32 %v1516, 4294901760
        %v2151 = vsub.f32 %v1516, %v2150
        %v2152 = vand.u32 %v2151, 4294901760
        %2153 = vmatprep.subr.mxu0 %v2152
        %v2154 = vand.u32 %v1514, 4294901760
        %v2155 = vsub.f32 %v1514, %v2154
        %v2156 = vand.u32 %v2155, 4294901760
        %2157 = vmatpush1.msra.mxu0 %v2156
        %2158 = vmatprep.subr.mxu0 0.0
        %2159 = vmatpush1.msra.mxu0 0.0
        %2160 = vmatprep.subr.mxu0 0.0
        %2161 = vmatpush1.msra.mxu0 0.0
        %2162 = vmatprep.subr.mxu0 0.0
        %2163 = vmatpush1.msra.mxu0 0.0
        %2164 = vmatprep.subr.mxu0 0.0
        %2165 = vmatpush1.msra.mxu0 0.0
        %2166 = vmatprep.subr.mxu0 0.0
        %2167 = vmatpush1.msra.mxu0 0.0
        %2168 = vmatprep.subr.mxu0 0.0
        %2169 = vmatpush1.msra.mxu0 0.0
        %2170 = vmatprep.subr.mxu0 0.0
        %2171 = vmatpush1.msra.mxu0 0.0
        %2172 = vmatprep.subr.mxu0 0.0
        %2173 = vmatpush1.msra.mxu0 0.0
        %2174 = vmatprep.subr.mxu0 0.0
        %2175 = vmatpush1.msra.mxu0 0.0
        %2176 = vmatprep.subr.mxu0 0.0
        %2177 = vmatpush1.msra.mxu0 0.0
        %2178 = vmatprep.subr.mxu0 0.0
        %2179 = vmatpush1.msra.mxu0 0.0
        %2180 = vmatprep.subr.mxu0 0.0
        %2181 = vmatpush1.msra.mxu0 0.0
        %2182 = vmatprep.subr.mxu0 0.0
        %2183 = vmatpush1.msra.mxu0 0.0
        %2184 = vmatprep.subr.mxu0 0.0
        %2185 = vmatpush1.msra.mxu0 0.0
        %2186 = vmatprep.subr.mxu0 0.0
        %2187 = vmatpush1.msra.mxu0 0.0
        %2188 = vmatprep.subr.mxu0 0.0
        %2189 = vmatpush1.msra.mxu0 0.0
        %2190 = vmatprep.subr.mxu0 0.0
        %2191 = vmatpush1.msra.mxu0 0.0
        %2192 = vmatprep.subr.mxu0 0.0
        %2193 = vmatpush1.msra.mxu0 0.0
        %2194 = vmatprep.subr.mxu0 0.0
        %2195 = vmatpush1.msra.mxu0 0.0
        %2196 = vmatprep.subr.mxu0 0.0
        %2197 = vmatpush1.msra.mxu0 0.0
        %2198 = vmatprep.subr.mxu0 0.0
        %2199 = vmatpush1.msra.mxu0 0.0
        %2200 = vmatprep.subr.mxu0 0.0
        %2201 = vmatpush1.msra.mxu0 0.0
        %2202 = vmatprep.subr.mxu0 0.0
        %2203 = vmatpush1.msra.mxu0 0.0
        %2204 = vmatprep.subr.mxu0 0.0
        %2205 = vmatpush1.msra.mxu0 0.0
        %2206 = vmatprep.mubr.f32.mxu0 0.0
        %v2207 = vand.u32 %v1539, 4294901760
        %2208 = vmatmul.mubr.f32.gmra.mrb[0].mxu0 %v2207
        %v2209 = vpop.f32.mrb[0].mxu0
        %v2210 = vadd.f32 %v2063, %v2209
        %v2211 = vpop.f32.mrb[0].mxu0
        %v2212 = vadd.f32 %v2065, %v2211
        %2213 = vmatprep.mubr.f32.mxu0 0.0
        %v2214 = vand.u32 %v1542, 4294901760
        %2215 = vmatmul.mubr.f32.gmra.mrb[0].mxu0 %v2214
        %v2216 = vpop.f32.mrb[0].mxu0
        %v2217 = vadd.f32 %v2072, %v2216
        %v2218 = vpop.f32.mrb[0].mxu0
        %v2219 = vadd.f32 %v2074, %v2218
        %2220 = vmatprep.mubr.f32.mxu0 0.0
        %v2221 = vand.u32 %v1545, 4294901760
        %2222 = vmatmul.mubr.f32.gmra.mrb[0].mxu0 %v2221
        %v2223 = vpop.f32.mrb[0].mxu0
        %v2224 = vadd.f32 %v2081, %v2223
        %v2225 = vpop.f32.mrb[0].mxu0
        %v2226 = vadd.f32 %v2083, %v2225
        %2227 = vmatprep.mubr.f32.mxu0 0.0
        %v2228 = vand.u32 %v1548, 4294901760
        %2229 = vmatmul.mubr.f32.gmra.mrb[0].mxu0 %v2228
        %v2230 = vpop.f32.mrb[0].mxu0
        %v2231 = vadd.f32 %v2090, %v2230
        %v2232 = vpop.f32.mrb[0].mxu0
        %v2233 = vadd.f32 %v2092, %v2232
        %2234 = vdwg.mxu0
        %v2235 = vand.u32 %v1467, 4294901760
        %2236 = vmatprep.subr.mxu0 %v2235
        %v2237 = vand.u32 %v1465, 4294901760
        %2238 = vmatpush1.msra.mxu0 %v2237
        %v2239 = vand.u32 %v1474, 4294901760
        %2240 = vmatprep.subr.mxu0 %v2239
        %v2241 = vand.u32 %v1472, 4294901760
        %2242 = vmatpush1.msra.mxu0 %v2241
        %v2243 = vand.u32 %v1481, 4294901760
        %2244 = vmatprep.subr.mxu0 %v2243
        %v2245 = vand.u32 %v1479, 4294901760
        %2246 = vmatpush1.msra.mxu0 %v2245
        %v2247 = vand.u32 %v1488, 4294901760
        %2248 = vmatprep.subr.mxu0 %v2247
        %v2249 = vand.u32 %v1486, 4294901760
        %2250 = vmatpush1.msra.mxu0 %v2249
        %v2251 = vand.u32 %v1495, 4294901760
        %2252 = vmatprep.subr.mxu0 %v2251
        %v2253 = vand.u32 %v1493, 4294901760
        %2254 = vmatpush1.msra.mxu0 %v2253
        %v2255 = vand.u32 %v1502, 4294901760
        %2256 = vmatprep.subr.mxu0 %v2255
        %v2257 = vand.u32 %v1500, 4294901760
        %2258 = vmatpush1.msra.mxu0 %v2257
        %v2259 = vand.u32 %v1509, 4294901760
        %2260 = vmatprep.subr.mxu0 %v2259
        %v2261 = vand.u32 %v1507, 4294901760
        %2262 = vmatpush1.msra.mxu0 %v2261
        %v2263 = vand.u32 %v1516, 4294901760
        %2264 = vmatprep.subr.mxu0 %v2263
        %v2265 = vand.u32 %v1514, 4294901760
        %2266 = vmatpush1.msra.mxu0 %v2265
        %2267 = vmatprep.subr.mxu0 0.0
        %2268 = vmatpush1.msra.mxu0 0.0
        %2269 = vmatprep.subr.mxu0 0.0
        %2270 = vmatpush1.msra.mxu0 0.0
        %2271 = vmatprep.subr.mxu0 0.0
        %2272 = vmatpush1.msra.mxu0 0.0
        %2273 = vmatprep.subr.mxu0 0.0
        %2274 = vmatpush1.msra.mxu0 0.0
        %2275 = vmatprep.subr.mxu0 0.0
        %2276 = vmatpush1.msra.mxu0 0.0
        %2277 = vmatprep.subr.mxu0 0.0
        %2278 = vmatpush1.msra.mxu0 0.0
        %2279 = vmatprep.subr.mxu0 0.0
        %2280 = vmatpush1.msra.mxu0 0.0
        %2281 = vmatprep.subr.mxu0 0.0
        %2282 = vmatpush1.msra.mxu0 0.0
        %2283 = vmatprep.subr.mxu0 0.0
        %2284 = vmatpush1.msra.mxu0 0.0
        %2285 = vmatprep.subr.mxu0 0.0
        %2286 = vmatpush1.msra.mxu0 0.0
        %2287 = vmatprep.subr.mxu0 0.0
        %2288 = vmatpush1.msra.mxu0 0.0
        %2289 = vmatprep.subr.mxu0 0.0
        %2290 = vmatpush1.msra.mxu0 0.0
        %2291 = vmatprep.subr.mxu0 0.0
        %2292 = vmatpush1.msra.mxu0 0.0
        %2293 = vmatprep.subr.mxu0 0.0
        %2294 = vmatpush1.msra.mxu0 0.0
        %2295 = vmatprep.subr.mxu0 0.0
        %2296 = vmatpush1.msra.mxu0 0.0
        %2297 = vmatprep.subr.mxu0 0.0
        %2298 = vmatpush1.msra.mxu0 0.0
        %2299 = vmatprep.subr.mxu0 0.0
        %2300 = vmatpush1.msra.mxu0 0.0
        %2301 = vmatprep.subr.mxu0 0.0
        %2302 = vmatpush1.msra.mxu0 0.0
        %2303 = vmatprep.subr.mxu0 0.0
        %2304 = vmatpush1.msra.mxu0 0.0
        %2305 = vmatprep.subr.mxu0 0.0
        %2306 = vmatpush1.msra.mxu0 0.0
        %2307 = vmatprep.subr.mxu0 0.0
        %2308 = vmatpush1.msra.mxu0 0.0
        %2309 = vmatprep.subr.mxu0 0.0
        %2310 = vmatpush1.msra.mxu0 0.0
        %2311 = vmatprep.subr.mxu0 0.0
        %2312 = vmatpush1.msra.mxu0 0.0
        %2313 = vmatprep.subr.mxu0 0.0
        %2314 = vmatpush1.msra.mxu0 0.0
        %2315 = vmatprep.mubr.f32.mxu0 0.0
        %v2316 = vand.u32 %v1539, 4294901760
        %2317 = vmatmul.mubr.f32.gmra.mrb[0].mxu0 %v2316
        %v2318 = vpop.f32.mrb[0].mxu0
        %v2319 = vadd.f32 %v2210, %v2318
        %v2320 = vpop.f32.mrb[0].mxu0
        %v2321 = vadd.f32 %v2212, %v2320
        %2322 = vmatprep.mubr.f32.mxu0 0.0
        %v2323 = vand.u32 %v1542, 4294901760
        %2324 = vmatmul.mubr.f32.gmra.mrb[0].mxu0 %v2323
        %v2325 = vpop.f32.mrb[0].mxu0
        %v2326 = vadd.f32 %v2217, %v2325
        %v2327 = vpop.f32.mrb[0].mxu0
        %v2328 = vadd.f32 %v2219, %v2327
        %2329 = vmatprep.mubr.f32.mxu0 0.0
        %v2330 = vand.u32 %v1545, 4294901760
        %2331 = vmatmul.mubr.f32.gmra.mrb[0].mxu0 %v2330
        %v2332 = vpop.f32.mrb[0].mxu0
        %v2333 = vadd.f32 %v2224, %v2332
        %v2334 = vpop.f32.mrb[0].mxu0
        %v2335 = vadd.f32 %v2226, %v2334
        %2336 = vmatprep.mubr.f32.mxu0 0.0
        %v2337 = vand.u32 %v1548, 4294901760
        %2338 = vmatmul.mubr.f32.gmra.mrb[0].mxu0 %v2337
        %v2339 = vpop.f32.mrb[0].mxu0
        %v2340 = vadd.f32 %v2231, %v2339
        %v2341 = vpop.f32.mrb[0].mxu0
        %v2342 = vadd.f32 %v2233, %v2341
        %2343 = vdwg.mxu0
        %2344 = vst [vmem:[%s336] sm:$0xff] %v2319
        %2345 = vst.msk [vmem:[%s336 + $0x8] sm:$0xff] %vm352, %v2321
        %2346 = vst [vmem:[%s336 + $0x10] sm:$0xff] %v2326
        %2347 = vst.msk [vmem:[%s336 + $0x18] sm:$0xff] %vm352, %v2328
        %2348 = vst [vmem:[%s336 + $0x20] sm:$0xff] %v2333
        %2349 = vst.msk [vmem:[%s336 + $0x28] sm:$0xff] %vm352, %v2335
        %2350 = vst [vmem:[%s336 + $0x30] sm:$0xff] %v2340
        %2351 = vst.msk [vmem:[%s336 + $0x38] sm:$0xff] %vm352, %v2342
        %2356 = vrot.lane.b32.xlu0 %v2319, 64
        %v2357 = vpop.permute.xlu0 %2356
        %2358 = vrot.lane.b32.xlu0 %v2326, 64
        %v2359 = vpop.permute.xlu0 %2358
        %2360 = vrot.lane.b32.xlu0 %v2333, 64
        %v2361 = vpop.permute.xlu0 %2360
        %2362 = vrot.lane.b32.xlu0 %v2340, 64
        %v2363 = vpop.permute.xlu0 %2362
        %vm2364 = vcmask 64512
        %v2365 = vsel %vm2364, %v2319, 0
        %v2367 = vsel %vm2364, %v2326, 0
        %v2369 = vsel %vm2364, %v2333, 0
        %v2371 = vsel %vm2364, %v2340, 0
        %v2373 = vsel %vm2364, %v2357, 0
        %v2375 = vsel %vm2364, %v2359, 0
        %v2377 = vsel %vm2364, %v2361, 0
        %v2379 = vsel %vm2364, %v2363, 0
        %2381 = vmatprep.subr.mxu0 0.0
        %v2382 = vand.u32 %v2373, 4294901760
        %2383 = vmatpush1.xpose.msra.mxu0 %v2382
        %2384 = vmatprep.subr.mxu0 0.0
        %v2385 = vand.u32 %v2375, 4294901760
        %2386 = vmatpush1.xpose.msra.mxu0 %v2385
        %2387 = vmatprep.subr.mxu0 0.0
        %v2388 = vand.u32 %v2377, 4294901760
        %2389 = vmatpush1.xpose.msra.mxu0 %v2388
        %2390 = vmatprep.subr.mxu0 0.0
        %v2391 = vand.u32 %v2379, 4294901760
        %2392 = vmatpush1.xpose.msra.mxu0 %v2391
        %2393 = vmatprep.subr.mxu0 0.0
        %2394 = vmatpush1.xpose.msra.mxu0 0.0
        %2395 = vmatprep.subr.mxu0 0.0
        %2396 = vmatpush1.xpose.msra.mxu0 0.0
        %2397 = vmatprep.subr.mxu0 0.0
        %2398 = vmatpush1.xpose.msra.mxu0 0.0
        %2399 = vmatprep.subr.mxu0 0.0
        %2400 = vmatpush1.xpose.msra.mxu0 0.0
        %2401 = vmatprep.subr.mxu0 0.0
        %2402 = vmatpush1.xpose.msra.mxu0 0.0
        %2403 = vmatprep.subr.mxu0 0.0
        %2404 = vmatpush1.xpose.msra.mxu0 0.0
        %2405 = vmatprep.subr.mxu0 0.0
        %2406 = vmatpush1.xpose.msra.mxu0 0.0
        %2407 = vmatprep.subr.mxu0 0.0
        %2408 = vmatpush1.xpose.msra.mxu0 0.0
        %2409 = vmatprep.subr.mxu0 0.0
        %2410 = vmatpush1.xpose.msra.mxu0 0.0
        %2411 = vmatprep.subr.mxu0 0.0
        %2412 = vmatpush1.xpose.msra.mxu0 0.0
        %2413 = vmatprep.subr.mxu0 0.0
        %2414 = vmatpush1.xpose.msra.mxu0 0.0
        %2415 = vmatprep.subr.mxu0 0.0
        %2416 = vmatpush1.xpose.msra.mxu0 0.0
        %2417 = vmatprep.subr.mxu0 0.0
        %2418 = vmatpush1.xpose.msra.mxu0 0.0
        %2419 = vmatprep.subr.mxu0 0.0
        %2420 = vmatpush1.xpose.msra.mxu0 0.0
        %2421 = vmatprep.subr.mxu0 0.0
        %2422 = vmatpush1.xpose.msra.mxu0 0.0
        %2423 = vmatprep.subr.mxu0 0.0
        %2424 = vmatpush1.xpose.msra.mxu0 0.0
        %2425 = vmatprep.subr.mxu0 0.0
        %2426 = vmatpush1.xpose.msra.mxu0 0.0
        %2427 = vmatprep.subr.mxu0 0.0
        %2428 = vmatpush1.xpose.msra.mxu0 0.0
        %2429 = vmatprep.subr.mxu0 0.0
        %2430 = vmatpush1.xpose.msra.mxu0 0.0
        %2431 = vmatprep.subr.mxu0 0.0
        %2432 = vmatpush1.xpose.msra.mxu0 0.0
        %2433 = vmatprep.subr.mxu0 0.0
        %2434 = vmatpush1.xpose.msra.mxu0 0.0
        %2435 = vmatprep.subr.mxu0 0.0
        %2436 = vmatpush1.xpose.msra.mxu0 0.0
        %2437 = vmatprep.subr.mxu0 0.0
        %2438 = vmatpush1.xpose.msra.mxu0 0.0
        %2439 = vmatprep.subr.mxu0 0.0
        %2440 = vmatpush1.xpose.msra.mxu0 0.0
        %2441 = vmatprep.subr.mxu0 0.0
        %2442 = vmatpush1.xpose.msra.mxu0 0.0
        %2443 = vmatprep.subr.mxu0 0.0
        %2444 = vmatpush1.xpose.msra.mxu0 0.0
        %2445 = vmatprep.subr.mxu0 0.0
        %2446 = vmatpush1.xpose.msra.mxu0 0.0
        %2447 = vmatprep.subr.mxu0 0.0
        %2448 = vmatpush1.xpose.msra.mxu0 0.0
        %2449 = vmatprep.mubr.f32.mxu0 0.0
        %v2450 = vand.u32 %v2365, 4294901760
        %v2451 = vsub.f32 %v2365, %v2450
        %v2452 = vand.u32 %v2451, 4294901760
        %v2453 = vsub.f32 %v2451, %v2452
        %v2454 = vand.u32 %v2453, 4294901760
        %2455 = vmatmul.mubr.f32.gmra.mrb[0].mxu0 %v2454
        %v2456 = vpop.f32.mrb[0].mxu0
        %v2457 = vadd.f32 0.0, %v2456
        %v2458 = vpop.f32.mrb[0].mxu0
        %2459 = vmatprep.mubr.f32.mxu0 0.0
        %v2460 = vand.u32 %v2367, 4294901760
        %v2461 = vsub.f32 %v2367, %v2460
        %v2462 = vand.u32 %v2461, 4294901760
        %v2463 = vsub.f32 %v2461, %v2462
        %v2464 = vand.u32 %v2463, 4294901760
        %2465 = vmatmul.mubr.f32.gmra.mrb[0].mxu0 %v2464
        %v2466 = vpop.f32.mrb[0].mxu0
        %v2467 = vadd.f32 0.0, %v2466
        %v2468 = vpop.f32.mrb[0].mxu0
        %2469 = vmatprep.mubr.f32.mxu0 0.0
        %v2470 = vand.u32 %v2369, 4294901760
        %v2471 = vsub.f32 %v2369, %v2470
        %v2472 = vand.u32 %v2471, 4294901760
        %v2473 = vsub.f32 %v2471, %v2472
        %v2474 = vand.u32 %v2473, 4294901760
        %2475 = vmatmul.mubr.f32.gmra.mrb[0].mxu0 %v2474
        %v2476 = vpop.f32.mrb[0].mxu0
        %v2477 = vadd.f32 0.0, %v2476
        %v2478 = vpop.f32.mrb[0].mxu0
        %2479 = vmatprep.mubr.f32.mxu0 0.0
        %v2480 = vand.u32 %v2371, 4294901760
        %v2481 = vsub.f32 %v2371, %v2480
        %v2482 = vand.u32 %v2481, 4294901760
        %v2483 = vsub.f32 %v2481, %v2482
        %v2484 = vand.u32 %v2483, 4294901760
        %2485 = vmatmul.mubr.f32.gmra.mrb[0].mxu0 %v2484
        %v2486 = vpop.f32.mrb[0].mxu0
        %v2487 = vadd.f32 0.0, %v2486
        %v2488 = vpop.f32.mrb[0].mxu0
        %2489 = vdwg.mxu0
        %2490 = vmatprep.subr.mxu0 0.0
        %v2491 = vand.u32 %v2373, 4294901760
        %v2492 = vsub.f32 %v2373, %v2491
        %v2493 = vand.u32 %v2492, 4294901760
        %v2494 = vsub.f32 %v2492, %v2493
        %v2495 = vand.u32 %v2494, 4294901760
        %2496 = vmatpush1.xpose.msra.mxu0 %v2495
        %2497 = vmatprep.subr.mxu0 0.0
        %v2498 = vand.u32 %v2375, 4294901760
        %v2499 = vsub.f32 %v2375, %v2498
        %v2500 = vand.u32 %v2499, 4294901760
        %v2501 = vsub.f32 %v2499, %v2500
        %v2502 = vand.u32 %v2501, 4294901760
        %2503 = vmatpush1.xpose.msra.mxu0 %v2502
        %2504 = vmatprep.subr.mxu0 0.0
        %v2505 = vand.u32 %v2377, 4294901760
        %v2506 = vsub.f32 %v2377, %v2505
        %v2507 = vand.u32 %v2506, 4294901760
        %v2508 = vsub.f32 %v2506, %v2507
        %v2509 = vand.u32 %v2508, 4294901760
        %2510 = vmatpush1.xpose.msra.mxu0 %v2509
        %2511 = vmatprep.subr.mxu0 0.0
        %v2512 = vand.u32 %v2379, 4294901760
        %v2513 = vsub.f32 %v2379, %v2512
        %v2514 = vand.u32 %v2513, 4294901760
        %v2515 = vsub.f32 %v2513, %v2514
        %v2516 = vand.u32 %v2515, 4294901760
        %2517 = vmatpush1.xpose.msra.mxu0 %v2516
        %2518 = vmatprep.subr.mxu0 0.0
        %2519 = vmatpush1.xpose.msra.mxu0 0.0
        %2520 = vmatprep.subr.mxu0 0.0
        %2521 = vmatpush1.xpose.msra.mxu0 0.0
        %2522 = vmatprep.subr.mxu0 0.0
        %2523 = vmatpush1.xpose.msra.mxu0 0.0
        %2524 = vmatprep.subr.mxu0 0.0
        %2525 = vmatpush1.xpose.msra.mxu0 0.0
        %2526 = vmatprep.subr.mxu0 0.0
        %2527 = vmatpush1.xpose.msra.mxu0 0.0
        %2528 = vmatprep.subr.mxu0 0.0
        %2529 = vmatpush1.xpose.msra.mxu0 0.0
        %2530 = vmatprep.subr.mxu0 0.0
        %2531 = vmatpush1.xpose.msra.mxu0 0.0
        %2532 = vmatprep.subr.mxu0 0.0
        %2533 = vmatpush1.xpose.msra.mxu0 0.0
        %2534 = vmatprep.subr.mxu0 0.0
        %2535 = vmatpush1.xpose.msra.mxu0 0.0
        %2536 = vmatprep.subr.mxu0 0.0
        %2537 = vmatpush1.xpose.msra.mxu0 0.0
        %2538 = vmatprep.subr.mxu0 0.0
        %2539 = vmatpush1.xpose.msra.mxu0 0.0
        %2540 = vmatprep.subr.mxu0 0.0
        %2541 = vmatpush1.xpose.msra.mxu0 0.0
        %2542 = vmatprep.subr.mxu0 0.0
        %2543 = vmatpush1.xpose.msra.mxu0 0.0
        %2544 = vmatprep.subr.mxu0 0.0
        %2545 = vmatpush1.xpose.msra.mxu0 0.0
        %2546 = vmatprep.subr.mxu0 0.0
        %2547 = vmatpush1.xpose.msra.mxu0 0.0
        %2548 = vmatprep.subr.mxu0 0.0
        %2549 = vmatpush1.xpose.msra.mxu0 0.0
        %2550 = vmatprep.subr.mxu0 0.0
        %2551 = vmatpush1.xpose.msra.mxu0 0.0
        %2552 = vmatprep.subr.mxu0 0.0
        %2553 = vmatpush1.xpose.msra.mxu0 0.0
        %2554 = vmatprep.subr.mxu0 0.0
        %2555 = vmatpush1.xpose.msra.mxu0 0.0
        %2556 = vmatprep.subr.mxu0 0.0
        %2557 = vmatpush1.xpose.msra.mxu0 0.0
        %2558 = vmatprep.subr.mxu0 0.0
        %2559 = vmatpush1.xpose.msra.mxu0 0.0
        %2560 = vmatprep.subr.mxu0 0.0
        %2561 = vmatpush1.xpose.msra.mxu0 0.0
        %2562 = vmatprep.subr.mxu0 0.0
        %2563 = vmatpush1.xpose.msra.mxu0 0.0
        %2564 = vmatprep.subr.mxu0 0.0
        %2565 = vmatpush1.xpose.msra.mxu0 0.0
        %2566 = vmatprep.subr.mxu0 0.0
        %2567 = vmatpush1.xpose.msra.mxu0 0.0
        %2568 = vmatprep.subr.mxu0 0.0
        %2569 = vmatpush1.xpose.msra.mxu0 0.0
        %2570 = vmatprep.subr.mxu0 0.0
        %2571 = vmatpush1.xpose.msra.mxu0 0.0
        %2572 = vmatprep.subr.mxu0 0.0
        %2573 = vmatpush1.xpose.msra.mxu0 0.0
        %2574 = vmatprep.mubr.f32.mxu0 0.0
        %v2575 = vand.u32 %v2365, 4294901760
        %2576 = vmatmul.mubr.f32.gmra.mrb[0].mxu0 %v2575
        %v2577 = vpop.f32.mrb[0].mxu0
        %v2578 = vadd.f32 %v2457, %v2577
        %v2579 = vpop.f32.mrb[0].mxu0
        %2580 = vmatprep.mubr.f32.mxu0 0.0
        %v2581 = vand.u32 %v2367, 4294901760
        %2582 = vmatmul.mubr.f32.gmra.mrb[0].mxu0 %v2581
        %v2583 = vpop.f32.mrb[0].mxu0
        %v2584 = vadd.f32 %v2467, %v2583
        %v2585 = vpop.f32.mrb[0].mxu0
        %2586 = vmatprep.mubr.f32.mxu0 0.0
        %v2587 = vand.u32 %v2369, 4294901760
        %2588 = vmatmul.mubr.f32.gmra.mrb[0].mxu0 %v2587
        %v2589 = vpop.f32.mrb[0].mxu0
        %v2590 = vadd.f32 %v2477, %v2589
        %v2591 = vpop.f32.mrb[0].mxu0
        %2592 = vmatprep.mubr.f32.mxu0 0.0
        %v2593 = vand.u32 %v2371, 4294901760
        %2594 = vmatmul.mubr.f32.gmra.mrb[0].mxu0 %v2593
        %v2595 = vpop.f32.mrb[0].mxu0
        %v2596 = vadd.f32 %v2487, %v2595
        %v2597 = vpop.f32.mrb[0].mxu0
        %2598 = vdwg.mxu0
        %2599 = vmatprep.subr.mxu0 0.0
        %v2600 = vand.u32 %v2373, 4294901760
        %v2601 = vsub.f32 %v2373, %v2600
        %2602 = vmatpush1.xpose.msra.mxu0 %v2601
        %2603 = vmatprep.subr.mxu0 0.0
        %v2604 = vand.u32 %v2375, 4294901760
        %v2605 = vsub.f32 %v2375, %v2604
        %2606 = vmatpush1.xpose.msra.mxu0 %v2605
        %2607 = vmatprep.subr.mxu0 0.0
        %v2608 = vand.u32 %v2377, 4294901760
        %v2609 = vsub.f32 %v2377, %v2608
        %2610 = vmatpush1.xpose.msra.mxu0 %v2609
        %2611 = vmatprep.subr.mxu0 0.0
        %v2612 = vand.u32 %v2379, 4294901760
        %v2613 = vsub.f32 %v2379, %v2612
        %2614 = vmatpush1.xpose.msra.mxu0 %v2613
        %2615 = vmatprep.subr.mxu0 0.0
        %2616 = vmatpush1.xpose.msra.mxu0 0.0
        %2617 = vmatprep.subr.mxu0 0.0
        %2618 = vmatpush1.xpose.msra.mxu0 0.0
        %2619 = vmatprep.subr.mxu0 0.0
        %2620 = vmatpush1.xpose.msra.mxu0 0.0
        %2621 = vmatprep.subr.mxu0 0.0
        %2622 = vmatpush1.xpose.msra.mxu0 0.0
        %2623 = vmatprep.subr.mxu0 0.0
        %2624 = vmatpush1.xpose.msra.mxu0 0.0
        %2625 = vmatprep.subr.mxu0 0.0
        %2626 = vmatpush1.xpose.msra.mxu0 0.0
        %2627 = vmatprep.subr.mxu0 0.0
        %2628 = vmatpush1.xpose.msra.mxu0 0.0
        %2629 = vmatprep.subr.mxu0 0.0
        %2630 = vmatpush1.xpose.msra.mxu0 0.0
        %2631 = vmatprep.subr.mxu0 0.0
        %2632 = vmatpush1.xpose.msra.mxu0 0.0
        %2633 = vmatprep.subr.mxu0 0.0
        %2634 = vmatpush1.xpose.msra.mxu0 0.0
        %2635 = vmatprep.subr.mxu0 0.0
        %2636 = vmatpush1.xpose.msra.mxu0 0.0
        %2637 = vmatprep.subr.mxu0 0.0
        %2638 = vmatpush1.xpose.msra.mxu0 0.0
        %2639 = vmatprep.subr.mxu0 0.0
        %2640 = vmatpush1.xpose.msra.mxu0 0.0
        %2641 = vmatprep.subr.mxu0 0.0
        %2642 = vmatpush1.xpose.msra.mxu0 0.0
        %2643 = vmatprep.subr.mxu0 0.0
        %2644 = vmatpush1.xpose.msra.mxu0 0.0
        %2645 = vmatprep.subr.mxu0 0.0
        %2646 = vmatpush1.xpose.msra.mxu0 0.0
        %2647 = vmatprep.subr.mxu0 0.0
        %2648 = vmatpush1.xpose.msra.mxu0 0.0
        %2649 = vmatprep.subr.mxu0 0.0
        %2650 = vmatpush1.xpose.msra.mxu0 0.0
        %2651 = vmatprep.subr.mxu0 0.0
        %2652 = vmatpush1.xpose.msra.mxu0 0.0
        %2653 = vmatprep.subr.mxu0 0.0
        %2654 = vmatpush1.xpose.msra.mxu0 0.0
        %2655 = vmatprep.subr.mxu0 0.0
        %2656 = vmatpush1.xpose.msra.mxu0 0.0
        %2657 = vmatprep.subr.mxu0 0.0
        %2658 = vmatpush1.xpose.msra.mxu0 0.0
        %2659 = vmatprep.subr.mxu0 0.0
        %2660 = vmatpush1.xpose.msra.mxu0 0.0
        %2661 = vmatprep.subr.mxu0 0.0
        %2662 = vmatpush1.xpose.msra.mxu0 0.0
        %2663 = vmatprep.subr.mxu0 0.0
        %2664 = vmatpush1.xpose.msra.mxu0 0.0
        %2665 = vmatprep.subr.mxu0 0.0
        %2666 = vmatpush1.xpose.msra.mxu0 0.0
        %2667 = vmatprep.subr.mxu0 0.0
        %2668 = vmatpush1.xpose.msra.mxu0 0.0
        %2669 = vmatprep.subr.mxu0 0.0
        %2670 = vmatpush1.xpose.msra.mxu0 0.0
        %2671 = vmatprep.mubr.f32.mxu0 0.0
        %v2672 = vand.u32 %v2365, 4294901760
        %v2673 = vsub.f32 %v2365, %v2672
        %2674 = vmatmul.mubr.f32.gmra.mrb[0].mxu0 %v2673
        %v2675 = vpop.f32.mrb[0].mxu0
        %v2676 = vadd.f32 %v2578, %v2675
        %v2677 = vpop.f32.mrb[0].mxu0
        %2678 = vmatprep.mubr.f32.mxu0 0.0
        %v2679 = vand.u32 %v2367, 4294901760
        %v2680 = vsub.f32 %v2367, %v2679
        %2681 = vmatmul.mubr.f32.gmra.mrb[0].mxu0 %v2680
        %v2682 = vpop.f32.mrb[0].mxu0
        %v2683 = vadd.f32 %v2584, %v2682
        %v2684 = vpop.f32.mrb[0].mxu0
        %2685 = vmatprep.mubr.f32.mxu0 0.0
        %v2686 = vand.u32 %v2369, 4294901760
        %v2687 = vsub.f32 %v2369, %v2686
        %2688 = vmatmul.mubr.f32.gmra.mrb[0].mxu0 %v2687
        %v2689 = vpop.f32.mrb[0].mxu0
        %v2690 = vadd.f32 %v2590, %v2689
        %v2691 = vpop.f32.mrb[0].mxu0
        %2692 = vmatprep.mubr.f32.mxu0 0.0
        %v2693 = vand.u32 %v2371, 4294901760
        %v2694 = vsub.f32 %v2371, %v2693
        %2695 = vmatmul.mubr.f32.gmra.mrb[0].mxu0 %v2694
        %v2696 = vpop.f32.mrb[0].mxu0
        %v2697 = vadd.f32 %v2596, %v2696
        %v2698 = vpop.f32.mrb[0].mxu0
        %2699 = vdwg.mxu0
        %2700 = vmatprep.subr.mxu0 0.0
        %v2701 = vand.u32 %v2373, 4294901760
        %2702 = vmatpush1.xpose.msra.mxu0 %v2701
        %2703 = vmatprep.subr.mxu0 0.0
        %v2704 = vand.u32 %v2375, 4294901760
        %2705 = vmatpush1.xpose.msra.mxu0 %v2704
        %2706 = vmatprep.subr.mxu0 0.0
        %v2707 = vand.u32 %v2377, 4294901760
        %2708 = vmatpush1.xpose.msra.mxu0 %v2707
        %2709 = vmatprep.subr.mxu0 0.0
        %v2710 = vand.u32 %v2379, 4294901760
        %2711 = vmatpush1.xpose.msra.mxu0 %v2710
        %2712 = vmatprep.subr.mxu0 0.0
        %2713 = vmatpush1.xpose.msra.mxu0 0.0
        %2714 = vmatprep.subr.mxu0 0.0
        %2715 = vmatpush1.xpose.msra.mxu0 0.0
        %2716 = vmatprep.subr.mxu0 0.0
        %2717 = vmatpush1.xpose.msra.mxu0 0.0
        %2718 = vmatprep.subr.mxu0 0.0
        %2719 = vmatpush1.xpose.msra.mxu0 0.0
        %2720 = vmatprep.subr.mxu0 0.0
        %2721 = vmatpush1.xpose.msra.mxu0 0.0
        %2722 = vmatprep.subr.mxu0 0.0
        %2723 = vmatpush1.xpose.msra.mxu0 0.0
        %2724 = vmatprep.subr.mxu0 0.0
        %2725 = vmatpush1.xpose.msra.mxu0 0.0
        %2726 = vmatprep.subr.mxu0 0.0
        %2727 = vmatpush1.xpose.msra.mxu0 0.0
        %2728 = vmatprep.subr.mxu0 0.0
        %2729 = vmatpush1.xpose.msra.mxu0 0.0
        %2730 = vmatprep.subr.mxu0 0.0
        %2731 = vmatpush1.xpose.msra.mxu0 0.0
        %2732 = vmatprep.subr.mxu0 0.0
        %2733 = vmatpush1.xpose.msra.mxu0 0.0
        %2734 = vmatprep.subr.mxu0 0.0
        %2735 = vmatpush1.xpose.msra.mxu0 0.0
        %2736 = vmatprep.subr.mxu0 0.0
        %2737 = vmatpush1.xpose.msra.mxu0 0.0
        %2738 = vmatprep.subr.mxu0 0.0
        %2739 = vmatpush1.xpose.msra.mxu0 0.0
        %2740 = vmatprep.subr.mxu0 0.0
        %2741 = vmatpush1.xpose.msra.mxu0 0.0
        %2742 = vmatprep.subr.mxu0 0.0
        %2743 = vmatpush1.xpose.msra.mxu0 0.0
        %2744 = vmatprep.subr.mxu0 0.0
        %2745 = vmatpush1.xpose.msra.mxu0 0.0
        %2746 = vmatprep.subr.mxu0 0.0
        %2747 = vmatpush1.xpose.msra.mxu0 0.0
        %2748 = vmatprep.subr.mxu0 0.0
        %2749 = vmatpush1.xpose.msra.mxu0 0.0
        %2750 = vmatprep.subr.mxu0 0.0
        %2751 = vmatpush1.xpose.msra.mxu0 0.0
        %2752 = vmatprep.subr.mxu0 0.0
        %2753 = vmatpush1.xpose.msra.mxu0 0.0
        %2754 = vmatprep.subr.mxu0 0.0
        %2755 = vmatpush1.xpose.msra.mxu0 0.0
        %2756 = vmatprep.subr.mxu0 0.0
        %2757 = vmatpush1.xpose.msra.mxu0 0.0
        %2758 = vmatprep.subr.mxu0 0.0
        %2759 = vmatpush1.xpose.msra.mxu0 0.0
        %2760 = vmatprep.subr.mxu0 0.0
        %2761 = vmatpush1.xpose.msra.mxu0 0.0
        %2762 = vmatprep.subr.mxu0 0.0
        %2763 = vmatpush1.xpose.msra.mxu0 0.0
        %2764 = vmatprep.subr.mxu0 0.0
        %2765 = vmatpush1.xpose.msra.mxu0 0.0
        %2766 = vmatprep.subr.mxu0 0.0
        %2767 = vmatpush1.xpose.msra.mxu0 0.0
        %2768 = vmatprep.mubr.f32.mxu0 0.0
        %v2769 = vand.u32 %v2365, 4294901760
        %v2770 = vsub.f32 %v2365, %v2769
        %v2771 = vand.u32 %v2770, 4294901760
        %2772 = vmatmul.mubr.f32.gmra.mrb[0].mxu0 %v2771
        %v2773 = vpop.f32.mrb[0].mxu0
        %v2774 = vadd.f32 %v2676, %v2773
        %v2775 = vpop.f32.mrb[0].mxu0
        %2776 = vmatprep.mubr.f32.mxu0 0.0
        %v2777 = vand.u32 %v2367, 4294901760
        %v2778 = vsub.f32 %v2367, %v2777
        %v2779 = vand.u32 %v2778, 4294901760
        %2780 = vmatmul.mubr.f32.gmra.mrb[0].mxu0 %v2779
        %v2781 = vpop.f32.mrb[0].mxu0
        %v2782 = vadd.f32 %v2683, %v2781
        %v2783 = vpop.f32.mrb[0].mxu0
        %2784 = vmatprep.mubr.f32.mxu0 0.0
        %v2785 = vand.u32 %v2369, 4294901760
        %v2786 = vsub.f32 %v2369, %v2785
        %v2787 = vand.u32 %v2786, 4294901760
        %2788 = vmatmul.mubr.f32.gmra.mrb[0].mxu0 %v2787
        %v2789 = vpop.f32.mrb[0].mxu0
        %v2790 = vadd.f32 %v2690, %v2789
        %v2791 = vpop.f32.mrb[0].mxu0
        %2792 = vmatprep.mubr.f32.mxu0 0.0
        %v2793 = vand.u32 %v2371, 4294901760
        %v2794 = vsub.f32 %v2371, %v2793
        %v2795 = vand.u32 %v2794, 4294901760
        %2796 = vmatmul.mubr.f32.gmra.mrb[0].mxu0 %v2795
        %v2797 = vpop.f32.mrb[0].mxu0
        %v2798 = vadd.f32 %v2697, %v2797
        %v2799 = vpop.f32.mrb[0].mxu0
        %2800 = vdwg.mxu0
        %2801 = vmatprep.subr.mxu0 0.0
        %v2802 = vand.u32 %v2373, 4294901760
        %v2803 = vsub.f32 %v2373, %v2802
        %v2804 = vand.u32 %v2803, 4294901760
        %2805 = vmatpush1.xpose.msra.mxu0 %v2804
        %2806 = vmatprep.subr.mxu0 0.0
        %v2807 = vand.u32 %v2375, 4294901760
        %v2808 = vsub.f32 %v2375, %v2807
        %v2809 = vand.u32 %v2808, 4294901760
        %2810 = vmatpush1.xpose.msra.mxu0 %v2809
        %2811 = vmatprep.subr.mxu0 0.0
        %v2812 = vand.u32 %v2377, 4294901760
        %v2813 = vsub.f32 %v2377, %v2812
        %v2814 = vand.u32 %v2813, 4294901760
        %2815 = vmatpush1.xpose.msra.mxu0 %v2814
        %2816 = vmatprep.subr.mxu0 0.0
        %v2817 = vand.u32 %v2379, 4294901760
        %v2818 = vsub.f32 %v2379, %v2817
        %v2819 = vand.u32 %v2818, 4294901760
        %2820 = vmatpush1.xpose.msra.mxu0 %v2819
        %2821 = vmatprep.subr.mxu0 0.0
        %2822 = vmatpush1.xpose.msra.mxu0 0.0
        %2823 = vmatprep.subr.mxu0 0.0
        %2824 = vmatpush1.xpose.msra.mxu0 0.0
        %2825 = vmatprep.subr.mxu0 0.0
        %2826 = vmatpush1.xpose.msra.mxu0 0.0
        %2827 = vmatprep.subr.mxu0 0.0
        %2828 = vmatpush1.xpose.msra.mxu0 0.0
        %2829 = vmatprep.subr.mxu0 0.0
        %2830 = vmatpush1.xpose.msra.mxu0 0.0
        %2831 = vmatprep.subr.mxu0 0.0
        %2832 = vmatpush1.xpose.msra.mxu0 0.0
        %2833 = vmatprep.subr.mxu0 0.0
        %2834 = vmatpush1.xpose.msra.mxu0 0.0
        %2835 = vmatprep.subr.mxu0 0.0
        %2836 = vmatpush1.xpose.msra.mxu0 0.0
        %2837 = vmatprep.subr.mxu0 0.0
        %2838 = vmatpush1.xpose.msra.mxu0 0.0
        %2839 = vmatprep.subr.mxu0 0.0
        %2840 = vmatpush1.xpose.msra.mxu0 0.0
        %2841 = vmatprep.subr.mxu0 0.0
        %2842 = vmatpush1.xpose.msra.mxu0 0.0
        %2843 = vmatprep.subr.mxu0 0.0
        %2844 = vmatpush1.xpose.msra.mxu0 0.0
        %2845 = vmatprep.subr.mxu0 0.0
        %2846 = vmatpush1.xpose.msra.mxu0 0.0
        %2847 = vmatprep.subr.mxu0 0.0
        %2848 = vmatpush1.xpose.msra.mxu0 0.0
        %2849 = vmatprep.subr.mxu0 0.0
        %2850 = vmatpush1.xpose.msra.mxu0 0.0
        %2851 = vmatprep.subr.mxu0 0.0
        %2852 = vmatpush1.xpose.msra.mxu0 0.0
        %2853 = vmatprep.subr.mxu0 0.0
        %2854 = vmatpush1.xpose.msra.mxu0 0.0
        %2855 = vmatprep.subr.mxu0 0.0
        %2856 = vmatpush1.xpose.msra.mxu0 0.0
        %2857 = vmatprep.subr.mxu0 0.0
        %2858 = vmatpush1.xpose.msra.mxu0 0.0
        %2859 = vmatprep.subr.mxu0 0.0
        %2860 = vmatpush1.xpose.msra.mxu0 0.0
        %2861 = vmatprep.subr.mxu0 0.0
        %2862 = vmatpush1.xpose.msra.mxu0 0.0
        %2863 = vmatprep.subr.mxu0 0.0
        %2864 = vmatpush1.xpose.msra.mxu0 0.0
        %2865 = vmatprep.subr.mxu0 0.0
        %2866 = vmatpush1.xpose.msra.mxu0 0.0
        %2867 = vmatprep.subr.mxu0 0.0
        %2868 = vmatpush1.xpose.msra.mxu0 0.0
        %2869 = vmatprep.subr.mxu0 0.0
        %2870 = vmatpush1.xpose.msra.mxu0 0.0
        %2871 = vmatprep.subr.mxu0 0.0
        %2872 = vmatpush1.xpose.msra.mxu0 0.0
        %2873 = vmatprep.subr.mxu0 0.0
        %2874 = vmatpush1.xpose.msra.mxu0 0.0
        %2875 = vmatprep.subr.mxu0 0.0
        %2876 = vmatpush1.xpose.msra.mxu0 0.0
        %2877 = vmatprep.mubr.f32.mxu0 0.0
        %v2878 = vand.u32 %v2365, 4294901760
        %2879 = vmatmul.mubr.f32.gmra.mrb[0].mxu0 %v2878
        %v2880 = vpop.f32.mrb[0].mxu0
        %v2881 = vadd.f32 %v2774, %v2880
        %v2882 = vpop.f32.mrb[0].mxu0
        %2883 = vmatprep.mubr.f32.mxu0 0.0
        %v2884 = vand.u32 %v2367, 4294901760
        %2885 = vmatmul.mubr.f32.gmra.mrb[0].mxu0 %v2884
        %v2886 = vpop.f32.mrb[0].mxu0
        %v2887 = vadd.f32 %v2782, %v2886
        %v2888 = vpop.f32.mrb[0].mxu0
        %2889 = vmatprep.mubr.f32.mxu0 0.0
        %v2890 = vand.u32 %v2369, 4294901760
        %2891 = vmatmul.mubr.f32.gmra.mrb[0].mxu0 %v2890
        %v2892 = vpop.f32.mrb[0].mxu0
        %v2893 = vadd.f32 %v2790, %v2892
        %v2894 = vpop.f32.mrb[0].mxu0
        %2895 = vmatprep.mubr.f32.mxu0 0.0
        %v2896 = vand.u32 %v2371, 4294901760
        %2897 = vmatmul.mubr.f32.gmra.mrb[0].mxu0 %v2896
        %v2898 = vpop.f32.mrb[0].mxu0
        %v2899 = vadd.f32 %v2798, %v2898
        %v2900 = vpop.f32.mrb[0].mxu0
        %2901 = vdwg.mxu0
        %2902 = vmatprep.subr.mxu0 0.0
        %v2903 = vand.u32 %v2373, 4294901760
        %2904 = vmatpush1.xpose.msra.mxu0 %v2903
        %2905 = vmatprep.subr.mxu0 0.0
        %v2906 = vand.u32 %v2375, 4294901760
        %2907 = vmatpush1.xpose.msra.mxu0 %v2906
        %2908 = vmatprep.subr.mxu0 0.0
        %v2909 = vand.u32 %v2377, 4294901760
        %2910 = vmatpush1.xpose.msra.mxu0 %v2909
        %2911 = vmatprep.subr.mxu0 0.0
        %v2912 = vand.u32 %v2379, 4294901760
        %2913 = vmatpush1.xpose.msra.mxu0 %v2912
        %2914 = vmatprep.subr.mxu0 0.0
        %2915 = vmatpush1.xpose.msra.mxu0 0.0
        %2916 = vmatprep.subr.mxu0 0.0
        %2917 = vmatpush1.xpose.msra.mxu0 0.0
        %2918 = vmatprep.subr.mxu0 0.0
        %2919 = vmatpush1.xpose.msra.mxu0 0.0
        %2920 = vmatprep.subr.mxu0 0.0
        %2921 = vmatpush1.xpose.msra.mxu0 0.0
        %2922 = vmatprep.subr.mxu0 0.0
        %2923 = vmatpush1.xpose.msra.mxu0 0.0
        %2924 = vmatprep.subr.mxu0 0.0
        %2925 = vmatpush1.xpose.msra.mxu0 0.0
        %2926 = vmatprep.subr.mxu0 0.0
        %2927 = vmatpush1.xpose.msra.mxu0 0.0
        %2928 = vmatprep.subr.mxu0 0.0
        %2929 = vmatpush1.xpose.msra.mxu0 0.0
        %2930 = vmatprep.subr.mxu0 0.0
        %2931 = vmatpush1.xpose.msra.mxu0 0.0
        %2932 = vmatprep.subr.mxu0 0.0
        %2933 = vmatpush1.xpose.msra.mxu0 0.0
        %2934 = vmatprep.subr.mxu0 0.0
        %2935 = vmatpush1.xpose.msra.mxu0 0.0
        %2936 = vmatprep.subr.mxu0 0.0
        %2937 = vmatpush1.xpose.msra.mxu0 0.0
        %2938 = vmatprep.subr.mxu0 0.0
        %2939 = vmatpush1.xpose.msra.mxu0 0.0
        %2940 = vmatprep.subr.mxu0 0.0
        %2941 = vmatpush1.xpose.msra.mxu0 0.0
        %2942 = vmatprep.subr.mxu0 0.0
        %2943 = vmatpush1.xpose.msra.mxu0 0.0
        %2944 = vmatprep.subr.mxu0 0.0
        %2945 = vmatpush1.xpose.msra.mxu0 0.0
        %2946 = vmatprep.subr.mxu0 0.0
        %2947 = vmatpush1.xpose.msra.mxu0 0.0
        %2948 = vmatprep.subr.mxu0 0.0
        %2949 = vmatpush1.xpose.msra.mxu0 0.0
        %2950 = vmatprep.subr.mxu0 0.0
        %2951 = vmatpush1.xpose.msra.mxu0 0.0
        %2952 = vmatprep.subr.mxu0 0.0
        %2953 = vmatpush1.xpose.msra.mxu0 0.0
        %2954 = vmatprep.subr.mxu0 0.0
        %2955 = vmatpush1.xpose.msra.mxu0 0.0
        %2956 = vmatprep.subr.mxu0 0.0
        %2957 = vmatpush1.xpose.msra.mxu0 0.0
        %2958 = vmatprep.subr.mxu0 0.0
        %2959 = vmatpush1.xpose.msra.mxu0 0.0
        %2960 = vmatprep.subr.mxu0 0.0
        %2961 = vmatpush1.xpose.msra.mxu0 0.0
        %2962 = vmatprep.subr.mxu0 0.0
        %2963 = vmatpush1.xpose.msra.mxu0 0.0
        %2964 = vmatprep.subr.mxu0 0.0
        %2965 = vmatpush1.xpose.msra.mxu0 0.0
        %2966 = vmatprep.subr.mxu0 0.0
        %2967 = vmatpush1.xpose.msra.mxu0 0.0
        %2968 = vmatprep.subr.mxu0 0.0
        %2969 = vmatpush1.xpose.msra.mxu0 0.0
        %2970 = vmatprep.mubr.f32.mxu0 0.0
        %v2971 = vand.u32 %v2365, 4294901760
        %2972 = vmatmul.mubr.f32.gmra.mrb[0].mxu0 %v2971
        %v2973 = vpop.f32.mrb[0].mxu0
        %v2974 = vadd.f32 %v2881, %v2973
        %v2975 = vpop.f32.mrb[0].mxu0
        %2976 = vmatprep.mubr.f32.mxu0 0.0
        %v2977 = vand.u32 %v2367, 4294901760
        %2978 = vmatmul.mubr.f32.gmra.mrb[0].mxu0 %v2977
        %v2979 = vpop.f32.mrb[0].mxu0
        %v2980 = vadd.f32 %v2887, %v2979
        %v2981 = vpop.f32.mrb[0].mxu0
        %2982 = vmatprep.mubr.f32.mxu0 0.0
        %v2983 = vand.u32 %v2369, 4294901760
        %2984 = vmatmul.mubr.f32.gmra.mrb[0].mxu0 %v2983
        %v2985 = vpop.f32.mrb[0].mxu0
        %v2986 = vadd.f32 %v2893, %v2985
        %v2987 = vpop.f32.mrb[0].mxu0
        %2988 = vmatprep.mubr.f32.mxu0 0.0
        %v2989 = vand.u32 %v2371, 4294901760
        %2990 = vmatmul.mubr.f32.gmra.mrb[0].mxu0 %v2989
        %v2991 = vpop.f32.mrb[0].mxu0
        %v2992 = vadd.f32 %v2899, %v2991
        %v2993 = vpop.f32.mrb[0].mxu0
        %2994 = vdwg.mxu0
        %vm2995 = vcmask 261120
        %v2996 = vsel %vm2995, %v2974, -inf
        %2997 = vmax.xlane.f32.xlu0 %v2996
        %v2998 = vpop.xlane.xlu0 %2997
        %v2999 = vsel %vm2995, %v2980, -inf
        %3000 = vmax.xlane.f32.xlu0 %v2999
        %v3001 = vpop.xlane.xlu0 %3000
        %v3002 = vsel %vm2995, %v2986, -inf
        %3003 = vmax.xlane.f32.xlu0 %v3002
        %v3004 = vpop.xlane.xlu0 %3003
        %v3005 = vsel %vm2995, %v2992, -inf
        %3006 = vmax.xlane.f32.xlu0 %v3005
        %v3007 = vpop.xlane.xlu0 %3006
        %v3008 = vsub.f32 %v2974, %v2998
        %v3009 = vsub.f32 %v2980, %v3001
        %v3010 = vsub.f32 %v2986, %v3004
        %v3011 = vsub.f32 %v2992, %v3007
        %v3012 = vmul.f32 %v3008, 1.442695
        %v3013 = vpow.pop %v3012
        %v3014 = vmul.f32 %v3009, 1.442695
        %v3015 = vpow.pop %v3014
        %v3016 = vmul.f32 %v3010, 1.442695
        %v3017 = vpow.pop %v3016
        %v3018 = vmul.f32 %v3011, 1.442695
        %v3019 = vpow.pop %v3018
        %v3020 = vsel %vm2995, %v3013, 0.0
        %3021 = vadd.xlane.f32.xlu0 %v3020
        %v3022 = vpop.xlane.xlu0 %3021
        %v3023 = vsel %vm2995, %v3015, 0.0
        %3024 = vadd.xlane.f32.xlu0 %v3023
        %v3025 = vpop.xlane.xlu0 %3024
        %v3026 = vsel %vm2995, %v3017, 0.0
        %3027 = vadd.xlane.f32.xlu0 %v3026
        %v3028 = vpop.xlane.xlu0 %3027
        %v3029 = vsel %vm2995, %v3019, 0.0
        %3030 = vadd.xlane.f32.xlu0 %v3029
        %v3031 = vpop.xlane.xlu0 %3030
        %v3032 = vrcp.pop %v3022
        %v3033 = vmul.f32 %v3013, %v3032
        %v3034 = vrcp.pop %v3025
        %v3035 = vmul.f32 %v3015, %v3034
        %v3036 = vrcp.pop %v3028
        %v3037 = vmul.f32 %v3017, %v3036
        %v3038 = vrcp.pop %v3031
        %v3039 = vmul.f32 %v3019, %v3038
        %3040 = vst.msk [vmem:[%s343] sm:$0xff] %vm2995, %v3033
        %3041 = vst.msk [vmem:[%s343 + $0x8] sm:$0xff] %vm2995, %v3035
        %3042 = vst.msk [vmem:[%s343 + $0x10] sm:$0xff] %vm2995, %v3037
        %3043 = vst.msk [vmem:[%s343 + $0x18] sm:$0xff] %vm2995, %v3039
        %3044 = vrot.lane.b32.xlu0 %v2319, 120
        %v3045 = vpop.permute.xlu0 %3044
        %3046 = vrot.lane.b32.xlu0 %v2326, 120
        %v3047 = vpop.permute.xlu0 %3046
        %3048 = vrot.lane.b32.xlu0 %v2333, 120
        %v3049 = vpop.permute.xlu0 %3048
        %3050 = vrot.lane.b32.xlu0 %v2340, 120
        %v3051 = vpop.permute.xlu0 %3050
        %3052 = vrot.lane.b32.xlu0 %v2319, 56
        %v3053 = vpop.permute.xlu0 %3052
        %3054 = vrot.lane.b32.xlu0 %v2326, 56
        %v3055 = vpop.permute.xlu0 %3054
        %3056 = vrot.lane.b32.xlu0 %v2333, 56
        %v3057 = vpop.permute.xlu0 %3056
        %3058 = vrot.lane.b32.xlu0 %v2340, 56
        %v3059 = vpop.permute.xlu0 %3058
        %v3060 = vsel %vm2364, %v3045, 0
        %v3062 = vsel %vm2364, %v3047, 0
        %v3064 = vsel %vm2364, %v3049, 0
        %v3066 = vsel %vm2364, %v3051, 0
        %v3068 = vsel %vm2364, %v3053, 0
        %v3070 = vsel %vm2364, %v3055, 0
        %v3072 = vsel %vm2364, %v3057, 0
        %v3074 = vsel %vm2364, %v3059, 0
        %3076 = vmatprep.subr.mxu0 0.0
        %v3077 = vand.u32 %v3068, 4294901760
        %3078 = vmatpush1.xpose.msra.mxu0 %v3077
        %3079 = vmatprep.subr.mxu0 0.0
        %v3080 = vand.u32 %v3070, 4294901760
        %3081 = vmatpush1.xpose.msra.mxu0 %v3080
        %3082 = vmatprep.subr.mxu0 0.0
        %v3083 = vand.u32 %v3072, 4294901760
        %3084 = vmatpush1.xpose.msra.mxu0 %v3083
        %3085 = vmatprep.subr.mxu0 0.0
        %v3086 = vand.u32 %v3074, 4294901760
        %3087 = vmatpush1.xpose.msra.mxu0 %v3086
        %3088 = vmatprep.subr.mxu0 0.0
        %3089 = vmatpush1.xpose.msra.mxu0 0.0
        %3090 = vmatprep.subr.mxu0 0.0
        %3091 = vmatpush1.xpose.msra.mxu0 0.0
        %3092 = vmatprep.subr.mxu0 0.0
        %3093 = vmatpush1.xpose.msra.mxu0 0.0
        %3094 = vmatprep.subr.mxu0 0.0
        %3095 = vmatpush1.xpose.msra.mxu0 0.0
        %3096 = vmatprep.subr.mxu0 0.0
        %3097 = vmatpush1.xpose.msra.mxu0 0.0
        %3098 = vmatprep.subr.mxu0 0.0
        %3099 = vmatpush1.xpose.msra.mxu0 0.0
        %3100 = vmatprep.subr.mxu0 0.0
        %3101 = vmatpush1.xpose.msra.mxu0 0.0
        %3102 = vmatprep.subr.mxu0 0.0
        %3103 = vmatpush1.xpose.msra.mxu0 0.0
        %3104 = vmatprep.subr.mxu0 0.0
        %3105 = vmatpush1.xpose.msra.mxu0 0.0
        %3106 = vmatprep.subr.mxu0 0.0
        %3107 = vmatpush1.xpose.msra.mxu0 0.0
        %3108 = vmatprep.subr.mxu0 0.0
        %3109 = vmatpush1.xpose.msra.mxu0 0.0
        %3110 = vmatprep.subr.mxu0 0.0
        %3111 = vmatpush1.xpose.msra.mxu0 0.0
        %3112 = vmatprep.subr.mxu0 0.0
        %3113 = vmatpush1.xpose.msra.mxu0 0.0
        %3114 = vmatprep.subr.mxu0 0.0
        %3115 = vmatpush1.xpose.msra.mxu0 0.0
        %3116 = vmatprep.subr.mxu0 0.0
        %3117 = vmatpush1.xpose.msra.mxu0 0.0
        %3118 = vmatprep.subr.mxu0 0.0
        %3119 = vmatpush1.xpose.msra.mxu0 0.0
        %3120 = vmatprep.subr.mxu0 0.0
        %3121 = vmatpush1.xpose.msra.mxu0 0.0
        %3122 = vmatprep.subr.mxu0 0.0
        %3123 = vmatpush1.xpose.msra.mxu0 0.0
        %3124 = vmatprep.subr.mxu0 0.0
        %3125 = vmatpush1.xpose.msra.mxu0 0.0
        %3126 = vmatprep.subr.mxu0 0.0
        %3127 = vmatpush1.xpose.msra.mxu0 0.0
        %3128 = vmatprep.subr.mxu0 0.0
        %3129 = vmatpush1.xpose.msra.mxu0 0.0
        %3130 = vmatprep.subr.mxu0 0.0
        %3131 = vmatpush1.xpose.msra.mxu0 0.0
        %3132 = vmatprep.subr.mxu0 0.0
        %3133 = vmatpush1.xpose.msra.mxu0 0.0
        %3134 = vmatprep.subr.mxu0 0.0
        %3135 = vmatpush1.xpose.msra.mxu0 0.0
        %3136 = vmatprep.subr.mxu0 0.0
        %3137 = vmatpush1.xpose.msra.mxu0 0.0
        %3138 = vmatprep.subr.mxu0 0.0
        %3139 = vmatpush1.xpose.msra.mxu0 0.0
        %3140 = vmatprep.subr.mxu0 0.0
        %3141 = vmatpush1.xpose.msra.mxu0 0.0
        %3142 = vmatprep.subr.mxu0 0.0
        %3143 = vmatpush1.xpose.msra.mxu0 0.0
        %3144 = vmatprep.mubr.f32.mxu0 0.0
        %v3145 = vand.u32 %v3060, 4294901760
        %v3146 = vsub.f32 %v3060, %v3145
        %v3147 = vand.u32 %v3146, 4294901760
        %v3148 = vsub.f32 %v3146, %v3147
        %v3149 = vand.u32 %v3148, 4294901760
        %3150 = vmatmul.mubr.f32.gmra.mrb[0].mxu0 %v3149
        %v3151 = vpop.f32.mrb[0].mxu0
        %v3152 = vadd.f32 0.0, %v3151
        %v3153 = vpop.f32.mrb[0].mxu0
        %3154 = vmatprep.mubr.f32.mxu0 0.0
        %v3155 = vand.u32 %v3062, 4294901760
        %v3156 = vsub.f32 %v3062, %v3155
        %v3157 = vand.u32 %v3156, 4294901760
        %v3158 = vsub.f32 %v3156, %v3157
        %v3159 = vand.u32 %v3158, 4294901760
        %3160 = vmatmul.mubr.f32.gmra.mrb[0].mxu0 %v3159
        %v3161 = vpop.f32.mrb[0].mxu0
        %v3162 = vadd.f32 0.0, %v3161
        %v3163 = vpop.f32.mrb[0].mxu0
        %3164 = vmatprep.mubr.f32.mxu0 0.0
        %v3165 = vand.u32 %v3064, 4294901760
        %v3166 = vsub.f32 %v3064, %v3165
        %v3167 = vand.u32 %v3166, 4294901760
        %v3168 = vsub.f32 %v3166, %v3167
        %v3169 = vand.u32 %v3168, 4294901760
        %3170 = vmatmul.mubr.f32.gmra.mrb[0].mxu0 %v3169
        %v3171 = vpop.f32.mrb[0].mxu0
        %v3172 = vadd.f32 0.0, %v3171
        %v3173 = vpop.f32.mrb[0].mxu0
        %3174 = vmatprep.mubr.f32.mxu0 0.0
        %v3175 = vand.u32 %v3066, 4294901760
        %v3176 = vsub.f32 %v3066, %v3175
        %v3177 = vand.u32 %v3176, 4294901760
        %v3178 = vsub.f32 %v3176, %v3177
        %v3179 = vand.u32 %v3178, 4294901760
        %3180 = vmatmul.mubr.f32.gmra.mrb[0].mxu0 %v3179
        %v3181 = vpop.f32.mrb[0].mxu0
        %v3182 = vadd.f32 0.0, %v3181
        %v3183 = vpop.f32.mrb[0].mxu0
        %3184 = vdwg.mxu0
        %3185 = vmatprep.subr.mxu0 0.0
        %v3186 = vand.u32 %v3068, 4294901760
        %v3187 = vsub.f32 %v3068, %v3186
        %v3188 = vand.u32 %v3187, 4294901760
        %v3189 = vsub.f32 %v3187, %v3188
        %v3190 = vand.u32 %v3189, 4294901760
        %3191 = vmatpush1.xpose.msra.mxu0 %v3190
        %3192 = vmatprep.subr.mxu0 0.0
        %v3193 = vand.u32 %v3070, 4294901760
        %v3194 = vsub.f32 %v3070, %v3193
        %v3195 = vand.u32 %v3194, 4294901760
        %v3196 = vsub.f32 %v3194, %v3195
        %v3197 = vand.u32 %v3196, 4294901760
        %3198 = vmatpush1.xpose.msra.mxu0 %v3197
        %3199 = vmatprep.subr.mxu0 0.0
        %v3200 = vand.u32 %v3072, 4294901760
        %v3201 = vsub.f32 %v3072, %v3200
        %v3202 = vand.u32 %v3201, 4294901760
        %v3203 = vsub.f32 %v3201, %v3202
        %v3204 = vand.u32 %v3203, 4294901760
        %3205 = vmatpush1.xpose.msra.mxu0 %v3204
        %3206 = vmatprep.subr.mxu0 0.0
        %v3207 = vand.u32 %v3074, 4294901760
        %v3208 = vsub.f32 %v3074, %v3207
        %v3209 = vand.u32 %v3208, 4294901760
        %v3210 = vsub.f32 %v3208, %v3209
        %v3211 = vand.u32 %v3210, 4294901760
        %3212 = vmatpush1.xpose.msra.mxu0 %v3211
        %3213 = vmatprep.subr.mxu0 0.0
        %3214 = vmatpush1.xpose.msra.mxu0 0.0
        %3215 = vmatprep.subr.mxu0 0.0
        %3216 = vmatpush1.xpose.msra.mxu0 0.0
        %3217 = vmatprep.subr.mxu0 0.0
        %3218 = vmatpush1.xpose.msra.mxu0 0.0
        %3219 = vmatprep.subr.mxu0 0.0
        %3220 = vmatpush1.xpose.msra.mxu0 0.0
        %3221 = vmatprep.subr.mxu0 0.0
        %3222 = vmatpush1.xpose.msra.mxu0 0.0
        %3223 = vmatprep.subr.mxu0 0.0
        %3224 = vmatpush1.xpose.msra.mxu0 0.0
        %3225 = vmatprep.subr.mxu0 0.0
        %3226 = vmatpush1.xpose.msra.mxu0 0.0
        %3227 = vmatprep.subr.mxu0 0.0
        %3228 = vmatpush1.xpose.msra.mxu0 0.0
        %3229 = vmatprep.subr.mxu0 0.0
        %3230 = vmatpush1.xpose.msra.mxu0 0.0
        %3231 = vmatprep.subr.mxu0 0.0
        %3232 = vmatpush1.xpose.msra.mxu0 0.0
        %3233 = vmatprep.subr.mxu0 0.0
        %3234 = vmatpush1.xpose.msra.mxu0 0.0
        %3235 = vmatprep.subr.mxu0 0.0
        %3236 = vmatpush1.xpose.msra.mxu0 0.0
        %3237 = vmatprep.subr.mxu0 0.0
        %3238 = vmatpush1.xpose.msra.mxu0 0.0
        %3239 = vmatprep.subr.mxu0 0.0
        %3240 = vmatpush1.xpose.msra.mxu0 0.0
        %3241 = vmatprep.subr.mxu0 0.0
        %3242 = vmatpush1.xpose.msra.mxu0 0.0
        %3243 = vmatprep.subr.mxu0 0.0
        %3244 = vmatpush1.xpose.msra.mxu0 0.0
        %3245 = vmatprep.subr.mxu0 0.0
        %3246 = vmatpush1.xpose.msra.mxu0 0.0
        %3247 = vmatprep.subr.mxu0 0.0
        %3248 = vmatpush1.xpose.msra.mxu0 0.0
        %3249 = vmatprep.subr.mxu0 0.0
        %3250 = vmatpush1.xpose.msra.mxu0 0.0
        %3251 = vmatprep.subr.mxu0 0.0
        %3252 = vmatpush1.xpose.msra.mxu0 0.0
        %3253 = vmatprep.subr.mxu0 0.0
        %3254 = vmatpush1.xpose.msra.mxu0 0.0
        %3255 = vmatprep.subr.mxu0 0.0
        %3256 = vmatpush1.xpose.msra.mxu0 0.0
        %3257 = vmatprep.subr.mxu0 0.0
        %3258 = vmatpush1.xpose.msra.mxu0 0.0
        %3259 = vmatprep.subr.mxu0 0.0
        %3260 = vmatpush1.xpose.msra.mxu0 0.0
        %3261 = vmatprep.subr.mxu0 0.0
        %3262 = vmatpush1.xpose.msra.mxu0 0.0
        %3263 = vmatprep.subr.mxu0 0.0
        %3264 = vmatpush1.xpose.msra.mxu0 0.0
        %3265 = vmatprep.subr.mxu0 0.0
        %3266 = vmatpush1.xpose.msra.mxu0 0.0
        %3267 = vmatprep.subr.mxu0 0.0
        %3268 = vmatpush1.xpose.msra.mxu0 0.0
        %3269 = vmatprep.mubr.f32.mxu0 0.0
        %v3270 = vand.u32 %v3060, 4294901760
        %3271 = vmatmul.mubr.f32.gmra.mrb[0].mxu0 %v3270
        %v3272 = vpop.f32.mrb[0].mxu0
        %v3273 = vadd.f32 %v3152, %v3272
        %v3274 = vpop.f32.mrb[0].mxu0
        %3275 = vmatprep.mubr.f32.mxu0 0.0
        %v3276 = vand.u32 %v3062, 4294901760
        %3277 = vmatmul.mubr.f32.gmra.mrb[0].mxu0 %v3276
        %v3278 = vpop.f32.mrb[0].mxu0
        %v3279 = vadd.f32 %v3162, %v3278
        %v3280 = vpop.f32.mrb[0].mxu0
        %3281 = vmatprep.mubr.f32.mxu0 0.0
        %v3282 = vand.u32 %v3064, 4294901760
        %3283 = vmatmul.mubr.f32.gmra.mrb[0].mxu0 %v3282
        %v3284 = vpop.f32.mrb[0].mxu0
        %v3285 = vadd.f32 %v3172, %v3284
        %v3286 = vpop.f32.mrb[0].mxu0
        %3287 = vmatprep.mubr.f32.mxu0 0.0
        %v3288 = vand.u32 %v3066, 4294901760
        %3289 = vmatmul.mubr.f32.gmra.mrb[0].mxu0 %v3288
        %v3290 = vpop.f32.mrb[0].mxu0
        %v3291 = vadd.f32 %v3182, %v3290
        %v3292 = vpop.f32.mrb[0].mxu0
        %3293 = vdwg.mxu0
        %3294 = vmatprep.subr.mxu0 0.0
        %v3295 = vand.u32 %v3068, 4294901760
        %v3296 = vsub.f32 %v3068, %v3295
        %3297 = vmatpush1.xpose.msra.mxu0 %v3296
        %3298 = vmatprep.subr.mxu0 0.0
        %v3299 = vand.u32 %v3070, 4294901760
        %v3300 = vsub.f32 %v3070, %v3299
        %3301 = vmatpush1.xpose.msra.mxu0 %v3300
        %3302 = vmatprep.subr.mxu0 0.0
        %v3303 = vand.u32 %v3072, 4294901760
        %v3304 = vsub.f32 %v3072, %v3303
        %3305 = vmatpush1.xpose.msra.mxu0 %v3304
        %3306 = vmatprep.subr.mxu0 0.0
        %v3307 = vand.u32 %v3074, 4294901760
        %v3308 = vsub.f32 %v3074, %v3307
        %3309 = vmatpush1.xpose.msra.mxu0 %v3308
        %3310 = vmatprep.subr.mxu0 0.0
        %3311 = vmatpush1.xpose.msra.mxu0 0.0
        %3312 = vmatprep.subr.mxu0 0.0
        %3313 = vmatpush1.xpose.msra.mxu0 0.0
        %3314 = vmatprep.subr.mxu0 0.0
        %3315 = vmatpush1.xpose.msra.mxu0 0.0
        %3316 = vmatprep.subr.mxu0 0.0
        %3317 = vmatpush1.xpose.msra.mxu0 0.0
        %3318 = vmatprep.subr.mxu0 0.0
        %3319 = vmatpush1.xpose.msra.mxu0 0.0
        %3320 = vmatprep.subr.mxu0 0.0
        %3321 = vmatpush1.xpose.msra.mxu0 0.0
        %3322 = vmatprep.subr.mxu0 0.0
        %3323 = vmatpush1.xpose.msra.mxu0 0.0
        %3324 = vmatprep.subr.mxu0 0.0
        %3325 = vmatpush1.xpose.msra.mxu0 0.0
        %3326 = vmatprep.subr.mxu0 0.0
        %3327 = vmatpush1.xpose.msra.mxu0 0.0
        %3328 = vmatprep.subr.mxu0 0.0
        %3329 = vmatpush1.xpose.msra.mxu0 0.0
        %3330 = vmatprep.subr.mxu0 0.0
        %3331 = vmatpush1.xpose.msra.mxu0 0.0
        %3332 = vmatprep.subr.mxu0 0.0
        %3333 = vmatpush1.xpose.msra.mxu0 0.0
        %3334 = vmatprep.subr.mxu0 0.0
        %3335 = vmatpush1.xpose.msra.mxu0 0.0
        %3336 = vmatprep.subr.mxu0 0.0
        %3337 = vmatpush1.xpose.msra.mxu0 0.0
        %3338 = vmatprep.subr.mxu0 0.0
        %3339 = vmatpush1.xpose.msra.mxu0 0.0
        %3340 = vmatprep.subr.mxu0 0.0
        %3341 = vmatpush1.xpose.msra.mxu0 0.0
        %3342 = vmatprep.subr.mxu0 0.0
        %3343 = vmatpush1.xpose.msra.mxu0 0.0
        %3344 = vmatprep.subr.mxu0 0.0
        %3345 = vmatpush1.xpose.msra.mxu0 0.0
        %3346 = vmatprep.subr.mxu0 0.0
        %3347 = vmatpush1.xpose.msra.mxu0 0.0
        %3348 = vmatprep.subr.mxu0 0.0
        %3349 = vmatpush1.xpose.msra.mxu0 0.0
        %3350 = vmatprep.subr.mxu0 0.0
        %3351 = vmatpush1.xpose.msra.mxu0 0.0
        %3352 = vmatprep.subr.mxu0 0.0
        %3353 = vmatpush1.xpose.msra.mxu0 0.0
        %3354 = vmatprep.subr.mxu0 0.0
        %3355 = vmatpush1.xpose.msra.mxu0 0.0
        %3356 = vmatprep.subr.mxu0 0.0
        %3357 = vmatpush1.xpose.msra.mxu0 0.0
        %3358 = vmatprep.subr.mxu0 0.0
        %3359 = vmatpush1.xpose.msra.mxu0 0.0
        %3360 = vmatprep.subr.mxu0 0.0
        %3361 = vmatpush1.xpose.msra.mxu0 0.0
        %3362 = vmatprep.subr.mxu0 0.0
        %3363 = vmatpush1.xpose.msra.mxu0 0.0
        %3364 = vmatprep.subr.mxu0 0.0
        %3365 = vmatpush1.xpose.msra.mxu0 0.0
        %3366 = vmatprep.mubr.f32.mxu0 0.0
        %v3367 = vand.u32 %v3060, 4294901760
        %v3368 = vsub.f32 %v3060, %v3367
        %3369 = vmatmul.mubr.f32.gmra.mrb[0].mxu0 %v3368
        %v3370 = vpop.f32.mrb[0].mxu0
        %v3371 = vadd.f32 %v3273, %v3370
        %v3372 = vpop.f32.mrb[0].mxu0
        %3373 = vmatprep.mubr.f32.mxu0 0.0
        %v3374 = vand.u32 %v3062, 4294901760
        %v3375 = vsub.f32 %v3062, %v3374
        %3376 = vmatmul.mubr.f32.gmra.mrb[0].mxu0 %v3375
        %v3377 = vpop.f32.mrb[0].mxu0
        %v3378 = vadd.f32 %v3279, %v3377
        %v3379 = vpop.f32.mrb[0].mxu0
        %3380 = vmatprep.mubr.f32.mxu0 0.0
        %v3381 = vand.u32 %v3064, 4294901760
        %v3382 = vsub.f32 %v3064, %v3381
        %3383 = vmatmul.mubr.f32.gmra.mrb[0].mxu0 %v3382
        %v3384 = vpop.f32.mrb[0].mxu0
        %v3385 = vadd.f32 %v3285, %v3384
        %v3386 = vpop.f32.mrb[0].mxu0
        %3387 = vmatprep.mubr.f32.mxu0 0.0
        %v3388 = vand.u32 %v3066, 4294901760
        %v3389 = vsub.f32 %v3066, %v3388
        %3390 = vmatmul.mubr.f32.gmra.mrb[0].mxu0 %v3389
        %v3391 = vpop.f32.mrb[0].mxu0
        %v3392 = vadd.f32 %v3291, %v3391
        %v3393 = vpop.f32.mrb[0].mxu0
        %3394 = vdwg.mxu0
        %3395 = vmatprep.subr.mxu0 0.0
        %v3396 = vand.u32 %v3068, 4294901760
        %3397 = vmatpush1.xpose.msra.mxu0 %v3396
        %3398 = vmatprep.subr.mxu0 0.0
        %v3399 = vand.u32 %v3070, 4294901760
        %3400 = vmatpush1.xpose.msra.mxu0 %v3399
        %3401 = vmatprep.subr.mxu0 0.0
        %v3402 = vand.u32 %v3072, 4294901760
        %3403 = vmatpush1.xpose.msra.mxu0 %v3402
        %3404 = vmatprep.subr.mxu0 0.0
        %v3405 = vand.u32 %v3074, 4294901760
        %3406 = vmatpush1.xpose.msra.mxu0 %v3405
        %3407 = vmatprep.subr.mxu0 0.0
        %3408 = vmatpush1.xpose.msra.mxu0 0.0
        %3409 = vmatprep.subr.mxu0 0.0
        %3410 = vmatpush1.xpose.msra.mxu0 0.0
        %3411 = vmatprep.subr.mxu0 0.0
        %3412 = vmatpush1.xpose.msra.mxu0 0.0
        %3413 = vmatprep.subr.mxu0 0.0
        %3414 = vmatpush1.xpose.msra.mxu0 0.0
        %3415 = vmatprep.subr.mxu0 0.0
        %3416 = vmatpush1.xpose.msra.mxu0 0.0
        %3417 = vmatprep.subr.mxu0 0.0
        %3418 = vmatpush1.xpose.msra.mxu0 0.0
        %3419 = vmatprep.subr.mxu0 0.0
        %3420 = vmatpush1.xpose.msra.mxu0 0.0
        %3421 = vmatprep.subr.mxu0 0.0
        %3422 = vmatpush1.xpose.msra.mxu0 0.0
        %3423 = vmatprep.subr.mxu0 0.0
        %3424 = vmatpush1.xpose.msra.mxu0 0.0
        %3425 = vmatprep.subr.mxu0 0.0
        %3426 = vmatpush1.xpose.msra.mxu0 0.0
        %3427 = vmatprep.subr.mxu0 0.0
        %3428 = vmatpush1.xpose.msra.mxu0 0.0
        %3429 = vmatprep.subr.mxu0 0.0
        %3430 = vmatpush1.xpose.msra.mxu0 0.0
        %3431 = vmatprep.subr.mxu0 0.0
        %3432 = vmatpush1.xpose.msra.mxu0 0.0
        %3433 = vmatprep.subr.mxu0 0.0
        %3434 = vmatpush1.xpose.msra.mxu0 0.0
        %3435 = vmatprep.subr.mxu0 0.0
        %3436 = vmatpush1.xpose.msra.mxu0 0.0
        %3437 = vmatprep.subr.mxu0 0.0
        %3438 = vmatpush1.xpose.msra.mxu0 0.0
        %3439 = vmatprep.subr.mxu0 0.0
        %3440 = vmatpush1.xpose.msra.mxu0 0.0
        %3441 = vmatprep.subr.mxu0 0.0
        %3442 = vmatpush1.xpose.msra.mxu0 0.0
        %3443 = vmatprep.subr.mxu0 0.0
        %3444 = vmatpush1.xpose.msra.mxu0 0.0
        %3445 = vmatprep.subr.mxu0 0.0
        %3446 = vmatpush1.xpose.msra.mxu0 0.0
        %3447 = vmatprep.subr.mxu0 0.0
        %3448 = vmatpush1.xpose.msra.mxu0 0.0
        %3449 = vmatprep.subr.mxu0 0.0
        %3450 = vmatpush1.xpose.msra.mxu0 0.0
        %3451 = vmatprep.subr.mxu0 0.0
        %3452 = vmatpush1.xpose.msra.mxu0 0.0
        %3453 = vmatprep.subr.mxu0 0.0
        %3454 = vmatpush1.xpose.msra.mxu0 0.0
        %3455 = vmatprep.subr.mxu0 0.0
        %3456 = vmatpush1.xpose.msra.mxu0 0.0
        %3457 = vmatprep.subr.mxu0 0.0
        %3458 = vmatpush1.xpose.msra.mxu0 0.0
        %3459 = vmatprep.subr.mxu0 0.0
        %3460 = vmatpush1.xpose.msra.mxu0 0.0
        %3461 = vmatprep.subr.mxu0 0.0
        %3462 = vmatpush1.xpose.msra.mxu0 0.0
        %3463 = vmatprep.mubr.f32.mxu0 0.0
        %v3464 = vand.u32 %v3060, 4294901760
        %v3465 = vsub.f32 %v3060, %v3464
        %v3466 = vand.u32 %v3465, 4294901760
        %3467 = vmatmul.mubr.f32.gmra.mrb[0].mxu0 %v3466
        %v3468 = vpop.f32.mrb[0].mxu0
        %v3469 = vadd.f32 %v3371, %v3468
        %v3470 = vpop.f32.mrb[0].mxu0
        %3471 = vmatprep.mubr.f32.mxu0 0.0
        %v3472 = vand.u32 %v3062, 4294901760
        %v3473 = vsub.f32 %v3062, %v3472
        %v3474 = vand.u32 %v3473, 4294901760
        %3475 = vmatmul.mubr.f32.gmra.mrb[0].mxu0 %v3474
        %v3476 = vpop.f32.mrb[0].mxu0
        %v3477 = vadd.f32 %v3378, %v3476
        %v3478 = vpop.f32.mrb[0].mxu0
        %3479 = vmatprep.mubr.f32.mxu0 0.0
        %v3480 = vand.u32 %v3064, 4294901760
        %v3481 = vsub.f32 %v3064, %v3480
        %v3482 = vand.u32 %v3481, 4294901760
        %3483 = vmatmul.mubr.f32.gmra.mrb[0].mxu0 %v3482
        %v3484 = vpop.f32.mrb[0].mxu0
        %v3485 = vadd.f32 %v3385, %v3484
        %v3486 = vpop.f32.mrb[0].mxu0
        %3487 = vmatprep.mubr.f32.mxu0 0.0
        %v3488 = vand.u32 %v3066, 4294901760
        %v3489 = vsub.f32 %v3066, %v3488
        %v3490 = vand.u32 %v3489, 4294901760
        %3491 = vmatmul.mubr.f32.gmra.mrb[0].mxu0 %v3490
        %v3492 = vpop.f32.mrb[0].mxu0
        %v3493 = vadd.f32 %v3392, %v3492
        %v3494 = vpop.f32.mrb[0].mxu0
        %3495 = vdwg.mxu0
        %3496 = vmatprep.subr.mxu0 0.0
        %v3497 = vand.u32 %v3068, 4294901760
        %v3498 = vsub.f32 %v3068, %v3497
        %v3499 = vand.u32 %v3498, 4294901760
        %3500 = vmatpush1.xpose.msra.mxu0 %v3499
        %3501 = vmatprep.subr.mxu0 0.0
        %v3502 = vand.u32 %v3070, 4294901760
        %v3503 = vsub.f32 %v3070, %v3502
        %v3504 = vand.u32 %v3503, 4294901760
        %3505 = vmatpush1.xpose.msra.mxu0 %v3504
        %3506 = vmatprep.subr.mxu0 0.0
        %v3507 = vand.u32 %v3072, 4294901760
        %v3508 = vsub.f32 %v3072, %v3507
        %v3509 = vand.u32 %v3508, 4294901760
        %3510 = vmatpush1.xpose.msra.mxu0 %v3509
        %3511 = vmatprep.subr.mxu0 0.0
        %v3512 = vand.u32 %v3074, 4294901760
        %v3513 = vsub.f32 %v3074, %v3512
        %v3514 = vand.u32 %v3513, 4294901760
        %3515 = vmatpush1.xpose.msra.mxu0 %v3514
        %3516 = vmatprep.subr.mxu0 0.0
        %3517 = vmatpush1.xpose.msra.mxu0 0.0
        %3518 = vmatprep.subr.mxu0 0.0
        %3519 = vmatpush1.xpose.msra.mxu0 0.0
        %3520 = vmatprep.subr.mxu0 0.0
        %3521 = vmatpush1.xpose.msra.mxu0 0.0
        %3522 = vmatprep.subr.mxu0 0.0
        %3523 = vmatpush1.xpose.msra.mxu0 0.0
        %3524 = vmatprep.subr.mxu0 0.0
        %3525 = vmatpush1.xpose.msra.mxu0 0.0
        %3526 = vmatprep.subr.mxu0 0.0
        %3527 = vmatpush1.xpose.msra.mxu0 0.0
        %3528 = vmatprep.subr.mxu0 0.0
        %3529 = vmatpush1.xpose.msra.mxu0 0.0
        %3530 = vmatprep.subr.mxu0 0.0
        %3531 = vmatpush1.xpose.msra.mxu0 0.0
        %3532 = vmatprep.subr.mxu0 0.0
        %3533 = vmatpush1.xpose.msra.mxu0 0.0
        %3534 = vmatprep.subr.mxu0 0.0
        %3535 = vmatpush1.xpose.msra.mxu0 0.0
        %3536 = vmatprep.subr.mxu0 0.0
        %3537 = vmatpush1.xpose.msra.mxu0 0.0
        %3538 = vmatprep.subr.mxu0 0.0
        %3539 = vmatpush1.xpose.msra.mxu0 0.0
        %3540 = vmatprep.subr.mxu0 0.0
        %3541 = vmatpush1.xpose.msra.mxu0 0.0
        %3542 = vmatprep.subr.mxu0 0.0
        %3543 = vmatpush1.xpose.msra.mxu0 0.0
        %3544 = vmatprep.subr.mxu0 0.0
        %3545 = vmatpush1.xpose.msra.mxu0 0.0
        %3546 = vmatprep.subr.mxu0 0.0
        %3547 = vmatpush1.xpose.msra.mxu0 0.0
        %3548 = vmatprep.subr.mxu0 0.0
        %3549 = vmatpush1.xpose.msra.mxu0 0.0
        %3550 = vmatprep.subr.mxu0 0.0
        %3551 = vmatpush1.xpose.msra.mxu0 0.0
        %3552 = vmatprep.subr.mxu0 0.0
        %3553 = vmatpush1.xpose.msra.mxu0 0.0
        %3554 = vmatprep.subr.mxu0 0.0
        %3555 = vmatpush1.xpose.msra.mxu0 0.0
        %3556 = vmatprep.subr.mxu0 0.0
        %3557 = vmatpush1.xpose.msra.mxu0 0.0
        %3558 = vmatprep.subr.mxu0 0.0
        %3559 = vmatpush1.xpose.msra.mxu0 0.0
        %3560 = vmatprep.subr.mxu0 0.0
        %3561 = vmatpush1.xpose.msra.mxu0 0.0
        %3562 = vmatprep.subr.mxu0 0.0
        %3563 = vmatpush1.xpose.msra.mxu0 0.0
        %3564 = vmatprep.subr.mxu0 0.0
        %3565 = vmatpush1.xpose.msra.mxu0 0.0
        %3566 = vmatprep.subr.mxu0 0.0
        %3567 = vmatpush1.xpose.msra.mxu0 0.0
        %3568 = vmatprep.subr.mxu0 0.0
        %3569 = vmatpush1.xpose.msra.mxu0 0.0
        %3570 = vmatprep.subr.mxu0 0.0
        %3571 = vmatpush1.xpose.msra.mxu0 0.0
        %3572 = vmatprep.mubr.f32.mxu0 0.0
        %v3573 = vand.u32 %v3060, 4294901760
        %3574 = vmatmul.mubr.f32.gmra.mrb[0].mxu0 %v3573
        %v3575 = vpop.f32.mrb[0].mxu0
        %v3576 = vadd.f32 %v3469, %v3575
        %v3577 = vpop.f32.mrb[0].mxu0
        %3578 = vmatprep.mubr.f32.mxu0 0.0
        %v3579 = vand.u32 %v3062, 4294901760
        %3580 = vmatmul.mubr.f32.gmra.mrb[0].mxu0 %v3579
        %v3581 = vpop.f32.mrb[0].mxu0
        %v3582 = vadd.f32 %v3477, %v3581
        %v3583 = vpop.f32.mrb[0].mxu0
        %3584 = vmatprep.mubr.f32.mxu0 0.0
        %v3585 = vand.u32 %v3064, 4294901760
        %3586 = vmatmul.mubr.f32.gmra.mrb[0].mxu0 %v3585
        %v3587 = vpop.f32.mrb[0].mxu0
        %v3588 = vadd.f32 %v3485, %v3587
        %v3589 = vpop.f32.mrb[0].mxu0
        %3590 = vmatprep.mubr.f32.mxu0 0.0
        %v3591 = vand.u32 %v3066, 4294901760
        %3592 = vmatmul.mubr.f32.gmra.mrb[0].mxu0 %v3591
        %v3593 = vpop.f32.mrb[0].mxu0
        %v3594 = vadd.f32 %v3493, %v3593
        %v3595 = vpop.f32.mrb[0].mxu0
        %3596 = vdwg.mxu0
        %3597 = vmatprep.subr.mxu0 0.0
        %v3598 = vand.u32 %v3068, 4294901760
        %3599 = vmatpush1.xpose.msra.mxu0 %v3598
        %3600 = vmatprep.subr.mxu0 0.0
        %v3601 = vand.u32 %v3070, 4294901760
        %3602 = vmatpush1.xpose.msra.mxu0 %v3601
        %3603 = vmatprep.subr.mxu0 0.0
        %v3604 = vand.u32 %v3072, 4294901760
        %3605 = vmatpush1.xpose.msra.mxu0 %v3604
        %3606 = vmatprep.subr.mxu0 0.0
        %v3607 = vand.u32 %v3074, 4294901760
        %3608 = vmatpush1.xpose.msra.mxu0 %v3607
        %3609 = vmatprep.subr.mxu0 0.0
        %3610 = vmatpush1.xpose.msra.mxu0 0.0
        %3611 = vmatprep.subr.mxu0 0.0
        %3612 = vmatpush1.xpose.msra.mxu0 0.0
        %3613 = vmatprep.subr.mxu0 0.0
        %3614 = vmatpush1.xpose.msra.mxu0 0.0
        %3615 = vmatprep.subr.mxu0 0.0
        %3616 = vmatpush1.xpose.msra.mxu0 0.0
        %3617 = vmatprep.subr.mxu0 0.0
        %3618 = vmatpush1.xpose.msra.mxu0 0.0
        %3619 = vmatprep.subr.mxu0 0.0
        %3620 = vmatpush1.xpose.msra.mxu0 0.0
        %3621 = vmatprep.subr.mxu0 0.0
        %3622 = vmatpush1.xpose.msra.mxu0 0.0
        %3623 = vmatprep.subr.mxu0 0.0
        %3624 = vmatpush1.xpose.msra.mxu0 0.0
        %3625 = vmatprep.subr.mxu0 0.0
        %3626 = vmatpush1.xpose.msra.mxu0 0.0
        %3627 = vmatprep.subr.mxu0 0.0
        %3628 = vmatpush1.xpose.msra.mxu0 0.0
        %3629 = vmatprep.subr.mxu0 0.0
        %3630 = vmatpush1.xpose.msra.mxu0 0.0
        %3631 = vmatprep.subr.mxu0 0.0
        %3632 = vmatpush1.xpose.msra.mxu0 0.0
        %3633 = vmatprep.subr.mxu0 0.0
        %3634 = vmatpush1.xpose.msra.mxu0 0.0
        %3635 = vmatprep.subr.mxu0 0.0
        %3636 = vmatpush1.xpose.msra.mxu0 0.0
        %3637 = vmatprep.subr.mxu0 0.0
        %3638 = vmatpush1.xpose.msra.mxu0 0.0
        %3639 = vmatprep.subr.mxu0 0.0
        %3640 = vmatpush1.xpose.msra.mxu0 0.0
        %3641 = vmatprep.subr.mxu0 0.0
        %3642 = vmatpush1.xpose.msra.mxu0 0.0
        %3643 = vmatprep.subr.mxu0 0.0
        %3644 = vmatpush1.xpose.msra.mxu0 0.0
        %3645 = vmatprep.subr.mxu0 0.0
        %3646 = vmatpush1.xpose.msra.mxu0 0.0
        %3647 = vmatprep.subr.mxu0 0.0
        %3648 = vmatpush1.xpose.msra.mxu0 0.0
        %3649 = vmatprep.subr.mxu0 0.0
        %3650 = vmatpush1.xpose.msra.mxu0 0.0
        %3651 = vmatprep.subr.mxu0 0.0
        %3652 = vmatpush1.xpose.msra.mxu0 0.0
        %3653 = vmatprep.subr.mxu0 0.0
        %3654 = vmatpush1.xpose.msra.mxu0 0.0
        %3655 = vmatprep.subr.mxu0 0.0
        %3656 = vmatpush1.xpose.msra.mxu0 0.0
        %3657 = vmatprep.subr.mxu0 0.0
        %3658 = vmatpush1.xpose.msra.mxu0 0.0
        %3659 = vmatprep.subr.mxu0 0.0
        %3660 = vmatpush1.xpose.msra.mxu0 0.0
        %3661 = vmatprep.subr.mxu0 0.0
        %3662 = vmatpush1.xpose.msra.mxu0 0.0
        %3663 = vmatprep.subr.mxu0 0.0
        %3664 = vmatpush1.xpose.msra.mxu0 0.0
        %3665 = vmatprep.mubr.f32.mxu0 0.0
        %v3666 = vand.u32 %v3060, 4294901760
        %3667 = vmatmul.mubr.f32.gmra.mrb[0].mxu0 %v3666
        %v3668 = vpop.f32.mrb[0].mxu0
        %v3669 = vadd.f32 %v3576, %v3668
        %v3670 = vpop.f32.mrb[0].mxu0
        %3671 = vmatprep.mubr.f32.mxu0 0.0
        %v3672 = vand.u32 %v3062, 4294901760
        %3673 = vmatmul.mubr.f32.gmra.mrb[0].mxu0 %v3672
        %v3674 = vpop.f32.mrb[0].mxu0
        %v3675 = vadd.f32 %v3582, %v3674
        %v3676 = vpop.f32.mrb[0].mxu0
        %3677 = vmatprep.mubr.f32.mxu0 0.0
        %v3678 = vand.u32 %v3064, 4294901760
        %3679 = vmatmul.mubr.f32.gmra.mrb[0].mxu0 %v3678
        %v3680 = vpop.f32.mrb[0].mxu0
        %v3681 = vadd.f32 %v3588, %v3680
        %v3682 = vpop.f32.mrb[0].mxu0
        %3683 = vmatprep.mubr.f32.mxu0 0.0
        %v3684 = vand.u32 %v3066, 4294901760
        %3685 = vmatmul.mubr.f32.gmra.mrb[0].mxu0 %v3684
        %v3686 = vpop.f32.mrb[0].mxu0
        %v3687 = vadd.f32 %v3594, %v3686
        %v3688 = vpop.f32.mrb[0].mxu0
        %3689 = vdwg.mxu0
        %v3690 = vsel %vm2995, %v3669, -inf
        %3691 = vmax.xlane.f32.xlu0 %v3690
        %v3692 = vpop.xlane.xlu0 %3691
        %v3693 = vsel %vm2995, %v3675, -inf
        %3694 = vmax.xlane.f32.xlu0 %v3693
        %v3695 = vpop.xlane.xlu0 %3694
        %v3696 = vsel %vm2995, %v3681, -inf
        %3697 = vmax.xlane.f32.xlu0 %v3696
        %v3698 = vpop.xlane.xlu0 %3697
        %v3699 = vsel %vm2995, %v3687, -inf
        %3700 = vmax.xlane.f32.xlu0 %v3699
        %v3701 = vpop.xlane.xlu0 %3700
        %v3702 = vsub.f32 %v3669, %v3692
        %v3703 = vsub.f32 %v3675, %v3695
        %v3704 = vsub.f32 %v3681, %v3698
        %v3705 = vsub.f32 %v3687, %v3701
        %v3706 = vmul.f32 %v3702, 1.442695
        %v3707 = vpow.pop %v3706
        %v3708 = vmul.f32 %v3703, 1.442695
        %v3709 = vpow.pop %v3708
        %v3710 = vmul.f32 %v3704, 1.442695
        %v3711 = vpow.pop %v3710
        %v3712 = vmul.f32 %v3705, 1.442695
        %v3713 = vpow.pop %v3712
        %v3714 = vsel %vm2995, %v3707, 0.0
        %3715 = vadd.xlane.f32.xlu0 %v3714
        %v3716 = vpop.xlane.xlu0 %3715
        %v3717 = vsel %vm2995, %v3709, 0.0
        %3718 = vadd.xlane.f32.xlu0 %v3717
        %v3719 = vpop.xlane.xlu0 %3718
        %v3720 = vsel %vm2995, %v3711, 0.0
        %3721 = vadd.xlane.f32.xlu0 %v3720
        %v3722 = vpop.xlane.xlu0 %3721
        %v3723 = vsel %vm2995, %v3713, 0.0
        %3724 = vadd.xlane.f32.xlu0 %v3723
        %v3725 = vpop.xlane.xlu0 %3724
        %v3726 = vrcp.pop %v3716
        %v3727 = vmul.f32 %v3707, %v3726
        %v3728 = vrcp.pop %v3719
        %v3729 = vmul.f32 %v3709, %v3728
        %v3730 = vrcp.pop %v3722
        %v3731 = vmul.f32 %v3711, %v3730
        %v3732 = vrcp.pop %v3725
        %v3733 = vmul.f32 %v3713, %v3732
        %s3734 = scalar_lea.vmem %s343, 32 [#allocation11]
        %3735 = vst.msk [vmem:[%s3734] sm:$0xff] %vm2995, %v3727
        %3736 = vst.msk [vmem:[%s3734 + $0x8] sm:$0xff] %vm2995, %v3729
        %3737 = vst.msk [vmem:[%s3734 + $0x10] sm:$0xff] %vm2995, %v3731
        %3738 = vst.msk [vmem:[%s3734 + $0x18] sm:$0xff] %vm2995, %v3733
        %3739 = vrot.lane.b32.xlu0 %v2319, 112
        %v3740 = vpop.permute.xlu0 %3739
        %3741 = vrot.lane.b32.xlu0 %v2326, 112
        %v3742 = vpop.permute.xlu0 %3741
        %3743 = vrot.lane.b32.xlu0 %v2333, 112
        %v3744 = vpop.permute.xlu0 %3743
        %3745 = vrot.lane.b32.xlu0 %v2340, 112
        %v3746 = vpop.permute.xlu0 %3745
        %3747 = vrot.lane.b32.xlu0 %v2319, 48
        %v3748 = vpop.permute.xlu0 %3747
        %3749 = vrot.lane.b32.xlu0 %v2326, 48
        %v3750 = vpop.permute.xlu0 %3749
        %3751 = vrot.lane.b32.xlu0 %v2333, 48
        %v3752 = vpop.permute.xlu0 %3751
        %3753 = vrot.lane.b32.xlu0 %v2340, 48
        %v3754 = vpop.permute.xlu0 %3753
        %v3755 = vsel %vm2364, %v3740, 0
        %v3757 = vsel %vm2364, %v3742, 0
        %v3759 = vsel %vm2364, %v3744, 0
        %v3761 = vsel %vm2364, %v3746, 0
        %v3763 = vsel %vm2364, %v3748, 0
        %v3765 = vsel %vm2364, %v3750, 0
        %v3767 = vsel %vm2364, %v3752, 0
        %v3769 = vsel %vm2364, %v3754, 0
        %3771 = vmatprep.subr.mxu0 0.0
        %v3772 = vand.u32 %v3763, 4294901760
        %3773 = vmatpush1.xpose.msra.mxu0 %v3772
        %3774 = vmatprep.subr.mxu0 0.0
        %v3775 = vand.u32 %v3765, 4294901760
        %3776 = vmatpush1.xpose.msra.mxu0 %v3775
        %3777 = vmatprep.subr.mxu0 0.0
        %v3778 = vand.u32 %v3767, 4294901760
        %3779 = vmatpush1.xpose.msra.mxu0 %v3778
        %3780 = vmatprep.subr.mxu0 0.0
        %v3781 = vand.u32 %v3769, 4294901760
        %3782 = vmatpush1.xpose.msra.mxu0 %v3781
        %3783 = vmatprep.subr.mxu0 0.0
        %3784 = vmatpush1.xpose.msra.mxu0 0.0
        %3785 = vmatprep.subr.mxu0 0.0
        %3786 = vmatpush1.xpose.msra.mxu0 0.0
        %3787 = vmatprep.subr.mxu0 0.0
        %3788 = vmatpush1.xpose.msra.mxu0 0.0
        %3789 = vmatprep.subr.mxu0 0.0
        %3790 = vmatpush1.xpose.msra.mxu0 0.0
        %3791 = vmatprep.subr.mxu0 0.0
        %3792 = vmatpush1.xpose.msra.mxu0 0.0
        %3793 = vmatprep.subr.mxu0 0.0
        %3794 = vmatpush1.xpose.msra.mxu0 0.0
        %3795 = vmatprep.subr.mxu0 0.0
        %3796 = vmatpush1.xpose.msra.mxu0 0.0
        %3797 = vmatprep.subr.mxu0 0.0
        %3798 = vmatpush1.xpose.msra.mxu0 0.0
        %3799 = vmatprep.subr.mxu0 0.0
        %3800 = vmatpush1.xpose.msra.mxu0 0.0
        %3801 = vmatprep.subr.mxu0 0.0
        %3802 = vmatpush1.xpose.msra.mxu0 0.0
        %3803 = vmatprep.subr.mxu0 0.0
        %3804 = vmatpush1.xpose.msra.mxu0 0.0
        %3805 = vmatprep.subr.mxu0 0.0
        %3806 = vmatpush1.xpose.msra.mxu0 0.0
        %3807 = vmatprep.subr.mxu0 0.0
        %3808 = vmatpush1.xpose.msra.mxu0 0.0
        %3809 = vmatprep.subr.mxu0 0.0
        %3810 = vmatpush1.xpose.msra.mxu0 0.0
        %3811 = vmatprep.subr.mxu0 0.0
        %3812 = vmatpush1.xpose.msra.mxu0 0.0
        %3813 = vmatprep.subr.mxu0 0.0
        %3814 = vmatpush1.xpose.msra.mxu0 0.0
        %3815 = vmatprep.subr.mxu0 0.0
        %3816 = vmatpush1.xpose.msra.mxu0 0.0
        %3817 = vmatprep.subr.mxu0 0.0
        %3818 = vmatpush1.xpose.msra.mxu0 0.0
        %3819 = vmatprep.subr.mxu0 0.0
        %3820 = vmatpush1.xpose.msra.mxu0 0.0
        %3821 = vmatprep.subr.mxu0 0.0
        %3822 = vmatpush1.xpose.msra.mxu0 0.0
        %3823 = vmatprep.subr.mxu0 0.0
        %3824 = vmatpush1.xpose.msra.mxu0 0.0
        %3825 = vmatprep.subr.mxu0 0.0
        %3826 = vmatpush1.xpose.msra.mxu0 0.0
        %3827 = vmatprep.subr.mxu0 0.0
        %3828 = vmatpush1.xpose.msra.mxu0 0.0
        %3829 = vmatprep.subr.mxu0 0.0
        %3830 = vmatpush1.xpose.msra.mxu0 0.0
        %3831 = vmatprep.subr.mxu0 0.0
        %3832 = vmatpush1.xpose.msra.mxu0 0.0
        %3833 = vmatprep.subr.mxu0 0.0
        %3834 = vmatpush1.xpose.msra.mxu0 0.0
        %3835 = vmatprep.subr.mxu0 0.0
        %3836 = vmatpush1.xpose.msra.mxu0 0.0
        %3837 = vmatprep.subr.mxu0 0.0
        %3838 = vmatpush1.xpose.msra.mxu0 0.0
        %3839 = vmatprep.mubr.f32.mxu0 0.0
        %v3840 = vand.u32 %v3755, 4294901760
        %v3841 = vsub.f32 %v3755, %v3840
        %v3842 = vand.u32 %v3841, 4294901760
        %v3843 = vsub.f32 %v3841, %v3842
        %v3844 = vand.u32 %v3843, 4294901760
        %3845 = vmatmul.mubr.f32.gmra.mrb[0].mxu0 %v3844
        %v3846 = vpop.f32.mrb[0].mxu0
        %v3847 = vadd.f32 0.0, %v3846
        %v3848 = vpop.f32.mrb[0].mxu0
        %3849 = vmatprep.mubr.f32.mxu0 0.0
        %v3850 = vand.u32 %v3757, 4294901760
        %v3851 = vsub.f32 %v3757, %v3850
        %v3852 = vand.u32 %v3851, 4294901760
        %v3853 = vsub.f32 %v3851, %v3852
        %v3854 = vand.u32 %v3853, 4294901760
        %3855 = vmatmul.mubr.f32.gmra.mrb[0].mxu0 %v3854
        %v3856 = vpop.f32.mrb[0].mxu0
        %v3857 = vadd.f32 0.0, %v3856
        %v3858 = vpop.f32.mrb[0].mxu0
        %3859 = vmatprep.mubr.f32.mxu0 0.0
        %v3860 = vand.u32 %v3759, 4294901760
        %v3861 = vsub.f32 %v3759, %v3860
        %v3862 = vand.u32 %v3861, 4294901760
        %v3863 = vsub.f32 %v3861, %v3862
        %v3864 = vand.u32 %v3863, 4294901760
        %3865 = vmatmul.mubr.f32.gmra.mrb[0].mxu0 %v3864
        %v3866 = vpop.f32.mrb[0].mxu0
        %v3867 = vadd.f32 0.0, %v3866
        %v3868 = vpop.f32.mrb[0].mxu0
        %3869 = vmatprep.mubr.f32.mxu0 0.0
        %v3870 = vand.u32 %v3761, 4294901760
        %v3871 = vsub.f32 %v3761, %v3870
        %v3872 = vand.u32 %v3871, 4294901760
        %v3873 = vsub.f32 %v3871, %v3872
        %v3874 = vand.u32 %v3873, 4294901760
        %3875 = vmatmul.mubr.f32.gmra.mrb[0].mxu0 %v3874
        %v3876 = vpop.f32.mrb[0].mxu0
        %v3877 = vadd.f32 0.0, %v3876
        %v3878 = vpop.f32.mrb[0].mxu0
        %3879 = vdwg.mxu0
        %3880 = vmatprep.subr.mxu0 0.0
        %v3881 = vand.u32 %v3763, 4294901760
        %v3882 = vsub.f32 %v3763, %v3881
        %v3883 = vand.u32 %v3882, 4294901760
        %v3884 = vsub.f32 %v3882, %v3883
        %v3885 = vand.u32 %v3884, 4294901760
        %3886 = vmatpush1.xpose.msra.mxu0 %v3885
        %3887 = vmatprep.subr.mxu0 0.0
        %v3888 = vand.u32 %v3765, 4294901760
        %v3889 = vsub.f32 %v3765, %v3888
        %v3890 = vand.u32 %v3889, 4294901760
        %v3891 = vsub.f32 %v3889, %v3890
        %v3892 = vand.u32 %v3891, 4294901760
        %3893 = vmatpush1.xpose.msra.mxu0 %v3892
        %3894 = vmatprep.subr.mxu0 0.0
        %v3895 = vand.u32 %v3767, 4294901760
        %v3896 = vsub.f32 %v3767, %v3895
        %v3897 = vand.u32 %v3896, 4294901760
        %v3898 = vsub.f32 %v3896, %v3897
        %v3899 = vand.u32 %v3898, 4294901760
        %3900 = vmatpush1.xpose.msra.mxu0 %v3899
        %3901 = vmatprep.subr.mxu0 0.0
        %v3902 = vand.u32 %v3769, 4294901760
        %v3903 = vsub.f32 %v3769, %v3902
        %v3904 = vand.u32 %v3903, 4294901760
        %v3905 = vsub.f32 %v3903, %v3904
        %v3906 = vand.u32 %v3905, 4294901760
        %3907 = vmatpush1.xpose.msra.mxu0 %v3906
        %3908 = vmatprep.subr.mxu0 0.0
        %3909 = vmatpush1.xpose.msra.mxu0 0.0
        %3910 = vmatprep.subr.mxu0 0.0
        %3911 = vmatpush1.xpose.msra.mxu0 0.0
        %3912 = vmatprep.subr.mxu0 0.0
        %3913 = vmatpush1.xpose.msra.mxu0 0.0
        %3914 = vmatprep.subr.mxu0 0.0
        %3915 = vmatpush1.xpose.msra.mxu0 0.0
        %3916 = vmatprep.subr.mxu0 0.0
        %3917 = vmatpush1.xpose.msra.mxu0 0.0
        %3918 = vmatprep.subr.mxu0 0.0
        %3919 = vmatpush1.xpose.msra.mxu0 0.0
        %3920 = vmatprep.subr.mxu0 0.0
        %3921 = vmatpush1.xpose.msra.mxu0 0.0
        %3922 = vmatprep.subr.mxu0 0.0
        %3923 = vmatpush1.xpose.msra.mxu0 0.0
        %3924 = vmatprep.subr.mxu0 0.0
        %3925 = vmatpush1.xpose.msra.mxu0 0.0
        %3926 = vmatprep.subr.mxu0 0.0
        %3927 = vmatpush1.xpose.msra.mxu0 0.0
        %3928 = vmatprep.subr.mxu0 0.0
        %3929 = vmatpush1.xpose.msra.mxu0 0.0
        %3930 = vmatprep.subr.mxu0 0.0
        %3931 = vmatpush1.xpose.msra.mxu0 0.0
        %3932 = vmatprep.subr.mxu0 0.0
        %3933 = vmatpush1.xpose.msra.mxu0 0.0
        %3934 = vmatprep.subr.mxu0 0.0
        %3935 = vmatpush1.xpose.msra.mxu0 0.0
        %3936 = vmatprep.subr.mxu0 0.0
        %3937 = vmatpush1.xpose.msra.mxu0 0.0
        %3938 = vmatprep.subr.mxu0 0.0
        %3939 = vmatpush1.xpose.msra.mxu0 0.0
        %3940 = vmatprep.subr.mxu0 0.0
        %3941 = vmatpush1.xpose.msra.mxu0 0.0
        %3942 = vmatprep.subr.mxu0 0.0
        %3943 = vmatpush1.xpose.msra.mxu0 0.0
        %3944 = vmatprep.subr.mxu0 0.0
        %3945 = vmatpush1.xpose.msra.mxu0 0.0
        %3946 = vmatprep.subr.mxu0 0.0
        %3947 = vmatpush1.xpose.msra.mxu0 0.0
        %3948 = vmatprep.subr.mxu0 0.0
        %3949 = vmatpush1.xpose.msra.mxu0 0.0
        %3950 = vmatprep.subr.mxu0 0.0
        %3951 = vmatpush1.xpose.msra.mxu0 0.0
        %3952 = vmatprep.subr.mxu0 0.0
        %3953 = vmatpush1.xpose.msra.mxu0 0.0
        %3954 = vmatprep.subr.mxu0 0.0
        %3955 = vmatpush1.xpose.msra.mxu0 0.0
        %3956 = vmatprep.subr.mxu0 0.0
        %3957 = vmatpush1.xpose.msra.mxu0 0.0
        %3958 = vmatprep.subr.mxu0 0.0
        %3959 = vmatpush1.xpose.msra.mxu0 0.0
        %3960 = vmatprep.subr.mxu0 0.0
        %3961 = vmatpush1.xpose.msra.mxu0 0.0
        %3962 = vmatprep.subr.mxu0 0.0
        %3963 = vmatpush1.xpose.msra.mxu0 0.0
        %3964 = vmatprep.mubr.f32.mxu0 0.0
        %v3965 = vand.u32 %v3755, 4294901760
        %3966 = vmatmul.mubr.f32.gmra.mrb[0].mxu0 %v3965
        %v3967 = vpop.f32.mrb[0].mxu0
        %v3968 = vadd.f32 %v3847, %v3967
        %v3969 = vpop.f32.mrb[0].mxu0
        %3970 = vmatprep.mubr.f32.mxu0 0.0
        %v3971 = vand.u32 %v3757, 4294901760
        %3972 = vmatmul.mubr.f32.gmra.mrb[0].mxu0 %v3971
        %v3973 = vpop.f32.mrb[0].mxu0
        %v3974 = vadd.f32 %v3857, %v3973
        %v3975 = vpop.f32.mrb[0].mxu0
        %3976 = vmatprep.mubr.f32.mxu0 0.0
        %v3977 = vand.u32 %v3759, 4294901760
        %3978 = vmatmul.mubr.f32.gmra.mrb[0].mxu0 %v3977
        %v3979 = vpop.f32.mrb[0].mxu0
        %v3980 = vadd.f32 %v3867, %v3979
        %v3981 = vpop.f32.mrb[0].mxu0
        %3982 = vmatprep.mubr.f32.mxu0 0.0
        %v3983 = vand.u32 %v3761, 4294901760
        %3984 = vmatmul.mubr.f32.gmra.mrb[0].mxu0 %v3983
        %v3985 = vpop.f32.mrb[0].mxu0
        %v3986 = vadd.f32 %v3877, %v3985
        %v3987 = vpop.f32.mrb[0].mxu0
        %3988 = vdwg.mxu0
        %3989 = vmatprep.subr.mxu0 0.0
        %v3990 = vand.u32 %v3763, 4294901760
        %v3991 = vsub.f32 %v3763, %v3990
        %3992 = vmatpush1.xpose.msra.mxu0 %v3991
        %3993 = vmatprep.subr.mxu0 0.0
        %v3994 = vand.u32 %v3765, 4294901760
        %v3995 = vsub.f32 %v3765, %v3994
        %3996 = vmatpush1.xpose.msra.mxu0 %v3995
        %3997 = vmatprep.subr.mxu0 0.0
        %v3998 = vand.u32 %v3767, 4294901760
        %v3999 = vsub.f32 %v3767, %v3998
        %4000 = vmatpush1.xpose.msra.mxu0 %v3999
        %4001 = vmatprep.subr.mxu0 0.0
        %v4002 = vand.u32 %v3769, 4294901760
        %v4003 = vsub.f32 %v3769, %v4002
        %4004 = vmatpush1.xpose.msra.mxu0 %v4003
        %4005 = vmatprep.subr.mxu0 0.0
        %4006 = vmatpush1.xpose.msra.mxu0 0.0
        %4007 = vmatprep.subr.mxu0 0.0
        %4008 = vmatpush1.xpose.msra.mxu0 0.0
        %4009 = vmatprep.subr.mxu0 0.0
        %4010 = vmatpush1.xpose.msra.mxu0 0.0
        %4011 = vmatprep.subr.mxu0 0.0
        %4012 = vmatpush1.xpose.msra.mxu0 0.0
        %4013 = vmatprep.subr.mxu0 0.0
        %4014 = vmatpush1.xpose.msra.mxu0 0.0
        %4015 = vmatprep.subr.mxu0 0.0
        %4016 = vmatpush1.xpose.msra.mxu0 0.0
        %4017 = vmatprep.subr.mxu0 0.0
        %4018 = vmatpush1.xpose.msra.mxu0 0.0
        %4019 = vmatprep.subr.mxu0 0.0
        %4020 = vmatpush1.xpose.msra.mxu0 0.0
        %4021 = vmatprep.subr.mxu0 0.0
        %4022 = vmatpush1.xpose.msra.mxu0 0.0
        %4023 = vmatprep.subr.mxu0 0.0
        %4024 = vmatpush1.xpose.msra.mxu0 0.0
        %4025 = vmatprep.subr.mxu0 0.0
        %4026 = vmatpush1.xpose.msra.mxu0 0.0
        %4027 = vmatprep.subr.mxu0 0.0
        %4028 = vmatpush1.xpose.msra.mxu0 0.0
        %4029 = vmatprep.subr.mxu0 0.0
        %4030 = vmatpush1.xpose.msra.mxu0 0.0
        %4031 = vmatprep.subr.mxu0 0.0
        %4032 = vmatpush1.xpose.msra.mxu0 0.0
        %4033 = vmatprep.subr.mxu0 0.0
        %4034 = vmatpush1.xpose.msra.mxu0 0.0
        %4035 = vmatprep.subr.mxu0 0.0
        %4036 = vmatpush1.xpose.msra.mxu0 0.0
        %4037 = vmatprep.subr.mxu0 0.0
        %4038 = vmatpush1.xpose.msra.mxu0 0.0
        %4039 = vmatprep.subr.mxu0 0.0
        %4040 = vmatpush1.xpose.msra.mxu0 0.0
        %4041 = vmatprep.subr.mxu0 0.0
        %4042 = vmatpush1.xpose.msra.mxu0 0.0
        %4043 = vmatprep.subr.mxu0 0.0
        %4044 = vmatpush1.xpose.msra.mxu0 0.0
        %4045 = vmatprep.subr.mxu0 0.0
        %4046 = vmatpush1.xpose.msra.mxu0 0.0
        %4047 = vmatprep.subr.mxu0 0.0
        %4048 = vmatpush1.xpose.msra.mxu0 0.0
        %4049 = vmatprep.subr.mxu0 0.0
        %4050 = vmatpush1.xpose.msra.mxu0 0.0
        %4051 = vmatprep.subr.mxu0 0.0
        %4052 = vmatpush1.xpose.msra.mxu0 0.0
        %4053 = vmatprep.subr.mxu0 0.0
        %4054 = vmatpush1.xpose.msra.mxu0 0.0
        %4055 = vmatprep.subr.mxu0 0.0
        %4056 = vmatpush1.xpose.msra.mxu0 0.0
        %4057 = vmatprep.subr.mxu0 0.0
        %4058 = vmatpush1.xpose.msra.mxu0 0.0
        %4059 = vmatprep.subr.mxu0 0.0
        %4060 = vmatpush1.xpose.msra.mxu0 0.0
        %4061 = vmatprep.mubr.f32.mxu0 0.0
        %v4062 = vand.u32 %v3755, 4294901760
        %v4063 = vsub.f32 %v3755, %v4062
        %4064 = vmatmul.mubr.f32.gmra.mrb[0].mxu0 %v4063
        %v4065 = vpop.f32.mrb[0].mxu0
        %v4066 = vadd.f32 %v3968, %v4065
        %v4067 = vpop.f32.mrb[0].mxu0
        %4068 = vmatprep.mubr.f32.mxu0 0.0
        %v4069 = vand.u32 %v3757, 4294901760
        %v4070 = vsub.f32 %v3757, %v4069
        %4071 = vmatmul.mubr.f32.gmra.mrb[0].mxu0 %v4070
        %v4072 = vpop.f32.mrb[0].mxu0
        %v4073 = vadd.f32 %v3974, %v4072
        %v4074 = vpop.f32.mrb[0].mxu0
        %4075 = vmatprep.mubr.f32.mxu0 0.0
        %v4076 = vand.u32 %v3759, 4294901760
        %v4077 = vsub.f32 %v3759, %v4076
        %4078 = vmatmul.mubr.f32.gmra.mrb[0].mxu0 %v4077
        %v4079 = vpop.f32.mrb[0].mxu0
        %v4080 = vadd.f32 %v3980, %v4079
        %v4081 = vpop.f32.mrb[0].mxu0
        %4082 = vmatprep.mubr.f32.mxu0 0.0
        %v4083 = vand.u32 %v3761, 4294901760
        %v4084 = vsub.f32 %v3761, %v4083
        %4085 = vmatmul.mubr.f32.gmra.mrb[0].mxu0 %v4084
        %v4086 = vpop.f32.mrb[0].mxu0
        %v4087 = vadd.f32 %v3986, %v4086
        %v4088 = vpop.f32.mrb[0].mxu0
        %4089 = vdwg.mxu0
        %4090 = vmatprep.subr.mxu0 0.0
        %v4091 = vand.u32 %v3763, 4294901760
        %4092 = vmatpush1.xpose.msra.mxu0 %v4091
        %4093 = vmatprep.subr.mxu0 0.0
        %v4094 = vand.u32 %v3765, 4294901760
        %4095 = vmatpush1.xpose.msra.mxu0 %v4094
        %4096 = vmatprep.subr.mxu0 0.0
        %v4097 = vand.u32 %v3767, 4294901760
        %4098 = vmatpush1.xpose.msra.mxu0 %v4097
        %4099 = vmatprep.subr.mxu0 0.0
        %v4100 = vand.u32 %v3769, 4294901760
        %4101 = vmatpush1.xpose.msra.mxu0 %v4100
        %4102 = vmatprep.subr.mxu0 0.0
        %4103 = vmatpush1.xpose.msra.mxu0 0.0
        %4104 = vmatprep.subr.mxu0 0.0
        %4105 = vmatpush1.xpose.msra.mxu0 0.0
        %4106 = vmatprep.subr.mxu0 0.0
        %4107 = vmatpush1.xpose.msra.mxu0 0.0
        %4108 = vmatprep.subr.mxu0 0.0
        %4109 = vmatpush1.xpose.msra.mxu0 0.0
        %4110 = vmatprep.subr.mxu0 0.0
        %4111 = vmatpush1.xpose.msra.mxu0 0.0
        %4112 = vmatprep.subr.mxu0 0.0
        %4113 = vmatpush1.xpose.msra.mxu0 0.0
        %4114 = vmatprep.subr.mxu0 0.0
        %4115 = vmatpush1.xpose.msra.mxu0 0.0
        %4116 = vmatprep.subr.mxu0 0.0
        %4117 = vmatpush1.xpose.msra.mxu0 0.0
        %4118 = vmatprep.subr.mxu0 0.0
        %4119 = vmatpush1.xpose.msra.mxu0 0.0
        %4120 = vmatprep.subr.mxu0 0.0
        %4121 = vmatpush1.xpose.msra.mxu0 0.0
        %4122 = vmatprep.subr.mxu0 0.0
        %4123 = vmatpush1.xpose.msra.mxu0 0.0
        %4124 = vmatprep.subr.mxu0 0.0
        %4125 = vmatpush1.xpose.msra.mxu0 0.0
        %4126 = vmatprep.subr.mxu0 0.0
        %4127 = vmatpush1.xpose.msra.mxu0 0.0
        %4128 = vmatprep.subr.mxu0 0.0
        %4129 = vmatpush1.xpose.msra.mxu0 0.0
        %4130 = vmatprep.subr.mxu0 0.0
        %4131 = vmatpush1.xpose.msra.mxu0 0.0
        %4132 = vmatprep.subr.mxu0 0.0
        %4133 = vmatpush1.xpose.msra.mxu0 0.0
        %4134 = vmatprep.subr.mxu0 0.0
        %4135 = vmatpush1.xpose.msra.mxu0 0.0
        %4136 = vmatprep.subr.mxu0 0.0
        %4137 = vmatpush1.xpose.msra.mxu0 0.0
        %4138 = vmatprep.subr.mxu0 0.0
        %4139 = vmatpush1.xpose.msra.mxu0 0.0
        %4140 = vmatprep.subr.mxu0 0.0
        %4141 = vmatpush1.xpose.msra.mxu0 0.0
        %4142 = vmatprep.subr.mxu0 0.0
        %4143 = vmatpush1.xpose.msra.mxu0 0.0
        %4144 = vmatprep.subr.mxu0 0.0
        %4145 = vmatpush1.xpose.msra.mxu0 0.0
        %4146 = vmatprep.subr.mxu0 0.0
        %4147 = vmatpush1.xpose.msra.mxu0 0.0
        %4148 = vmatprep.subr.mxu0 0.0
        %4149 = vmatpush1.xpose.msra.mxu0 0.0
        %4150 = vmatprep.subr.mxu0 0.0
        %4151 = vmatpush1.xpose.msra.mxu0 0.0
        %4152 = vmatprep.subr.mxu0 0.0
        %4153 = vmatpush1.xpose.msra.mxu0 0.0
        %4154 = vmatprep.subr.mxu0 0.0
        %4155 = vmatpush1.xpose.msra.mxu0 0.0
        %4156 = vmatprep.subr.mxu0 0.0
        %4157 = vmatpush1.xpose.msra.mxu0 0.0
        %4158 = vmatprep.mubr.f32.mxu0 0.0
        %v4159 = vand.u32 %v3755, 4294901760
        %v4160 = vsub.f32 %v3755, %v4159
        %v4161 = vand.u32 %v4160, 4294901760
        %4162 = vmatmul.mubr.f32.gmra.mrb[0].mxu0 %v4161
        %v4163 = vpop.f32.mrb[0].mxu0
        %v4164 = vadd.f32 %v4066, %v4163
        %v4165 = vpop.f32.mrb[0].mxu0
        %4166 = vmatprep.mubr.f32.mxu0 0.0
        %v4167 = vand.u32 %v3757, 4294901760
        %v4168 = vsub.f32 %v3757, %v4167
        %v4169 = vand.u32 %v4168, 4294901760
        %4170 = vmatmul.mubr.f32.gmra.mrb[0].mxu0 %v4169
        %v4171 = vpop.f32.mrb[0].mxu0
        %v4172 = vadd.f32 %v4073, %v4171
        %v4173 = vpop.f32.mrb[0].mxu0
        %4174 = vmatprep.mubr.f32.mxu0 0.0
        %v4175 = vand.u32 %v3759, 4294901760
        %v4176 = vsub.f32 %v3759, %v4175
        %v4177 = vand.u32 %v4176, 4294901760
        %4178 = vmatmul.mubr.f32.gmra.mrb[0].mxu0 %v4177
        %v4179 = vpop.f32.mrb[0].mxu0
        %v4180 = vadd.f32 %v4080, %v4179
        %v4181 = vpop.f32.mrb[0].mxu0
        %4182 = vmatprep.mubr.f32.mxu0 0.0
        %v4183 = vand.u32 %v3761, 4294901760
        %v4184 = vsub.f32 %v3761, %v4183
        %v4185 = vand.u32 %v4184, 4294901760
        %4186 = vmatmul.mubr.f32.gmra.mrb[0].mxu0 %v4185
        %v4187 = vpop.f32.mrb[0].mxu0
        %v4188 = vadd.f32 %v4087, %v4187
        %v4189 = vpop.f32.mrb[0].mxu0
        %4190 = vdwg.mxu0
        %4191 = vmatprep.subr.mxu0 0.0
        %v4192 = vand.u32 %v3763, 4294901760
        %v4193 = vsub.f32 %v3763, %v4192
        %v4194 = vand.u32 %v4193, 4294901760
        %4195 = vmatpush1.xpose.msra.mxu0 %v4194
        %4196 = vmatprep.subr.mxu0 0.0
        %v4197 = vand.u32 %v3765, 4294901760
        %v4198 = vsub.f32 %v3765, %v4197
        %v4199 = vand.u32 %v4198, 4294901760
        %4200 = vmatpush1.xpose.msra.mxu0 %v4199
        %4201 = vmatprep.subr.mxu0 0.0
        %v4202 = vand.u32 %v3767, 4294901760
        %v4203 = vsub.f32 %v3767, %v4202
        %v4204 = vand.u32 %v4203, 4294901760
        %4205 = vmatpush1.xpose.msra.mxu0 %v4204
        %4206 = vmatprep.subr.mxu0 0.0
        %v4207 = vand.u32 %v3769, 4294901760
        %v4208 = vsub.f32 %v3769, %v4207
        %v4209 = vand.u32 %v4208, 4294901760
        %4210 = vmatpush1.xpose.msra.mxu0 %v4209
        %4211 = vmatprep.subr.mxu0 0.0
        %4212 = vmatpush1.xpose.msra.mxu0 0.0
        %4213 = vmatprep.subr.mxu0 0.0
        %4214 = vmatpush1.xpose.msra.mxu0 0.0
        %4215 = vmatprep.subr.mxu0 0.0
        %4216 = vmatpush1.xpose.msra.mxu0 0.0
        %4217 = vmatprep.subr.mxu0 0.0
        %4218 = vmatpush1.xpose.msra.mxu0 0.0
        %4219 = vmatprep.subr.mxu0 0.0
        %4220 = vmatpush1.xpose.msra.mxu0 0.0
        %4221 = vmatprep.subr.mxu0 0.0
        %4222 = vmatpush1.xpose.msra.mxu0 0.0
        %4223 = vmatprep.subr.mxu0 0.0
        %4224 = vmatpush1.xpose.msra.mxu0 0.0
        %4225 = vmatprep.subr.mxu0 0.0
        %4226 = vmatpush1.xpose.msra.mxu0 0.0
        %4227 = vmatprep.subr.mxu0 0.0
        %4228 = vmatpush1.xpose.msra.mxu0 0.0
        %4229 = vmatprep.subr.mxu0 0.0
        %4230 = vmatpush1.xpose.msra.mxu0 0.0
        %4231 = vmatprep.subr.mxu0 0.0
        %4232 = vmatpush1.xpose.msra.mxu0 0.0
        %4233 = vmatprep.subr.mxu0 0.0
        %4234 = vmatpush1.xpose.msra.mxu0 0.0
        %4235 = vmatprep.subr.mxu0 0.0
        %4236 = vmatpush1.xpose.msra.mxu0 0.0
        %4237 = vmatprep.subr.mxu0 0.0
        %4238 = vmatpush1.xpose.msra.mxu0 0.0
        %4239 = vmatprep.subr.mxu0 0.0
        %4240 = vmatpush1.xpose.msra.mxu0 0.0
        %4241 = vmatprep.subr.mxu0 0.0
        %4242 = vmatpush1.xpose.msra.mxu0 0.0
        %4243 = vmatprep.subr.mxu0 0.0
        %4244 = vmatpush1.xpose.msra.mxu0 0.0
        %4245 = vmatprep.subr.mxu0 0.0
        %4246 = vmatpush1.xpose.msra.mxu0 0.0
        %4247 = vmatprep.subr.mxu0 0.0
        %4248 = vmatpush1.xpose.msra.mxu0 0.0
        %4249 = vmatprep.subr.mxu0 0.0
        %4250 = vmatpush1.xpose.msra.mxu0 0.0
        %4251 = vmatprep.subr.mxu0 0.0
        %4252 = vmatpush1.xpose.msra.mxu0 0.0
        %4253 = vmatprep.subr.mxu0 0.0
        %4254 = vmatpush1.xpose.msra.mxu0 0.0
        %4255 = vmatprep.subr.mxu0 0.0
        %4256 = vmatpush1.xpose.msra.mxu0 0.0
        %4257 = vmatprep.subr.mxu0 0.0
        %4258 = vmatpush1.xpose.msra.mxu0 0.0
        %4259 = vmatprep.subr.mxu0 0.0
        %4260 = vmatpush1.xpose.msra.mxu0 0.0
        %4261 = vmatprep.subr.mxu0 0.0
        %4262 = vmatpush1.xpose.msra.mxu0 0.0
        %4263 = vmatprep.subr.mxu0 0.0
        %4264 = vmatpush1.xpose.msra.mxu0 0.0
        %4265 = vmatprep.subr.mxu0 0.0
        %4266 = vmatpush1.xpose.msra.mxu0 0.0
        %4267 = vmatprep.mubr.f32.mxu0 0.0
        %v4268 = vand.u32 %v3755, 4294901760
        %4269 = vmatmul.mubr.f32.gmra.mrb[0].mxu0 %v4268
        %v4270 = vpop.f32.mrb[0].mxu0
        %v4271 = vadd.f32 %v4164, %v4270
        %v4272 = vpop.f32.mrb[0].mxu0
        %4273 = vmatprep.mubr.f32.mxu0 0.0
        %v4274 = vand.u32 %v3757, 4294901760
        %4275 = vmatmul.mubr.f32.gmra.mrb[0].mxu0 %v4274
        %v4276 = vpop.f32.mrb[0].mxu0
        %v4277 = vadd.f32 %v4172, %v4276
        %v4278 = vpop.f32.mrb[0].mxu0
        %4279 = vmatprep.mubr.f32.mxu0 0.0
        %v4280 = vand.u32 %v3759, 4294901760
        %4281 = vmatmul.mubr.f32.gmra.mrb[0].mxu0 %v4280
        %v4282 = vpop.f32.mrb[0].mxu0
        %v4283 = vadd.f32 %v4180, %v4282
        %v4284 = vpop.f32.mrb[0].mxu0
        %4285 = vmatprep.mubr.f32.mxu0 0.0
        %v4286 = vand.u32 %v3761, 4294901760
        %4287 = vmatmul.mubr.f32.gmra.mrb[0].mxu0 %v4286
        %v4288 = vpop.f32.mrb[0].mxu0
        %v4289 = vadd.f32 %v4188, %v4288
        %v4290 = vpop.f32.mrb[0].mxu0
        %4291 = vdwg.mxu0
        %4292 = vmatprep.subr.mxu0 0.0
        %v4293 = vand.u32 %v3763, 4294901760
        %4294 = vmatpush1.xpose.msra.mxu0 %v4293
        %4295 = vmatprep.subr.mxu0 0.0
        %v4296 = vand.u32 %v3765, 4294901760
        %4297 = vmatpush1.xpose.msra.mxu0 %v4296
        %4298 = vmatprep.subr.mxu0 0.0
        %v4299 = vand.u32 %v3767, 4294901760
        %4300 = vmatpush1.xpose.msra.mxu0 %v4299
        %4301 = vmatprep.subr.mxu0 0.0
        %v4302 = vand.u32 %v3769, 4294901760
        %4303 = vmatpush1.xpose.msra.mxu0 %v4302
        %4304 = vmatprep.subr.mxu0 0.0
        %4305 = vmatpush1.xpose.msra.mxu0 0.0
        %4306 = vmatprep.subr.mxu0 0.0
        %4307 = vmatpush1.xpose.msra.mxu0 0.0
        %4308 = vmatprep.subr.mxu0 0.0
        %4309 = vmatpush1.xpose.msra.mxu0 0.0
        %4310 = vmatprep.subr.mxu0 0.0
        %4311 = vmatpush1.xpose.msra.mxu0 0.0
        %4312 = vmatprep.subr.mxu0 0.0
        %4313 = vmatpush1.xpose.msra.mxu0 0.0
        %4314 = vmatprep.subr.mxu0 0.0
        %4315 = vmatpush1.xpose.msra.mxu0 0.0
        %4316 = vmatprep.subr.mxu0 0.0
        %4317 = vmatpush1.xpose.msra.mxu0 0.0
        %4318 = vmatprep.subr.mxu0 0.0
        %4319 = vmatpush1.xpose.msra.mxu0 0.0
        %4320 = vmatprep.subr.mxu0 0.0
        %4321 = vmatpush1.xpose.msra.mxu0 0.0
        %4322 = vmatprep.subr.mxu0 0.0
        %4323 = vmatpush1.xpose.msra.mxu0 0.0
        %4324 = vmatprep.subr.mxu0 0.0
        %4325 = vmatpush1.xpose.msra.mxu0 0.0
        %4326 = vmatprep.subr.mxu0 0.0
        %4327 = vmatpush1.xpose.msra.mxu0 0.0
        %4328 = vmatprep.subr.mxu0 0.0
        %4329 = vmatpush1.xpose.msra.mxu0 0.0
        %4330 = vmatprep.subr.mxu0 0.0
        %4331 = vmatpush1.xpose.msra.mxu0 0.0
        %4332 = vmatprep.subr.mxu0 0.0
        %4333 = vmatpush1.xpose.msra.mxu0 0.0
        %4334 = vmatprep.subr.mxu0 0.0
        %4335 = vmatpush1.xpose.msra.mxu0 0.0
        %4336 = vmatprep.subr.mxu0 0.0
        %4337 = vmatpush1.xpose.msra.mxu0 0.0
        %4338 = vmatprep.subr.mxu0 0.0
        %4339 = vmatpush1.xpose.msra.mxu0 0.0
        %4340 = vmatprep.subr.mxu0 0.0
        %4341 = vmatpush1.xpose.msra.mxu0 0.0
        %4342 = vmatprep.subr.mxu0 0.0
        %4343 = vmatpush1.xpose.msra.mxu0 0.0
        %4344 = vmatprep.subr.mxu0 0.0
        %4345 = vmatpush1.xpose.msra.mxu0 0.0
        %4346 = vmatprep.subr.mxu0 0.0
        %4347 = vmatpush1.xpose.msra.mxu0 0.0
        %4348 = vmatprep.subr.mxu0 0.0
        %4349 = vmatpush1.xpose.msra.mxu0 0.0
        %4350 = vmatprep.subr.mxu0 0.0
        %4351 = vmatpush1.xpose.msra.mxu0 0.0
        %4352 = vmatprep.subr.mxu0 0.0
        %4353 = vmatpush1.xpose.msra.mxu0 0.0
        %4354 = vmatprep.subr.mxu0 0.0
        %4355 = vmatpush1.xpose.msra.mxu0 0.0
        %4356 = vmatprep.subr.mxu0 0.0
        %4357 = vmatpush1.xpose.msra.mxu0 0.0
        %4358 = vmatprep.subr.mxu0 0.0
        %4359 = vmatpush1.xpose.msra.mxu0 0.0
        %4360 = vmatprep.mubr.f32.mxu0 0.0
        %v4361 = vand.u32 %v3755, 4294901760
        %4362 = vmatmul.mubr.f32.gmra.mrb[0].mxu0 %v4361
        %v4363 = vpop.f32.mrb[0].mxu0
        %v4364 = vadd.f32 %v4271, %v4363
        %v4365 = vpop.f32.mrb[0].mxu0
        %4366 = vmatprep.mubr.f32.mxu0 0.0
        %v4367 = vand.u32 %v3757, 4294901760
        %4368 = vmatmul.mubr.f32.gmra.mrb[0].mxu0 %v4367
        %v4369 = vpop.f32.mrb[0].mxu0
        %v4370 = vadd.f32 %v4277, %v4369
        %v4371 = vpop.f32.mrb[0].mxu0
        %4372 = vmatprep.mubr.f32.mxu0 0.0
        %v4373 = vand.u32 %v3759, 4294901760
        %4374 = vmatmul.mubr.f32.gmra.mrb[0].mxu0 %v4373
        %v4375 = vpop.f32.mrb[0].mxu0
        %v4376 = vadd.f32 %v4283, %v4375
        %v4377 = vpop.f32.mrb[0].mxu0
        %4378 = vmatprep.mubr.f32.mxu0 0.0
        %v4379 = vand.u32 %v3761, 4294901760
        %4380 = vmatmul.mubr.f32.gmra.mrb[0].mxu0 %v4379
        %v4381 = vpop.f32.mrb[0].mxu0
        %v4382 = vadd.f32 %v4289, %v4381
        %v4383 = vpop.f32.mrb[0].mxu0
        %4384 = vdwg.mxu0
        %v4385 = vsel %vm2995, %v4364, -inf
        %4386 = vmax.xlane.f32.xlu0 %v4385
        %v4387 = vpop.xlane.xlu0 %4386
        %v4388 = vsel %vm2995, %v4370, -inf
        %4389 = vmax.xlane.f32.xlu0 %v4388
        %v4390 = vpop.xlane.xlu0 %4389
        %v4391 = vsel %vm2995, %v4376, -inf
        %4392 = vmax.xlane.f32.xlu0 %v4391
        %v4393 = vpop.xlane.xlu0 %4392
        %v4394 = vsel %vm2995, %v4382, -inf
        %4395 = vmax.xlane.f32.xlu0 %v4394
        %v4396 = vpop.xlane.xlu0 %4395
        %v4397 = vsub.f32 %v4364, %v4387
        %v4398 = vsub.f32 %v4370, %v4390
        %v4399 = vsub.f32 %v4376, %v4393
        %v4400 = vsub.f32 %v4382, %v4396
        %v4401 = vmul.f32 %v4397, 1.442695
        %v4402 = vpow.pop %v4401
        %v4403 = vmul.f32 %v4398, 1.442695
        %v4404 = vpow.pop %v4403
        %v4405 = vmul.f32 %v4399, 1.442695
        %v4406 = vpow.pop %v4405
        %v4407 = vmul.f32 %v4400, 1.442695
        %v4408 = vpow.pop %v4407
        %v4409 = vsel %vm2995, %v4402, 0.0
        %4410 = vadd.xlane.f32.xlu0 %v4409
        %v4411 = vpop.xlane.xlu0 %4410
        %v4412 = vsel %vm2995, %v4404, 0.0
        %4413 = vadd.xlane.f32.xlu0 %v4412
        %v4414 = vpop.xlane.xlu0 %4413
        %v4415 = vsel %vm2995, %v4406, 0.0
        %4416 = vadd.xlane.f32.xlu0 %v4415
        %v4417 = vpop.xlane.xlu0 %4416
        %v4418 = vsel %vm2995, %v4408, 0.0
        %4419 = vadd.xlane.f32.xlu0 %v4418
        %v4420 = vpop.xlane.xlu0 %4419
        %v4421 = vrcp.pop %v4411
        %v4422 = vmul.f32 %v4402, %v4421
        %v4423 = vrcp.pop %v4414
        %v4424 = vmul.f32 %v4404, %v4423
        %v4425 = vrcp.pop %v4417
        %v4426 = vmul.f32 %v4406, %v4425
        %v4427 = vrcp.pop %v4420
        %v4428 = vmul.f32 %v4408, %v4427
        %s4429 = scalar_lea.vmem %s343, 64 [#allocation11]
        %4430 = vst.msk [vmem:[%s4429] sm:$0xff] %vm2995, %v4422
        %4431 = vst.msk [vmem:[%s4429 + $0x8] sm:$0xff] %vm2995, %v4424
        %4432 = vst.msk [vmem:[%s4429 + $0x10] sm:$0xff] %vm2995, %v4426
        %4433 = vst.msk [vmem:[%s4429 + $0x18] sm:$0xff] %vm2995, %v4428
        %4434 = vrot.lane.b32.xlu0 %v2319, 104
        %v4435 = vpop.permute.xlu0 %4434
        %4436 = vrot.lane.b32.xlu0 %v2326, 104
        %v4437 = vpop.permute.xlu0 %4436
        %4438 = vrot.lane.b32.xlu0 %v2333, 104
        %v4439 = vpop.permute.xlu0 %4438
        %4440 = vrot.lane.b32.xlu0 %v2340, 104
        %v4441 = vpop.permute.xlu0 %4440
        %4442 = vrot.lane.b32.xlu0 %v2319, 40
        %v4443 = vpop.permute.xlu0 %4442
        %4444 = vrot.lane.b32.xlu0 %v2326, 40
        %v4445 = vpop.permute.xlu0 %4444
        %4446 = vrot.lane.b32.xlu0 %v2333, 40
        %v4447 = vpop.permute.xlu0 %4446
        %4448 = vrot.lane.b32.xlu0 %v2340, 40
        %v4449 = vpop.permute.xlu0 %4448
        %v4450 = vsel %vm2364, %v4435, 0
        %v4452 = vsel %vm2364, %v4437, 0
        %v4454 = vsel %vm2364, %v4439, 0
        %v4456 = vsel %vm2364, %v4441, 0
        %v4458 = vsel %vm2364, %v4443, 0
        %v4460 = vsel %vm2364, %v4445, 0
        %v4462 = vsel %vm2364, %v4447, 0
        %v4464 = vsel %vm2364, %v4449, 0
        %4466 = vmatprep.subr.mxu0 0.0
        %v4467 = vand.u32 %v4458, 4294901760
        %4468 = vmatpush1.xpose.msra.mxu0 %v4467
        %4469 = vmatprep.subr.mxu0 0.0
        %v4470 = vand.u32 %v4460, 4294901760
        %4471 = vmatpush1.xpose.msra.mxu0 %v4470
        %4472 = vmatprep.subr.mxu0 0.0
        %v4473 = vand.u32 %v4462, 4294901760
        %4474 = vmatpush1.xpose.msra.mxu0 %v4473
        %4475 = vmatprep.subr.mxu0 0.0
        %v4476 = vand.u32 %v4464, 4294901760
        %4477 = vmatpush1.xpose.msra.mxu0 %v4476
        %4478 = vmatprep.subr.mxu0 0.0
        %4479 = vmatpush1.xpose.msra.mxu0 0.0
        %4480 = vmatprep.subr.mxu0 0.0
        %4481 = vmatpush1.xpose.msra.mxu0 0.0
        %4482 = vmatprep.subr.mxu0 0.0
        %4483 = vmatpush1.xpose.msra.mxu0 0.0
        %4484 = vmatprep.subr.mxu0 0.0
        %4485 = vmatpush1.xpose.msra.mxu0 0.0
        %4486 = vmatprep.subr.mxu0 0.0
        %4487 = vmatpush1.xpose.msra.mxu0 0.0
        %4488 = vmatprep.subr.mxu0 0.0
        %4489 = vmatpush1.xpose.msra.mxu0 0.0
        %4490 = vmatprep.subr.mxu0 0.0
        %4491 = vmatpush1.xpose.msra.mxu0 0.0
        %4492 = vmatprep.subr.mxu0 0.0
        %4493 = vmatpush1.xpose.msra.mxu0 0.0
        %4494 = vmatprep.subr.mxu0 0.0
        %4495 = vmatpush1.xpose.msra.mxu0 0.0
        %4496 = vmatprep.subr.mxu0 0.0
        %4497 = vmatpush1.xpose.msra.mxu0 0.0
        %4498 = vmatprep.subr.mxu0 0.0
        %4499 = vmatpush1.xpose.msra.mxu0 0.0
        %4500 = vmatprep.subr.mxu0 0.0
        %4501 = vmatpush1.xpose.msra.mxu0 0.0
        %4502 = vmatprep.subr.mxu0 0.0
        %4503 = vmatpush1.xpose.msra.mxu0 0.0
        %4504 = vmatprep.subr.mxu0 0.0
        %4505 = vmatpush1.xpose.msra.mxu0 0.0
        %4506 = vmatprep.subr.mxu0 0.0
        %4507 = vmatpush1.xpose.msra.mxu0 0.0
        %4508 = vmatprep.subr.mxu0 0.0
        %4509 = vmatpush1.xpose.msra.mxu0 0.0
        %4510 = vmatprep.subr.mxu0 0.0
        %4511 = vmatpush1.xpose.msra.mxu0 0.0
        %4512 = vmatprep.subr.mxu0 0.0
        %4513 = vmatpush1.xpose.msra.mxu0 0.0
        %4514 = vmatprep.subr.mxu0 0.0
        %4515 = vmatpush1.xpose.msra.mxu0 0.0
        %4516 = vmatprep.subr.mxu0 0.0
        %4517 = vmatpush1.xpose.msra.mxu0 0.0
        %4518 = vmatprep.subr.mxu0 0.0
        %4519 = vmatpush1.xpose.msra.mxu0 0.0
        %4520 = vmatprep.subr.mxu0 0.0
        %4521 = vmatpush1.xpose.msra.mxu0 0.0
        %4522 = vmatprep.subr.mxu0 0.0
        %4523 = vmatpush1.xpose.msra.mxu0 0.0
        %4524 = vmatprep.subr.mxu0 0.0
        %4525 = vmatpush1.xpose.msra.mxu0 0.0
        %4526 = vmatprep.subr.mxu0 0.0
        %4527 = vmatpush1.xpose.msra.mxu0 0.0
        %4528 = vmatprep.subr.mxu0 0.0
        %4529 = vmatpush1.xpose.msra.mxu0 0.0
        %4530 = vmatprep.subr.mxu0 0.0
        %4531 = vmatpush1.xpose.msra.mxu0 0.0
        %4532 = vmatprep.subr.mxu0 0.0
        %4533 = vmatpush1.xpose.msra.mxu0 0.0
        %4534 = vmatprep.mubr.f32.mxu0 0.0
        %v4535 = vand.u32 %v4450, 4294901760
        %v4536 = vsub.f32 %v4450, %v4535
        %v4537 = vand.u32 %v4536, 4294901760
        %v4538 = vsub.f32 %v4536, %v4537
        %v4539 = vand.u32 %v4538, 4294901760
        %4540 = vmatmul.mubr.f32.gmra.mrb[0].mxu0 %v4539
        %v4541 = vpop.f32.mrb[0].mxu0
        %v4542 = vadd.f32 0.0, %v4541
        %v4543 = vpop.f32.mrb[0].mxu0
        %4544 = vmatprep.mubr.f32.mxu0 0.0
        %v4545 = vand.u32 %v4452, 4294901760
        %v4546 = vsub.f32 %v4452, %v4545
        %v4547 = vand.u32 %v4546, 4294901760
        %v4548 = vsub.f32 %v4546, %v4547
        %v4549 = vand.u32 %v4548, 4294901760
        %4550 = vmatmul.mubr.f32.gmra.mrb[0].mxu0 %v4549
        %v4551 = vpop.f32.mrb[0].mxu0
        %v4552 = vadd.f32 0.0, %v4551
        %v4553 = vpop.f32.mrb[0].mxu0
        %4554 = vmatprep.mubr.f32.mxu0 0.0
        %v4555 = vand.u32 %v4454, 4294901760
        %v4556 = vsub.f32 %v4454, %v4555
        %v4557 = vand.u32 %v4556, 4294901760
        %v4558 = vsub.f32 %v4556, %v4557
        %v4559 = vand.u32 %v4558, 4294901760
        %4560 = vmatmul.mubr.f32.gmra.mrb[0].mxu0 %v4559
        %v4561 = vpop.f32.mrb[0].mxu0
        %v4562 = vadd.f32 0.0, %v4561
        %v4563 = vpop.f32.mrb[0].mxu0
        %4564 = vmatprep.mubr.f32.mxu0 0.0
        %v4565 = vand.u32 %v4456, 4294901760
        %v4566 = vsub.f32 %v4456, %v4565
        %v4567 = vand.u32 %v4566, 4294901760
        %v4568 = vsub.f32 %v4566, %v4567
        %v4569 = vand.u32 %v4568, 4294901760
        %4570 = vmatmul.mubr.f32.gmra.mrb[0].mxu0 %v4569
        %v4571 = vpop.f32.mrb[0].mxu0
        %v4572 = vadd.f32 0.0, %v4571
        %v4573 = vpop.f32.mrb[0].mxu0
        %4574 = vdwg.mxu0
        %4575 = vmatprep.subr.mxu0 0.0
        %v4576 = vand.u32 %v4458, 4294901760
        %v4577 = vsub.f32 %v4458, %v4576
        %v4578 = vand.u32 %v4577, 4294901760
        %v4579 = vsub.f32 %v4577, %v4578
        %v4580 = vand.u32 %v4579, 4294901760
        %4581 = vmatpush1.xpose.msra.mxu0 %v4580
        %4582 = vmatprep.subr.mxu0 0.0
        %v4583 = vand.u32 %v4460, 4294901760
        %v4584 = vsub.f32 %v4460, %v4583
        %v4585 = vand.u32 %v4584, 4294901760
        %v4586 = vsub.f32 %v4584, %v4585
        %v4587 = vand.u32 %v4586, 4294901760
        %4588 = vmatpush1.xpose.msra.mxu0 %v4587
        %4589 = vmatprep.subr.mxu0 0.0
        %v4590 = vand.u32 %v4462, 4294901760
        %v4591 = vsub.f32 %v4462, %v4590
        %v4592 = vand.u32 %v4591, 4294901760
        %v4593 = vsub.f32 %v4591, %v4592
        %v4594 = vand.u32 %v4593, 4294901760
        %4595 = vmatpush1.xpose.msra.mxu0 %v4594
        %4596 = vmatprep.subr.mxu0 0.0
        %v4597 = vand.u32 %v4464, 4294901760
        %v4598 = vsub.f32 %v4464, %v4597
        %v4599 = vand.u32 %v4598, 4294901760
        %v4600 = vsub.f32 %v4598, %v4599
        %v4601 = vand.u32 %v4600, 4294901760
        %4602 = vmatpush1.xpose.msra.mxu0 %v4601
        %4603 = vmatprep.subr.mxu0 0.0
        %4604 = vmatpush1.xpose.msra.mxu0 0.0
        %4605 = vmatprep.subr.mxu0 0.0
        %4606 = vmatpush1.xpose.msra.mxu0 0.0
        %4607 = vmatprep.subr.mxu0 0.0
        %4608 = vmatpush1.xpose.msra.mxu0 0.0
        %4609 = vmatprep.subr.mxu0 0.0
        %4610 = vmatpush1.xpose.msra.mxu0 0.0
        %4611 = vmatprep.subr.mxu0 0.0
        %4612 = vmatpush1.xpose.msra.mxu0 0.0
        %4613 = vmatprep.subr.mxu0 0.0
        %4614 = vmatpush1.xpose.msra.mxu0 0.0
        %4615 = vmatprep.subr.mxu0 0.0
        %4616 = vmatpush1.xpose.msra.mxu0 0.0
        %4617 = vmatprep.subr.mxu0 0.0
        %4618 = vmatpush1.xpose.msra.mxu0 0.0
        %4619 = vmatprep.subr.mxu0 0.0
        %4620 = vmatpush1.xpose.msra.mxu0 0.0
        %4621 = vmatprep.subr.mxu0 0.0
        %4622 = vmatpush1.xpose.msra.mxu0 0.0
        %4623 = vmatprep.subr.mxu0 0.0
        %4624 = vmatpush1.xpose.msra.mxu0 0.0
        %4625 = vmatprep.subr.mxu0 0.0
        %4626 = vmatpush1.xpose.msra.mxu0 0.0
        %4627 = vmatprep.subr.mxu0 0.0
        %4628 = vmatpush1.xpose.msra.mxu0 0.0
        %4629 = vmatprep.subr.mxu0 0.0
        %4630 = vmatpush1.xpose.msra.mxu0 0.0
        %4631 = vmatprep.subr.mxu0 0.0
        %4632 = vmatpush1.xpose.msra.mxu0 0.0
        %4633 = vmatprep.subr.mxu0 0.0
        %4634 = vmatpush1.xpose.msra.mxu0 0.0
        %4635 = vmatprep.subr.mxu0 0.0
        %4636 = vmatpush1.xpose.msra.mxu0 0.0
        %4637 = vmatprep.subr.mxu0 0.0
        %4638 = vmatpush1.xpose.msra.mxu0 0.0
        %4639 = vmatprep.subr.mxu0 0.0
        %4640 = vmatpush1.xpose.msra.mxu0 0.0
        %4641 = vmatprep.subr.mxu0 0.0
        %4642 = vmatpush1.xpose.msra.mxu0 0.0
        %4643 = vmatprep.subr.mxu0 0.0
        %4644 = vmatpush1.xpose.msra.mxu0 0.0
        %4645 = vmatprep.subr.mxu0 0.0
        %4646 = vmatpush1.xpose.msra.mxu0 0.0
        %4647 = vmatprep.subr.mxu0 0.0
        %4648 = vmatpush1.xpose.msra.mxu0 0.0
        %4649 = vmatprep.subr.mxu0 0.0
        %4650 = vmatpush1.xpose.msra.mxu0 0.0
        %4651 = vmatprep.subr.mxu0 0.0
        %4652 = vmatpush1.xpose.msra.mxu0 0.0
        %4653 = vmatprep.subr.mxu0 0.0
        %4654 = vmatpush1.xpose.msra.mxu0 0.0
        %4655 = vmatprep.subr.mxu0 0.0
        %4656 = vmatpush1.xpose.msra.mxu0 0.0
        %4657 = vmatprep.subr.mxu0 0.0
        %4658 = vmatpush1.xpose.msra.mxu0 0.0
        %4659 = vmatprep.mubr.f32.mxu0 0.0
        %v4660 = vand.u32 %v4450, 4294901760
        %4661 = vmatmul.mubr.f32.gmra.mrb[0].mxu0 %v4660
        %v4662 = vpop.f32.mrb[0].mxu0
        %v4663 = vadd.f32 %v4542, %v4662
        %v4664 = vpop.f32.mrb[0].mxu0
        %4665 = vmatprep.mubr.f32.mxu0 0.0
        %v4666 = vand.u32 %v4452, 4294901760
        %4667 = vmatmul.mubr.f32.gmra.mrb[0].mxu0 %v4666
        %v4668 = vpop.f32.mrb[0].mxu0
        %v4669 = vadd.f32 %v4552, %v4668
        %v4670 = vpop.f32.mrb[0].mxu0
        %4671 = vmatprep.mubr.f32.mxu0 0.0
        %v4672 = vand.u32 %v4454, 4294901760
        %4673 = vmatmul.mubr.f32.gmra.mrb[0].mxu0 %v4672
        %v4674 = vpop.f32.mrb[0].mxu0
        %v4675 = vadd.f32 %v4562, %v4674
        %v4676 = vpop.f32.mrb[0].mxu0
        %4677 = vmatprep.mubr.f32.mxu0 0.0
        %v4678 = vand.u32 %v4456, 4294901760
        %4679 = vmatmul.mubr.f32.gmra.mrb[0].mxu0 %v4678
        %v4680 = vpop.f32.mrb[0].mxu0
        %v4681 = vadd.f32 %v4572, %v4680
        %v4682 = vpop.f32.mrb[0].mxu0
        %4683 = vdwg.mxu0
        %4684 = vmatprep.subr.mxu0 0.0
        %v4685 = vand.u32 %v4458, 4294901760
        %v4686 = vsub.f32 %v4458, %v4685
        %4687 = vmatpush1.xpose.msra.mxu0 %v4686
        %4688 = vmatprep.subr.mxu0 0.0
        %v4689 = vand.u32 %v4460, 4294901760
        %v4690 = vsub.f32 %v4460, %v4689
        %4691 = vmatpush1.xpose.msra.mxu0 %v4690
        %4692 = vmatprep.subr.mxu0 0.0
        %v4693 = vand.u32 %v4462, 4294901760
        %v4694 = vsub.f32 %v4462, %v4693
        %4695 = vmatpush1.xpose.msra.mxu0 %v4694
        %4696 = vmatprep.subr.mxu0 0.0
        %v4697 = vand.u32 %v4464, 4294901760
        %v4698 = vsub.f32 %v4464, %v4697
        %4699 = vmatpush1.xpose.msra.mxu0 %v4698
        %4700 = vmatprep.subr.mxu0 0.0
        %4701 = vmatpush1.xpose.msra.mxu0 0.0
        %4702 = vmatprep.subr.mxu0 0.0
        %4703 = vmatpush1.xpose.msra.mxu0 0.0
        %4704 = vmatprep.subr.mxu0 0.0
        %4705 = vmatpush1.xpose.msra.mxu0 0.0
        %4706 = vmatprep.subr.mxu0 0.0
        %4707 = vmatpush1.xpose.msra.mxu0 0.0
        %4708 = vmatprep.subr.mxu0 0.0
        %4709 = vmatpush1.xpose.msra.mxu0 0.0
        %4710 = vmatprep.subr.mxu0 0.0
        %4711 = vmatpush1.xpose.msra.mxu0 0.0
        %4712 = vmatprep.subr.mxu0 0.0
        %4713 = vmatpush1.xpose.msra.mxu0 0.0
        %4714 = vmatprep.subr.mxu0 0.0
        %4715 = vmatpush1.xpose.msra.mxu0 0.0
        %4716 = vmatprep.subr.mxu0 0.0
        %4717 = vmatpush1.xpose.msra.mxu0 0.0
        %4718 = vmatprep.subr.mxu0 0.0
        %4719 = vmatpush1.xpose.msra.mxu0 0.0
        %4720 = vmatprep.subr.mxu0 0.0
        %4721 = vmatpush1.xpose.msra.mxu0 0.0
        %4722 = vmatprep.subr.mxu0 0.0
        %4723 = vmatpush1.xpose.msra.mxu0 0.0
        %4724 = vmatprep.subr.mxu0 0.0
        %4725 = vmatpush1.xpose.msra.mxu0 0.0
        %4726 = vmatprep.subr.mxu0 0.0
        %4727 = vmatpush1.xpose.msra.mxu0 0.0
        %4728 = vmatprep.subr.mxu0 0.0
        %4729 = vmatpush1.xpose.msra.mxu0 0.0
        %4730 = vmatprep.subr.mxu0 0.0
        %4731 = vmatpush1.xpose.msra.mxu0 0.0
        %4732 = vmatprep.subr.mxu0 0.0
        %4733 = vmatpush1.xpose.msra.mxu0 0.0
        %4734 = vmatprep.subr.mxu0 0.0
        %4735 = vmatpush1.xpose.msra.mxu0 0.0
        %4736 = vmatprep.subr.mxu0 0.0
        %4737 = vmatpush1.xpose.msra.mxu0 0.0
        %4738 = vmatprep.subr.mxu0 0.0
        %4739 = vmatpush1.xpose.msra.mxu0 0.0
        %4740 = vmatprep.subr.mxu0 0.0
        %4741 = vmatpush1.xpose.msra.mxu0 0.0
        %4742 = vmatprep.subr.mxu0 0.0
        %4743 = vmatpush1.xpose.msra.mxu0 0.0
        %4744 = vmatprep.subr.mxu0 0.0
        %4745 = vmatpush1.xpose.msra.mxu0 0.0
        %4746 = vmatprep.subr.mxu0 0.0
        %4747 = vmatpush1.xpose.msra.mxu0 0.0
        %4748 = vmatprep.subr.mxu0 0.0
        %4749 = vmatpush1.xpose.msra.mxu0 0.0
        %4750 = vmatprep.subr.mxu0 0.0
        %4751 = vmatpush1.xpose.msra.mxu0 0.0
        %4752 = vmatprep.subr.mxu0 0.0
        %4753 = vmatpush1.xpose.msra.mxu0 0.0
        %4754 = vmatprep.subr.mxu0 0.0
        %4755 = vmatpush1.xpose.msra.mxu0 0.0
        %4756 = vmatprep.mubr.f32.mxu0 0.0
        %v4757 = vand.u32 %v4450, 4294901760
        %v4758 = vsub.f32 %v4450, %v4757
        %4759 = vmatmul.mubr.f32.gmra.mrb[0].mxu0 %v4758
        %v4760 = vpop.f32.mrb[0].mxu0
        %v4761 = vadd.f32 %v4663, %v4760
        %v4762 = vpop.f32.mrb[0].mxu0
        %4763 = vmatprep.mubr.f32.mxu0 0.0
        %v4764 = vand.u32 %v4452, 4294901760
        %v4765 = vsub.f32 %v4452, %v4764
        %4766 = vmatmul.mubr.f32.gmra.mrb[0].mxu0 %v4765
        %v4767 = vpop.f32.mrb[0].mxu0
        %v4768 = vadd.f32 %v4669, %v4767
        %v4769 = vpop.f32.mrb[0].mxu0
        %4770 = vmatprep.mubr.f32.mxu0 0.0
        %v4771 = vand.u32 %v4454, 4294901760
        %v4772 = vsub.f32 %v4454, %v4771
        %4773 = vmatmul.mubr.f32.gmra.mrb[0].mxu0 %v4772
        %v4774 = vpop.f32.mrb[0].mxu0
        %v4775 = vadd.f32 %v4675, %v4774
        %v4776 = vpop.f32.mrb[0].mxu0
        %4777 = vmatprep.mubr.f32.mxu0 0.0
        %v4778 = vand.u32 %v4456, 4294901760
        %v4779 = vsub.f32 %v4456, %v4778
        %4780 = vmatmul.mubr.f32.gmra.mrb[0].mxu0 %v4779
        %v4781 = vpop.f32.mrb[0].mxu0
        %v4782 = vadd.f32 %v4681, %v4781
        %v4783 = vpop.f32.mrb[0].mxu0
        %4784 = vdwg.mxu0
        %4785 = vmatprep.subr.mxu0 0.0
        %v4786 = vand.u32 %v4458, 4294901760
        %4787 = vmatpush1.xpose.msra.mxu0 %v4786
        %4788 = vmatprep.subr.mxu0 0.0
        %v4789 = vand.u32 %v4460, 4294901760
        %4790 = vmatpush1.xpose.msra.mxu0 %v4789
        %4791 = vmatprep.subr.mxu0 0.0
        %v4792 = vand.u32 %v4462, 4294901760
        %4793 = vmatpush1.xpose.msra.mxu0 %v4792
        %4794 = vmatprep.subr.mxu0 0.0
        %v4795 = vand.u32 %v4464, 4294901760
        %4796 = vmatpush1.xpose.msra.mxu0 %v4795
        %4797 = vmatprep.subr.mxu0 0.0
        %4798 = vmatpush1.xpose.msra.mxu0 0.0
        %4799 = vmatprep.subr.mxu0 0.0
        %4800 = vmatpush1.xpose.msra.mxu0 0.0
        %4801 = vmatprep.subr.mxu0 0.0
        %4802 = vmatpush1.xpose.msra.mxu0 0.0
        %4803 = vmatprep.subr.mxu0 0.0
        %4804 = vmatpush1.xpose.msra.mxu0 0.0
        %4805 = vmatprep.subr.mxu0 0.0
        %4806 = vmatpush1.xpose.msra.mxu0 0.0
        %4807 = vmatprep.subr.mxu0 0.0
        %4808 = vmatpush1.xpose.msra.mxu0 0.0
        %4809 = vmatprep.subr.mxu0 0.0
        %4810 = vmatpush1.xpose.msra.mxu0 0.0
        %4811 = vmatprep.subr.mxu0 0.0
        %4812 = vmatpush1.xpose.msra.mxu0 0.0
        %4813 = vmatprep.subr.mxu0 0.0
        %4814 = vmatpush1.xpose.msra.mxu0 0.0
        %4815 = vmatprep.subr.mxu0 0.0
        %4816 = vmatpush1.xpose.msra.mxu0 0.0
        %4817 = vmatprep.subr.mxu0 0.0
        %4818 = vmatpush1.xpose.msra.mxu0 0.0
        %4819 = vmatprep.subr.mxu0 0.0
        %4820 = vmatpush1.xpose.msra.mxu0 0.0
        %4821 = vmatprep.subr.mxu0 0.0
        %4822 = vmatpush1.xpose.msra.mxu0 0.0
        %4823 = vmatprep.subr.mxu0 0.0
        %4824 = vmatpush1.xpose.msra.mxu0 0.0
        %4825 = vmatprep.subr.mxu0 0.0
        %4826 = vmatpush1.xpose.msra.mxu0 0.0
        %4827 = vmatprep.subr.mxu0 0.0
        %4828 = vmatpush1.xpose.msra.mxu0 0.0
        %4829 = vmatprep.subr.mxu0 0.0
        %4830 = vmatpush1.xpose.msra.mxu0 0.0
        %4831 = vmatprep.subr.mxu0 0.0
        %4832 = vmatpush1.xpose.msra.mxu0 0.0
        %4833 = vmatprep.subr.mxu0 0.0
        %4834 = vmatpush1.xpose.msra.mxu0 0.0
        %4835 = vmatprep.subr.mxu0 0.0
        %4836 = vmatpush1.xpose.msra.mxu0 0.0
        %4837 = vmatprep.subr.mxu0 0.0
        %4838 = vmatpush1.xpose.msra.mxu0 0.0
        %4839 = vmatprep.subr.mxu0 0.0
        %4840 = vmatpush1.xpose.msra.mxu0 0.0
        %4841 = vmatprep.subr.mxu0 0.0
        %4842 = vmatpush1.xpose.msra.mxu0 0.0
        %4843 = vmatprep.subr.mxu0 0.0
        %4844 = vmatpush1.xpose.msra.mxu0 0.0
        %4845 = vmatprep.subr.mxu0 0.0
        %4846 = vmatpush1.xpose.msra.mxu0 0.0
        %4847 = vmatprep.subr.mxu0 0.0
        %4848 = vmatpush1.xpose.msra.mxu0 0.0
        %4849 = vmatprep.subr.mxu0 0.0
        %4850 = vmatpush1.xpose.msra.mxu0 0.0
        %4851 = vmatprep.subr.mxu0 0.0
        %4852 = vmatpush1.xpose.msra.mxu0 0.0
        %4853 = vmatprep.mubr.f32.mxu0 0.0
        %v4854 = vand.u32 %v4450, 4294901760
        %v4855 = vsub.f32 %v4450, %v4854
        %v4856 = vand.u32 %v4855, 4294901760
        %4857 = vmatmul.mubr.f32.gmra.mrb[0].mxu0 %v4856
        %v4858 = vpop.f32.mrb[0].mxu0
        %v4859 = vadd.f32 %v4761, %v4858
        %v4860 = vpop.f32.mrb[0].mxu0
        %4861 = vmatprep.mubr.f32.mxu0 0.0
        %v4862 = vand.u32 %v4452, 4294901760
        %v4863 = vsub.f32 %v4452, %v4862
        %v4864 = vand.u32 %v4863, 4294901760
        %4865 = vmatmul.mubr.f32.gmra.mrb[0].mxu0 %v4864
        %v4866 = vpop.f32.mrb[0].mxu0
        %v4867 = vadd.f32 %v4768, %v4866
        %v4868 = vpop.f32.mrb[0].mxu0
        %4869 = vmatprep.mubr.f32.mxu0 0.0
        %v4870 = vand.u32 %v4454, 4294901760
        %v4871 = vsub.f32 %v4454, %v4870
        %v4872 = vand.u32 %v4871, 4294901760
        %4873 = vmatmul.mubr.f32.gmra.mrb[0].mxu0 %v4872
        %v4874 = vpop.f32.mrb[0].mxu0
        %v4875 = vadd.f32 %v4775, %v4874
        %v4876 = vpop.f32.mrb[0].mxu0
        %4877 = vmatprep.mubr.f32.mxu0 0.0
        %v4878 = vand.u32 %v4456, 4294901760
        %v4879 = vsub.f32 %v4456, %v4878
        %v4880 = vand.u32 %v4879, 4294901760
        %4881 = vmatmul.mubr.f32.gmra.mrb[0].mxu0 %v4880
        %v4882 = vpop.f32.mrb[0].mxu0
        %v4883 = vadd.f32 %v4782, %v4882
        %v4884 = vpop.f32.mrb[0].mxu0
        %4885 = vdwg.mxu0
        %4886 = vmatprep.subr.mxu0 0.0
        %v4887 = vand.u32 %v4458, 4294901760
        %v4888 = vsub.f32 %v4458, %v4887
        %v4889 = vand.u32 %v4888, 4294901760
        %4890 = vmatpush1.xpose.msra.mxu0 %v4889
        %4891 = vmatprep.subr.mxu0 0.0
        %v4892 = vand.u32 %v4460, 4294901760
        %v4893 = vsub.f32 %v4460, %v4892
        %v4894 = vand.u32 %v4893, 4294901760
        %4895 = vmatpush1.xpose.msra.mxu0 %v4894
        %4896 = vmatprep.subr.mxu0 0.0
        %v4897 = vand.u32 %v4462, 4294901760
        %v4898 = vsub.f32 %v4462, %v4897
        %v4899 = vand.u32 %v4898, 4294901760
        %4900 = vmatpush1.xpose.msra.mxu0 %v4899
        %4901 = vmatprep.subr.mxu0 0.0
        %v4902 = vand.u32 %v4464, 4294901760
        %v4903 = vsub.f32 %v4464, %v4902
        %v4904 = vand.u32 %v4903, 4294901760
        %4905 = vmatpush1.xpose.msra.mxu0 %v4904
        %4906 = vmatprep.subr.mxu0 0.0
        %4907 = vmatpush1.xpose.msra.mxu0 0.0
        %4908 = vmatprep.subr.mxu0 0.0
        %4909 = vmatpush1.xpose.msra.mxu0 0.0
        %4910 = vmatprep.subr.mxu0 0.0
        %4911 = vmatpush1.xpose.msra.mxu0 0.0
        %4912 = vmatprep.subr.mxu0 0.0
        %4913 = vmatpush1.xpose.msra.mxu0 0.0
        %4914 = vmatprep.subr.mxu0 0.0
        %4915 = vmatpush1.xpose.msra.mxu0 0.0
        %4916 = vmatprep.subr.mxu0 0.0
        %4917 = vmatpush1.xpose.msra.mxu0 0.0
        %4918 = vmatprep.subr.mxu0 0.0
        %4919 = vmatpush1.xpose.msra.mxu0 0.0
        %4920 = vmatprep.subr.mxu0 0.0
        %4921 = vmatpush1.xpose.msra.mxu0 0.0
        %4922 = vmatprep.subr.mxu0 0.0
        %4923 = vmatpush1.xpose.msra.mxu0 0.0
        %4924 = vmatprep.subr.mxu0 0.0
        %4925 = vmatpush1.xpose.msra.mxu0 0.0
        %4926 = vmatprep.subr.mxu0 0.0
        %4927 = vmatpush1.xpose.msra.mxu0 0.0
        %4928 = vmatprep.subr.mxu0 0.0
        %4929 = vmatpush1.xpose.msra.mxu0 0.0
        %4930 = vmatprep.subr.mxu0 0.0
        %4931 = vmatpush1.xpose.msra.mxu0 0.0
        %4932 = vmatprep.subr.mxu0 0.0
        %4933 = vmatpush1.xpose.msra.mxu0 0.0
        %4934 = vmatprep.subr.mxu0 0.0
        %4935 = vmatpush1.xpose.msra.mxu0 0.0
        %4936 = vmatprep.subr.mxu0 0.0
        %4937 = vmatpush1.xpose.msra.mxu0 0.0
        %4938 = vmatprep.subr.mxu0 0.0
        %4939 = vmatpush1.xpose.msra.mxu0 0.0
        %4940 = vmatprep.subr.mxu0 0.0
        %4941 = vmatpush1.xpose.msra.mxu0 0.0
        %4942 = vmatprep.subr.mxu0 0.0
        %4943 = vmatpush1.xpose.msra.mxu0 0.0
        %4944 = vmatprep.subr.mxu0 0.0
        %4945 = vmatpush1.xpose.msra.mxu0 0.0
        %4946 = vmatprep.subr.mxu0 0.0
        %4947 = vmatpush1.xpose.msra.mxu0 0.0
        %4948 = vmatprep.subr.mxu0 0.0
        %4949 = vmatpush1.xpose.msra.mxu0 0.0
        %4950 = vmatprep.subr.mxu0 0.0
        %4951 = vmatpush1.xpose.msra.mxu0 0.0
        %4952 = vmatprep.subr.mxu0 0.0
        %4953 = vmatpush1.xpose.msra.mxu0 0.0
        %4954 = vmatprep.subr.mxu0 0.0
        %4955 = vmatpush1.xpose.msra.mxu0 0.0
        %4956 = vmatprep.subr.mxu0 0.0
        %4957 = vmatpush1.xpose.msra.mxu0 0.0
        %4958 = vmatprep.subr.mxu0 0.0
        %4959 = vmatpush1.xpose.msra.mxu0 0.0
        %4960 = vmatprep.subr.mxu0 0.0
        %4961 = vmatpush1.xpose.msra.mxu0 0.0
        %4962 = vmatprep.mubr.f32.mxu0 0.0
        %v4963 = vand.u32 %v4450, 4294901760
        %4964 = vmatmul.mubr.f32.gmra.mrb[0].mxu0 %v4963
        %v4965 = vpop.f32.mrb[0].mxu0
        %v4966 = vadd.f32 %v4859, %v4965
        %v4967 = vpop.f32.mrb[0].mxu0
        %4968 = vmatprep.mubr.f32.mxu0 0.0
        %v4969 = vand.u32 %v4452, 4294901760
        %4970 = vmatmul.mubr.f32.gmra.mrb[0].mxu0 %v4969
        %v4971 = vpop.f32.mrb[0].mxu0
        %v4972 = vadd.f32 %v4867, %v4971
        %v4973 = vpop.f32.mrb[0].mxu0
        %4974 = vmatprep.mubr.f32.mxu0 0.0
        %v4975 = vand.u32 %v4454, 4294901760
        %4976 = vmatmul.mubr.f32.gmra.mrb[0].mxu0 %v4975
        %v4977 = vpop.f32.mrb[0].mxu0
        %v4978 = vadd.f32 %v4875, %v4977
        %v4979 = vpop.f32.mrb[0].mxu0
        %4980 = vmatprep.mubr.f32.mxu0 0.0
        %v4981 = vand.u32 %v4456, 4294901760
        %4982 = vmatmul.mubr.f32.gmra.mrb[0].mxu0 %v4981
        %v4983 = vpop.f32.mrb[0].mxu0
        %v4984 = vadd.f32 %v4883, %v4983
        %v4985 = vpop.f32.mrb[0].mxu0
        %4986 = vdwg.mxu0
        %4987 = vmatprep.subr.mxu0 0.0
        %v4988 = vand.u32 %v4458, 4294901760
        %4989 = vmatpush1.xpose.msra.mxu0 %v4988
        %4990 = vmatprep.subr.mxu0 0.0
        %v4991 = vand.u32 %v4460, 4294901760
        %4992 = vmatpush1.xpose.msra.mxu0 %v4991
        %4993 = vmatprep.subr.mxu0 0.0
        %v4994 = vand.u32 %v4462, 4294901760
        %4995 = vmatpush1.xpose.msra.mxu0 %v4994
        %4996 = vmatprep.subr.mxu0 0.0
        %v4997 = vand.u32 %v4464, 4294901760
        %4998 = vmatpush1.xpose.msra.mxu0 %v4997
        %4999 = vmatprep.subr.mxu0 0.0
        %5000 = vmatpush1.xpose.msra.mxu0 0.0
        %5001 = vmatprep.subr.mxu0 0.0
        %5002 = vmatpush1.xpose.msra.mxu0 0.0
        %5003 = vmatprep.subr.mxu0 0.0
        %5004 = vmatpush1.xpose.msra.mxu0 0.0
        %5005 = vmatprep.subr.mxu0 0.0
        %5006 = vmatpush1.xpose.msra.mxu0 0.0
        %5007 = vmatprep.subr.mxu0 0.0
        %5008 = vmatpush1.xpose.msra.mxu0 0.0
        %5009 = vmatprep.subr.mxu0 0.0
        %5010 = vmatpush1.xpose.msra.mxu0 0.0
        %5011 = vmatprep.subr.mxu0 0.0
        %5012 = vmatpush1.xpose.msra.mxu0 0.0
        %5013 = vmatprep.subr.mxu0 0.0
        %5014 = vmatpush1.xpose.msra.mxu0 0.0
        %5015 = vmatprep.subr.mxu0 0.0
        %5016 = vmatpush1.xpose.msra.mxu0 0.0
        %5017 = vmatprep.subr.mxu0 0.0
        %5018 = vmatpush1.xpose.msra.mxu0 0.0
        %5019 = vmatprep.subr.mxu0 0.0
        %5020 = vmatpush1.xpose.msra.mxu0 0.0
        %5021 = vmatprep.subr.mxu0 0.0
        %5022 = vmatpush1.xpose.msra.mxu0 0.0
        %5023 = vmatprep.subr.mxu0 0.0
        %5024 = vmatpush1.xpose.msra.mxu0 0.0
        %5025 = vmatprep.subr.mxu0 0.0
        %5026 = vmatpush1.xpose.msra.mxu0 0.0
        %5027 = vmatprep.subr.mxu0 0.0
        %5028 = vmatpush1.xpose.msra.mxu0 0.0
        %5029 = vmatprep.subr.mxu0 0.0
        %5030 = vmatpush1.xpose.msra.mxu0 0.0
        %5031 = vmatprep.subr.mxu0 0.0
        %5032 = vmatpush1.xpose.msra.mxu0 0.0
        %5033 = vmatprep.subr.mxu0 0.0
        %5034 = vmatpush1.xpose.msra.mxu0 0.0
        %5035 = vmatprep.subr.mxu0 0.0
        %5036 = vmatpush1.xpose.msra.mxu0 0.0
        %5037 = vmatprep.subr.mxu0 0.0
        %5038 = vmatpush1.xpose.msra.mxu0 0.0
        %5039 = vmatprep.subr.mxu0 0.0
        %5040 = vmatpush1.xpose.msra.mxu0 0.0
        %5041 = vmatprep.subr.mxu0 0.0
        %5042 = vmatpush1.xpose.msra.mxu0 0.0
        %5043 = vmatprep.subr.mxu0 0.0
        %5044 = vmatpush1.xpose.msra.mxu0 0.0
        %5045 = vmatprep.subr.mxu0 0.0
        %5046 = vmatpush1.xpose.msra.mxu0 0.0
        %5047 = vmatprep.subr.mxu0 0.0
        %5048 = vmatpush1.xpose.msra.mxu0 0.0
        %5049 = vmatprep.subr.mxu0 0.0
        %5050 = vmatpush1.xpose.msra.mxu0 0.0
        %5051 = vmatprep.subr.mxu0 0.0
        %5052 = vmatpush1.xpose.msra.mxu0 0.0
        %5053 = vmatprep.subr.mxu0 0.0
        %5054 = vmatpush1.xpose.msra.mxu0 0.0
        %5055 = vmatprep.mubr.f32.mxu0 0.0
        %v5056 = vand.u32 %v4450, 4294901760
        %5057 = vmatmul.mubr.f32.gmra.mrb[0].mxu0 %v5056
        %v5058 = vpop.f32.mrb[0].mxu0
        %v5059 = vadd.f32 %v4966, %v5058
        %v5060 = vpop.f32.mrb[0].mxu0
        %5061 = vmatprep.mubr.f32.mxu0 0.0
        %v5062 = vand.u32 %v4452, 4294901760
        %5063 = vmatmul.mubr.f32.gmra.mrb[0].mxu0 %v5062
        %v5064 = vpop.f32.mrb[0].mxu0
        %v5065 = vadd.f32 %v4972, %v5064
        %v5066 = vpop.f32.mrb[0].mxu0
        %5067 = vmatprep.mubr.f32.mxu0 0.0
        %v5068 = vand.u32 %v4454, 4294901760
        %5069 = vmatmul.mubr.f32.gmra.mrb[0].mxu0 %v5068
        %v5070 = vpop.f32.mrb[0].mxu0
        %v5071 = vadd.f32 %v4978, %v5070
        %v5072 = vpop.f32.mrb[0].mxu0
        %5073 = vmatprep.mubr.f32.mxu0 0.0
        %v5074 = vand.u32 %v4456, 4294901760
        %5075 = vmatmul.mubr.f32.gmra.mrb[0].mxu0 %v5074
        %v5076 = vpop.f32.mrb[0].mxu0
        %v5077 = vadd.f32 %v4984, %v5076
        %v5078 = vpop.f32.mrb[0].mxu0
        %5079 = vdwg.mxu0
        %v5080 = vsel %vm2995, %v5059, -inf
        %5081 = vmax.xlane.f32.xlu0 %v5080
        %v5082 = vpop.xlane.xlu0 %5081
        %v5083 = vsel %vm2995, %v5065, -inf
        %5084 = vmax.xlane.f32.xlu0 %v5083
        %v5085 = vpop.xlane.xlu0 %5084
        %v5086 = vsel %vm2995, %v5071, -inf
        %5087 = vmax.xlane.f32.xlu0 %v5086
        %v5088 = vpop.xlane.xlu0 %5087
        %v5089 = vsel %vm2995, %v5077, -inf
        %5090 = vmax.xlane.f32.xlu0 %v5089
        %v5091 = vpop.xlane.xlu0 %5090
        %v5092 = vsub.f32 %v5059, %v5082
        %v5093 = vsub.f32 %v5065, %v5085
        %v5094 = vsub.f32 %v5071, %v5088
        %v5095 = vsub.f32 %v5077, %v5091
        %v5096 = vmul.f32 %v5092, 1.442695
        %v5097 = vpow.pop %v5096
        %v5098 = vmul.f32 %v5093, 1.442695
        %v5099 = vpow.pop %v5098
        %v5100 = vmul.f32 %v5094, 1.442695
        %v5101 = vpow.pop %v5100
        %v5102 = vmul.f32 %v5095, 1.442695
        %v5103 = vpow.pop %v5102
        %v5104 = vsel %vm2995, %v5097, 0.0
        %5105 = vadd.xlane.f32.xlu0 %v5104
        %v5106 = vpop.xlane.xlu0 %5105
        %v5107 = vsel %vm2995, %v5099, 0.0
        %5108 = vadd.xlane.f32.xlu0 %v5107
        %v5109 = vpop.xlane.xlu0 %5108
        %v5110 = vsel %vm2995, %v5101, 0.0
        %5111 = vadd.xlane.f32.xlu0 %v5110
        %v5112 = vpop.xlane.xlu0 %5111
        %v5113 = vsel %vm2995, %v5103, 0.0
        %5114 = vadd.xlane.f32.xlu0 %v5113
        %v5115 = vpop.xlane.xlu0 %5114
        %v5116 = vrcp.pop %v5106
        %v5117 = vmul.f32 %v5097, %v5116
        %v5118 = vrcp.pop %v5109
        %v5119 = vmul.f32 %v5099, %v5118
        %v5120 = vrcp.pop %v5112
        %v5121 = vmul.f32 %v5101, %v5120
        %v5122 = vrcp.pop %v5115
        %v5123 = vmul.f32 %v5103, %v5122
        %s5124 = scalar_lea.vmem %s343, 96 [#allocation11]
        %5125 = vst.msk [vmem:[%s5124] sm:$0xff] %vm2995, %v5117
        %5126 = vst.msk [vmem:[%s5124 + $0x8] sm:$0xff] %vm2995, %v5119
        %5127 = vst.msk [vmem:[%s5124 + $0x10] sm:$0xff] %vm2995, %v5121
        %5128 = vst.msk [vmem:[%s5124 + $0x18] sm:$0xff] %vm2995, %v5123
        %5129 = vrot.lane.b32.xlu0 %v2319, 96
        %v5130 = vpop.permute.xlu0 %5129
        %5131 = vrot.lane.b32.xlu0 %v2326, 96
        %v5132 = vpop.permute.xlu0 %5131
        %5133 = vrot.lane.b32.xlu0 %v2333, 96
        %v5134 = vpop.permute.xlu0 %5133
        %5135 = vrot.lane.b32.xlu0 %v2340, 96
        %v5136 = vpop.permute.xlu0 %5135
        %5137 = vrot.lane.b32.xlu0 %v2319, 32
        %v5138 = vpop.permute.xlu0 %5137
        %5139 = vrot.lane.b32.xlu0 %v2326, 32
        %v5140 = vpop.permute.xlu0 %5139
        %5141 = vrot.lane.b32.xlu0 %v2333, 32
        %v5142 = vpop.permute.xlu0 %5141
        %5143 = vrot.lane.b32.xlu0 %v2340, 32
        %v5144 = vpop.permute.xlu0 %5143
        %v5145 = vsel %vm2364, %v5130, 0
        %v5147 = vsel %vm2364, %v5132, 0
        %v5149 = vsel %vm2364, %v5134, 0
        %v5151 = vsel %vm2364, %v5136, 0
        %v5153 = vsel %vm2364, %v5138, 0
        %v5155 = vsel %vm2364, %v5140, 0
        %v5157 = vsel %vm2364, %v5142, 0
        %v5159 = vsel %vm2364, %v5144, 0
        %5161 = vmatprep.subr.mxu0 0.0
        %v5162 = vand.u32 %v5153, 4294901760
        %5163 = vmatpush1.xpose.msra.mxu0 %v5162
        %5164 = vmatprep.subr.mxu0 0.0
        %v5165 = vand.u32 %v5155, 4294901760
        %5166 = vmatpush1.xpose.msra.mxu0 %v5165
        %5167 = vmatprep.subr.mxu0 0.0
        %v5168 = vand.u32 %v5157, 4294901760
        %5169 = vmatpush1.xpose.msra.mxu0 %v5168
        %5170 = vmatprep.subr.mxu0 0.0
        %v5171 = vand.u32 %v5159, 4294901760
        %5172 = vmatpush1.xpose.msra.mxu0 %v5171
        %5173 = vmatprep.subr.mxu0 0.0
        %5174 = vmatpush1.xpose.msra.mxu0 0.0
        %5175 = vmatprep.subr.mxu0 0.0
        %5176 = vmatpush1.xpose.msra.mxu0 0.0
        %5177 = vmatprep.subr.mxu0 0.0
        %5178 = vmatpush1.xpose.msra.mxu0 0.0
        %5179 = vmatprep.subr.mxu0 0.0
        %5180 = vmatpush1.xpose.msra.mxu0 0.0
        %5181 = vmatprep.subr.mxu0 0.0
        %5182 = vmatpush1.xpose.msra.mxu0 0.0
        %5183 = vmatprep.subr.mxu0 0.0
        %5184 = vmatpush1.xpose.msra.mxu0 0.0
        %5185 = vmatprep.subr.mxu0 0.0
        %5186 = vmatpush1.xpose.msra.mxu0 0.0
        %5187 = vmatprep.subr.mxu0 0.0
        %5188 = vmatpush1.xpose.msra.mxu0 0.0
        %5189 = vmatprep.subr.mxu0 0.0
        %5190 = vmatpush1.xpose.msra.mxu0 0.0
        %5191 = vmatprep.subr.mxu0 0.0
        %5192 = vmatpush1.xpose.msra.mxu0 0.0
        %5193 = vmatprep.subr.mxu0 0.0
        %5194 = vmatpush1.xpose.msra.mxu0 0.0
        %5195 = vmatprep.subr.mxu0 0.0
        %5196 = vmatpush1.xpose.msra.mxu0 0.0
        %5197 = vmatprep.subr.mxu0 0.0
        %5198 = vmatpush1.xpose.msra.mxu0 0.0
        %5199 = vmatprep.subr.mxu0 0.0
        %5200 = vmatpush1.xpose.msra.mxu0 0.0
        %5201 = vmatprep.subr.mxu0 0.0
        %5202 = vmatpush1.xpose.msra.mxu0 0.0
        %5203 = vmatprep.subr.mxu0 0.0
        %5204 = vmatpush1.xpose.msra.mxu0 0.0
        %5205 = vmatprep.subr.mxu0 0.0
        %5206 = vmatpush1.xpose.msra.mxu0 0.0
        %5207 = vmatprep.subr.mxu0 0.0
        %5208 = vmatpush1.xpose.msra.mxu0 0.0
        %5209 = vmatprep.subr.mxu0 0.0
        %5210 = vmatpush1.xpose.msra.mxu0 0.0
        %5211 = vmatprep.subr.mxu0 0.0
        %5212 = vmatpush1.xpose.msra.mxu0 0.0
        %5213 = vmatprep.subr.mxu0 0.0
        %5214 = vmatpush1.xpose.msra.mxu0 0.0
        %5215 = vmatprep.subr.mxu0 0.0
        %5216 = vmatpush1.xpose.msra.mxu0 0.0
        %5217 = vmatprep.subr.mxu0 0.0
        %5218 = vmatpush1.xpose.msra.mxu0 0.0
        %5219 = vmatprep.subr.mxu0 0.0
        %5220 = vmatpush1.xpose.msra.mxu0 0.0
        %5221 = vmatprep.subr.mxu0 0.0
        %5222 = vmatpush1.xpose.msra.mxu0 0.0
        %5223 = vmatprep.subr.mxu0 0.0
        %5224 = vmatpush1.xpose.msra.mxu0 0.0
        %5225 = vmatprep.subr.mxu0 0.0
        %5226 = vmatpush1.xpose.msra.mxu0 0.0
        %5227 = vmatprep.subr.mxu0 0.0
        %5228 = vmatpush1.xpose.msra.mxu0 0.0
        %5229 = vmatprep.mubr.f32.mxu0 0.0
        %v5230 = vand.u32 %v5145, 4294901760
        %v5231 = vsub.f32 %v5145, %v5230
        %v5232 = vand.u32 %v5231, 4294901760
        %v5233 = vsub.f32 %v5231, %v5232
        %v5234 = vand.u32 %v5233, 4294901760
        %5235 = vmatmul.mubr.f32.gmra.mrb[0].mxu0 %v5234
        %v5236 = vpop.f32.mrb[0].mxu0
        %v5237 = vadd.f32 0.0, %v5236
        %v5238 = vpop.f32.mrb[0].mxu0
        %5239 = vmatprep.mubr.f32.mxu0 0.0
        %v5240 = vand.u32 %v5147, 4294901760
        %v5241 = vsub.f32 %v5147, %v5240
        %v5242 = vand.u32 %v5241, 4294901760
        %v5243 = vsub.f32 %v5241, %v5242
        %v5244 = vand.u32 %v5243, 4294901760
        %5245 = vmatmul.mubr.f32.gmra.mrb[0].mxu0 %v5244
        %v5246 = vpop.f32.mrb[0].mxu0
        %v5247 = vadd.f32 0.0, %v5246
        %v5248 = vpop.f32.mrb[0].mxu0
        %5249 = vmatprep.mubr.f32.mxu0 0.0
        %v5250 = vand.u32 %v5149, 4294901760
        %v5251 = vsub.f32 %v5149, %v5250
        %v5252 = vand.u32 %v5251, 4294901760
        %v5253 = vsub.f32 %v5251, %v5252
        %v5254 = vand.u32 %v5253, 4294901760
        %5255 = vmatmul.mubr.f32.gmra.mrb[0].mxu0 %v5254
        %v5256 = vpop.f32.mrb[0].mxu0
        %v5257 = vadd.f32 0.0, %v5256
        %v5258 = vpop.f32.mrb[0].mxu0
        %5259 = vmatprep.mubr.f32.mxu0 0.0
        %v5260 = vand.u32 %v5151, 4294901760
        %v5261 = vsub.f32 %v5151, %v5260
        %v5262 = vand.u32 %v5261, 4294901760
        %v5263 = vsub.f32 %v5261, %v5262
        %v5264 = vand.u32 %v5263, 4294901760
        %5265 = vmatmul.mubr.f32.gmra.mrb[0].mxu0 %v5264
        %v5266 = vpop.f32.mrb[0].mxu0
        %v5267 = vadd.f32 0.0, %v5266
        %v5268 = vpop.f32.mrb[0].mxu0
        %5269 = vdwg.mxu0
        %5270 = vmatprep.subr.mxu0 0.0
        %v5271 = vand.u32 %v5153, 4294901760
        %v5272 = vsub.f32 %v5153, %v5271
        %v5273 = vand.u32 %v5272, 4294901760
        %v5274 = vsub.f32 %v5272, %v5273
        %v5275 = vand.u32 %v5274, 4294901760
        %5276 = vmatpush1.xpose.msra.mxu0 %v5275
        %5277 = vmatprep.subr.mxu0 0.0
        %v5278 = vand.u32 %v5155, 4294901760
        %v5279 = vsub.f32 %v5155, %v5278
        %v5280 = vand.u32 %v5279, 4294901760
        %v5281 = vsub.f32 %v5279, %v5280
        %v5282 = vand.u32 %v5281, 4294901760
        %5283 = vmatpush1.xpose.msra.mxu0 %v5282
        %5284 = vmatprep.subr.mxu0 0.0
        %v5285 = vand.u32 %v5157, 4294901760
        %v5286 = vsub.f32 %v5157, %v5285
        %v5287 = vand.u32 %v5286, 4294901760
        %v5288 = vsub.f32 %v5286, %v5287
        %v5289 = vand.u32 %v5288, 4294901760
        %5290 = vmatpush1.xpose.msra.mxu0 %v5289
        %5291 = vmatprep.subr.mxu0 0.0
        %v5292 = vand.u32 %v5159, 4294901760
        %v5293 = vsub.f32 %v5159, %v5292
        %v5294 = vand.u32 %v5293, 4294901760
        %v5295 = vsub.f32 %v5293, %v5294
        %v5296 = vand.u32 %v5295, 4294901760
        %5297 = vmatpush1.xpose.msra.mxu0 %v5296
        %5298 = vmatprep.subr.mxu0 0.0
        %5299 = vmatpush1.xpose.msra.mxu0 0.0
        %5300 = vmatprep.subr.mxu0 0.0
        %5301 = vmatpush1.xpose.msra.mxu0 0.0
        %5302 = vmatprep.subr.mxu0 0.0
        %5303 = vmatpush1.xpose.msra.mxu0 0.0
        %5304 = vmatprep.subr.mxu0 0.0
        %5305 = vmatpush1.xpose.msra.mxu0 0.0
        %5306 = vmatprep.subr.mxu0 0.0
        %5307 = vmatpush1.xpose.msra.mxu0 0.0
        %5308 = vmatprep.subr.mxu0 0.0
        %5309 = vmatpush1.xpose.msra.mxu0 0.0
        %5310 = vmatprep.subr.mxu0 0.0
        %5311 = vmatpush1.xpose.msra.mxu0 0.0
        %5312 = vmatprep.subr.mxu0 0.0
        %5313 = vmatpush1.xpose.msra.mxu0 0.0
        %5314 = vmatprep.subr.mxu0 0.0
        %5315 = vmatpush1.xpose.msra.mxu0 0.0
        %5316 = vmatprep.subr.mxu0 0.0
        %5317 = vmatpush1.xpose.msra.mxu0 0.0
        %5318 = vmatprep.subr.mxu0 0.0
        %5319 = vmatpush1.xpose.msra.mxu0 0.0
        %5320 = vmatprep.subr.mxu0 0.0
        %5321 = vmatpush1.xpose.msra.mxu0 0.0
        %5322 = vmatprep.subr.mxu0 0.0
        %5323 = vmatpush1.xpose.msra.mxu0 0.0
        %5324 = vmatprep.subr.mxu0 0.0
        %5325 = vmatpush1.xpose.msra.mxu0 0.0
        %5326 = vmatprep.subr.mxu0 0.0
        %5327 = vmatpush1.xpose.msra.mxu0 0.0
        %5328 = vmatprep.subr.mxu0 0.0
        %5329 = vmatpush1.xpose.msra.mxu0 0.0
        %5330 = vmatprep.subr.mxu0 0.0
        %5331 = vmatpush1.xpose.msra.mxu0 0.0
        %5332 = vmatprep.subr.mxu0 0.0
        %5333 = vmatpush1.xpose.msra.mxu0 0.0
        %5334 = vmatprep.subr.mxu0 0.0
        %5335 = vmatpush1.xpose.msra.mxu0 0.0
        %5336 = vmatprep.subr.mxu0 0.0
        %5337 = vmatpush1.xpose.msra.mxu0 0.0
        %5338 = vmatprep.subr.mxu0 0.0
        %5339 = vmatpush1.xpose.msra.mxu0 0.0
        %5340 = vmatprep.subr.mxu0 0.0
        %5341 = vmatpush1.xpose.msra.mxu0 0.0
        %5342 = vmatprep.subr.mxu0 0.0
        %5343 = vmatpush1.xpose.msra.mxu0 0.0
        %5344 = vmatprep.subr.mxu0 0.0
        %5345 = vmatpush1.xpose.msra.mxu0 0.0
        %5346 = vmatprep.subr.mxu0 0.0
        %5347 = vmatpush1.xpose.msra.mxu0 0.0
        %5348 = vmatprep.subr.mxu0 0.0
        %5349 = vmatpush1.xpose.msra.mxu0 0.0
        %5350 = vmatprep.subr.mxu0 0.0
        %5351 = vmatpush1.xpose.msra.mxu0 0.0
        %5352 = vmatprep.subr.mxu0 0.0
        %5353 = vmatpush1.xpose.msra.mxu0 0.0
        %5354 = vmatprep.mubr.f32.mxu0 0.0
        %v5355 = vand.u32 %v5145, 4294901760
        %5356 = vmatmul.mubr.f32.gmra.mrb[0].mxu0 %v5355
        %v5357 = vpop.f32.mrb[0].mxu0
        %v5358 = vadd.f32 %v5237, %v5357
        %v5359 = vpop.f32.mrb[0].mxu0
        %5360 = vmatprep.mubr.f32.mxu0 0.0
        %v5361 = vand.u32 %v5147, 4294901760
        %5362 = vmatmul.mubr.f32.gmra.mrb[0].mxu0 %v5361
        %v5363 = vpop.f32.mrb[0].mxu0
        %v5364 = vadd.f32 %v5247, %v5363
        %v5365 = vpop.f32.mrb[0].mxu0
        %5366 = vmatprep.mubr.f32.mxu0 0.0
        %v5367 = vand.u32 %v5149, 4294901760
        %5368 = vmatmul.mubr.f32.gmra.mrb[0].mxu0 %v5367
        %v5369 = vpop.f32.mrb[0].mxu0
        %v5370 = vadd.f32 %v5257, %v5369
        %v5371 = vpop.f32.mrb[0].mxu0
        %5372 = vmatprep.mubr.f32.mxu0 0.0
        %v5373 = vand.u32 %v5151, 4294901760
        %5374 = vmatmul.mubr.f32.gmra.mrb[0].mxu0 %v5373
        %v5375 = vpop.f32.mrb[0].mxu0
        %v5376 = vadd.f32 %v5267, %v5375
        %v5377 = vpop.f32.mrb[0].mxu0
        %5378 = vdwg.mxu0
        %5379 = vmatprep.subr.mxu0 0.0
        %v5380 = vand.u32 %v5153, 4294901760
        %v5381 = vsub.f32 %v5153, %v5380
        %5382 = vmatpush1.xpose.msra.mxu0 %v5381
        %5383 = vmatprep.subr.mxu0 0.0
        %v5384 = vand.u32 %v5155, 4294901760
        %v5385 = vsub.f32 %v5155, %v5384
        %5386 = vmatpush1.xpose.msra.mxu0 %v5385
        %5387 = vmatprep.subr.mxu0 0.0
        %v5388 = vand.u32 %v5157, 4294901760
        %v5389 = vsub.f32 %v5157, %v5388
        %5390 = vmatpush1.xpose.msra.mxu0 %v5389
        %5391 = vmatprep.subr.mxu0 0.0
        %v5392 = vand.u32 %v5159, 4294901760
        %v5393 = vsub.f32 %v5159, %v5392
        %5394 = vmatpush1.xpose.msra.mxu0 %v5393
        %5395 = vmatprep.subr.mxu0 0.0
        %5396 = vmatpush1.xpose.msra.mxu0 0.0
        %5397 = vmatprep.subr.mxu0 0.0
        %5398 = vmatpush1.xpose.msra.mxu0 0.0
        %5399 = vmatprep.subr.mxu0 0.0
        %5400 = vmatpush1.xpose.msra.mxu0 0.0
        %5401 = vmatprep.subr.mxu0 0.0
        %5402 = vmatpush1.xpose.msra.mxu0 0.0
        %5403 = vmatprep.subr.mxu0 0.0
        %5404 = vmatpush1.xpose.msra.mxu0 0.0
        %5405 = vmatprep.subr.mxu0 0.0
        %5406 = vmatpush1.xpose.msra.mxu0 0.0
        %5407 = vmatprep.subr.mxu0 0.0
        %5408 = vmatpush1.xpose.msra.mxu0 0.0
        %5409 = vmatprep.subr.mxu0 0.0
        %5410 = vmatpush1.xpose.msra.mxu0 0.0
        %5411 = vmatprep.subr.mxu0 0.0
        %5412 = vmatpush1.xpose.msra.mxu0 0.0
        %5413 = vmatprep.subr.mxu0 0.0
        %5414 = vmatpush1.xpose.msra.mxu0 0.0
        %5415 = vmatprep.subr.mxu0 0.0
        %5416 = vmatpush1.xpose.msra.mxu0 0.0
        %5417 = vmatprep.subr.mxu0 0.0
        %5418 = vmatpush1.xpose.msra.mxu0 0.0
        %5419 = vmatprep.subr.mxu0 0.0
        %5420 = vmatpush1.xpose.msra.mxu0 0.0
        %5421 = vmatprep.subr.mxu0 0.0
        %5422 = vmatpush1.xpose.msra.mxu0 0.0
        %5423 = vmatprep.subr.mxu0 0.0
        %5424 = vmatpush1.xpose.msra.mxu0 0.0
        %5425 = vmatprep.subr.mxu0 0.0
        %5426 = vmatpush1.xpose.msra.mxu0 0.0
        %5427 = vmatprep.subr.mxu0 0.0
        %5428 = vmatpush1.xpose.msra.mxu0 0.0
        %5429 = vmatprep.subr.mxu0 0.0
        %5430 = vmatpush1.xpose.msra.mxu0 0.0
        %5431 = vmatprep.subr.mxu0 0.0
        %5432 = vmatpush1.xpose.msra.mxu0 0.0
        %5433 = vmatprep.subr.mxu0 0.0
        %5434 = vmatpush1.xpose.msra.mxu0 0.0
        %5435 = vmatprep.subr.mxu0 0.0
        %5436 = vmatpush1.xpose.msra.mxu0 0.0
        %5437 = vmatprep.subr.mxu0 0.0
        %5438 = vmatpush1.xpose.msra.mxu0 0.0
        %5439 = vmatprep.subr.mxu0 0.0
        %5440 = vmatpush1.xpose.msra.mxu0 0.0
        %5441 = vmatprep.subr.mxu0 0.0
        %5442 = vmatpush1.xpose.msra.mxu0 0.0
        %5443 = vmatprep.subr.mxu0 0.0
        %5444 = vmatpush1.xpose.msra.mxu0 0.0
        %5445 = vmatprep.subr.mxu0 0.0
        %5446 = vmatpush1.xpose.msra.mxu0 0.0
        %5447 = vmatprep.subr.mxu0 0.0
        %5448 = vmatpush1.xpose.msra.mxu0 0.0
        %5449 = vmatprep.subr.mxu0 0.0
        %5450 = vmatpush1.xpose.msra.mxu0 0.0
        %5451 = vmatprep.mubr.f32.mxu0 0.0
        %v5452 = vand.u32 %v5145, 4294901760
        %v5453 = vsub.f32 %v5145, %v5452
        %5454 = vmatmul.mubr.f32.gmra.mrb[0].mxu0 %v5453
        %v5455 = vpop.f32.mrb[0].mxu0
        %v5456 = vadd.f32 %v5358, %v5455
        %v5457 = vpop.f32.mrb[0].mxu0
        %5458 = vmatprep.mubr.f32.mxu0 0.0
        %v5459 = vand.u32 %v5147, 4294901760
        %v5460 = vsub.f32 %v5147, %v5459
        %5461 = vmatmul.mubr.f32.gmra.mrb[0].mxu0 %v5460
        %v5462 = vpop.f32.mrb[0].mxu0
        %v5463 = vadd.f32 %v5364, %v5462
        %v5464 = vpop.f32.mrb[0].mxu0
        %5465 = vmatprep.mubr.f32.mxu0 0.0
        %v5466 = vand.u32 %v5149, 4294901760
        %v5467 = vsub.f32 %v5149, %v5466
        %5468 = vmatmul.mubr.f32.gmra.mrb[0].mxu0 %v5467
        %v5469 = vpop.f32.mrb[0].mxu0
        %v5470 = vadd.f32 %v5370, %v5469
        %v5471 = vpop.f32.mrb[0].mxu0
        %5472 = vmatprep.mubr.f32.mxu0 0.0
        %v5473 = vand.u32 %v5151, 4294901760
        %v5474 = vsub.f32 %v5151, %v5473
        %5475 = vmatmul.mubr.f32.gmra.mrb[0].mxu0 %v5474
        %v5476 = vpop.f32.mrb[0].mxu0
        %v5477 = vadd.f32 %v5376, %v5476
        %v5478 = vpop.f32.mrb[0].mxu0
        %5479 = vdwg.mxu0
        %5480 = vmatprep.subr.mxu0 0.0
        %v5481 = vand.u32 %v5153, 4294901760
        %5482 = vmatpush1.xpose.msra.mxu0 %v5481
        %5483 = vmatprep.subr.mxu0 0.0
        %v5484 = vand.u32 %v5155, 4294901760
        %5485 = vmatpush1.xpose.msra.mxu0 %v5484
        %5486 = vmatprep.subr.mxu0 0.0
        %v5487 = vand.u32 %v5157, 4294901760
        %5488 = vmatpush1.xpose.msra.mxu0 %v5487
        %5489 = vmatprep.subr.mxu0 0.0
        %v5490 = vand.u32 %v5159, 4294901760
        %5491 = vmatpush1.xpose.msra.mxu0 %v5490
        %5492 = vmatprep.subr.mxu0 0.0
        %5493 = vmatpush1.xpose.msra.mxu0 0.0
        %5494 = vmatprep.subr.mxu0 0.0
        %5495 = vmatpush1.xpose.msra.mxu0 0.0
        %5496 = vmatprep.subr.mxu0 0.0
        %5497 = vmatpush1.xpose.msra.mxu0 0.0
        %5498 = vmatprep.subr.mxu0 0.0
        %5499 = vmatpush1.xpose.msra.mxu0 0.0
        %5500 = vmatprep.subr.mxu0 0.0
        %5501 = vmatpush1.xpose.msra.mxu0 0.0
        %5502 = vmatprep.subr.mxu0 0.0
        %5503 = vmatpush1.xpose.msra.mxu0 0.0
        %5504 = vmatprep.subr.mxu0 0.0
        %5505 = vmatpush1.xpose.msra.mxu0 0.0
        %5506 = vmatprep.subr.mxu0 0.0
        %5507 = vmatpush1.xpose.msra.mxu0 0.0
        %5508 = vmatprep.subr.mxu0 0.0
        %5509 = vmatpush1.xpose.msra.mxu0 0.0
        %5510 = vmatprep.subr.mxu0 0.0
        %5511 = vmatpush1.xpose.msra.mxu0 0.0
        %5512 = vmatprep.subr.mxu0 0.0
        %5513 = vmatpush1.xpose.msra.mxu0 0.0
        %5514 = vmatprep.subr.mxu0 0.0
        %5515 = vmatpush1.xpose.msra.mxu0 0.0
        %5516 = vmatprep.subr.mxu0 0.0
        %5517 = vmatpush1.xpose.msra.mxu0 0.0
        %5518 = vmatprep.subr.mxu0 0.0
        %5519 = vmatpush1.xpose.msra.mxu0 0.0
        %5520 = vmatprep.subr.mxu0 0.0
        %5521 = vmatpush1.xpose.msra.mxu0 0.0
        %5522 = vmatprep.subr.mxu0 0.0
        %5523 = vmatpush1.xpose.msra.mxu0 0.0
        %5524 = vmatprep.subr.mxu0 0.0
        %5525 = vmatpush1.xpose.msra.mxu0 0.0
        %5526 = vmatprep.subr.mxu0 0.0
        %5527 = vmatpush1.xpose.msra.mxu0 0.0
        %5528 = vmatprep.subr.mxu0 0.0
        %5529 = vmatpush1.xpose.msra.mxu0 0.0
        %5530 = vmatprep.subr.mxu0 0.0
        %5531 = vmatpush1.xpose.msra.mxu0 0.0
        %5532 = vmatprep.subr.mxu0 0.0
        %5533 = vmatpush1.xpose.msra.mxu0 0.0
        %5534 = vmatprep.subr.mxu0 0.0
        %5535 = vmatpush1.xpose.msra.mxu0 0.0
        %5536 = vmatprep.subr.mxu0 0.0
        %5537 = vmatpush1.xpose.msra.mxu0 0.0
        %5538 = vmatprep.subr.mxu0 0.0
        %5539 = vmatpush1.xpose.msra.mxu0 0.0
        %5540 = vmatprep.subr.mxu0 0.0
        %5541 = vmatpush1.xpose.msra.mxu0 0.0
        %5542 = vmatprep.subr.mxu0 0.0
        %5543 = vmatpush1.xpose.msra.mxu0 0.0
        %5544 = vmatprep.subr.mxu0 0.0
        %5545 = vmatpush1.xpose.msra.mxu0 0.0
        %5546 = vmatprep.subr.mxu0 0.0
        %5547 = vmatpush1.xpose.msra.mxu0 0.0
        %5548 = vmatprep.mubr.f32.mxu0 0.0
        %v5549 = vand.u32 %v5145, 4294901760
        %v5550 = vsub.f32 %v5145, %v5549
        %v5551 = vand.u32 %v5550, 4294901760
        %5552 = vmatmul.mubr.f32.gmra.mrb[0].mxu0 %v5551
        %v5553 = vpop.f32.mrb[0].mxu0
        %v5554 = vadd.f32 %v5456, %v5553
        %v5555 = vpop.f32.mrb[0].mxu0
        %5556 = vmatprep.mubr.f32.mxu0 0.0
        %v5557 = vand.u32 %v5147, 4294901760
        %v5558 = vsub.f32 %v5147, %v5557
        %v5559 = vand.u32 %v5558, 4294901760
        %5560 = vmatmul.mubr.f32.gmra.mrb[0].mxu0 %v5559
        %v5561 = vpop.f32.mrb[0].mxu0
        %v5562 = vadd.f32 %v5463, %v5561
        %v5563 = vpop.f32.mrb[0].mxu0
        %5564 = vmatprep.mubr.f32.mxu0 0.0
        %v5565 = vand.u32 %v5149, 4294901760
        %v5566 = vsub.f32 %v5149, %v5565
        %v5567 = vand.u32 %v5566, 4294901760
        %5568 = vmatmul.mubr.f32.gmra.mrb[0].mxu0 %v5567
        %v5569 = vpop.f32.mrb[0].mxu0
        %v5570 = vadd.f32 %v5470, %v5569
        %v5571 = vpop.f32.mrb[0].mxu0
        %5572 = vmatprep.mubr.f32.mxu0 0.0
        %v5573 = vand.u32 %v5151, 4294901760
        %v5574 = vsub.f32 %v5151, %v5573
        %v5575 = vand.u32 %v5574, 4294901760
        %5576 = vmatmul.mubr.f32.gmra.mrb[0].mxu0 %v5575
        %v5577 = vpop.f32.mrb[0].mxu0
        %v5578 = vadd.f32 %v5477, %v5577
        %v5579 = vpop.f32.mrb[0].mxu0
        %5580 = vdwg.mxu0
        %5581 = vmatprep.subr.mxu0 0.0
        %v5582 = vand.u32 %v5153, 4294901760
        %v5583 = vsub.f32 %v5153, %v5582
        %v5584 = vand.u32 %v5583, 4294901760
        %5585 = vmatpush1.xpose.msra.mxu0 %v5584
        %5586 = vmatprep.subr.mxu0 0.0
        %v5587 = vand.u32 %v5155, 4294901760
        %v5588 = vsub.f32 %v5155, %v5587
        %v5589 = vand.u32 %v5588, 4294901760
        %5590 = vmatpush1.xpose.msra.mxu0 %v5589
        %5591 = vmatprep.subr.mxu0 0.0
        %v5592 = vand.u32 %v5157, 4294901760
        %v5593 = vsub.f32 %v5157, %v5592
        %v5594 = vand.u32 %v5593, 4294901760
        %5595 = vmatpush1.xpose.msra.mxu0 %v5594
        %5596 = vmatprep.subr.mxu0 0.0
        %v5597 = vand.u32 %v5159, 4294901760
        %v5598 = vsub.f32 %v5159, %v5597
        %v5599 = vand.u32 %v5598, 4294901760
        %5600 = vmatpush1.xpose.msra.mxu0 %v5599
        %5601 = vmatprep.subr.mxu0 0.0
        %5602 = vmatpush1.xpose.msra.mxu0 0.0
        %5603 = vmatprep.subr.mxu0 0.0
        %5604 = vmatpush1.xpose.msra.mxu0 0.0
        %5605 = vmatprep.subr.mxu0 0.0
        %5606 = vmatpush1.xpose.msra.mxu0 0.0
        %5607 = vmatprep.subr.mxu0 0.0
        %5608 = vmatpush1.xpose.msra.mxu0 0.0
        %5609 = vmatprep.subr.mxu0 0.0
        %5610 = vmatpush1.xpose.msra.mxu0 0.0
        %5611 = vmatprep.subr.mxu0 0.0
        %5612 = vmatpush1.xpose.msra.mxu0 0.0
        %5613 = vmatprep.subr.mxu0 0.0
        %5614 = vmatpush1.xpose.msra.mxu0 0.0
        %5615 = vmatprep.subr.mxu0 0.0
        %5616 = vmatpush1.xpose.msra.mxu0 0.0
        %5617 = vmatprep.subr.mxu0 0.0
        %5618 = vmatpush1.xpose.msra.mxu0 0.0
        %5619 = vmatprep.subr.mxu0 0.0
        %5620 = vmatpush1.xpose.msra.mxu0 0.0
        %5621 = vmatprep.subr.mxu0 0.0
        %5622 = vmatpush1.xpose.msra.mxu0 0.0
        %5623 = vmatprep.subr.mxu0 0.0
        %5624 = vmatpush1.xpose.msra.mxu0 0.0
        %5625 = vmatprep.subr.mxu0 0.0
        %5626 = vmatpush1.xpose.msra.mxu0 0.0
        %5627 = vmatprep.subr.mxu0 0.0
        %5628 = vmatpush1.xpose.msra.mxu0 0.0
        %5629 = vmatprep.subr.mxu0 0.0
        %5630 = vmatpush1.xpose.msra.mxu0 0.0
        %5631 = vmatprep.subr.mxu0 0.0
        %5632 = vmatpush1.xpose.msra.mxu0 0.0
        %5633 = vmatprep.subr.mxu0 0.0
        %5634 = vmatpush1.xpose.msra.mxu0 0.0
        %5635 = vmatprep.subr.mxu0 0.0
        %5636 = vmatpush1.xpose.msra.mxu0 0.0
        %5637 = vmatprep.subr.mxu0 0.0
        %5638 = vmatpush1.xpose.msra.mxu0 0.0
        %5639 = vmatprep.subr.mxu0 0.0
        %5640 = vmatpush1.xpose.msra.mxu0 0.0
        %5641 = vmatprep.subr.mxu0 0.0
        %5642 = vmatpush1.xpose.msra.mxu0 0.0
        %5643 = vmatprep.subr.mxu0 0.0
        %5644 = vmatpush1.xpose.msra.mxu0 0.0
        %5645 = vmatprep.subr.mxu0 0.0
        %5646 = vmatpush1.xpose.msra.mxu0 0.0
        %5647 = vmatprep.subr.mxu0 0.0
        %5648 = vmatpush1.xpose.msra.mxu0 0.0
        %5649 = vmatprep.subr.mxu0 0.0
        %5650 = vmatpush1.xpose.msra.mxu0 0.0
        %5651 = vmatprep.subr.mxu0 0.0
        %5652 = vmatpush1.xpose.msra.mxu0 0.0
        %5653 = vmatprep.subr.mxu0 0.0
        %5654 = vmatpush1.xpose.msra.mxu0 0.0
        %5655 = vmatprep.subr.mxu0 0.0
        %5656 = vmatpush1.xpose.msra.mxu0 0.0
        %5657 = vmatprep.mubr.f32.mxu0 0.0
        %v5658 = vand.u32 %v5145, 4294901760
        %5659 = vmatmul.mubr.f32.gmra.mrb[0].mxu0 %v5658
        %v5660 = vpop.f32.mrb[0].mxu0
        %v5661 = vadd.f32 %v5554, %v5660
        %v5662 = vpop.f32.mrb[0].mxu0
        %5663 = vmatprep.mubr.f32.mxu0 0.0
        %v5664 = vand.u32 %v5147, 4294901760
        %5665 = vmatmul.mubr.f32.gmra.mrb[0].mxu0 %v5664
        %v5666 = vpop.f32.mrb[0].mxu0
        %v5667 = vadd.f32 %v5562, %v5666
        %v5668 = vpop.f32.mrb[0].mxu0
        %5669 = vmatprep.mubr.f32.mxu0 0.0
        %v5670 = vand.u32 %v5149, 4294901760
        %5671 = vmatmul.mubr.f32.gmra.mrb[0].mxu0 %v5670
        %v5672 = vpop.f32.mrb[0].mxu0
        %v5673 = vadd.f32 %v5570, %v5672
        %v5674 = vpop.f32.mrb[0].mxu0
        %5675 = vmatprep.mubr.f32.mxu0 0.0
        %v5676 = vand.u32 %v5151, 4294901760
        %5677 = vmatmul.mubr.f32.gmra.mrb[0].mxu0 %v5676
        %v5678 = vpop.f32.mrb[0].mxu0
        %v5679 = vadd.f32 %v5578, %v5678
        %v5680 = vpop.f32.mrb[0].mxu0
        %5681 = vdwg.mxu0
        %5682 = vmatprep.subr.mxu0 0.0
        %v5683 = vand.u32 %v5153, 4294901760
        %5684 = vmatpush1.xpose.msra.mxu0 %v5683
        %5685 = vmatprep.subr.mxu0 0.0
        %v5686 = vand.u32 %v5155, 4294901760
        %5687 = vmatpush1.xpose.msra.mxu0 %v5686
        %5688 = vmatprep.subr.mxu0 0.0
        %v5689 = vand.u32 %v5157, 4294901760
        %5690 = vmatpush1.xpose.msra.mxu0 %v5689
        %5691 = vmatprep.subr.mxu0 0.0
        %v5692 = vand.u32 %v5159, 4294901760
        %5693 = vmatpush1.xpose.msra.mxu0 %v5692
        %5694 = vmatprep.subr.mxu0 0.0
        %5695 = vmatpush1.xpose.msra.mxu0 0.0
        %5696 = vmatprep.subr.mxu0 0.0
        %5697 = vmatpush1.xpose.msra.mxu0 0.0
        %5698 = vmatprep.subr.mxu0 0.0
        %5699 = vmatpush1.xpose.msra.mxu0 0.0
        %5700 = vmatprep.subr.mxu0 0.0
        %5701 = vmatpush1.xpose.msra.mxu0 0.0
        %5702 = vmatprep.subr.mxu0 0.0
        %5703 = vmatpush1.xpose.msra.mxu0 0.0
        %5704 = vmatprep.subr.mxu0 0.0
        %5705 = vmatpush1.xpose.msra.mxu0 0.0
        %5706 = vmatprep.subr.mxu0 0.0
        %5707 = vmatpush1.xpose.msra.mxu0 0.0
        %5708 = vmatprep.subr.mxu0 0.0
        %5709 = vmatpush1.xpose.msra.mxu0 0.0
        %5710 = vmatprep.subr.mxu0 0.0
        %5711 = vmatpush1.xpose.msra.mxu0 0.0
        %5712 = vmatprep.subr.mxu0 0.0
        %5713 = vmatpush1.xpose.msra.mxu0 0.0
        %5714 = vmatprep.subr.mxu0 0.0
        %5715 = vmatpush1.xpose.msra.mxu0 0.0
        %5716 = vmatprep.subr.mxu0 0.0
        %5717 = vmatpush1.xpose.msra.mxu0 0.0
        %5718 = vmatprep.subr.mxu0 0.0
        %5719 = vmatpush1.xpose.msra.mxu0 0.0
        %5720 = vmatprep.subr.mxu0 0.0
        %5721 = vmatpush1.xpose.msra.mxu0 0.0
        %5722 = vmatprep.subr.mxu0 0.0
        %5723 = vmatpush1.xpose.msra.mxu0 0.0
        %5724 = vmatprep.subr.mxu0 0.0
        %5725 = vmatpush1.xpose.msra.mxu0 0.0
        %5726 = vmatprep.subr.mxu0 0.0
        %5727 = vmatpush1.xpose.msra.mxu0 0.0
        %5728 = vmatprep.subr.mxu0 0.0
        %5729 = vmatpush1.xpose.msra.mxu0 0.0
        %5730 = vmatprep.subr.mxu0 0.0
        %5731 = vmatpush1.xpose.msra.mxu0 0.0
        %5732 = vmatprep.subr.mxu0 0.0
        %5733 = vmatpush1.xpose.msra.mxu0 0.0
        %5734 = vmatprep.subr.mxu0 0.0
        %5735 = vmatpush1.xpose.msra.mxu0 0.0
        %5736 = vmatprep.subr.mxu0 0.0
        %5737 = vmatpush1.xpose.msra.mxu0 0.0
        %5738 = vmatprep.subr.mxu0 0.0
        %5739 = vmatpush1.xpose.msra.mxu0 0.0
        %5740 = vmatprep.subr.mxu0 0.0
        %5741 = vmatpush1.xpose.msra.mxu0 0.0
        %5742 = vmatprep.subr.mxu0 0.0
        %5743 = vmatpush1.xpose.msra.mxu0 0.0
        %5744 = vmatprep.subr.mxu0 0.0
        %5745 = vmatpush1.xpose.msra.mxu0 0.0
        %5746 = vmatprep.subr.mxu0 0.0
        %5747 = vmatpush1.xpose.msra.mxu0 0.0
        %5748 = vmatprep.subr.mxu0 0.0
        %5749 = vmatpush1.xpose.msra.mxu0 0.0
        %5750 = vmatprep.mubr.f32.mxu0 0.0
        %v5751 = vand.u32 %v5145, 4294901760
        %5752 = vmatmul.mubr.f32.gmra.mrb[0].mxu0 %v5751
        %v5753 = vpop.f32.mrb[0].mxu0
        %v5754 = vadd.f32 %v5661, %v5753
        %v5755 = vpop.f32.mrb[0].mxu0
        %5756 = vmatprep.mubr.f32.mxu0 0.0
        %v5757 = vand.u32 %v5147, 4294901760
        %5758 = vmatmul.mubr.f32.gmra.mrb[0].mxu0 %v5757
        %v5759 = vpop.f32.mrb[0].mxu0
        %v5760 = vadd.f32 %v5667, %v5759
        %v5761 = vpop.f32.mrb[0].mxu0
        %5762 = vmatprep.mubr.f32.mxu0 0.0
        %v5763 = vand.u32 %v5149, 4294901760
        %5764 = vmatmul.mubr.f32.gmra.mrb[0].mxu0 %v5763
        %v5765 = vpop.f32.mrb[0].mxu0
        %v5766 = vadd.f32 %v5673, %v5765
        %v5767 = vpop.f32.mrb[0].mxu0
        %5768 = vmatprep.mubr.f32.mxu0 0.0
        %v5769 = vand.u32 %v5151, 4294901760
        %5770 = vmatmul.mubr.f32.gmra.mrb[0].mxu0 %v5769
        %v5771 = vpop.f32.mrb[0].mxu0
        %v5772 = vadd.f32 %v5679, %v5771
        %v5773 = vpop.f32.mrb[0].mxu0
        %5774 = vdwg.mxu0
        %v5775 = vsel %vm2995, %v5754, -inf
        %5776 = vmax.xlane.f32.xlu0 %v5775
        %v5777 = vpop.xlane.xlu0 %5776
        %v5778 = vsel %vm2995, %v5760, -inf
        %5779 = vmax.xlane.f32.xlu0 %v5778
        %v5780 = vpop.xlane.xlu0 %5779
        %v5781 = vsel %vm2995, %v5766, -inf
        %5782 = vmax.xlane.f32.xlu0 %v5781
        %v5783 = vpop.xlane.xlu0 %5782
        %v5784 = vsel %vm2995, %v5772, -inf
        %5785 = vmax.xlane.f32.xlu0 %v5784
        %v5786 = vpop.xlane.xlu0 %5785
        %v5787 = vsub.f32 %v5754, %v5777
        %v5788 = vsub.f32 %v5760, %v5780
        %v5789 = vsub.f32 %v5766, %v5783
        %v5790 = vsub.f32 %v5772, %v5786
        %v5791 = vmul.f32 %v5787, 1.442695
        %v5792 = vpow.pop %v5791
        %v5793 = vmul.f32 %v5788, 1.442695
        %v5794 = vpow.pop %v5793
        %v5795 = vmul.f32 %v5789, 1.442695
        %v5796 = vpow.pop %v5795
        %v5797 = vmul.f32 %v5790, 1.442695
        %v5798 = vpow.pop %v5797
        %v5799 = vsel %vm2995, %v5792, 0.0
        %5800 = vadd.xlane.f32.xlu0 %v5799
        %v5801 = vpop.xlane.xlu0 %5800
        %v5802 = vsel %vm2995, %v5794, 0.0
        %5803 = vadd.xlane.f32.xlu0 %v5802
        %v5804 = vpop.xlane.xlu0 %5803
        %v5805 = vsel %vm2995, %v5796, 0.0
        %5806 = vadd.xlane.f32.xlu0 %v5805
        %v5807 = vpop.xlane.xlu0 %5806
        %v5808 = vsel %vm2995, %v5798, 0.0
        %5809 = vadd.xlane.f32.xlu0 %v5808
        %v5810 = vpop.xlane.xlu0 %5809
        %v5811 = vrcp.pop %v5801
        %v5812 = vmul.f32 %v5792, %v5811
        %v5813 = vrcp.pop %v5804
        %v5814 = vmul.f32 %v5794, %v5813
        %v5815 = vrcp.pop %v5807
        %v5816 = vmul.f32 %v5796, %v5815
        %v5817 = vrcp.pop %v5810
        %v5818 = vmul.f32 %v5798, %v5817
        %s5819 = scalar_lea.vmem %s343, 128 [#allocation11]
        %5820 = vst.msk [vmem:[%s5819] sm:$0xff] %vm2995, %v5812
        %5821 = vst.msk [vmem:[%s5819 + $0x8] sm:$0xff] %vm2995, %v5814
        %5822 = vst.msk [vmem:[%s5819 + $0x10] sm:$0xff] %vm2995, %v5816
        %5823 = vst.msk [vmem:[%s5819 + $0x18] sm:$0xff] %vm2995, %v5818
        %5824 = vrot.lane.b32.xlu0 %v2319, 88
        %v5825 = vpop.permute.xlu0 %5824
        %5826 = vrot.lane.b32.xlu0 %v2326, 88
        %v5827 = vpop.permute.xlu0 %5826
        %5828 = vrot.lane.b32.xlu0 %v2333, 88
        %v5829 = vpop.permute.xlu0 %5828
        %5830 = vrot.lane.b32.xlu0 %v2340, 88
        %v5831 = vpop.permute.xlu0 %5830
        %5832 = vrot.lane.b32.xlu0 %v2319, 24
        %v5833 = vpop.permute.xlu0 %5832
        %5834 = vrot.lane.b32.xlu0 %v2326, 24
        %v5835 = vpop.permute.xlu0 %5834
        %5836 = vrot.lane.b32.xlu0 %v2333, 24
        %v5837 = vpop.permute.xlu0 %5836
        %5838 = vrot.lane.b32.xlu0 %v2340, 24
        %v5839 = vpop.permute.xlu0 %5838
        %v5840 = vsel %vm2364, %v5825, 0
        %v5842 = vsel %vm2364, %v5827, 0
        %v5844 = vsel %vm2364, %v5829, 0
        %v5846 = vsel %vm2364, %v5831, 0
        %v5848 = vsel %vm2364, %v5833, 0
        %v5850 = vsel %vm2364, %v5835, 0
        %v5852 = vsel %vm2364, %v5837, 0
        %v5854 = vsel %vm2364, %v5839, 0
        %5856 = vmatprep.subr.mxu0 0.0
        %v5857 = vand.u32 %v5848, 4294901760
        %5858 = vmatpush1.xpose.msra.mxu0 %v5857
        %5859 = vmatprep.subr.mxu0 0.0
        %v5860 = vand.u32 %v5850, 4294901760
        %5861 = vmatpush1.xpose.msra.mxu0 %v5860
        %5862 = vmatprep.subr.mxu0 0.0
        %v5863 = vand.u32 %v5852, 4294901760
        %5864 = vmatpush1.xpose.msra.mxu0 %v5863
        %5865 = vmatprep.subr.mxu0 0.0
        %v5866 = vand.u32 %v5854, 4294901760
        %5867 = vmatpush1.xpose.msra.mxu0 %v5866
        %5868 = vmatprep.subr.mxu0 0.0
        %5869 = vmatpush1.xpose.msra.mxu0 0.0
        %5870 = vmatprep.subr.mxu0 0.0
        %5871 = vmatpush1.xpose.msra.mxu0 0.0
        %5872 = vmatprep.subr.mxu0 0.0
        %5873 = vmatpush1.xpose.msra.mxu0 0.0
        %5874 = vmatprep.subr.mxu0 0.0
        %5875 = vmatpush1.xpose.msra.mxu0 0.0
        %5876 = vmatprep.subr.mxu0 0.0
        %5877 = vmatpush1.xpose.msra.mxu0 0.0
        %5878 = vmatprep.subr.mxu0 0.0
        %5879 = vmatpush1.xpose.msra.mxu0 0.0
        %5880 = vmatprep.subr.mxu0 0.0
        %5881 = vmatpush1.xpose.msra.mxu0 0.0
        %5882 = vmatprep.subr.mxu0 0.0
        %5883 = vmatpush1.xpose.msra.mxu0 0.0
        %5884 = vmatprep.subr.mxu0 0.0
        %5885 = vmatpush1.xpose.msra.mxu0 0.0
        %5886 = vmatprep.subr.mxu0 0.0
        %5887 = vmatpush1.xpose.msra.mxu0 0.0
        %5888 = vmatprep.subr.mxu0 0.0
        %5889 = vmatpush1.xpose.msra.mxu0 0.0
        %5890 = vmatprep.subr.mxu0 0.0
        %5891 = vmatpush1.xpose.msra.mxu0 0.0
        %5892 = vmatprep.subr.mxu0 0.0
        %5893 = vmatpush1.xpose.msra.mxu0 0.0
        %5894 = vmatprep.subr.mxu0 0.0
        %5895 = vmatpush1.xpose.msra.mxu0 0.0
        %5896 = vmatprep.subr.mxu0 0.0
        %5897 = vmatpush1.xpose.msra.mxu0 0.0
        %5898 = vmatprep.subr.mxu0 0.0
        %5899 = vmatpush1.xpose.msra.mxu0 0.0
        %5900 = vmatprep.subr.mxu0 0.0
        %5901 = vmatpush1.xpose.msra.mxu0 0.0
        %5902 = vmatprep.subr.mxu0 0.0
        %5903 = vmatpush1.xpose.msra.mxu0 0.0
        %5904 = vmatprep.subr.mxu0 0.0
        %5905 = vmatpush1.xpose.msra.mxu0 0.0
        %5906 = vmatprep.subr.mxu0 0.0
        %5907 = vmatpush1.xpose.msra.mxu0 0.0
        %5908 = vmatprep.subr.mxu0 0.0
        %5909 = vmatpush1.xpose.msra.mxu0 0.0
        %5910 = vmatprep.subr.mxu0 0.0
        %5911 = vmatpush1.xpose.msra.mxu0 0.0
        %5912 = vmatprep.subr.mxu0 0.0
        %5913 = vmatpush1.xpose.msra.mxu0 0.0
        %5914 = vmatprep.subr.mxu0 0.0
        %5915 = vmatpush1.xpose.msra.mxu0 0.0
        %5916 = vmatprep.subr.mxu0 0.0
        %5917 = vmatpush1.xpose.msra.mxu0 0.0
        %5918 = vmatprep.subr.mxu0 0.0
        %5919 = vmatpush1.xpose.msra.mxu0 0.0
        %5920 = vmatprep.subr.mxu0 0.0
        %5921 = vmatpush1.xpose.msra.mxu0 0.0
        %5922 = vmatprep.subr.mxu0 0.0
        %5923 = vmatpush1.xpose.msra.mxu0 0.0
        %5924 = vmatprep.mubr.f32.mxu0 0.0
        %v5925 = vand.u32 %v5840, 4294901760
        %v5926 = vsub.f32 %v5840, %v5925
        %v5927 = vand.u32 %v5926, 4294901760
        %v5928 = vsub.f32 %v5926, %v5927
        %v5929 = vand.u32 %v5928, 4294901760
        %5930 = vmatmul.mubr.f32.gmra.mrb[0].mxu0 %v5929
        %v5931 = vpop.f32.mrb[0].mxu0
        %v5932 = vadd.f32 0.0, %v5931
        %v5933 = vpop.f32.mrb[0].mxu0
        %5934 = vmatprep.mubr.f32.mxu0 0.0
        %v5935 = vand.u32 %v5842, 4294901760
        %v5936 = vsub.f32 %v5842, %v5935
        %v5937 = vand.u32 %v5936, 4294901760
        %v5938 = vsub.f32 %v5936, %v5937
        %v5939 = vand.u32 %v5938, 4294901760
        %5940 = vmatmul.mubr.f32.gmra.mrb[0].mxu0 %v5939
        %v5941 = vpop.f32.mrb[0].mxu0
        %v5942 = vadd.f32 0.0, %v5941
        %v5943 = vpop.f32.mrb[0].mxu0
        %5944 = vmatprep.mubr.f32.mxu0 0.0
        %v5945 = vand.u32 %v5844, 4294901760
        %v5946 = vsub.f32 %v5844, %v5945
        %v5947 = vand.u32 %v5946, 4294901760
        %v5948 = vsub.f32 %v5946, %v5947
        %v5949 = vand.u32 %v5948, 4294901760
        %5950 = vmatmul.mubr.f32.gmra.mrb[0].mxu0 %v5949
        %v5951 = vpop.f32.mrb[0].mxu0
        %v5952 = vadd.f32 0.0, %v5951
        %v5953 = vpop.f32.mrb[0].mxu0
        %5954 = vmatprep.mubr.f32.mxu0 0.0
        %v5955 = vand.u32 %v5846, 4294901760
        %v5956 = vsub.f32 %v5846, %v5955
        %v5957 = vand.u32 %v5956, 4294901760
        %v5958 = vsub.f32 %v5956, %v5957
        %v5959 = vand.u32 %v5958, 4294901760
        %5960 = vmatmul.mubr.f32.gmra.mrb[0].mxu0 %v5959
        %v5961 = vpop.f32.mrb[0].mxu0
        %v5962 = vadd.f32 0.0, %v5961
        %v5963 = vpop.f32.mrb[0].mxu0
        %5964 = vdwg.mxu0
        %5965 = vmatprep.subr.mxu0 0.0
        %v5966 = vand.u32 %v5848, 4294901760
        %v5967 = vsub.f32 %v5848, %v5966
        %v5968 = vand.u32 %v5967, 4294901760
        %v5969 = vsub.f32 %v5967, %v5968
        %v5970 = vand.u32 %v5969, 4294901760
        %5971 = vmatpush1.xpose.msra.mxu0 %v5970
        %5972 = vmatprep.subr.mxu0 0.0
        %v5973 = vand.u32 %v5850, 4294901760
        %v5974 = vsub.f32 %v5850, %v5973
        %v5975 = vand.u32 %v5974, 4294901760
        %v5976 = vsub.f32 %v5974, %v5975
        %v5977 = vand.u32 %v5976, 4294901760
        %5978 = vmatpush1.xpose.msra.mxu0 %v5977
        %5979 = vmatprep.subr.mxu0 0.0
        %v5980 = vand.u32 %v5852, 4294901760
        %v5981 = vsub.f32 %v5852, %v5980
        %v5982 = vand.u32 %v5981, 4294901760
        %v5983 = vsub.f32 %v5981, %v5982
        %v5984 = vand.u32 %v5983, 4294901760
        %5985 = vmatpush1.xpose.msra.mxu0 %v5984
        %5986 = vmatprep.subr.mxu0 0.0
        %v5987 = vand.u32 %v5854, 4294901760
        %v5988 = vsub.f32 %v5854, %v5987
        %v5989 = vand.u32 %v5988, 4294901760
        %v5990 = vsub.f32 %v5988, %v5989
        %v5991 = vand.u32 %v5990, 4294901760
        %5992 = vmatpush1.xpose.msra.mxu0 %v5991
        %5993 = vmatprep.subr.mxu0 0.0
        %5994 = vmatpush1.xpose.msra.mxu0 0.0
        %5995 = vmatprep.subr.mxu0 0.0
        %5996 = vmatpush1.xpose.msra.mxu0 0.0
        %5997 = vmatprep.subr.mxu0 0.0
        %5998 = vmatpush1.xpose.msra.mxu0 0.0
        %5999 = vmatprep.subr.mxu0 0.0
        %6000 = vmatpush1.xpose.msra.mxu0 0.0
        %6001 = vmatprep.subr.mxu0 0.0
        %6002 = vmatpush1.xpose.msra.mxu0 0.0
        %6003 = vmatprep.subr.mxu0 0.0
        %6004 = vmatpush1.xpose.msra.mxu0 0.0
        %6005 = vmatprep.subr.mxu0 0.0
        %6006 = vmatpush1.xpose.msra.mxu0 0.0
        %6007 = vmatprep.subr.mxu0 0.0
        %6008 = vmatpush1.xpose.msra.mxu0 0.0
        %6009 = vmatprep.subr.mxu0 0.0
        %6010 = vmatpush1.xpose.msra.mxu0 0.0
        %6011 = vmatprep.subr.mxu0 0.0
        %6012 = vmatpush1.xpose.msra.mxu0 0.0
        %6013 = vmatprep.subr.mxu0 0.0
        %6014 = vmatpush1.xpose.msra.mxu0 0.0
        %6015 = vmatprep.subr.mxu0 0.0
        %6016 = vmatpush1.xpose.msra.mxu0 0.0
        %6017 = vmatprep.subr.mxu0 0.0
        %6018 = vmatpush1.xpose.msra.mxu0 0.0
        %6019 = vmatprep.subr.mxu0 0.0
        %6020 = vmatpush1.xpose.msra.mxu0 0.0
        %6021 = vmatprep.subr.mxu0 0.0
        %6022 = vmatpush1.xpose.msra.mxu0 0.0
        %6023 = vmatprep.subr.mxu0 0.0
        %6024 = vmatpush1.xpose.msra.mxu0 0.0
        %6025 = vmatprep.subr.mxu0 0.0
        %6026 = vmatpush1.xpose.msra.mxu0 0.0
        %6027 = vmatprep.subr.mxu0 0.0
        %6028 = vmatpush1.xpose.msra.mxu0 0.0
        %6029 = vmatprep.subr.mxu0 0.0
        %6030 = vmatpush1.xpose.msra.mxu0 0.0
        %6031 = vmatprep.subr.mxu0 0.0
        %6032 = vmatpush1.xpose.msra.mxu0 0.0
        %6033 = vmatprep.subr.mxu0 0.0
        %6034 = vmatpush1.xpose.msra.mxu0 0.0
        %6035 = vmatprep.subr.mxu0 0.0
        %6036 = vmatpush1.xpose.msra.mxu0 0.0
        %6037 = vmatprep.subr.mxu0 0.0
        %6038 = vmatpush1.xpose.msra.mxu0 0.0
        %6039 = vmatprep.subr.mxu0 0.0
        %6040 = vmatpush1.xpose.msra.mxu0 0.0
        %6041 = vmatprep.subr.mxu0 0.0
        %6042 = vmatpush1.xpose.msra.mxu0 0.0
        %6043 = vmatprep.subr.mxu0 0.0
        %6044 = vmatpush1.xpose.msra.mxu0 0.0
        %6045 = vmatprep.subr.mxu0 0.0
        %6046 = vmatpush1.xpose.msra.mxu0 0.0
        %6047 = vmatprep.subr.mxu0 0.0
        %6048 = vmatpush1.xpose.msra.mxu0 0.0
        %6049 = vmatprep.mubr.f32.mxu0 0.0
        %v6050 = vand.u32 %v5840, 4294901760
        %6051 = vmatmul.mubr.f32.gmra.mrb[0].mxu0 %v6050
        %v6052 = vpop.f32.mrb[0].mxu0
        %v6053 = vadd.f32 %v5932, %v6052
        %v6054 = vpop.f32.mrb[0].mxu0
        %6055 = vmatprep.mubr.f32.mxu0 0.0
        %v6056 = vand.u32 %v5842, 4294901760
        %6057 = vmatmul.mubr.f32.gmra.mrb[0].mxu0 %v6056
        %v6058 = vpop.f32.mrb[0].mxu0
        %v6059 = vadd.f32 %v5942, %v6058
        %v6060 = vpop.f32.mrb[0].mxu0
        %6061 = vmatprep.mubr.f32.mxu0 0.0
        %v6062 = vand.u32 %v5844, 4294901760
        %6063 = vmatmul.mubr.f32.gmra.mrb[0].mxu0 %v6062
        %v6064 = vpop.f32.mrb[0].mxu0
        %v6065 = vadd.f32 %v5952, %v6064
        %v6066 = vpop.f32.mrb[0].mxu0
        %6067 = vmatprep.mubr.f32.mxu0 0.0
        %v6068 = vand.u32 %v5846, 4294901760
        %6069 = vmatmul.mubr.f32.gmra.mrb[0].mxu0 %v6068
        %v6070 = vpop.f32.mrb[0].mxu0
        %v6071 = vadd.f32 %v5962, %v6070
        %v6072 = vpop.f32.mrb[0].mxu0
        %6073 = vdwg.mxu0
        %6074 = vmatprep.subr.mxu0 0.0
        %v6075 = vand.u32 %v5848, 4294901760
        %v6076 = vsub.f32 %v5848, %v6075
        %6077 = vmatpush1.xpose.msra.mxu0 %v6076
        %6078 = vmatprep.subr.mxu0 0.0
        %v6079 = vand.u32 %v5850, 4294901760
        %v6080 = vsub.f32 %v5850, %v6079
        %6081 = vmatpush1.xpose.msra.mxu0 %v6080
        %6082 = vmatprep.subr.mxu0 0.0
        %v6083 = vand.u32 %v5852, 4294901760
        %v6084 = vsub.f32 %v5852, %v6083
        %6085 = vmatpush1.xpose.msra.mxu0 %v6084
        %6086 = vmatprep.subr.mxu0 0.0
        %v6087 = vand.u32 %v5854, 4294901760
        %v6088 = vsub.f32 %v5854, %v6087
        %6089 = vmatpush1.xpose.msra.mxu0 %v6088
        %6090 = vmatprep.subr.mxu0 0.0
        %6091 = vmatpush1.xpose.msra.mxu0 0.0
        %6092 = vmatprep.subr.mxu0 0.0
        %6093 = vmatpush1.xpose.msra.mxu0 0.0
        %6094 = vmatprep.subr.mxu0 0.0
        %6095 = vmatpush1.xpose.msra.mxu0 0.0
        %6096 = vmatprep.subr.mxu0 0.0
        %6097 = vmatpush1.xpose.msra.mxu0 0.0
        %6098 = vmatprep.subr.mxu0 0.0
        %6099 = vmatpush1.xpose.msra.mxu0 0.0
        %6100 = vmatprep.subr.mxu0 0.0
        %6101 = vmatpush1.xpose.msra.mxu0 0.0
        %6102 = vmatprep.subr.mxu0 0.0
        %6103 = vmatpush1.xpose.msra.mxu0 0.0
        %6104 = vmatprep.subr.mxu0 0.0
        %6105 = vmatpush1.xpose.msra.mxu0 0.0
        %6106 = vmatprep.subr.mxu0 0.0
        %6107 = vmatpush1.xpose.msra.mxu0 0.0
        %6108 = vmatprep.subr.mxu0 0.0
        %6109 = vmatpush1.xpose.msra.mxu0 0.0
        %6110 = vmatprep.subr.mxu0 0.0
        %6111 = vmatpush1.xpose.msra.mxu0 0.0
        %6112 = vmatprep.subr.mxu0 0.0
        %6113 = vmatpush1.xpose.msra.mxu0 0.0
        %6114 = vmatprep.subr.mxu0 0.0
        %6115 = vmatpush1.xpose.msra.mxu0 0.0
        %6116 = vmatprep.subr.mxu0 0.0
        %6117 = vmatpush1.xpose.msra.mxu0 0.0
        %6118 = vmatprep.subr.mxu0 0.0
        %6119 = vmatpush1.xpose.msra.mxu0 0.0
        %6120 = vmatprep.subr.mxu0 0.0
        %6121 = vmatpush1.xpose.msra.mxu0 0.0
        %6122 = vmatprep.subr.mxu0 0.0
        %6123 = vmatpush1.xpose.msra.mxu0 0.0
        %6124 = vmatprep.subr.mxu0 0.0
        %6125 = vmatpush1.xpose.msra.mxu0 0.0
        %6126 = vmatprep.subr.mxu0 0.0
        %6127 = vmatpush1.xpose.msra.mxu0 0.0
        %6128 = vmatprep.subr.mxu0 0.0
        %6129 = vmatpush1.xpose.msra.mxu0 0.0
        %6130 = vmatprep.subr.mxu0 0.0
        %6131 = vmatpush1.xpose.msra.mxu0 0.0
        %6132 = vmatprep.subr.mxu0 0.0
        %6133 = vmatpush1.xpose.msra.mxu0 0.0
        %6134 = vmatprep.subr.mxu0 0.0
        %6135 = vmatpush1.xpose.msra.mxu0 0.0
        %6136 = vmatprep.subr.mxu0 0.0
        %6137 = vmatpush1.xpose.msra.mxu0 0.0
        %6138 = vmatprep.subr.mxu0 0.0
        %6139 = vmatpush1.xpose.msra.mxu0 0.0
        %6140 = vmatprep.subr.mxu0 0.0
        %6141 = vmatpush1.xpose.msra.mxu0 0.0
        %6142 = vmatprep.subr.mxu0 0.0
        %6143 = vmatpush1.xpose.msra.mxu0 0.0
        %6144 = vmatprep.subr.mxu0 0.0
        %6145 = vmatpush1.xpose.msra.mxu0 0.0
        %6146 = vmatprep.mubr.f32.mxu0 0.0
        %v6147 = vand.u32 %v5840, 4294901760
        %v6148 = vsub.f32 %v5840, %v6147
        %6149 = vmatmul.mubr.f32.gmra.mrb[0].mxu0 %v6148
        %v6150 = vpop.f32.mrb[0].mxu0
        %v6151 = vadd.f32 %v6053, %v6150
        %v6152 = vpop.f32.mrb[0].mxu0
        %6153 = vmatprep.mubr.f32.mxu0 0.0
        %v6154 = vand.u32 %v5842, 4294901760
        %v6155 = vsub.f32 %v5842, %v6154
        %6156 = vmatmul.mubr.f32.gmra.mrb[0].mxu0 %v6155
        %v6157 = vpop.f32.mrb[0].mxu0
        %v6158 = vadd.f32 %v6059, %v6157
        %v6159 = vpop.f32.mrb[0].mxu0
        %6160 = vmatprep.mubr.f32.mxu0 0.0
        %v6161 = vand.u32 %v5844, 4294901760
        %v6162 = vsub.f32 %v5844, %v6161
        %6163 = vmatmul.mubr.f32.gmra.mrb[0].mxu0 %v6162
        %v6164 = vpop.f32.mrb[0].mxu0
        %v6165 = vadd.f32 %v6065, %v6164
        %v6166 = vpop.f32.mrb[0].mxu0
        %6167 = vmatprep.mubr.f32.mxu0 0.0
        %v6168 = vand.u32 %v5846, 4294901760
        %v6169 = vsub.f32 %v5846, %v6168
        %6170 = vmatmul.mubr.f32.gmra.mrb[0].mxu0 %v6169
        %v6171 = vpop.f32.mrb[0].mxu0
        %v6172 = vadd.f32 %v6071, %v6171
        %v6173 = vpop.f32.mrb[0].mxu0
        %6174 = vdwg.mxu0
        %6175 = vmatprep.subr.mxu0 0.0
        %v6176 = vand.u32 %v5848, 4294901760
        %6177 = vmatpush1.xpose.msra.mxu0 %v6176
        %6178 = vmatprep.subr.mxu0 0.0
        %v6179 = vand.u32 %v5850, 4294901760
        %6180 = vmatpush1.xpose.msra.mxu0 %v6179
        %6181 = vmatprep.subr.mxu0 0.0
        %v6182 = vand.u32 %v5852, 4294901760
        %6183 = vmatpush1.xpose.msra.mxu0 %v6182
        %6184 = vmatprep.subr.mxu0 0.0
        %v6185 = vand.u32 %v5854, 4294901760
        %6186 = vmatpush1.xpose.msra.mxu0 %v6185
        %6187 = vmatprep.subr.mxu0 0.0
        %6188 = vmatpush1.xpose.msra.mxu0 0.0
        %6189 = vmatprep.subr.mxu0 0.0
        %6190 = vmatpush1.xpose.msra.mxu0 0.0
        %6191 = vmatprep.subr.mxu0 0.0
        %6192 = vmatpush1.xpose.msra.mxu0 0.0
        %6193 = vmatprep.subr.mxu0 0.0
        %6194 = vmatpush1.xpose.msra.mxu0 0.0
        %6195 = vmatprep.subr.mxu0 0.0
        %6196 = vmatpush1.xpose.msra.mxu0 0.0
        %6197 = vmatprep.subr.mxu0 0.0
        %6198 = vmatpush1.xpose.msra.mxu0 0.0
        %6199 = vmatprep.subr.mxu0 0.0
        %6200 = vmatpush1.xpose.msra.mxu0 0.0
        %6201 = vmatprep.subr.mxu0 0.0
        %6202 = vmatpush1.xpose.msra.mxu0 0.0
        %6203 = vmatprep.subr.mxu0 0.0
        %6204 = vmatpush1.xpose.msra.mxu0 0.0
        %6205 = vmatprep.subr.mxu0 0.0
        %6206 = vmatpush1.xpose.msra.mxu0 0.0
        %6207 = vmatprep.subr.mxu0 0.0
        %6208 = vmatpush1.xpose.msra.mxu0 0.0
        %6209 = vmatprep.subr.mxu0 0.0
        %6210 = vmatpush1.xpose.msra.mxu0 0.0
        %6211 = vmatprep.subr.mxu0 0.0
        %6212 = vmatpush1.xpose.msra.mxu0 0.0
        %6213 = vmatprep.subr.mxu0 0.0
        %6214 = vmatpush1.xpose.msra.mxu0 0.0
        %6215 = vmatprep.subr.mxu0 0.0
        %6216 = vmatpush1.xpose.msra.mxu0 0.0
        %6217 = vmatprep.subr.mxu0 0.0
        %6218 = vmatpush1.xpose.msra.mxu0 0.0
        %6219 = vmatprep.subr.mxu0 0.0
        %6220 = vmatpush1.xpose.msra.mxu0 0.0
        %6221 = vmatprep.subr.mxu0 0.0
        %6222 = vmatpush1.xpose.msra.mxu0 0.0
        %6223 = vmatprep.subr.mxu0 0.0
        %6224 = vmatpush1.xpose.msra.mxu0 0.0
        %6225 = vmatprep.subr.mxu0 0.0
        %6226 = vmatpush1.xpose.msra.mxu0 0.0
        %6227 = vmatprep.subr.mxu0 0.0
        %6228 = vmatpush1.xpose.msra.mxu0 0.0
        %6229 = vmatprep.subr.mxu0 0.0
        %6230 = vmatpush1.xpose.msra.mxu0 0.0
        %6231 = vmatprep.subr.mxu0 0.0
        %6232 = vmatpush1.xpose.msra.mxu0 0.0
        %6233 = vmatprep.subr.mxu0 0.0
        %6234 = vmatpush1.xpose.msra.mxu0 0.0
        %6235 = vmatprep.subr.mxu0 0.0
        %6236 = vmatpush1.xpose.msra.mxu0 0.0
        %6237 = vmatprep.subr.mxu0 0.0
        %6238 = vmatpush1.xpose.msra.mxu0 0.0
        %6239 = vmatprep.subr.mxu0 0.0
        %6240 = vmatpush1.xpose.msra.mxu0 0.0
        %6241 = vmatprep.subr.mxu0 0.0
        %6242 = vmatpush1.xpose.msra.mxu0 0.0
        %6243 = vmatprep.mubr.f32.mxu0 0.0
        %v6244 = vand.u32 %v5840, 4294901760
        %v6245 = vsub.f32 %v5840, %v6244
        %v6246 = vand.u32 %v6245, 4294901760
        %6247 = vmatmul.mubr.f32.gmra.mrb[0].mxu0 %v6246
        %v6248 = vpop.f32.mrb[0].mxu0
        %v6249 = vadd.f32 %v6151, %v6248
        %v6250 = vpop.f32.mrb[0].mxu0
        %6251 = vmatprep.mubr.f32.mxu0 0.0
        %v6252 = vand.u32 %v5842, 4294901760
        %v6253 = vsub.f32 %v5842, %v6252
        %v6254 = vand.u32 %v6253, 4294901760
        %6255 = vmatmul.mubr.f32.gmra.mrb[0].mxu0 %v6254
        %v6256 = vpop.f32.mrb[0].mxu0
        %v6257 = vadd.f32 %v6158, %v6256
        %v6258 = vpop.f32.mrb[0].mxu0
        %6259 = vmatprep.mubr.f32.mxu0 0.0
        %v6260 = vand.u32 %v5844, 4294901760
        %v6261 = vsub.f32 %v5844, %v6260
        %v6262 = vand.u32 %v6261, 4294901760
        %6263 = vmatmul.mubr.f32.gmra.mrb[0].mxu0 %v6262
        %v6264 = vpop.f32.mrb[0].mxu0
        %v6265 = vadd.f32 %v6165, %v6264
        %v6266 = vpop.f32.mrb[0].mxu0
        %6267 = vmatprep.mubr.f32.mxu0 0.0
        %v6268 = vand.u32 %v5846, 4294901760
        %v6269 = vsub.f32 %v5846, %v6268
        %v6270 = vand.u32 %v6269, 4294901760
        %6271 = vmatmul.mubr.f32.gmra.mrb[0].mxu0 %v6270
        %v6272 = vpop.f32.mrb[0].mxu0
        %v6273 = vadd.f32 %v6172, %v6272
        %v6274 = vpop.f32.mrb[0].mxu0
        %6275 = vdwg.mxu0
        %6276 = vmatprep.subr.mxu0 0.0
        %v6277 = vand.u32 %v5848, 4294901760
        %v6278 = vsub.f32 %v5848, %v6277
        %v6279 = vand.u32 %v6278, 4294901760
        %6280 = vmatpush1.xpose.msra.mxu0 %v6279
        %6281 = vmatprep.subr.mxu0 0.0
        %v6282 = vand.u32 %v5850, 4294901760
        %v6283 = vsub.f32 %v5850, %v6282
        %v6284 = vand.u32 %v6283, 4294901760
        %6285 = vmatpush1.xpose.msra.mxu0 %v6284
        %6286 = vmatprep.subr.mxu0 0.0
        %v6287 = vand.u32 %v5852, 4294901760
        %v6288 = vsub.f32 %v5852, %v6287
        %v6289 = vand.u32 %v6288, 4294901760
        %6290 = vmatpush1.xpose.msra.mxu0 %v6289
        %6291 = vmatprep.subr.mxu0 0.0
        %v6292 = vand.u32 %v5854, 4294901760
        %v6293 = vsub.f32 %v5854, %v6292
        %v6294 = vand.u32 %v6293, 4294901760
        %6295 = vmatpush1.xpose.msra.mxu0 %v6294
        %6296 = vmatprep.subr.mxu0 0.0
        %6297 = vmatpush1.xpose.msra.mxu0 0.0
        %6298 = vmatprep.subr.mxu0 0.0
        %6299 = vmatpush1.xpose.msra.mxu0 0.0
        %6300 = vmatprep.subr.mxu0 0.0
        %6301 = vmatpush1.xpose.msra.mxu0 0.0
        %6302 = vmatprep.subr.mxu0 0.0
        %6303 = vmatpush1.xpose.msra.mxu0 0.0
        %6304 = vmatprep.subr.mxu0 0.0
        %6305 = vmatpush1.xpose.msra.mxu0 0.0
        %6306 = vmatprep.subr.mxu0 0.0
        %6307 = vmatpush1.xpose.msra.mxu0 0.0
        %6308 = vmatprep.subr.mxu0 0.0
        %6309 = vmatpush1.xpose.msra.mxu0 0.0
        %6310 = vmatprep.subr.mxu0 0.0
        %6311 = vmatpush1.xpose.msra.mxu0 0.0
        %6312 = vmatprep.subr.mxu0 0.0
        %6313 = vmatpush1.xpose.msra.mxu0 0.0
        %6314 = vmatprep.subr.mxu0 0.0
        %6315 = vmatpush1.xpose.msra.mxu0 0.0
        %6316 = vmatprep.subr.mxu0 0.0
        %6317 = vmatpush1.xpose.msra.mxu0 0.0
        %6318 = vmatprep.subr.mxu0 0.0
        %6319 = vmatpush1.xpose.msra.mxu0 0.0
        %6320 = vmatprep.subr.mxu0 0.0
        %6321 = vmatpush1.xpose.msra.mxu0 0.0
        %6322 = vmatprep.subr.mxu0 0.0
        %6323 = vmatpush1.xpose.msra.mxu0 0.0
        %6324 = vmatprep.subr.mxu0 0.0
        %6325 = vmatpush1.xpose.msra.mxu0 0.0
        %6326 = vmatprep.subr.mxu0 0.0
        %6327 = vmatpush1.xpose.msra.mxu0 0.0
        %6328 = vmatprep.subr.mxu0 0.0
        %6329 = vmatpush1.xpose.msra.mxu0 0.0
        %6330 = vmatprep.subr.mxu0 0.0
        %6331 = vmatpush1.xpose.msra.mxu0 0.0
        %6332 = vmatprep.subr.mxu0 0.0
        %6333 = vmatpush1.xpose.msra.mxu0 0.0
        %6334 = vmatprep.subr.mxu0 0.0
        %6335 = vmatpush1.xpose.msra.mxu0 0.0
        %6336 = vmatprep.subr.mxu0 0.0
        %6337 = vmatpush1.xpose.msra.mxu0 0.0
        %6338 = vmatprep.subr.mxu0 0.0
        %6339 = vmatpush1.xpose.msra.mxu0 0.0
        %6340 = vmatprep.subr.mxu0 0.0
        %6341 = vmatpush1.xpose.msra.mxu0 0.0
        %6342 = vmatprep.subr.mxu0 0.0
        %6343 = vmatpush1.xpose.msra.mxu0 0.0
        %6344 = vmatprep.subr.mxu0 0.0
        %6345 = vmatpush1.xpose.msra.mxu0 0.0
        %6346 = vmatprep.subr.mxu0 0.0
        %6347 = vmatpush1.xpose.msra.mxu0 0.0
        %6348 = vmatprep.subr.mxu0 0.0
        %6349 = vmatpush1.xpose.msra.mxu0 0.0
        %6350 = vmatprep.subr.mxu0 0.0
        %6351 = vmatpush1.xpose.msra.mxu0 0.0
        %6352 = vmatprep.mubr.f32.mxu0 0.0
        %v6353 = vand.u32 %v5840, 4294901760
        %6354 = vmatmul.mubr.f32.gmra.mrb[0].mxu0 %v6353
        %v6355 = vpop.f32.mrb[0].mxu0
        %v6356 = vadd.f32 %v6249, %v6355
        %v6357 = vpop.f32.mrb[0].mxu0
        %6358 = vmatprep.mubr.f32.mxu0 0.0
        %v6359 = vand.u32 %v5842, 4294901760
        %6360 = vmatmul.mubr.f32.gmra.mrb[0].mxu0 %v6359
        %v6361 = vpop.f32.mrb[0].mxu0
        %v6362 = vadd.f32 %v6257, %v6361
        %v6363 = vpop.f32.mrb[0].mxu0
        %6364 = vmatprep.mubr.f32.mxu0 0.0
        %v6365 = vand.u32 %v5844, 4294901760
        %6366 = vmatmul.mubr.f32.gmra.mrb[0].mxu0 %v6365
        %v6367 = vpop.f32.mrb[0].mxu0
        %v6368 = vadd.f32 %v6265, %v6367
        %v6369 = vpop.f32.mrb[0].mxu0
        %6370 = vmatprep.mubr.f32.mxu0 0.0
        %v6371 = vand.u32 %v5846, 4294901760
        %6372 = vmatmul.mubr.f32.gmra.mrb[0].mxu0 %v6371
        %v6373 = vpop.f32.mrb[0].mxu0
        %v6374 = vadd.f32 %v6273, %v6373
        %v6375 = vpop.f32.mrb[0].mxu0
        %6376 = vdwg.mxu0
        %6377 = vmatprep.subr.mxu0 0.0
        %v6378 = vand.u32 %v5848, 4294901760
        %6379 = vmatpush1.xpose.msra.mxu0 %v6378
        %6380 = vmatprep.subr.mxu0 0.0
        %v6381 = vand.u32 %v5850, 4294901760
        %6382 = vmatpush1.xpose.msra.mxu0 %v6381
        %6383 = vmatprep.subr.mxu0 0.0
        %v6384 = vand.u32 %v5852, 4294901760
        %6385 = vmatpush1.xpose.msra.mxu0 %v6384
        %6386 = vmatprep.subr.mxu0 0.0
        %v6387 = vand.u32 %v5854, 4294901760
        %6388 = vmatpush1.xpose.msra.mxu0 %v6387
        %6389 = vmatprep.subr.mxu0 0.0
        %6390 = vmatpush1.xpose.msra.mxu0 0.0
        %6391 = vmatprep.subr.mxu0 0.0
        %6392 = vmatpush1.xpose.msra.mxu0 0.0
        %6393 = vmatprep.subr.mxu0 0.0
        %6394 = vmatpush1.xpose.msra.mxu0 0.0
        %6395 = vmatprep.subr.mxu0 0.0
        %6396 = vmatpush1.xpose.msra.mxu0 0.0
        %6397 = vmatprep.subr.mxu0 0.0
        %6398 = vmatpush1.xpose.msra.mxu0 0.0
        %6399 = vmatprep.subr.mxu0 0.0
        %6400 = vmatpush1.xpose.msra.mxu0 0.0
        %6401 = vmatprep.subr.mxu0 0.0
        %6402 = vmatpush1.xpose.msra.mxu0 0.0
        %6403 = vmatprep.subr.mxu0 0.0
        %6404 = vmatpush1.xpose.msra.mxu0 0.0
        %6405 = vmatprep.subr.mxu0 0.0
        %6406 = vmatpush1.xpose.msra.mxu0 0.0
        %6407 = vmatprep.subr.mxu0 0.0
        %6408 = vmatpush1.xpose.msra.mxu0 0.0
        %6409 = vmatprep.subr.mxu0 0.0
        %6410 = vmatpush1.xpose.msra.mxu0 0.0
        %6411 = vmatprep.subr.mxu0 0.0
        %6412 = vmatpush1.xpose.msra.mxu0 0.0
        %6413 = vmatprep.subr.mxu0 0.0
        %6414 = vmatpush1.xpose.msra.mxu0 0.0
        %6415 = vmatprep.subr.mxu0 0.0
        %6416 = vmatpush1.xpose.msra.mxu0 0.0
        %6417 = vmatprep.subr.mxu0 0.0
        %6418 = vmatpush1.xpose.msra.mxu0 0.0
        %6419 = vmatprep.subr.mxu0 0.0
        %6420 = vmatpush1.xpose.msra.mxu0 0.0
        %6421 = vmatprep.subr.mxu0 0.0
        %6422 = vmatpush1.xpose.msra.mxu0 0.0
        %6423 = vmatprep.subr.mxu0 0.0
        %6424 = vmatpush1.xpose.msra.mxu0 0.0
        %6425 = vmatprep.subr.mxu0 0.0
        %6426 = vmatpush1.xpose.msra.mxu0 0.0
        %6427 = vmatprep.subr.mxu0 0.0
        %6428 = vmatpush1.xpose.msra.mxu0 0.0
        %6429 = vmatprep.subr.mxu0 0.0
        %6430 = vmatpush1.xpose.msra.mxu0 0.0
        %6431 = vmatprep.subr.mxu0 0.0
        %6432 = vmatpush1.xpose.msra.mxu0 0.0
        %6433 = vmatprep.subr.mxu0 0.0
        %6434 = vmatpush1.xpose.msra.mxu0 0.0
        %6435 = vmatprep.subr.mxu0 0.0
        %6436 = vmatpush1.xpose.msra.mxu0 0.0
        %6437 = vmatprep.subr.mxu0 0.0
        %6438 = vmatpush1.xpose.msra.mxu0 0.0
        %6439 = vmatprep.subr.mxu0 0.0
        %6440 = vmatpush1.xpose.msra.mxu0 0.0
        %6441 = vmatprep.subr.mxu0 0.0
        %6442 = vmatpush1.xpose.msra.mxu0 0.0
        %6443 = vmatprep.subr.mxu0 0.0
        %6444 = vmatpush1.xpose.msra.mxu0 0.0
        %6445 = vmatprep.mubr.f32.mxu0 0.0
        %v6446 = vand.u32 %v5840, 4294901760
        %6447 = vmatmul.mubr.f32.gmra.mrb[0].mxu0 %v6446
        %v6448 = vpop.f32.mrb[0].mxu0
        %v6449 = vadd.f32 %v6356, %v6448
        %v6450 = vpop.f32.mrb[0].mxu0
        %6451 = vmatprep.mubr.f32.mxu0 0.0
        %v6452 = vand.u32 %v5842, 4294901760
        %6453 = vmatmul.mubr.f32.gmra.mrb[0].mxu0 %v6452
        %v6454 = vpop.f32.mrb[0].mxu0
        %v6455 = vadd.f32 %v6362, %v6454
        %v6456 = vpop.f32.mrb[0].mxu0
        %6457 = vmatprep.mubr.f32.mxu0 0.0
        %v6458 = vand.u32 %v5844, 4294901760
        %6459 = vmatmul.mubr.f32.gmra.mrb[0].mxu0 %v6458
        %v6460 = vpop.f32.mrb[0].mxu0
        %v6461 = vadd.f32 %v6368, %v6460
        %v6462 = vpop.f32.mrb[0].mxu0
        %6463 = vmatprep.mubr.f32.mxu0 0.0
        %v6464 = vand.u32 %v5846, 4294901760
        %6465 = vmatmul.mubr.f32.gmra.mrb[0].mxu0 %v6464
        %v6466 = vpop.f32.mrb[0].mxu0
        %v6467 = vadd.f32 %v6374, %v6466
        %v6468 = vpop.f32.mrb[0].mxu0
        %6469 = vdwg.mxu0
        %v6470 = vsel %vm2995, %v6449, -inf
        %6471 = vmax.xlane.f32.xlu0 %v6470
        %v6472 = vpop.xlane.xlu0 %6471
        %v6473 = vsel %vm2995, %v6455, -inf
        %6474 = vmax.xlane.f32.xlu0 %v6473
        %v6475 = vpop.xlane.xlu0 %6474
        %v6476 = vsel %vm2995, %v6461, -inf
        %6477 = vmax.xlane.f32.xlu0 %v6476
        %v6478 = vpop.xlane.xlu0 %6477
        %v6479 = vsel %vm2995, %v6467, -inf
        %6480 = vmax.xlane.f32.xlu0 %v6479
        %v6481 = vpop.xlane.xlu0 %6480
        %v6482 = vsub.f32 %v6449, %v6472
        %v6483 = vsub.f32 %v6455, %v6475
        %v6484 = vsub.f32 %v6461, %v6478
        %v6485 = vsub.f32 %v6467, %v6481
        %v6486 = vmul.f32 %v6482, 1.442695
        %v6487 = vpow.pop %v6486
        %v6488 = vmul.f32 %v6483, 1.442695
        %v6489 = vpow.pop %v6488
        %v6490 = vmul.f32 %v6484, 1.442695
        %v6491 = vpow.pop %v6490
        %v6492 = vmul.f32 %v6485, 1.442695
        %v6493 = vpow.pop %v6492
        %v6494 = vsel %vm2995, %v6487, 0.0
        %6495 = vadd.xlane.f32.xlu0 %v6494
        %v6496 = vpop.xlane.xlu0 %6495
        %v6497 = vsel %vm2995, %v6489, 0.0
        %6498 = vadd.xlane.f32.xlu0 %v6497
        %v6499 = vpop.xlane.xlu0 %6498
        %v6500 = vsel %vm2995, %v6491, 0.0
        %6501 = vadd.xlane.f32.xlu0 %v6500
        %v6502 = vpop.xlane.xlu0 %6501
        %v6503 = vsel %vm2995, %v6493, 0.0
        %6504 = vadd.xlane.f32.xlu0 %v6503
        %v6505 = vpop.xlane.xlu0 %6504
        %v6506 = vrcp.pop %v6496
        %v6507 = vmul.f32 %v6487, %v6506
        %v6508 = vrcp.pop %v6499
        %v6509 = vmul.f32 %v6489, %v6508
        %v6510 = vrcp.pop %v6502
        %v6511 = vmul.f32 %v6491, %v6510
        %v6512 = vrcp.pop %v6505
        %v6513 = vmul.f32 %v6493, %v6512
        %s6514 = scalar_lea.vmem %s343, 160 [#allocation11]
        %6515 = vst.msk [vmem:[%s6514] sm:$0xff] %vm2995, %v6507
        %6516 = vst.msk [vmem:[%s6514 + $0x8] sm:$0xff] %vm2995, %v6509
        %6517 = vst.msk [vmem:[%s6514 + $0x10] sm:$0xff] %vm2995, %v6511
        %6518 = vst.msk [vmem:[%s6514 + $0x18] sm:$0xff] %vm2995, %v6513
        %6519 = vrot.lane.b32.xlu0 %v2319, 80
        %v6520 = vpop.permute.xlu0 %6519
        %6521 = vrot.lane.b32.xlu0 %v2326, 80
        %v6522 = vpop.permute.xlu0 %6521
        %6523 = vrot.lane.b32.xlu0 %v2333, 80
        %v6524 = vpop.permute.xlu0 %6523
        %6525 = vrot.lane.b32.xlu0 %v2340, 80
        %v6526 = vpop.permute.xlu0 %6525
        %6527 = vrot.lane.b32.xlu0 %v2319, 16
        %v6528 = vpop.permute.xlu0 %6527
        %6529 = vrot.lane.b32.xlu0 %v2326, 16
        %v6530 = vpop.permute.xlu0 %6529
        %6531 = vrot.lane.b32.xlu0 %v2333, 16
        %v6532 = vpop.permute.xlu0 %6531
        %6533 = vrot.lane.b32.xlu0 %v2340, 16
        %v6534 = vpop.permute.xlu0 %6533
        %v6535 = vsel %vm2364, %v6520, 0
        %v6537 = vsel %vm2364, %v6522, 0
        %v6539 = vsel %vm2364, %v6524, 0
        %v6541 = vsel %vm2364, %v6526, 0
        %v6543 = vsel %vm2364, %v6528, 0
        %v6545 = vsel %vm2364, %v6530, 0
        %v6547 = vsel %vm2364, %v6532, 0
        %v6549 = vsel %vm2364, %v6534, 0
        %6551 = vmatprep.subr.mxu0 0.0
        %v6552 = vand.u32 %v6543, 4294901760
        %6553 = vmatpush1.xpose.msra.mxu0 %v6552
        %6554 = vmatprep.subr.mxu0 0.0
        %v6555 = vand.u32 %v6545, 4294901760
        %6556 = vmatpush1.xpose.msra.mxu0 %v6555
        %6557 = vmatprep.subr.mxu0 0.0
        %v6558 = vand.u32 %v6547, 4294901760
        %6559 = vmatpush1.xpose.msra.mxu0 %v6558
        %6560 = vmatprep.subr.mxu0 0.0
        %v6561 = vand.u32 %v6549, 4294901760
        %6562 = vmatpush1.xpose.msra.mxu0 %v6561
        %6563 = vmatprep.subr.mxu0 0.0
        %6564 = vmatpush1.xpose.msra.mxu0 0.0
        %6565 = vmatprep.subr.mxu0 0.0
        %6566 = vmatpush1.xpose.msra.mxu0 0.0
        %6567 = vmatprep.subr.mxu0 0.0
        %6568 = vmatpush1.xpose.msra.mxu0 0.0
        %6569 = vmatprep.subr.mxu0 0.0
        %6570 = vmatpush1.xpose.msra.mxu0 0.0
        %6571 = vmatprep.subr.mxu0 0.0
        %6572 = vmatpush1.xpose.msra.mxu0 0.0
        %6573 = vmatprep.subr.mxu0 0.0
        %6574 = vmatpush1.xpose.msra.mxu0 0.0
        %6575 = vmatprep.subr.mxu0 0.0
        %6576 = vmatpush1.xpose.msra.mxu0 0.0
        %6577 = vmatprep.subr.mxu0 0.0
        %6578 = vmatpush1.xpose.msra.mxu0 0.0
        %6579 = vmatprep.subr.mxu0 0.0
        %6580 = vmatpush1.xpose.msra.mxu0 0.0
        %6581 = vmatprep.subr.mxu0 0.0
        %6582 = vmatpush1.xpose.msra.mxu0 0.0
        %6583 = vmatprep.subr.mxu0 0.0
        %6584 = vmatpush1.xpose.msra.mxu0 0.0
        %6585 = vmatprep.subr.mxu0 0.0
        %6586 = vmatpush1.xpose.msra.mxu0 0.0
        %6587 = vmatprep.subr.mxu0 0.0
        %6588 = vmatpush1.xpose.msra.mxu0 0.0
        %6589 = vmatprep.subr.mxu0 0.0
        %6590 = vmatpush1.xpose.msra.mxu0 0.0
        %6591 = vmatprep.subr.mxu0 0.0
        %6592 = vmatpush1.xpose.msra.mxu0 0.0
        %6593 = vmatprep.subr.mxu0 0.0
        %6594 = vmatpush1.xpose.msra.mxu0 0.0
        %6595 = vmatprep.subr.mxu0 0.0
        %6596 = vmatpush1.xpose.msra.mxu0 0.0
        %6597 = vmatprep.subr.mxu0 0.0
        %6598 = vmatpush1.xpose.msra.mxu0 0.0
        %6599 = vmatprep.subr.mxu0 0.0
        %6600 = vmatpush1.xpose.msra.mxu0 0.0
        %6601 = vmatprep.subr.mxu0 0.0
        %6602 = vmatpush1.xpose.msra.mxu0 0.0
        %6603 = vmatprep.subr.mxu0 0.0
        %6604 = vmatpush1.xpose.msra.mxu0 0.0
        %6605 = vmatprep.subr.mxu0 0.0
        %6606 = vmatpush1.xpose.msra.mxu0 0.0
        %6607 = vmatprep.subr.mxu0 0.0
        %6608 = vmatpush1.xpose.msra.mxu0 0.0
        %6609 = vmatprep.subr.mxu0 0.0
        %6610 = vmatpush1.xpose.msra.mxu0 0.0
        %6611 = vmatprep.subr.mxu0 0.0
        %6612 = vmatpush1.xpose.msra.mxu0 0.0
        %6613 = vmatprep.subr.mxu0 0.0
        %6614 = vmatpush1.xpose.msra.mxu0 0.0
        %6615 = vmatprep.subr.mxu0 0.0
        %6616 = vmatpush1.xpose.msra.mxu0 0.0
        %6617 = vmatprep.subr.mxu0 0.0
        %6618 = vmatpush1.xpose.msra.mxu0 0.0
        %6619 = vmatprep.mubr.f32.mxu0 0.0
        %v6620 = vand.u32 %v6535, 4294901760
        %v6621 = vsub.f32 %v6535, %v6620
        %v6622 = vand.u32 %v6621, 4294901760
        %v6623 = vsub.f32 %v6621, %v6622
        %v6624 = vand.u32 %v6623, 4294901760
        %6625 = vmatmul.mubr.f32.gmra.mrb[0].mxu0 %v6624
        %v6626 = vpop.f32.mrb[0].mxu0
        %v6627 = vadd.f32 0.0, %v6626
        %v6628 = vpop.f32.mrb[0].mxu0
        %6629 = vmatprep.mubr.f32.mxu0 0.0
        %v6630 = vand.u32 %v6537, 4294901760
        %v6631 = vsub.f32 %v6537, %v6630
        %v6632 = vand.u32 %v6631, 4294901760
        %v6633 = vsub.f32 %v6631, %v6632
        %v6634 = vand.u32 %v6633, 4294901760
        %6635 = vmatmul.mubr.f32.gmra.mrb[0].mxu0 %v6634
        %v6636 = vpop.f32.mrb[0].mxu0
        %v6637 = vadd.f32 0.0, %v6636
        %v6638 = vpop.f32.mrb[0].mxu0
        %6639 = vmatprep.mubr.f32.mxu0 0.0
        %v6640 = vand.u32 %v6539, 4294901760
        %v6641 = vsub.f32 %v6539, %v6640
        %v6642 = vand.u32 %v6641, 4294901760
        %v6643 = vsub.f32 %v6641, %v6642
        %v6644 = vand.u32 %v6643, 4294901760
        %6645 = vmatmul.mubr.f32.gmra.mrb[0].mxu0 %v6644
        %v6646 = vpop.f32.mrb[0].mxu0
        %v6647 = vadd.f32 0.0, %v6646
        %v6648 = vpop.f32.mrb[0].mxu0
        %6649 = vmatprep.mubr.f32.mxu0 0.0
        %v6650 = vand.u32 %v6541, 4294901760
        %v6651 = vsub.f32 %v6541, %v6650
        %v6652 = vand.u32 %v6651, 4294901760
        %v6653 = vsub.f32 %v6651, %v6652
        %v6654 = vand.u32 %v6653, 4294901760
        %6655 = vmatmul.mubr.f32.gmra.mrb[0].mxu0 %v6654
        %v6656 = vpop.f32.mrb[0].mxu0
        %v6657 = vadd.f32 0.0, %v6656
        %v6658 = vpop.f32.mrb[0].mxu0
        %6659 = vdwg.mxu0
        %6660 = vmatprep.subr.mxu0 0.0
        %v6661 = vand.u32 %v6543, 4294901760
        %v6662 = vsub.f32 %v6543, %v6661
        %v6663 = vand.u32 %v6662, 4294901760
        %v6664 = vsub.f32 %v6662, %v6663
        %v6665 = vand.u32 %v6664, 4294901760
        %6666 = vmatpush1.xpose.msra.mxu0 %v6665
        %6667 = vmatprep.subr.mxu0 0.0
        %v6668 = vand.u32 %v6545, 4294901760
        %v6669 = vsub.f32 %v6545, %v6668
        %v6670 = vand.u32 %v6669, 4294901760
        %v6671 = vsub.f32 %v6669, %v6670
        %v6672 = vand.u32 %v6671, 4294901760
        %6673 = vmatpush1.xpose.msra.mxu0 %v6672
        %6674 = vmatprep.subr.mxu0 0.0
        %v6675 = vand.u32 %v6547, 4294901760
        %v6676 = vsub.f32 %v6547, %v6675
        %v6677 = vand.u32 %v6676, 4294901760
        %v6678 = vsub.f32 %v6676, %v6677
        %v6679 = vand.u32 %v6678, 4294901760
        %6680 = vmatpush1.xpose.msra.mxu0 %v6679
        %6681 = vmatprep.subr.mxu0 0.0
        %v6682 = vand.u32 %v6549, 4294901760
        %v6683 = vsub.f32 %v6549, %v6682
        %v6684 = vand.u32 %v6683, 4294901760
        %v6685 = vsub.f32 %v6683, %v6684
        %v6686 = vand.u32 %v6685, 4294901760
        %6687 = vmatpush1.xpose.msra.mxu0 %v6686
        %6688 = vmatprep.subr.mxu0 0.0
        %6689 = vmatpush1.xpose.msra.mxu0 0.0
        %6690 = vmatprep.subr.mxu0 0.0
        %6691 = vmatpush1.xpose.msra.mxu0 0.0
        %6692 = vmatprep.subr.mxu0 0.0
        %6693 = vmatpush1.xpose.msra.mxu0 0.0
        %6694 = vmatprep.subr.mxu0 0.0
        %6695 = vmatpush1.xpose.msra.mxu0 0.0
        %6696 = vmatprep.subr.mxu0 0.0
        %6697 = vmatpush1.xpose.msra.mxu0 0.0
        %6698 = vmatprep.subr.mxu0 0.0
        %6699 = vmatpush1.xpose.msra.mxu0 0.0
        %6700 = vmatprep.subr.mxu0 0.0
        %6701 = vmatpush1.xpose.msra.mxu0 0.0
        %6702 = vmatprep.subr.mxu0 0.0
        %6703 = vmatpush1.xpose.msra.mxu0 0.0
        %6704 = vmatprep.subr.mxu0 0.0
        %6705 = vmatpush1.xpose.msra.mxu0 0.0
        %6706 = vmatprep.subr.mxu0 0.0
        %6707 = vmatpush1.xpose.msra.mxu0 0.0
        %6708 = vmatprep.subr.mxu0 0.0
        %6709 = vmatpush1.xpose.msra.mxu0 0.0
        %6710 = vmatprep.subr.mxu0 0.0
        %6711 = vmatpush1.xpose.msra.mxu0 0.0
        %6712 = vmatprep.subr.mxu0 0.0
        %6713 = vmatpush1.xpose.msra.mxu0 0.0
        %6714 = vmatprep.subr.mxu0 0.0
        %6715 = vmatpush1.xpose.msra.mxu0 0.0
        %6716 = vmatprep.subr.mxu0 0.0
        %6717 = vmatpush1.xpose.msra.mxu0 0.0
        %6718 = vmatprep.subr.mxu0 0.0
        %6719 = vmatpush1.xpose.msra.mxu0 0.0
        %6720 = vmatprep.subr.mxu0 0.0
        %6721 = vmatpush1.xpose.msra.mxu0 0.0
        %6722 = vmatprep.subr.mxu0 0.0
        %6723 = vmatpush1.xpose.msra.mxu0 0.0
        %6724 = vmatprep.subr.mxu0 0.0
        %6725 = vmatpush1.xpose.msra.mxu0 0.0
        %6726 = vmatprep.subr.mxu0 0.0
        %6727 = vmatpush1.xpose.msra.mxu0 0.0
        %6728 = vmatprep.subr.mxu0 0.0
        %6729 = vmatpush1.xpose.msra.mxu0 0.0
        %6730 = vmatprep.subr.mxu0 0.0
        %6731 = vmatpush1.xpose.msra.mxu0 0.0
        %6732 = vmatprep.subr.mxu0 0.0
        %6733 = vmatpush1.xpose.msra.mxu0 0.0
        %6734 = vmatprep.subr.mxu0 0.0
        %6735 = vmatpush1.xpose.msra.mxu0 0.0
        %6736 = vmatprep.subr.mxu0 0.0
        %6737 = vmatpush1.xpose.msra.mxu0 0.0
        %6738 = vmatprep.subr.mxu0 0.0
        %6739 = vmatpush1.xpose.msra.mxu0 0.0
        %6740 = vmatprep.subr.mxu0 0.0
        %6741 = vmatpush1.xpose.msra.mxu0 0.0
        %6742 = vmatprep.subr.mxu0 0.0
        %6743 = vmatpush1.xpose.msra.mxu0 0.0
        %6744 = vmatprep.mubr.f32.mxu0 0.0
        %v6745 = vand.u32 %v6535, 4294901760
        %6746 = vmatmul.mubr.f32.gmra.mrb[0].mxu0 %v6745
        %v6747 = vpop.f32.mrb[0].mxu0
        %v6748 = vadd.f32 %v6627, %v6747
        %v6749 = vpop.f32.mrb[0].mxu0
        %6750 = vmatprep.mubr.f32.mxu0 0.0
        %v6751 = vand.u32 %v6537, 4294901760
        %6752 = vmatmul.mubr.f32.gmra.mrb[0].mxu0 %v6751
        %v6753 = vpop.f32.mrb[0].mxu0
        %v6754 = vadd.f32 %v6637, %v6753
        %v6755 = vpop.f32.mrb[0].mxu0
        %6756 = vmatprep.mubr.f32.mxu0 0.0
        %v6757 = vand.u32 %v6539, 4294901760
        %6758 = vmatmul.mubr.f32.gmra.mrb[0].mxu0 %v6757
        %v6759 = vpop.f32.mrb[0].mxu0
        %v6760 = vadd.f32 %v6647, %v6759
        %v6761 = vpop.f32.mrb[0].mxu0
        %6762 = vmatprep.mubr.f32.mxu0 0.0
        %v6763 = vand.u32 %v6541, 4294901760
        %6764 = vmatmul.mubr.f32.gmra.mrb[0].mxu0 %v6763
        %v6765 = vpop.f32.mrb[0].mxu0
        %v6766 = vadd.f32 %v6657, %v6765
        %v6767 = vpop.f32.mrb[0].mxu0
        %6768 = vdwg.mxu0
        %6769 = vmatprep.subr.mxu0 0.0
        %v6770 = vand.u32 %v6543, 4294901760
        %v6771 = vsub.f32 %v6543, %v6770
        %6772 = vmatpush1.xpose.msra.mxu0 %v6771
        %6773 = vmatprep.subr.mxu0 0.0
        %v6774 = vand.u32 %v6545, 4294901760
        %v6775 = vsub.f32 %v6545, %v6774
        %6776 = vmatpush1.xpose.msra.mxu0 %v6775
        %6777 = vmatprep.subr.mxu0 0.0
        %v6778 = vand.u32 %v6547, 4294901760
        %v6779 = vsub.f32 %v6547, %v6778
        %6780 = vmatpush1.xpose.msra.mxu0 %v6779
        %6781 = vmatprep.subr.mxu0 0.0
        %v6782 = vand.u32 %v6549, 4294901760
        %v6783 = vsub.f32 %v6549, %v6782
        %6784 = vmatpush1.xpose.msra.mxu0 %v6783
        %6785 = vmatprep.subr.mxu0 0.0
        %6786 = vmatpush1.xpose.msra.mxu0 0.0
        %6787 = vmatprep.subr.mxu0 0.0
        %6788 = vmatpush1.xpose.msra.mxu0 0.0
        %6789 = vmatprep.subr.mxu0 0.0
        %6790 = vmatpush1.xpose.msra.mxu0 0.0
        %6791 = vmatprep.subr.mxu0 0.0
        %6792 = vmatpush1.xpose.msra.mxu0 0.0
        %6793 = vmatprep.subr.mxu0 0.0
        %6794 = vmatpush1.xpose.msra.mxu0 0.0
        %6795 = vmatprep.subr.mxu0 0.0
        %6796 = vmatpush1.xpose.msra.mxu0 0.0
        %6797 = vmatprep.subr.mxu0 0.0
        %6798 = vmatpush1.xpose.msra.mxu0 0.0
        %6799 = vmatprep.subr.mxu0 0.0
        %6800 = vmatpush1.xpose.msra.mxu0 0.0
        %6801 = vmatprep.subr.mxu0 0.0
        %6802 = vmatpush1.xpose.msra.mxu0 0.0
        %6803 = vmatprep.subr.mxu0 0.0
        %6804 = vmatpush1.xpose.msra.mxu0 0.0
        %6805 = vmatprep.subr.mxu0 0.0
        %6806 = vmatpush1.xpose.msra.mxu0 0.0
        %6807 = vmatprep.subr.mxu0 0.0
        %6808 = vmatpush1.xpose.msra.mxu0 0.0
        %6809 = vmatprep.subr.mxu0 0.0
        %6810 = vmatpush1.xpose.msra.mxu0 0.0
        %6811 = vmatprep.subr.mxu0 0.0
        %6812 = vmatpush1.xpose.msra.mxu0 0.0
        %6813 = vmatprep.subr.mxu0 0.0
        %6814 = vmatpush1.xpose.msra.mxu0 0.0
        %6815 = vmatprep.subr.mxu0 0.0
        %6816 = vmatpush1.xpose.msra.mxu0 0.0
        %6817 = vmatprep.subr.mxu0 0.0
        %6818 = vmatpush1.xpose.msra.mxu0 0.0
        %6819 = vmatprep.subr.mxu0 0.0
        %6820 = vmatpush1.xpose.msra.mxu0 0.0
        %6821 = vmatprep.subr.mxu0 0.0
        %6822 = vmatpush1.xpose.msra.mxu0 0.0
        %6823 = vmatprep.subr.mxu0 0.0
        %6824 = vmatpush1.xpose.msra.mxu0 0.0
        %6825 = vmatprep.subr.mxu0 0.0
        %6826 = vmatpush1.xpose.msra.mxu0 0.0
        %6827 = vmatprep.subr.mxu0 0.0
        %6828 = vmatpush1.xpose.msra.mxu0 0.0
        %6829 = vmatprep.subr.mxu0 0.0
        %6830 = vmatpush1.xpose.msra.mxu0 0.0
        %6831 = vmatprep.subr.mxu0 0.0
        %6832 = vmatpush1.xpose.msra.mxu0 0.0
        %6833 = vmatprep.subr.mxu0 0.0
        %6834 = vmatpush1.xpose.msra.mxu0 0.0
        %6835 = vmatprep.subr.mxu0 0.0
        %6836 = vmatpush1.xpose.msra.mxu0 0.0
        %6837 = vmatprep.subr.mxu0 0.0
        %6838 = vmatpush1.xpose.msra.mxu0 0.0
        %6839 = vmatprep.subr.mxu0 0.0
        %6840 = vmatpush1.xpose.msra.mxu0 0.0
        %6841 = vmatprep.mubr.f32.mxu0 0.0
        %v6842 = vand.u32 %v6535, 4294901760
        %v6843 = vsub.f32 %v6535, %v6842
        %6844 = vmatmul.mubr.f32.gmra.mrb[0].mxu0 %v6843
        %v6845 = vpop.f32.mrb[0].mxu0
        %v6846 = vadd.f32 %v6748, %v6845
        %v6847 = vpop.f32.mrb[0].mxu0
        %6848 = vmatprep.mubr.f32.mxu0 0.0
        %v6849 = vand.u32 %v6537, 4294901760
        %v6850 = vsub.f32 %v6537, %v6849
        %6851 = vmatmul.mubr.f32.gmra.mrb[0].mxu0 %v6850
        %v6852 = vpop.f32.mrb[0].mxu0
        %v6853 = vadd.f32 %v6754, %v6852
        %v6854 = vpop.f32.mrb[0].mxu0
        %6855 = vmatprep.mubr.f32.mxu0 0.0
        %v6856 = vand.u32 %v6539, 4294901760
        %v6857 = vsub.f32 %v6539, %v6856
        %6858 = vmatmul.mubr.f32.gmra.mrb[0].mxu0 %v6857
        %v6859 = vpop.f32.mrb[0].mxu0
        %v6860 = vadd.f32 %v6760, %v6859
        %v6861 = vpop.f32.mrb[0].mxu0
        %6862 = vmatprep.mubr.f32.mxu0 0.0
        %v6863 = vand.u32 %v6541, 4294901760
        %v6864 = vsub.f32 %v6541, %v6863
        %6865 = vmatmul.mubr.f32.gmra.mrb[0].mxu0 %v6864
        %v6866 = vpop.f32.mrb[0].mxu0
        %v6867 = vadd.f32 %v6766, %v6866
        %v6868 = vpop.f32.mrb[0].mxu0
        %6869 = vdwg.mxu0
        %6870 = vmatprep.subr.mxu0 0.0
        %v6871 = vand.u32 %v6543, 4294901760
        %6872 = vmatpush1.xpose.msra.mxu0 %v6871
        %6873 = vmatprep.subr.mxu0 0.0
        %v6874 = vand.u32 %v6545, 4294901760
        %6875 = vmatpush1.xpose.msra.mxu0 %v6874
        %6876 = vmatprep.subr.mxu0 0.0
        %v6877 = vand.u32 %v6547, 4294901760
        %6878 = vmatpush1.xpose.msra.mxu0 %v6877
        %6879 = vmatprep.subr.mxu0 0.0
        %v6880 = vand.u32 %v6549, 4294901760
        %6881 = vmatpush1.xpose.msra.mxu0 %v6880
        %6882 = vmatprep.subr.mxu0 0.0
        %6883 = vmatpush1.xpose.msra.mxu0 0.0
        %6884 = vmatprep.subr.mxu0 0.0
        %6885 = vmatpush1.xpose.msra.mxu0 0.0
        %6886 = vmatprep.subr.mxu0 0.0
        %6887 = vmatpush1.xpose.msra.mxu0 0.0
        %6888 = vmatprep.subr.mxu0 0.0
        %6889 = vmatpush1.xpose.msra.mxu0 0.0
        %6890 = vmatprep.subr.mxu0 0.0
        %6891 = vmatpush1.xpose.msra.mxu0 0.0
        %6892 = vmatprep.subr.mxu0 0.0
        %6893 = vmatpush1.xpose.msra.mxu0 0.0
        %6894 = vmatprep.subr.mxu0 0.0
        %6895 = vmatpush1.xpose.msra.mxu0 0.0
        %6896 = vmatprep.subr.mxu0 0.0
        %6897 = vmatpush1.xpose.msra.mxu0 0.0
        %6898 = vmatprep.subr.mxu0 0.0
        %6899 = vmatpush1.xpose.msra.mxu0 0.0
        %6900 = vmatprep.subr.mxu0 0.0
        %6901 = vmatpush1.xpose.msra.mxu0 0.0
        %6902 = vmatprep.subr.mxu0 0.0
        %6903 = vmatpush1.xpose.msra.mxu0 0.0
        %6904 = vmatprep.subr.mxu0 0.0
        %6905 = vmatpush1.xpose.msra.mxu0 0.0
        %6906 = vmatprep.subr.mxu0 0.0
        %6907 = vmatpush1.xpose.msra.mxu0 0.0
        %6908 = vmatprep.subr.mxu0 0.0
        %6909 = vmatpush1.xpose.msra.mxu0 0.0
        %6910 = vmatprep.subr.mxu0 0.0
        %6911 = vmatpush1.xpose.msra.mxu0 0.0
        %6912 = vmatprep.subr.mxu0 0.0
        %6913 = vmatpush1.xpose.msra.mxu0 0.0
        %6914 = vmatprep.subr.mxu0 0.0
        %6915 = vmatpush1.xpose.msra.mxu0 0.0
        %6916 = vmatprep.subr.mxu0 0.0
        %6917 = vmatpush1.xpose.msra.mxu0 0.0
        %6918 = vmatprep.subr.mxu0 0.0
        %6919 = vmatpush1.xpose.msra.mxu0 0.0
        %6920 = vmatprep.subr.mxu0 0.0
        %6921 = vmatpush1.xpose.msra.mxu0 0.0
        %6922 = vmatprep.subr.mxu0 0.0
        %6923 = vmatpush1.xpose.msra.mxu0 0.0
        %6924 = vmatprep.subr.mxu0 0.0
        %6925 = vmatpush1.xpose.msra.mxu0 0.0
        %6926 = vmatprep.subr.mxu0 0.0
        %6927 = vmatpush1.xpose.msra.mxu0 0.0
        %6928 = vmatprep.subr.mxu0 0.0
        %6929 = vmatpush1.xpose.msra.mxu0 0.0
        %6930 = vmatprep.subr.mxu0 0.0
        %6931 = vmatpush1.xpose.msra.mxu0 0.0
        %6932 = vmatprep.subr.mxu0 0.0
        %6933 = vmatpush1.xpose.msra.mxu0 0.0
        %6934 = vmatprep.subr.mxu0 0.0
        %6935 = vmatpush1.xpose.msra.mxu0 0.0
        %6936 = vmatprep.subr.mxu0 0.0
        %6937 = vmatpush1.xpose.msra.mxu0 0.0
        %6938 = vmatprep.mubr.f32.mxu0 0.0
        %v6939 = vand.u32 %v6535, 4294901760
        %v6940 = vsub.f32 %v6535, %v6939
        %v6941 = vand.u32 %v6940, 4294901760
        %6942 = vmatmul.mubr.f32.gmra.mrb[0].mxu0 %v6941
        %v6943 = vpop.f32.mrb[0].mxu0
        %v6944 = vadd.f32 %v6846, %v6943
        %v6945 = vpop.f32.mrb[0].mxu0
        %6946 = vmatprep.mubr.f32.mxu0 0.0
        %v6947 = vand.u32 %v6537, 4294901760
        %v6948 = vsub.f32 %v6537, %v6947
        %v6949 = vand.u32 %v6948, 4294901760
        %6950 = vmatmul.mubr.f32.gmra.mrb[0].mxu0 %v6949
        %v6951 = vpop.f32.mrb[0].mxu0
        %v6952 = vadd.f32 %v6853, %v6951
        %v6953 = vpop.f32.mrb[0].mxu0
        %6954 = vmatprep.mubr.f32.mxu0 0.0
        %v6955 = vand.u32 %v6539, 4294901760
        %v6956 = vsub.f32 %v6539, %v6955
        %v6957 = vand.u32 %v6956, 4294901760
        %6958 = vmatmul.mubr.f32.gmra.mrb[0].mxu0 %v6957
        %v6959 = vpop.f32.mrb[0].mxu0
        %v6960 = vadd.f32 %v6860, %v6959
        %v6961 = vpop.f32.mrb[0].mxu0
        %6962 = vmatprep.mubr.f32.mxu0 0.0
        %v6963 = vand.u32 %v6541, 4294901760
        %v6964 = vsub.f32 %v6541, %v6963
        %v6965 = vand.u32 %v6964, 4294901760
        %6966 = vmatmul.mubr.f32.gmra.mrb[0].mxu0 %v6965
        %v6967 = vpop.f32.mrb[0].mxu0
        %v6968 = vadd.f32 %v6867, %v6967
        %v6969 = vpop.f32.mrb[0].mxu0
        %6970 = vdwg.mxu0
        %6971 = vmatprep.subr.mxu0 0.0
        %v6972 = vand.u32 %v6543, 4294901760
        %v6973 = vsub.f32 %v6543, %v6972
        %v6974 = vand.u32 %v6973, 4294901760
        %6975 = vmatpush1.xpose.msra.mxu0 %v6974
        %6976 = vmatprep.subr.mxu0 0.0
        %v6977 = vand.u32 %v6545, 4294901760
        %v6978 = vsub.f32 %v6545, %v6977
        %v6979 = vand.u32 %v6978, 4294901760
        %6980 = vmatpush1.xpose.msra.mxu0 %v6979
        %6981 = vmatprep.subr.mxu0 0.0
        %v6982 = vand.u32 %v6547, 4294901760
        %v6983 = vsub.f32 %v6547, %v6982
        %v6984 = vand.u32 %v6983, 4294901760
        %6985 = vmatpush1.xpose.msra.mxu0 %v6984
        %6986 = vmatprep.subr.mxu0 0.0
        %v6987 = vand.u32 %v6549, 4294901760
        %v6988 = vsub.f32 %v6549, %v6987
        %v6989 = vand.u32 %v6988, 4294901760
        %6990 = vmatpush1.xpose.msra.mxu0 %v6989
        %6991 = vmatprep.subr.mxu0 0.0
        %6992 = vmatpush1.xpose.msra.mxu0 0.0
        %6993 = vmatprep.subr.mxu0 0.0
        %6994 = vmatpush1.xpose.msra.mxu0 0.0
        %6995 = vmatprep.subr.mxu0 0.0
        %6996 = vmatpush1.xpose.msra.mxu0 0.0
        %6997 = vmatprep.subr.mxu0 0.0
        %6998 = vmatpush1.xpose.msra.mxu0 0.0
        %6999 = vmatprep.subr.mxu0 0.0
        %7000 = vmatpush1.xpose.msra.mxu0 0.0
        %7001 = vmatprep.subr.mxu0 0.0
        %7002 = vmatpush1.xpose.msra.mxu0 0.0
        %7003 = vmatprep.subr.mxu0 0.0
        %7004 = vmatpush1.xpose.msra.mxu0 0.0
        %7005 = vmatprep.subr.mxu0 0.0
        %7006 = vmatpush1.xpose.msra.mxu0 0.0
        %7007 = vmatprep.subr.mxu0 0.0
        %7008 = vmatpush1.xpose.msra.mxu0 0.0
        %7009 = vmatprep.subr.mxu0 0.0
        %7010 = vmatpush1.xpose.msra.mxu0 0.0
        %7011 = vmatprep.subr.mxu0 0.0
        %7012 = vmatpush1.xpose.msra.mxu0 0.0
        %7013 = vmatprep.subr.mxu0 0.0
        %7014 = vmatpush1.xpose.msra.mxu0 0.0
        %7015 = vmatprep.subr.mxu0 0.0
        %7016 = vmatpush1.xpose.msra.mxu0 0.0
        %7017 = vmatprep.subr.mxu0 0.0
        %7018 = vmatpush1.xpose.msra.mxu0 0.0
        %7019 = vmatprep.subr.mxu0 0.0
        %7020 = vmatpush1.xpose.msra.mxu0 0.0
        %7021 = vmatprep.subr.mxu0 0.0
        %7022 = vmatpush1.xpose.msra.mxu0 0.0
        %7023 = vmatprep.subr.mxu0 0.0
        %7024 = vmatpush1.xpose.msra.mxu0 0.0
        %7025 = vmatprep.subr.mxu0 0.0
        %7026 = vmatpush1.xpose.msra.mxu0 0.0
        %7027 = vmatprep.subr.mxu0 0.0
        %7028 = vmatpush1.xpose.msra.mxu0 0.0
        %7029 = vmatprep.subr.mxu0 0.0
        %7030 = vmatpush1.xpose.msra.mxu0 0.0
        %7031 = vmatprep.subr.mxu0 0.0
        %7032 = vmatpush1.xpose.msra.mxu0 0.0
        %7033 = vmatprep.subr.mxu0 0.0
        %7034 = vmatpush1.xpose.msra.mxu0 0.0
        %7035 = vmatprep.subr.mxu0 0.0
        %7036 = vmatpush1.xpose.msra.mxu0 0.0
        %7037 = vmatprep.subr.mxu0 0.0
        %7038 = vmatpush1.xpose.msra.mxu0 0.0
        %7039 = vmatprep.subr.mxu0 0.0
        %7040 = vmatpush1.xpose.msra.mxu0 0.0
        %7041 = vmatprep.subr.mxu0 0.0
        %7042 = vmatpush1.xpose.msra.mxu0 0.0
        %7043 = vmatprep.subr.mxu0 0.0
        %7044 = vmatpush1.xpose.msra.mxu0 0.0
        %7045 = vmatprep.subr.mxu0 0.0
        %7046 = vmatpush1.xpose.msra.mxu0 0.0
        %7047 = vmatprep.mubr.f32.mxu0 0.0
        %v7048 = vand.u32 %v6535, 4294901760
        %7049 = vmatmul.mubr.f32.gmra.mrb[0].mxu0 %v7048
        %v7050 = vpop.f32.mrb[0].mxu0
        %v7051 = vadd.f32 %v6944, %v7050
        %v7052 = vpop.f32.mrb[0].mxu0
        %7053 = vmatprep.mubr.f32.mxu0 0.0
        %v7054 = vand.u32 %v6537, 4294901760
        %7055 = vmatmul.mubr.f32.gmra.mrb[0].mxu0 %v7054
        %v7056 = vpop.f32.mrb[0].mxu0
        %v7057 = vadd.f32 %v6952, %v7056
        %v7058 = vpop.f32.mrb[0].mxu0
        %7059 = vmatprep.mubr.f32.mxu0 0.0
        %v7060 = vand.u32 %v6539, 4294901760
        %7061 = vmatmul.mubr.f32.gmra.mrb[0].mxu0 %v7060
        %v7062 = vpop.f32.mrb[0].mxu0
        %v7063 = vadd.f32 %v6960, %v7062
        %v7064 = vpop.f32.mrb[0].mxu0
        %7065 = vmatprep.mubr.f32.mxu0 0.0
        %v7066 = vand.u32 %v6541, 4294901760
        %7067 = vmatmul.mubr.f32.gmra.mrb[0].mxu0 %v7066
        %v7068 = vpop.f32.mrb[0].mxu0
        %v7069 = vadd.f32 %v6968, %v7068
        %v7070 = vpop.f32.mrb[0].mxu0
        %7071 = vdwg.mxu0
        %7072 = vmatprep.subr.mxu0 0.0
        %v7073 = vand.u32 %v6543, 4294901760
        %7074 = vmatpush1.xpose.msra.mxu0 %v7073
        %7075 = vmatprep.subr.mxu0 0.0
        %v7076 = vand.u32 %v6545, 4294901760
        %7077 = vmatpush1.xpose.msra.mxu0 %v7076
        %7078 = vmatprep.subr.mxu0 0.0
        %v7079 = vand.u32 %v6547, 4294901760
        %7080 = vmatpush1.xpose.msra.mxu0 %v7079
        %7081 = vmatprep.subr.mxu0 0.0
        %v7082 = vand.u32 %v6549, 4294901760
        %7083 = vmatpush1.xpose.msra.mxu0 %v7082
        %7084 = vmatprep.subr.mxu0 0.0
        %7085 = vmatpush1.xpose.msra.mxu0 0.0
        %7086 = vmatprep.subr.mxu0 0.0
        %7087 = vmatpush1.xpose.msra.mxu0 0.0
        %7088 = vmatprep.subr.mxu0 0.0
        %7089 = vmatpush1.xpose.msra.mxu0 0.0
        %7090 = vmatprep.subr.mxu0 0.0
        %7091 = vmatpush1.xpose.msra.mxu0 0.0
        %7092 = vmatprep.subr.mxu0 0.0
        %7093 = vmatpush1.xpose.msra.mxu0 0.0
        %7094 = vmatprep.subr.mxu0 0.0
        %7095 = vmatpush1.xpose.msra.mxu0 0.0
        %7096 = vmatprep.subr.mxu0 0.0
        %7097 = vmatpush1.xpose.msra.mxu0 0.0
        %7098 = vmatprep.subr.mxu0 0.0
        %7099 = vmatpush1.xpose.msra.mxu0 0.0
        %7100 = vmatprep.subr.mxu0 0.0
        %7101 = vmatpush1.xpose.msra.mxu0 0.0
        %7102 = vmatprep.subr.mxu0 0.0
        %7103 = vmatpush1.xpose.msra.mxu0 0.0
        %7104 = vmatprep.subr.mxu0 0.0
        %7105 = vmatpush1.xpose.msra.mxu0 0.0
        %7106 = vmatprep.subr.mxu0 0.0
        %7107 = vmatpush1.xpose.msra.mxu0 0.0
        %7108 = vmatprep.subr.mxu0 0.0
        %7109 = vmatpush1.xpose.msra.mxu0 0.0
        %7110 = vmatprep.subr.mxu0 0.0
        %7111 = vmatpush1.xpose.msra.mxu0 0.0
        %7112 = vmatprep.subr.mxu0 0.0
        %7113 = vmatpush1.xpose.msra.mxu0 0.0
        %7114 = vmatprep.subr.mxu0 0.0
        %7115 = vmatpush1.xpose.msra.mxu0 0.0
        %7116 = vmatprep.subr.mxu0 0.0
        %7117 = vmatpush1.xpose.msra.mxu0 0.0
        %7118 = vmatprep.subr.mxu0 0.0
        %7119 = vmatpush1.xpose.msra.mxu0 0.0
        %7120 = vmatprep.subr.mxu0 0.0
        %7121 = vmatpush1.xpose.msra.mxu0 0.0
        %7122 = vmatprep.subr.mxu0 0.0
        %7123 = vmatpush1.xpose.msra.mxu0 0.0
        %7124 = vmatprep.subr.mxu0 0.0
        %7125 = vmatpush1.xpose.msra.mxu0 0.0
        %7126 = vmatprep.subr.mxu0 0.0
        %7127 = vmatpush1.xpose.msra.mxu0 0.0
        %7128 = vmatprep.subr.mxu0 0.0
        %7129 = vmatpush1.xpose.msra.mxu0 0.0
        %7130 = vmatprep.subr.mxu0 0.0
        %7131 = vmatpush1.xpose.msra.mxu0 0.0
        %7132 = vmatprep.subr.mxu0 0.0
        %7133 = vmatpush1.xpose.msra.mxu0 0.0
        %7134 = vmatprep.subr.mxu0 0.0
        %7135 = vmatpush1.xpose.msra.mxu0 0.0
        %7136 = vmatprep.subr.mxu0 0.0
        %7137 = vmatpush1.xpose.msra.mxu0 0.0
        %7138 = vmatprep.subr.mxu0 0.0
        %7139 = vmatpush1.xpose.msra.mxu0 0.0
        %7140 = vmatprep.mubr.f32.mxu0 0.0
        %v7141 = vand.u32 %v6535, 4294901760
        %7142 = vmatmul.mubr.f32.gmra.mrb[0].mxu0 %v7141
        %v7143 = vpop.f32.mrb[0].mxu0
        %v7144 = vadd.f32 %v7051, %v7143
        %v7145 = vpop.f32.mrb[0].mxu0
        %7146 = vmatprep.mubr.f32.mxu0 0.0
        %v7147 = vand.u32 %v6537, 4294901760
        %7148 = vmatmul.mubr.f32.gmra.mrb[0].mxu0 %v7147
        %v7149 = vpop.f32.mrb[0].mxu0
        %v7150 = vadd.f32 %v7057, %v7149
        %v7151 = vpop.f32.mrb[0].mxu0
        %7152 = vmatprep.mubr.f32.mxu0 0.0
        %v7153 = vand.u32 %v6539, 4294901760
        %7154 = vmatmul.mubr.f32.gmra.mrb[0].mxu0 %v7153
        %v7155 = vpop.f32.mrb[0].mxu0
        %v7156 = vadd.f32 %v7063, %v7155
        %v7157 = vpop.f32.mrb[0].mxu0
        %7158 = vmatprep.mubr.f32.mxu0 0.0
        %v7159 = vand.u32 %v6541, 4294901760
        %7160 = vmatmul.mubr.f32.gmra.mrb[0].mxu0 %v7159
        %v7161 = vpop.f32.mrb[0].mxu0
        %v7162 = vadd.f32 %v7069, %v7161
        %v7163 = vpop.f32.mrb[0].mxu0
        %7164 = vdwg.mxu0
        %v7165 = vsel %vm2995, %v7144, -inf
        %7166 = vmax.xlane.f32.xlu0 %v7165
        %v7167 = vpop.xlane.xlu0 %7166
        %v7168 = vsel %vm2995, %v7150, -inf
        %7169 = vmax.xlane.f32.xlu0 %v7168
        %v7170 = vpop.xlane.xlu0 %7169
        %v7171 = vsel %vm2995, %v7156, -inf
        %7172 = vmax.xlane.f32.xlu0 %v7171
        %v7173 = vpop.xlane.xlu0 %7172
        %v7174 = vsel %vm2995, %v7162, -inf
        %7175 = vmax.xlane.f32.xlu0 %v7174
        %v7176 = vpop.xlane.xlu0 %7175
        %v7177 = vsub.f32 %v7144, %v7167
        %v7178 = vsub.f32 %v7150, %v7170
        %v7179 = vsub.f32 %v7156, %v7173
        %v7180 = vsub.f32 %v7162, %v7176
        %v7181 = vmul.f32 %v7177, 1.442695
        %v7182 = vpow.pop %v7181
        %v7183 = vmul.f32 %v7178, 1.442695
        %v7184 = vpow.pop %v7183
        %v7185 = vmul.f32 %v7179, 1.442695
        %v7186 = vpow.pop %v7185
        %v7187 = vmul.f32 %v7180, 1.442695
        %v7188 = vpow.pop %v7187
        %v7189 = vsel %vm2995, %v7182, 0.0
        %7190 = vadd.xlane.f32.xlu0 %v7189
        %v7191 = vpop.xlane.xlu0 %7190
        %v7192 = vsel %vm2995, %v7184, 0.0
        %7193 = vadd.xlane.f32.xlu0 %v7192
        %v7194 = vpop.xlane.xlu0 %7193
        %v7195 = vsel %vm2995, %v7186, 0.0
        %7196 = vadd.xlane.f32.xlu0 %v7195
        %v7197 = vpop.xlane.xlu0 %7196
        %v7198 = vsel %vm2995, %v7188, 0.0
        %7199 = vadd.xlane.f32.xlu0 %v7198
        %v7200 = vpop.xlane.xlu0 %7199
        %v7201 = vrcp.pop %v7191
        %v7202 = vmul.f32 %v7182, %v7201
        %v7203 = vrcp.pop %v7194
        %v7204 = vmul.f32 %v7184, %v7203
        %v7205 = vrcp.pop %v7197
        %v7206 = vmul.f32 %v7186, %v7205
        %v7207 = vrcp.pop %v7200
        %v7208 = vmul.f32 %v7188, %v7207
        %s7209 = scalar_lea.vmem %s343, 192 [#allocation11]
        %7210 = vst.msk [vmem:[%s7209] sm:$0xff] %vm2995, %v7202
        %7211 = vst.msk [vmem:[%s7209 + $0x8] sm:$0xff] %vm2995, %v7204
        %7212 = vst.msk [vmem:[%s7209 + $0x10] sm:$0xff] %vm2995, %v7206
        %7213 = vst.msk [vmem:[%s7209 + $0x18] sm:$0xff] %vm2995, %v7208
        %7214 = vrot.lane.b32.xlu0 %v2319, 72
        %v7215 = vpop.permute.xlu0 %7214
        %7216 = vrot.lane.b32.xlu0 %v2326, 72
        %v7217 = vpop.permute.xlu0 %7216
        %7218 = vrot.lane.b32.xlu0 %v2333, 72
        %v7219 = vpop.permute.xlu0 %7218
        %7220 = vrot.lane.b32.xlu0 %v2340, 72
        %v7221 = vpop.permute.xlu0 %7220
        %7222 = vrot.lane.b32.xlu0 %v2319, 8
        %v7223 = vpop.permute.xlu0 %7222
        %7224 = vrot.lane.b32.xlu0 %v2326, 8
        %v7225 = vpop.permute.xlu0 %7224
        %7226 = vrot.lane.b32.xlu0 %v2333, 8
        %v7227 = vpop.permute.xlu0 %7226
        %7228 = vrot.lane.b32.xlu0 %v2340, 8
        %v7229 = vpop.permute.xlu0 %7228
        %v7230 = vsel %vm2364, %v7215, 0
        %v7232 = vsel %vm2364, %v7217, 0
        %v7234 = vsel %vm2364, %v7219, 0
        %v7236 = vsel %vm2364, %v7221, 0
        %v7238 = vsel %vm2364, %v7223, 0
        %v7240 = vsel %vm2364, %v7225, 0
        %v7242 = vsel %vm2364, %v7227, 0
        %v7244 = vsel %vm2364, %v7229, 0
        %7246 = vmatprep.subr.mxu0 0.0
        %v7247 = vand.u32 %v7238, 4294901760
        %7248 = vmatpush1.xpose.msra.mxu0 %v7247
        %7249 = vmatprep.subr.mxu0 0.0
        %v7250 = vand.u32 %v7240, 4294901760
        %7251 = vmatpush1.xpose.msra.mxu0 %v7250
        %7252 = vmatprep.subr.mxu0 0.0
        %v7253 = vand.u32 %v7242, 4294901760
        %7254 = vmatpush1.xpose.msra.mxu0 %v7253
        %7255 = vmatprep.subr.mxu0 0.0
        %v7256 = vand.u32 %v7244, 4294901760
        %7257 = vmatpush1.xpose.msra.mxu0 %v7256
        %7258 = vmatprep.subr.mxu0 0.0
        %7259 = vmatpush1.xpose.msra.mxu0 0.0
        %7260 = vmatprep.subr.mxu0 0.0
        %7261 = vmatpush1.xpose.msra.mxu0 0.0
        %7262 = vmatprep.subr.mxu0 0.0
        %7263 = vmatpush1.xpose.msra.mxu0 0.0
        %7264 = vmatprep.subr.mxu0 0.0
        %7265 = vmatpush1.xpose.msra.mxu0 0.0
        %7266 = vmatprep.subr.mxu0 0.0
        %7267 = vmatpush1.xpose.msra.mxu0 0.0
        %7268 = vmatprep.subr.mxu0 0.0
        %7269 = vmatpush1.xpose.msra.mxu0 0.0
        %7270 = vmatprep.subr.mxu0 0.0
        %7271 = vmatpush1.xpose.msra.mxu0 0.0
        %7272 = vmatprep.subr.mxu0 0.0
        %7273 = vmatpush1.xpose.msra.mxu0 0.0
        %7274 = vmatprep.subr.mxu0 0.0
        %7275 = vmatpush1.xpose.msra.mxu0 0.0
        %7276 = vmatprep.subr.mxu0 0.0
        %7277 = vmatpush1.xpose.msra.mxu0 0.0
        %7278 = vmatprep.subr.mxu0 0.0
        %7279 = vmatpush1.xpose.msra.mxu0 0.0
        %7280 = vmatprep.subr.mxu0 0.0
        %7281 = vmatpush1.xpose.msra.mxu0 0.0
        %7282 = vmatprep.subr.mxu0 0.0
        %7283 = vmatpush1.xpose.msra.mxu0 0.0
        %7284 = vmatprep.subr.mxu0 0.0
        %7285 = vmatpush1.xpose.msra.mxu0 0.0
        %7286 = vmatprep.subr.mxu0 0.0
        %7287 = vmatpush1.xpose.msra.mxu0 0.0
        %7288 = vmatprep.subr.mxu0 0.0
        %7289 = vmatpush1.xpose.msra.mxu0 0.0
        %7290 = vmatprep.subr.mxu0 0.0
        %7291 = vmatpush1.xpose.msra.mxu0 0.0
        %7292 = vmatprep.subr.mxu0 0.0
        %7293 = vmatpush1.xpose.msra.mxu0 0.0
        %7294 = vmatprep.subr.mxu0 0.0
        %7295 = vmatpush1.xpose.msra.mxu0 0.0
        %7296 = vmatprep.subr.mxu0 0.0
        %7297 = vmatpush1.xpose.msra.mxu0 0.0
        %7298 = vmatprep.subr.mxu0 0.0
        %7299 = vmatpush1.xpose.msra.mxu0 0.0
        %7300 = vmatprep.subr.mxu0 0.0
        %7301 = vmatpush1.xpose.msra.mxu0 0.0
        %7302 = vmatprep.subr.mxu0 0.0
        %7303 = vmatpush1.xpose.msra.mxu0 0.0
        %7304 = vmatprep.subr.mxu0 0.0
        %7305 = vmatpush1.xpose.msra.mxu0 0.0
        %7306 = vmatprep.subr.mxu0 0.0
        %7307 = vmatpush1.xpose.msra.mxu0 0.0
        %7308 = vmatprep.subr.mxu0 0.0
        %7309 = vmatpush1.xpose.msra.mxu0 0.0
        %7310 = vmatprep.subr.mxu0 0.0
        %7311 = vmatpush1.xpose.msra.mxu0 0.0
        %7312 = vmatprep.subr.mxu0 0.0
        %7313 = vmatpush1.xpose.msra.mxu0 0.0
        %7314 = vmatprep.mubr.f32.mxu0 0.0
        %v7315 = vand.u32 %v7230, 4294901760
        %v7316 = vsub.f32 %v7230, %v7315
        %v7317 = vand.u32 %v7316, 4294901760
        %v7318 = vsub.f32 %v7316, %v7317
        %v7319 = vand.u32 %v7318, 4294901760
        %7320 = vmatmul.mubr.f32.gmra.mrb[0].mxu0 %v7319
        %v7321 = vpop.f32.mrb[0].mxu0
        %v7322 = vadd.f32 0.0, %v7321
        %v7323 = vpop.f32.mrb[0].mxu0
        %7324 = vmatprep.mubr.f32.mxu0 0.0
        %v7325 = vand.u32 %v7232, 4294901760
        %v7326 = vsub.f32 %v7232, %v7325
        %v7327 = vand.u32 %v7326, 4294901760
        %v7328 = vsub.f32 %v7326, %v7327
        %v7329 = vand.u32 %v7328, 4294901760
        %7330 = vmatmul.mubr.f32.gmra.mrb[0].mxu0 %v7329
        %v7331 = vpop.f32.mrb[0].mxu0
        %v7332 = vadd.f32 0.0, %v7331
        %v7333 = vpop.f32.mrb[0].mxu0
        %7334 = vmatprep.mubr.f32.mxu0 0.0
        %v7335 = vand.u32 %v7234, 4294901760
        %v7336 = vsub.f32 %v7234, %v7335
        %v7337 = vand.u32 %v7336, 4294901760
        %v7338 = vsub.f32 %v7336, %v7337
        %v7339 = vand.u32 %v7338, 4294901760
        %7340 = vmatmul.mubr.f32.gmra.mrb[0].mxu0 %v7339
        %v7341 = vpop.f32.mrb[0].mxu0
        %v7342 = vadd.f32 0.0, %v7341
        %v7343 = vpop.f32.mrb[0].mxu0
        %7344 = vmatprep.mubr.f32.mxu0 0.0
        %v7345 = vand.u32 %v7236, 4294901760
        %v7346 = vsub.f32 %v7236, %v7345
        %v7347 = vand.u32 %v7346, 4294901760
        %v7348 = vsub.f32 %v7346, %v7347
        %v7349 = vand.u32 %v7348, 4294901760
        %7350 = vmatmul.mubr.f32.gmra.mrb[0].mxu0 %v7349
        %v7351 = vpop.f32.mrb[0].mxu0
        %v7352 = vadd.f32 0.0, %v7351
        %v7353 = vpop.f32.mrb[0].mxu0
        %7354 = vdwg.mxu0
        %7355 = vmatprep.subr.mxu0 0.0
        %v7356 = vand.u32 %v7238, 4294901760
        %v7357 = vsub.f32 %v7238, %v7356
        %v7358 = vand.u32 %v7357, 4294901760
        %v7359 = vsub.f32 %v7357, %v7358
        %v7360 = vand.u32 %v7359, 4294901760
        %7361 = vmatpush1.xpose.msra.mxu0 %v7360
        %7362 = vmatprep.subr.mxu0 0.0
        %v7363 = vand.u32 %v7240, 4294901760
        %v7364 = vsub.f32 %v7240, %v7363
        %v7365 = vand.u32 %v7364, 4294901760
        %v7366 = vsub.f32 %v7364, %v7365
        %v7367 = vand.u32 %v7366, 4294901760
        %7368 = vmatpush1.xpose.msra.mxu0 %v7367
        %7369 = vmatprep.subr.mxu0 0.0
        %v7370 = vand.u32 %v7242, 4294901760
        %v7371 = vsub.f32 %v7242, %v7370
        %v7372 = vand.u32 %v7371, 4294901760
        %v7373 = vsub.f32 %v7371, %v7372
        %v7374 = vand.u32 %v7373, 4294901760
        %7375 = vmatpush1.xpose.msra.mxu0 %v7374
        %7376 = vmatprep.subr.mxu0 0.0
        %v7377 = vand.u32 %v7244, 4294901760
        %v7378 = vsub.f32 %v7244, %v7377
        %v7379 = vand.u32 %v7378, 4294901760
        %v7380 = vsub.f32 %v7378, %v7379
        %v7381 = vand.u32 %v7380, 4294901760
        %7382 = vmatpush1.xpose.msra.mxu0 %v7381
        %7383 = vmatprep.subr.mxu0 0.0
        %7384 = vmatpush1.xpose.msra.mxu0 0.0
        %7385 = vmatprep.subr.mxu0 0.0
        %7386 = vmatpush1.xpose.msra.mxu0 0.0
        %7387 = vmatprep.subr.mxu0 0.0
        %7388 = vmatpush1.xpose.msra.mxu0 0.0
        %7389 = vmatprep.subr.mxu0 0.0
        %7390 = vmatpush1.xpose.msra.mxu0 0.0
        %7391 = vmatprep.subr.mxu0 0.0
        %7392 = vmatpush1.xpose.msra.mxu0 0.0
        %7393 = vmatprep.subr.mxu0 0.0
        %7394 = vmatpush1.xpose.msra.mxu0 0.0
        %7395 = vmatprep.subr.mxu0 0.0
        %7396 = vmatpush1.xpose.msra.mxu0 0.0
        %7397 = vmatprep.subr.mxu0 0.0
        %7398 = vmatpush1.xpose.msra.mxu0 0.0
        %7399 = vmatprep.subr.mxu0 0.0
        %7400 = vmatpush1.xpose.msra.mxu0 0.0
        %7401 = vmatprep.subr.mxu0 0.0
        %7402 = vmatpush1.xpose.msra.mxu0 0.0
        %7403 = vmatprep.subr.mxu0 0.0
        %7404 = vmatpush1.xpose.msra.mxu0 0.0
        %7405 = vmatprep.subr.mxu0 0.0
        %7406 = vmatpush1.xpose.msra.mxu0 0.0
        %7407 = vmatprep.subr.mxu0 0.0
        %7408 = vmatpush1.xpose.msra.mxu0 0.0
        %7409 = vmatprep.subr.mxu0 0.0
        %7410 = vmatpush1.xpose.msra.mxu0 0.0
        %7411 = vmatprep.subr.mxu0 0.0
        %7412 = vmatpush1.xpose.msra.mxu0 0.0
        %7413 = vmatprep.subr.mxu0 0.0
        %7414 = vmatpush1.xpose.msra.mxu0 0.0
        %7415 = vmatprep.subr.mxu0 0.0
        %7416 = vmatpush1.xpose.msra.mxu0 0.0
        %7417 = vmatprep.subr.mxu0 0.0
        %7418 = vmatpush1.xpose.msra.mxu0 0.0
        %7419 = vmatprep.subr.mxu0 0.0
        %7420 = vmatpush1.xpose.msra.mxu0 0.0
        %7421 = vmatprep.subr.mxu0 0.0
        %7422 = vmatpush1.xpose.msra.mxu0 0.0
        %7423 = vmatprep.subr.mxu0 0.0
        %7424 = vmatpush1.xpose.msra.mxu0 0.0
        %7425 = vmatprep.subr.mxu0 0.0
        %7426 = vmatpush1.xpose.msra.mxu0 0.0
        %7427 = vmatprep.subr.mxu0 0.0
        %7428 = vmatpush1.xpose.msra.mxu0 0.0
        %7429 = vmatprep.subr.mxu0 0.0
        %7430 = vmatpush1.xpose.msra.mxu0 0.0
        %7431 = vmatprep.subr.mxu0 0.0
        %7432 = vmatpush1.xpose.msra.mxu0 0.0
        %7433 = vmatprep.subr.mxu0 0.0
        %7434 = vmatpush1.xpose.msra.mxu0 0.0
        %7435 = vmatprep.subr.mxu0 0.0
        %7436 = vmatpush1.xpose.msra.mxu0 0.0
        %7437 = vmatprep.subr.mxu0 0.0
        %7438 = vmatpush1.xpose.msra.mxu0 0.0
        %7439 = vmatprep.mubr.f32.mxu0 0.0
        %v7440 = vand.u32 %v7230, 4294901760
        %7441 = vmatmul.mubr.f32.gmra.mrb[0].mxu0 %v7440
        %v7442 = vpop.f32.mrb[0].mxu0
        %v7443 = vadd.f32 %v7322, %v7442
        %v7444 = vpop.f32.mrb[0].mxu0
        %7445 = vmatprep.mubr.f32.mxu0 0.0
        %v7446 = vand.u32 %v7232, 4294901760
        %7447 = vmatmul.mubr.f32.gmra.mrb[0].mxu0 %v7446
        %v7448 = vpop.f32.mrb[0].mxu0
        %v7449 = vadd.f32 %v7332, %v7448
        %v7450 = vpop.f32.mrb[0].mxu0
        %7451 = vmatprep.mubr.f32.mxu0 0.0
        %v7452 = vand.u32 %v7234, 4294901760
        %7453 = vmatmul.mubr.f32.gmra.mrb[0].mxu0 %v7452
        %v7454 = vpop.f32.mrb[0].mxu0
        %v7455 = vadd.f32 %v7342, %v7454
        %v7456 = vpop.f32.mrb[0].mxu0
        %7457 = vmatprep.mubr.f32.mxu0 0.0
        %v7458 = vand.u32 %v7236, 4294901760
        %7459 = vmatmul.mubr.f32.gmra.mrb[0].mxu0 %v7458
        %v7460 = vpop.f32.mrb[0].mxu0
        %v7461 = vadd.f32 %v7352, %v7460
        %v7462 = vpop.f32.mrb[0].mxu0
        %7463 = vdwg.mxu0
        %7464 = vmatprep.subr.mxu0 0.0
        %v7465 = vand.u32 %v7238, 4294901760
        %v7466 = vsub.f32 %v7238, %v7465
        %7467 = vmatpush1.xpose.msra.mxu0 %v7466
        %7468 = vmatprep.subr.mxu0 0.0
        %v7469 = vand.u32 %v7240, 4294901760
        %v7470 = vsub.f32 %v7240, %v7469
        %7471 = vmatpush1.xpose.msra.mxu0 %v7470
        %7472 = vmatprep.subr.mxu0 0.0
        %v7473 = vand.u32 %v7242, 4294901760
        %v7474 = vsub.f32 %v7242, %v7473
        %7475 = vmatpush1.xpose.msra.mxu0 %v7474
        %7476 = vmatprep.subr.mxu0 0.0
        %v7477 = vand.u32 %v7244, 4294901760
        %v7478 = vsub.f32 %v7244, %v7477
        %7479 = vmatpush1.xpose.msra.mxu0 %v7478
        %7480 = vmatprep.subr.mxu0 0.0
        %7481 = vmatpush1.xpose.msra.mxu0 0.0
        %7482 = vmatprep.subr.mxu0 0.0
        %7483 = vmatpush1.xpose.msra.mxu0 0.0
        %7484 = vmatprep.subr.mxu0 0.0
        %7485 = vmatpush1.xpose.msra.mxu0 0.0
        %7486 = vmatprep.subr.mxu0 0.0
        %7487 = vmatpush1.xpose.msra.mxu0 0.0
        %7488 = vmatprep.subr.mxu0 0.0
        %7489 = vmatpush1.xpose.msra.mxu0 0.0
        %7490 = vmatprep.subr.mxu0 0.0
        %7491 = vmatpush1.xpose.msra.mxu0 0.0
        %7492 = vmatprep.subr.mxu0 0.0
        %7493 = vmatpush1.xpose.msra.mxu0 0.0
        %7494 = vmatprep.subr.mxu0 0.0
        %7495 = vmatpush1.xpose.msra.mxu0 0.0
        %7496 = vmatprep.subr.mxu0 0.0
        %7497 = vmatpush1.xpose.msra.mxu0 0.0
        %7498 = vmatprep.subr.mxu0 0.0
        %7499 = vmatpush1.xpose.msra.mxu0 0.0
        %7500 = vmatprep.subr.mxu0 0.0
        %7501 = vmatpush1.xpose.msra.mxu0 0.0
        %7502 = vmatprep.subr.mxu0 0.0
        %7503 = vmatpush1.xpose.msra.mxu0 0.0
        %7504 = vmatprep.subr.mxu0 0.0
        %7505 = vmatpush1.xpose.msra.mxu0 0.0
        %7506 = vmatprep.subr.mxu0 0.0
        %7507 = vmatpush1.xpose.msra.mxu0 0.0
        %7508 = vmatprep.subr.mxu0 0.0
        %7509 = vmatpush1.xpose.msra.mxu0 0.0
        %7510 = vmatprep.subr.mxu0 0.0
        %7511 = vmatpush1.xpose.msra.mxu0 0.0
        %7512 = vmatprep.subr.mxu0 0.0
        %7513 = vmatpush1.xpose.msra.mxu0 0.0
        %7514 = vmatprep.subr.mxu0 0.0
        %7515 = vmatpush1.xpose.msra.mxu0 0.0
        %7516 = vmatprep.subr.mxu0 0.0
        %7517 = vmatpush1.xpose.msra.mxu0 0.0
        %7518 = vmatprep.subr.mxu0 0.0
        %7519 = vmatpush1.xpose.msra.mxu0 0.0
        %7520 = vmatprep.subr.mxu0 0.0
        %7521 = vmatpush1.xpose.msra.mxu0 0.0
        %7522 = vmatprep.subr.mxu0 0.0
        %7523 = vmatpush1.xpose.msra.mxu0 0.0
        %7524 = vmatprep.subr.mxu0 0.0
        %7525 = vmatpush1.xpose.msra.mxu0 0.0
        %7526 = vmatprep.subr.mxu0 0.0
        %7527 = vmatpush1.xpose.msra.mxu0 0.0
        %7528 = vmatprep.subr.mxu0 0.0
        %7529 = vmatpush1.xpose.msra.mxu0 0.0
        %7530 = vmatprep.subr.mxu0 0.0
        %7531 = vmatpush1.xpose.msra.mxu0 0.0
        %7532 = vmatprep.subr.mxu0 0.0
        %7533 = vmatpush1.xpose.msra.mxu0 0.0
        %7534 = vmatprep.subr.mxu0 0.0
        %7535 = vmatpush1.xpose.msra.mxu0 0.0
        %7536 = vmatprep.mubr.f32.mxu0 0.0
        %v7537 = vand.u32 %v7230, 4294901760
        %v7538 = vsub.f32 %v7230, %v7537
        %7539 = vmatmul.mubr.f32.gmra.mrb[0].mxu0 %v7538
        %v7540 = vpop.f32.mrb[0].mxu0
        %v7541 = vadd.f32 %v7443, %v7540
        %v7542 = vpop.f32.mrb[0].mxu0
        %7543 = vmatprep.mubr.f32.mxu0 0.0
        %v7544 = vand.u32 %v7232, 4294901760
        %v7545 = vsub.f32 %v7232, %v7544
        %7546 = vmatmul.mubr.f32.gmra.mrb[0].mxu0 %v7545
        %v7547 = vpop.f32.mrb[0].mxu0
        %v7548 = vadd.f32 %v7449, %v7547
        %v7549 = vpop.f32.mrb[0].mxu0
        %7550 = vmatprep.mubr.f32.mxu0 0.0
        %v7551 = vand.u32 %v7234, 4294901760
        %v7552 = vsub.f32 %v7234, %v7551
        %7553 = vmatmul.mubr.f32.gmra.mrb[0].mxu0 %v7552
        %v7554 = vpop.f32.mrb[0].mxu0
        %v7555 = vadd.f32 %v7455, %v7554
        %v7556 = vpop.f32.mrb[0].mxu0
        %7557 = vmatprep.mubr.f32.mxu0 0.0
        %v7558 = vand.u32 %v7236, 4294901760
        %v7559 = vsub.f32 %v7236, %v7558
        %7560 = vmatmul.mubr.f32.gmra.mrb[0].mxu0 %v7559
        %v7561 = vpop.f32.mrb[0].mxu0
        %v7562 = vadd.f32 %v7461, %v7561
        %v7563 = vpop.f32.mrb[0].mxu0
        %7564 = vdwg.mxu0
        %7565 = vmatprep.subr.mxu0 0.0
        %v7566 = vand.u32 %v7238, 4294901760
        %7567 = vmatpush1.xpose.msra.mxu0 %v7566
        %7568 = vmatprep.subr.mxu0 0.0
        %v7569 = vand.u32 %v7240, 4294901760
        %7570 = vmatpush1.xpose.msra.mxu0 %v7569
        %7571 = vmatprep.subr.mxu0 0.0
        %v7572 = vand.u32 %v7242, 4294901760
        %7573 = vmatpush1.xpose.msra.mxu0 %v7572
        %7574 = vmatprep.subr.mxu0 0.0
        %v7575 = vand.u32 %v7244, 4294901760
        %7576 = vmatpush1.xpose.msra.mxu0 %v7575
        %7577 = vmatprep.subr.mxu0 0.0
        %7578 = vmatpush1.xpose.msra.mxu0 0.0
        %7579 = vmatprep.subr.mxu0 0.0
        %7580 = vmatpush1.xpose.msra.mxu0 0.0
        %7581 = vmatprep.subr.mxu0 0.0
        %7582 = vmatpush1.xpose.msra.mxu0 0.0
        %7583 = vmatprep.subr.mxu0 0.0
        %7584 = vmatpush1.xpose.msra.mxu0 0.0
        %7585 = vmatprep.subr.mxu0 0.0
        %7586 = vmatpush1.xpose.msra.mxu0 0.0
        %7587 = vmatprep.subr.mxu0 0.0
        %7588 = vmatpush1.xpose.msra.mxu0 0.0
        %7589 = vmatprep.subr.mxu0 0.0
        %7590 = vmatpush1.xpose.msra.mxu0 0.0
        %7591 = vmatprep.subr.mxu0 0.0
        %7592 = vmatpush1.xpose.msra.mxu0 0.0
        %7593 = vmatprep.subr.mxu0 0.0
        %7594 = vmatpush1.xpose.msra.mxu0 0.0
        %7595 = vmatprep.subr.mxu0 0.0
        %7596 = vmatpush1.xpose.msra.mxu0 0.0
        %7597 = vmatprep.subr.mxu0 0.0
        %7598 = vmatpush1.xpose.msra.mxu0 0.0
        %7599 = vmatprep.subr.mxu0 0.0
        %7600 = vmatpush1.xpose.msra.mxu0 0.0
        %7601 = vmatprep.subr.mxu0 0.0
        %7602 = vmatpush1.xpose.msra.mxu0 0.0
        %7603 = vmatprep.subr.mxu0 0.0
        %7604 = vmatpush1.xpose.msra.mxu0 0.0
        %7605 = vmatprep.subr.mxu0 0.0
        %7606 = vmatpush1.xpose.msra.mxu0 0.0
        %7607 = vmatprep.subr.mxu0 0.0
        %7608 = vmatpush1.xpose.msra.mxu0 0.0
        %7609 = vmatprep.subr.mxu0 0.0
        %7610 = vmatpush1.xpose.msra.mxu0 0.0
        %7611 = vmatprep.subr.mxu0 0.0
        %7612 = vmatpush1.xpose.msra.mxu0 0.0
        %7613 = vmatprep.subr.mxu0 0.0
        %7614 = vmatpush1.xpose.msra.mxu0 0.0
        %7615 = vmatprep.subr.mxu0 0.0
        %7616 = vmatpush1.xpose.msra.mxu0 0.0
        %7617 = vmatprep.subr.mxu0 0.0
        %7618 = vmatpush1.xpose.msra.mxu0 0.0
        %7619 = vmatprep.subr.mxu0 0.0
        %7620 = vmatpush1.xpose.msra.mxu0 0.0
        %7621 = vmatprep.subr.mxu0 0.0
        %7622 = vmatpush1.xpose.msra.mxu0 0.0
        %7623 = vmatprep.subr.mxu0 0.0
        %7624 = vmatpush1.xpose.msra.mxu0 0.0
        %7625 = vmatprep.subr.mxu0 0.0
        %7626 = vmatpush1.xpose.msra.mxu0 0.0
        %7627 = vmatprep.subr.mxu0 0.0
        %7628 = vmatpush1.xpose.msra.mxu0 0.0
        %7629 = vmatprep.subr.mxu0 0.0
        %7630 = vmatpush1.xpose.msra.mxu0 0.0
        %7631 = vmatprep.subr.mxu0 0.0
        %7632 = vmatpush1.xpose.msra.mxu0 0.0
        %7633 = vmatprep.mubr.f32.mxu0 0.0
        %v7634 = vand.u32 %v7230, 4294901760
        %v7635 = vsub.f32 %v7230, %v7634
        %v7636 = vand.u32 %v7635, 4294901760
        %7637 = vmatmul.mubr.f32.gmra.mrb[0].mxu0 %v7636
        %v7638 = vpop.f32.mrb[0].mxu0
        %v7639 = vadd.f32 %v7541, %v7638
        %v7640 = vpop.f32.mrb[0].mxu0
        %7641 = vmatprep.mubr.f32.mxu0 0.0
        %v7642 = vand.u32 %v7232, 4294901760
        %v7643 = vsub.f32 %v7232, %v7642
        %v7644 = vand.u32 %v7643, 4294901760
        %7645 = vmatmul.mubr.f32.gmra.mrb[0].mxu0 %v7644
        %v7646 = vpop.f32.mrb[0].mxu0
        %v7647 = vadd.f32 %v7548, %v7646
        %v7648 = vpop.f32.mrb[0].mxu0
        %7649 = vmatprep.mubr.f32.mxu0 0.0
        %v7650 = vand.u32 %v7234, 4294901760
        %v7651 = vsub.f32 %v7234, %v7650
        %v7652 = vand.u32 %v7651, 4294901760
        %7653 = vmatmul.mubr.f32.gmra.mrb[0].mxu0 %v7652
        %v7654 = vpop.f32.mrb[0].mxu0
        %v7655 = vadd.f32 %v7555, %v7654
        %v7656 = vpop.f32.mrb[0].mxu0
        %7657 = vmatprep.mubr.f32.mxu0 0.0
        %v7658 = vand.u32 %v7236, 4294901760
        %v7659 = vsub.f32 %v7236, %v7658
        %v7660 = vand.u32 %v7659, 4294901760
        %7661 = vmatmul.mubr.f32.gmra.mrb[0].mxu0 %v7660
        %v7662 = vpop.f32.mrb[0].mxu0
        %v7663 = vadd.f32 %v7562, %v7662
        %v7664 = vpop.f32.mrb[0].mxu0
        %7665 = vdwg.mxu0
        %7666 = vmatprep.subr.mxu0 0.0
        %v7667 = vand.u32 %v7238, 4294901760
        %v7668 = vsub.f32 %v7238, %v7667
        %v7669 = vand.u32 %v7668, 4294901760
        %7670 = vmatpush1.xpose.msra.mxu0 %v7669
        %7671 = vmatprep.subr.mxu0 0.0
        %v7672 = vand.u32 %v7240, 4294901760
        %v7673 = vsub.f32 %v7240, %v7672
        %v7674 = vand.u32 %v7673, 4294901760
        %7675 = vmatpush1.xpose.msra.mxu0 %v7674
        %7676 = vmatprep.subr.mxu0 0.0
        %v7677 = vand.u32 %v7242, 4294901760
        %v7678 = vsub.f32 %v7242, %v7677
        %v7679 = vand.u32 %v7678, 4294901760
        %7680 = vmatpush1.xpose.msra.mxu0 %v7679
        %7681 = vmatprep.subr.mxu0 0.0
        %v7682 = vand.u32 %v7244, 4294901760
        %v7683 = vsub.f32 %v7244, %v7682
        %v7684 = vand.u32 %v7683, 4294901760
        %7685 = vmatpush1.xpose.msra.mxu0 %v7684
        %7686 = vmatprep.subr.mxu0 0.0
        %7687 = vmatpush1.xpose.msra.mxu0 0.0
        %7688 = vmatprep.subr.mxu0 0.0
        %7689 = vmatpush1.xpose.msra.mxu0 0.0
        %7690 = vmatprep.subr.mxu0 0.0
        %7691 = vmatpush1.xpose.msra.mxu0 0.0
        %7692 = vmatprep.subr.mxu0 0.0
        %7693 = vmatpush1.xpose.msra.mxu0 0.0
        %7694 = vmatprep.subr.mxu0 0.0
        %7695 = vmatpush1.xpose.msra.mxu0 0.0
        %7696 = vmatprep.subr.mxu0 0.0
        %7697 = vmatpush1.xpose.msra.mxu0 0.0
        %7698 = vmatprep.subr.mxu0 0.0
        %7699 = vmatpush1.xpose.msra.mxu0 0.0
        %7700 = vmatprep.subr.mxu0 0.0
        %7701 = vmatpush1.xpose.msra.mxu0 0.0
        %7702 = vmatprep.subr.mxu0 0.0
        %7703 = vmatpush1.xpose.msra.mxu0 0.0
        %7704 = vmatprep.subr.mxu0 0.0
        %7705 = vmatpush1.xpose.msra.mxu0 0.0
        %7706 = vmatprep.subr.mxu0 0.0
        %7707 = vmatpush1.xpose.msra.mxu0 0.0
        %7708 = vmatprep.subr.mxu0 0.0
        %7709 = vmatpush1.xpose.msra.mxu0 0.0
        %7710 = vmatprep.subr.mxu0 0.0
        %7711 = vmatpush1.xpose.msra.mxu0 0.0
        %7712 = vmatprep.subr.mxu0 0.0
        %7713 = vmatpush1.xpose.msra.mxu0 0.0
        %7714 = vmatprep.subr.mxu0 0.0
        %7715 = vmatpush1.xpose.msra.mxu0 0.0
        %7716 = vmatprep.subr.mxu0 0.0
        %7717 = vmatpush1.xpose.msra.mxu0 0.0
        %7718 = vmatprep.subr.mxu0 0.0
        %7719 = vmatpush1.xpose.msra.mxu0 0.0
        %7720 = vmatprep.subr.mxu0 0.0
        %7721 = vmatpush1.xpose.msra.mxu0 0.0
        %7722 = vmatprep.subr.mxu0 0.0
        %7723 = vmatpush1.xpose.msra.mxu0 0.0
        %7724 = vmatprep.subr.mxu0 0.0
        %7725 = vmatpush1.xpose.msra.mxu0 0.0
        %7726 = vmatprep.subr.mxu0 0.0
        %7727 = vmatpush1.xpose.msra.mxu0 0.0
        %7728 = vmatprep.subr.mxu0 0.0
        %7729 = vmatpush1.xpose.msra.mxu0 0.0
        %7730 = vmatprep.subr.mxu0 0.0
        %7731 = vmatpush1.xpose.msra.mxu0 0.0
        %7732 = vmatprep.subr.mxu0 0.0
        %7733 = vmatpush1.xpose.msra.mxu0 0.0
        %7734 = vmatprep.subr.mxu0 0.0
        %7735 = vmatpush1.xpose.msra.mxu0 0.0
        %7736 = vmatprep.subr.mxu0 0.0
        %7737 = vmatpush1.xpose.msra.mxu0 0.0
        %7738 = vmatprep.subr.mxu0 0.0
        %7739 = vmatpush1.xpose.msra.mxu0 0.0
        %7740 = vmatprep.subr.mxu0 0.0
        %7741 = vmatpush1.xpose.msra.mxu0 0.0
        %7742 = vmatprep.mubr.f32.mxu0 0.0
        %v7743 = vand.u32 %v7230, 4294901760
        %7744 = vmatmul.mubr.f32.gmra.mrb[0].mxu0 %v7743
        %v7745 = vpop.f32.mrb[0].mxu0
        %v7746 = vadd.f32 %v7639, %v7745
        %v7747 = vpop.f32.mrb[0].mxu0
        %7748 = vmatprep.mubr.f32.mxu0 0.0
        %v7749 = vand.u32 %v7232, 4294901760
        %7750 = vmatmul.mubr.f32.gmra.mrb[0].mxu0 %v7749
        %v7751 = vpop.f32.mrb[0].mxu0
        %v7752 = vadd.f32 %v7647, %v7751
        %v7753 = vpop.f32.mrb[0].mxu0
        %7754 = vmatprep.mubr.f32.mxu0 0.0
        %v7755 = vand.u32 %v7234, 4294901760
        %7756 = vmatmul.mubr.f32.gmra.mrb[0].mxu0 %v7755
        %v7757 = vpop.f32.mrb[0].mxu0
        %v7758 = vadd.f32 %v7655, %v7757
        %v7759 = vpop.f32.mrb[0].mxu0
        %7760 = vmatprep.mubr.f32.mxu0 0.0
        %v7761 = vand.u32 %v7236, 4294901760
        %7762 = vmatmul.mubr.f32.gmra.mrb[0].mxu0 %v7761
        %v7763 = vpop.f32.mrb[0].mxu0
        %v7764 = vadd.f32 %v7663, %v7763
        %v7765 = vpop.f32.mrb[0].mxu0
        %7766 = vdwg.mxu0
        %7767 = vmatprep.subr.mxu0 0.0
        %v7768 = vand.u32 %v7238, 4294901760
        %7769 = vmatpush1.xpose.msra.mxu0 %v7768
        %7770 = vmatprep.subr.mxu0 0.0
        %v7771 = vand.u32 %v7240, 4294901760
        %7772 = vmatpush1.xpose.msra.mxu0 %v7771
        %7773 = vmatprep.subr.mxu0 0.0
        %v7774 = vand.u32 %v7242, 4294901760
        %7775 = vmatpush1.xpose.msra.mxu0 %v7774
        %7776 = vmatprep.subr.mxu0 0.0
        %v7777 = vand.u32 %v7244, 4294901760
        %7778 = vmatpush1.xpose.msra.mxu0 %v7777
        %7779 = vmatprep.subr.mxu0 0.0
        %7780 = vmatpush1.xpose.msra.mxu0 0.0
        %7781 = vmatprep.subr.mxu0 0.0
        %7782 = vmatpush1.xpose.msra.mxu0 0.0
        %7783 = vmatprep.subr.mxu0 0.0
        %7784 = vmatpush1.xpose.msra.mxu0 0.0
        %7785 = vmatprep.subr.mxu0 0.0
        %7786 = vmatpush1.xpose.msra.mxu0 0.0
        %7787 = vmatprep.subr.mxu0 0.0
        %7788 = vmatpush1.xpose.msra.mxu0 0.0
        %7789 = vmatprep.subr.mxu0 0.0
        %7790 = vmatpush1.xpose.msra.mxu0 0.0
        %7791 = vmatprep.subr.mxu0 0.0
        %7792 = vmatpush1.xpose.msra.mxu0 0.0
        %7793 = vmatprep.subr.mxu0 0.0
        %7794 = vmatpush1.xpose.msra.mxu0 0.0
        %7795 = vmatprep.subr.mxu0 0.0
        %7796 = vmatpush1.xpose.msra.mxu0 0.0
        %7797 = vmatprep.subr.mxu0 0.0
        %7798 = vmatpush1.xpose.msra.mxu0 0.0
        %7799 = vmatprep.subr.mxu0 0.0
        %7800 = vmatpush1.xpose.msra.mxu0 0.0
        %7801 = vmatprep.subr.mxu0 0.0
        %7802 = vmatpush1.xpose.msra.mxu0 0.0
        %7803 = vmatprep.subr.mxu0 0.0
        %7804 = vmatpush1.xpose.msra.mxu0 0.0
        %7805 = vmatprep.subr.mxu0 0.0
        %7806 = vmatpush1.xpose.msra.mxu0 0.0
        %7807 = vmatprep.subr.mxu0 0.0
        %7808 = vmatpush1.xpose.msra.mxu0 0.0
        %7809 = vmatprep.subr.mxu0 0.0
        %7810 = vmatpush1.xpose.msra.mxu0 0.0
        %7811 = vmatprep.subr.mxu0 0.0
        %7812 = vmatpush1.xpose.msra.mxu0 0.0
        %7813 = vmatprep.subr.mxu0 0.0
        %7814 = vmatpush1.xpose.msra.mxu0 0.0
        %7815 = vmatprep.subr.mxu0 0.0
        %7816 = vmatpush1.xpose.msra.mxu0 0.0
        %7817 = vmatprep.subr.mxu0 0.0
        %7818 = vmatpush1.xpose.msra.mxu0 0.0
        %7819 = vmatprep.subr.mxu0 0.0
        %7820 = vmatpush1.xpose.msra.mxu0 0.0
        %7821 = vmatprep.subr.mxu0 0.0
        %7822 = vmatpush1.xpose.msra.mxu0 0.0
        %7823 = vmatprep.subr.mxu0 0.0
        %7824 = vmatpush1.xpose.msra.mxu0 0.0
        %7825 = vmatprep.subr.mxu0 0.0
        %7826 = vmatpush1.xpose.msra.mxu0 0.0
        %7827 = vmatprep.subr.mxu0 0.0
        %7828 = vmatpush1.xpose.msra.mxu0 0.0
        %7829 = vmatprep.subr.mxu0 0.0
        %7830 = vmatpush1.xpose.msra.mxu0 0.0
        %7831 = vmatprep.subr.mxu0 0.0
        %7832 = vmatpush1.xpose.msra.mxu0 0.0
        %7833 = vmatprep.subr.mxu0 0.0
        %7834 = vmatpush1.xpose.msra.mxu0 0.0
        %7835 = vmatprep.mubr.f32.mxu0 0.0
        %v7836 = vand.u32 %v7230, 4294901760
        %7837 = vmatmul.mubr.f32.gmra.mrb[0].mxu0 %v7836
        %v7838 = vpop.f32.mrb[0].mxu0
        %v7839 = vadd.f32 %v7746, %v7838
        %v7840 = vpop.f32.mrb[0].mxu0
        %7841 = vmatprep.mubr.f32.mxu0 0.0
        %v7842 = vand.u32 %v7232, 4294901760
        %7843 = vmatmul.mubr.f32.gmra.mrb[0].mxu0 %v7842
        %v7844 = vpop.f32.mrb[0].mxu0
        %v7845 = vadd.f32 %v7752, %v7844
        %v7846 = vpop.f32.mrb[0].mxu0
        %7847 = vmatprep.mubr.f32.mxu0 0.0
        %v7848 = vand.u32 %v7234, 4294901760
        %7849 = vmatmul.mubr.f32.gmra.mrb[0].mxu0 %v7848
        %v7850 = vpop.f32.mrb[0].mxu0
        %v7851 = vadd.f32 %v7758, %v7850
        %v7852 = vpop.f32.mrb[0].mxu0
        %7853 = vmatprep.mubr.f32.mxu0 0.0
        %v7854 = vand.u32 %v7236, 4294901760
        %7855 = vmatmul.mubr.f32.gmra.mrb[0].mxu0 %v7854
        %v7856 = vpop.f32.mrb[0].mxu0
        %v7857 = vadd.f32 %v7764, %v7856
        %v7858 = vpop.f32.mrb[0].mxu0
        %7859 = vdwg.mxu0
        %v7860 = vsel %vm2995, %v7839, -inf
        %7861 = vmax.xlane.f32.xlu0 %v7860
        %v7862 = vpop.xlane.xlu0 %7861
        %v7863 = vsel %vm2995, %v7845, -inf
        %7864 = vmax.xlane.f32.xlu0 %v7863
        %v7865 = vpop.xlane.xlu0 %7864
        %v7866 = vsel %vm2995, %v7851, -inf
        %7867 = vmax.xlane.f32.xlu0 %v7866
        %v7868 = vpop.xlane.xlu0 %7867
        %v7869 = vsel %vm2995, %v7857, -inf
        %7870 = vmax.xlane.f32.xlu0 %v7869
        %v7871 = vpop.xlane.xlu0 %7870
        %v7872 = vsub.f32 %v7839, %v7862
        %v7873 = vsub.f32 %v7845, %v7865
        %v7874 = vsub.f32 %v7851, %v7868
        %v7875 = vsub.f32 %v7857, %v7871
        %v7876 = vmul.f32 %v7872, 1.442695
        %v7877 = vpow.pop %v7876
        %v7878 = vmul.f32 %v7873, 1.442695
        %v7879 = vpow.pop %v7878
        %v7880 = vmul.f32 %v7874, 1.442695
        %v7881 = vpow.pop %v7880
        %v7882 = vmul.f32 %v7875, 1.442695
        %v7883 = vpow.pop %v7882
        %v7884 = vsel %vm2995, %v7877, 0.0
        %7885 = vadd.xlane.f32.xlu0 %v7884
        %v7886 = vpop.xlane.xlu0 %7885
        %v7887 = vsel %vm2995, %v7879, 0.0
        %7888 = vadd.xlane.f32.xlu0 %v7887
        %v7889 = vpop.xlane.xlu0 %7888
        %v7890 = vsel %vm2995, %v7881, 0.0
        %7891 = vadd.xlane.f32.xlu0 %v7890
        %v7892 = vpop.xlane.xlu0 %7891
        %v7893 = vsel %vm2995, %v7883, 0.0
        %7894 = vadd.xlane.f32.xlu0 %v7893
        %v7895 = vpop.xlane.xlu0 %7894
        %v7896 = vrcp.pop %v7886
        %v7897 = vmul.f32 %v7877, %v7896
        %v7898 = vrcp.pop %v7889
        %v7899 = vmul.f32 %v7879, %v7898
        %v7900 = vrcp.pop %v7892
        %v7901 = vmul.f32 %v7881, %v7900
        %v7902 = vrcp.pop %v7895
        %v7903 = vmul.f32 %v7883, %v7902
        %s7904 = scalar_lea.vmem %s343, 224 [#allocation11]
        %7905 = vst.msk [vmem:[%s7904] sm:$0xff] %vm2995, %v7897
        %7906 = vst.msk [vmem:[%s7904 + $0x8] sm:$0xff] %vm2995, %v7899
        %7907 = vst.msk [vmem:[%s7904 + $0x10] sm:$0xff] %vm2995, %v7901
        %7908 = vst.msk [vmem:[%s7904 + $0x18] sm:$0xff] %vm2995, %v7903
        %s7909 = sand.u32 %s147, 1
        %s7910 = scalar_lea.sflag [#allocation4], %s7909
        %s7911 = sand.u32 %s147, 1
        %s7912 = smul.addr %s7911, 128
        %s7913 = scalar_lea.vmem [#allocation8], %s7912
        %s7914 = sand.u32 %s29, 1
        %s7915 = scalar_lea.sflag [#allocation10], %s7914
        %s7916 = sand.u32 %s173, 1
        %s7917 = smul.addr %s7916, 64
        %s7918 = scalar_lea.vmem [#allocation9], %s7917
        %s7919 = sand.u32 %s29, 1
        %s7920 = scalar_lea.sflag [#allocation10], %s7919
        %s7921 = sand.u32 %s199, 1
        %s7922 = smul.addr %s7921, 256
        %s7923 = scalar_lea.vmem [#allocation11], %s7922
        // Predicated region
        $region53: #{tpu_custom_call.1} parent=39 // pred_check
          %p7924 = pneg %p157
        $region54: #{tpu_custom_call.1} parent=39 // pred_check_branch
          %7926 = sbr.rel (%p7924) target = $region56
        $region55: #{tpu_custom_call.1} parent=39 // pred_region
          %s7928 = ssub.s32 2048, 2048
          %7929 = vsyncadd %s7910, %s7928
          %s7930 = smul.addr %s29, 16
          %s7931 = smul.addr %s7930, 128
          %s7932 = scalar_lea.hbm %s5, %s7931
          %s7933 = sshll.u32 %s7913, 4
          %s7934 = int_to_ptr.vmem [resolvable:$true] %s7933
          %7939 = dma.vmem_to_hbm [thread:$0]  %s7934, 2048, %s7932, %s7910, 256, 256, 16
        $region56: #{tpu_custom_call.1} parent=39 // pred_fallthru
          _
        // Predicated region
        $region57: #{tpu_custom_call.1} parent=39 // pred_check
          %p7940 = pneg %p183
        $region58: #{tpu_custom_call.1} parent=39 // pred_check_branch
          %7942 = sbr.rel (%p7940) target = $region60
        $region59: #{tpu_custom_call.1} parent=39 // pred_region
          %s7944 = ssub.s32 1024, 1024
          %7945 = vsyncadd %s7915, %s7944
          %s7946 = smul.addr %s29, 8
          %s7947 = smul.addr %s7946, 128
          %s7948 = scalar_lea.hbm %s6, %s7947
          %s7949 = sshll.u32 %s7918, 4
          %s7950 = int_to_ptr.vmem [resolvable:$true] %s7949
          %7955 = dma.vmem_to_hbm [thread:$0]  %s7950, 1024, %s7948, %s7915, 256, 256, 16
        $region60: #{tpu_custom_call.1} parent=39 // pred_fallthru
          _
        // Predicated region
        $region61: #{tpu_custom_call.1} parent=39 // pred_check
          %p7956 = pneg %p209
        $region62: #{tpu_custom_call.1} parent=39 // pred_check_branch
          %7958 = sbr.rel (%p7956) target = $region64
        $region63: #{tpu_custom_call.1} parent=39 // pred_region
          %s7960 = ssub.s32 4096, 4096
          %7961 = vsyncadd %s7920, %s7960
          %s7962 = smul.addr %s29, 32
          %s7963 = smul.addr %s7962, 128
          %s7964 = scalar_lea.hbm %s7, %s7963
          %s7965 = sshll.u32 %s7923, 4
          %s7966 = int_to_ptr.vmem [resolvable:$true] %s7965
          %7971 = dma.vmem_to_hbm [thread:$0]  %s7966, 4096, %s7964, %s7920, 128, 128, 8
        $region64: #{tpu_custom_call.1} parent=39 // pred_fallthru
          _
      $region40: #{tpu_custom_call.1} parent=5 // pred_fallthru
        _
      %p7972 = scmp.le.s32.totalorder 2, %s24
      // Predicated region
      $region65: #{tpu_custom_call.1} parent=5 // pred_check
        %p7973 = pneg %p7972
      $region66: #{tpu_custom_call.1} parent=5 // pred_check_branch
        %7975 = sbr.rel (%p7973) target = $region68
      $region67: #{tpu_custom_call.1} parent=5 // pred_region
        %s7976 = ssub.s32 %s24, 2
        // Predicated region
        $region69: #{tpu_custom_call.1} parent=67 // pred_check
          %p7977 = pneg %p163
        $region70: #{tpu_custom_call.1} parent=67 // pred_check_branch
          %7979 = sbr.rel (%p7977) target = $region72
        $region71: #{tpu_custom_call.1} parent=67 // pred_region
          %s7980 = sand.u32 %s148, 1
          %s7981 = scalar_lea.sflag [#allocation4], %s7980
          %s7982 = sand.u32 %s148, 1
          %s7983 = smul.addr %s7982, 128
          %s7984 = scalar_lea.vmem [#allocation8], %s7983
          %7985 = dma.done %s7981, 2048
        $region72: #{tpu_custom_call.1} parent=67 // pred_fallthru
          _
        // Predicated region
        $region73: #{tpu_custom_call.1} parent=67 // pred_check
          %p7986 = pneg %p189
        $region74: #{tpu_custom_call.1} parent=67 // pred_check_branch
          %7988 = sbr.rel (%p7986) target = $region76
        $region75: #{tpu_custom_call.1} parent=67 // pred_region
          %s7989 = sand.u32 %s30, 1
          %s7990 = scalar_lea.sflag [#allocation10], %s7989
          %s7991 = sand.u32 %s174, 1
          %s7992 = smul.addr %s7991, 64
          %s7993 = scalar_lea.vmem [#allocation9], %s7992
          %7994 = dma.done %s7990, 1024
        $region76: #{tpu_custom_call.1} parent=67 // pred_fallthru
          _
        // Predicated region
        $region77: #{tpu_custom_call.1} parent=67 // pred_check
          %p7995 = pneg %p215
        $region78: #{tpu_custom_call.1} parent=67 // pred_check_branch
          %7997 = sbr.rel (%p7995) target = $region80
        $region79: #{tpu_custom_call.1} parent=67 // pred_region
          %s7998 = sand.u32 %s30, 1
          %s7999 = scalar_lea.sflag [#allocation10], %s7998
          %s8000 = sand.u32 %s200, 1
          %s8001 = smul.addr %s8000, 256
          %s8002 = scalar_lea.vmem [#allocation11], %s8001
          %8003 = dma.done %s7999, 4096
        $region80: #{tpu_custom_call.1} parent=67 // pred_fallthru
          _
      $region68: #{tpu_custom_call.1} parent=5 // pred_fallthru
        _
    $region6: #{tpu_custom_call.1} parent=1 // loop_footer
      %s28 = sadd.s32 1, %s24
    $region7: #{tpu_custom_call.1} parent=1 // loop_footer_branch
      %23 = sbr.rel target = $region3
    $region8: #{tpu_custom_call.1} parent=1 // loop_exit
      _
    %8004 = vsyncpa [#allocation3], 1
    %s8005 = scalar_lea.sflag [#allocation3], 1
    %8006 = vsyncpa %s8005, 1
    %8007 = vsyncpa [#allocation6], 1
    %8008 = vsyncpa [#allocation4], 1
    %s8009 = scalar_lea.sflag [#allocation4], 1
    %8010 = vsyncpa %s8009, 1
    %8011 = vsyncpa [#allocation10], 1
    %s8012 = scalar_lea.sflag [#allocation10], 1
    %8013 = vsyncpa %s8012, 1

</llo_original>
